<compile_context>
chip_gen: v6e
topology: v6e:2x2x1
jax: 0.10.0
libtpu: 0.0.40
codegen_flags: <defaults>
</compile_context>

<pallas_src>
import functools

import numpy as np

import jax
import jax.numpy as jnp
from jax.experimental import pallas as pl
from jax.experimental.pallas import tpu as pltpu


def _round_up(x, m):
    return ((x + m - 1) // m) * m


def _resident_spec(shape):
    # Full-array block with a constant index map -> the block index never
    # changes, so the weight stays resident in VMEM across all batch tiles.
    return pl.BlockSpec(shape, lambda i, _n=len(shape): (0,) * _n)


# ----------------------------- Pallas kernel --------------------------------


def _dlrm_kernel(
    dense_ref,     # (TB, Din_p)     matmul dtype
    sparse_ref,    # (TB, F, Dp)     matmul dtype (sum-pooled embeddings)
    labels_ref,    # (1, 1, TB)      f32
    w0_ref, b0_ref,       # dense arch layer 0
    w1_ref, b1_ref,       # dense arch layer 1 (out dim == Dp)
    wcat_ref,             # (Kp+Dp, O0p)  over-arch layer 0: [pair rows ; dense rows]
    bo0_ref,              # (1, O0p)   f32
    wo1_ref,              # (1, O0p)   final layer as a row vector
    bo1_ref,              # (1, 1)     f32
    logits_ref,    # out (1, 1, TB)  f32  (transposed, lane dense)
    loss_ref,      # out (1, 8, 128) f32  (per-tile partial BCE sum, broadcast)
    zcat_ref,      # scratch (TB, Kp+Dp) f32 : [pairwise dots | 0 pad | dense]
    *,
    b_total,       # static: true (unpadded) batch size, for the loss mask
):
    f32 = jnp.float32
    md = w0_ref.dtype
    tb = dense_ref.shape[0]
    F = sparse_ref.shape[1]
    d_p = sparse_ref.shape[2]
    kp = zcat_ref.shape[1] - d_p
    P = F * (F + 1) // 2

    # ---- DenseArch: ReLU after every layer ----
    h = jnp.dot(dense_ref[...], w0_ref[...], preferred_element_type=f32) + b0_ref[...]
    h = jnp.maximum(h, 0.0)
    d = jnp.dot(h.astype(md), w1_ref[...], preferred_element_type=f32) + b1_ref[...]
    d = jnp.maximum(d, 0.0)                                   # (TB, Dp) f32

    # ---- InteractionArch: all pairwise dots on the VPU/XLU (no per-sample
    # batched einsum, no combined-slot scratch).  Results land directly in the
    # lane-padded "pairs" region of zcat; column order matches the host-side
    # wcat row construction. ----
    off = 0
    for n in range(F - 1):                       # sparse_n . sparse_m, m > n
        w = F - 1 - n
        left = sparse_ref[:, n:n + 1, :].astype(f32)          # (TB, 1, Dp)
        rest = sparse_ref[:, n + 1:, :].astype(f32)           # (TB, w, Dp)
        zcat_ref[:, off:off + w] = jnp.sum(left * rest, axis=-1)
        off += w
    # sparse_k . dense pairs (all F at once)
    zcat_ref[:, off:off + F] = jnp.sum(
        d[:, None, :] * sparse_ref[...].astype(f32), axis=-1)
    if kp > P:   # zero the lane-pad columns (uninitialized VMEM could hold NaNs)
        zcat_ref[:, P:kp] = jnp.zeros((tb, kp - P), f32)
    zcat_ref[:, kp:] = d                          # dense block, lane-aligned slot

    # ---- OverArch layer 0: ONE flattened MXU matmul over [pairs | dense].
    # The triu selection, both torch concats and the old per-slot matmul loop are
    # all folded into the stacked weight wcat (K = Kp + Dp weight push). ----
    y = jnp.dot(zcat_ref[...].astype(md), wcat_ref[...],
                preferred_element_type=f32) + bo0_ref[...]
    y = jnp.maximum(y, 0.0)                                   # (TB, O0p) f32

    # ---- OverArch final layer, emitted TRANSPOSED: (1, O0p) x (TB, O0p)^T ->
    # (1, TB), so the logits store is one lane-dense row per tile instead of a
    # 128x-replicated block. ----
    logits = jax.lax.dot_general(
        wo1_ref[...], y.astype(md),
        dimension_numbers=(((1,), (1,)), ((), ())),
        preferred_element_type=f32) + bo1_ref[...]            # (1, TB)
    logits_ref[...] = logits[None]

    # ---- BCEWithLogits: per-tile partial sum; the tiny /B reduction happens in
    # the wrapper.  Batch-padding rows are masked via an in-kernel iota (no HBM
    # valid-mask stream). ----
    lbl = labels_ref[0]                                       # (1, TB)
    row = pl.program_id(0) * tb + jax.lax.broadcasted_iota(jnp.int32, (1, tb), 1)
    valid = (row < b_total).astype(f32)
    # TODO(synk): switch to jnp.log1p once its Mosaic lowering is verified on all
    # targets; the log(1+exp) form only loses < 6e-8 absolute per element here.
    per = (jnp.maximum(logits, 0.0) - logits * lbl
           + jnp.log(1.0 + jnp.exp(-jnp.abs(logits)))) * valid
    tile_sum = jnp.sum(per, axis=1, keepdims=True)            # (1, 1)
    loss_ref[...] = jnp.broadcast_to(tile_sum, (8, 128))[None]


# ------------------------------- wrapper -------------------------------------


@functools.partial(jax.jit, static_argnames=("tb", "matmul_dtype"))
def dlrm_train_forward(dense_features, sparse_indices, labels, params,
                       *, tb=256, matmul_dtype=jnp.bfloat16):
    """DLRMTrain forward: returns (loss, (loss, logits, labels))."""
    f32 = jnp.float32
    md = matmul_dtype
    lane = 128

    B, Din = dense_features.shape
    F = sparse_indices.shape[1]
    tables = params["emb_tables"]                  # (F, E, D)
    D = tables.shape[-1]
    H0 = params["w0"].shape[1]
    O0 = params["wo0"].shape[1]
    N = F + 1
    P = N * (N - 1) // 2

    # --- SparseArch: sum-pooled embedding-bag lookup (plain-JAX glue) ---
    # TODO(synk): fuse this data-dependent gather into the kernel (scalar-prefetch
    # indices + manual row DMAs) so pooled embeddings never round-trip HBM in f32.
    feat = jnp.arange(F, dtype=sparse_indices.dtype).reshape(1, F, 1)
    pooled = tables[feat, sparse_indices].sum(axis=2)          # (B, F, D) f32
    pooled = pooled.astype(md)   # cast BEFORE pad: stream/pads run at matmul width

    # --- zero padding to lane multiples / batch tiles (accuracy neutral) ---
    # TODO(synk): for production layer widths on v6e/v7x, round matmul output
    # dims to 256 (2x256^2 MXU); 128 is right for v5e and this toy config.
    din_p = _round_up(Din, lane)
    h0_p = _round_up(H0, lane)
    d_p = _round_up(D, lane)
    o0_p = _round_up(O0, lane)
    kp = _round_up(P, lane)
    b_pad = _round_up(B, tb)
    ntiles = b_pad // tb

    dense_p = jnp.pad(dense_features.astype(md), ((0, b_pad - B), (0, din_p - Din)))
    pooled_p = jnp.pad(pooled, ((0, b_pad - B), (0, 0), (0, d_p - D)))
    labels_p = jnp.pad(labels.astype(f32), (0, b_pad - B)).reshape(ntiles, 1, tb)

    def pad2(x, r, c):
        return jnp.pad(x, ((0, r - x.shape[0]), (0, c - x.shape[1])))

    w0 = pad2(params["w0"], din_p, h0_p).astype(md)
    b0 = pad2(params["b0"], 1, h0_p).astype(f32)
    w1 = pad2(params["w1"], h0_p, d_p).astype(md)
    b1 = pad2(params["b1"], 1, d_p).astype(f32)

    # OverArch layer 0: fold torch's triu-pair selection and both concats into a
    # single stacked weight.  Row layout matches the kernel's zcat scratch:
    #   rows 0..P-1       pair rows (kernel pair-enumeration order)
    #   rows P..kp-1      zero (lane padding of the pair block)
    #   rows kp..kp+Dp-1  DenseArch-output rows (wo0[:D], zero padded)
    wo0 = params["wo0"]                                        # (D + P, O0)

    def torch_pair_index(i, j):        # torch.triu_indices(N, N, offset=1) order
        return i * N - (i * (i + 1)) // 2 + (j - i - 1)

    order = []
    for n in range(F - 1):
        for m in range(n + 1, F):
            order.append(torch_pair_index(n + 1, m + 1))       # (sparse_n, sparse_m)
    for k in range(F):
        order.append(torch_pair_index(0, k + 1))               # (sparse_k, dense)
    order = np.asarray(order, dtype=np.int32)                  # len == P
    wz = pad2(wo0[D:][order], kp, o0_p)                        # (kp, o0_p)
    wo0_dense = pad2(wo0[:D], d_p, o0_p)                       # (d_p, o0_p)
    wcat = jnp.concatenate([wz, wo0_dense], axis=0).astype(md)  # (kp+d_p, o0_p)
    bo0 = pad2(params["bo0"], 1, o0_p).astype(f32)

    wo1_row = pad2(params["wo1"].T, 1, o0_p).astype(md)        # (1, o0_p)
    bo1 = params["bo1"].astype(f32)                            # (1, 1)

    weights = (w0, b0, w1, b1, wcat, bo0, wo1_row, bo1)
    args = (dense_p, pooled_p, labels_p) + weights

    in_specs = [
        pl.BlockSpec((tb, din_p), lambda i: (i, 0)),
        pl.BlockSpec((tb, F, d_p), lambda i: (i, 0, 0)),
        pl.BlockSpec((1, 1, tb), lambda i: (i, 0, 0)),
    ] + [_resident_spec(w.shape) for w in weights]

    out_specs = [
        pl.BlockSpec((1, 1, tb), lambda i: (i, 0, 0)),   # logits (transposed row)
        pl.BlockSpec((1, 8, 128), lambda i: (i, 0, 0)),  # per-tile BCE partials
    ]
    out_shape = (
        jax.ShapeDtypeStruct((ntiles, 1, tb), f32),
        jax.ShapeDtypeStruct((ntiles, 8, 128), f32),
    )

    # VMEM budget: resident weights + double-buffered tiles + scratch, with slack
    # for compiler temporaries; capped at 48 MiB (75% of v7x's 64 MiB physical;
    # v5e/v6e have 128 MiB and could go higher for production shapes).
    md_b = jnp.dtype(md).itemsize
    weight_bytes = sum(int(w.size) * jnp.dtype(w.dtype).itemsize for w in weights)
    stream_bytes = 2 * ((tb * din_p + tb * F * d_p) * md_b
                        + tb * 4 + (tb + 8 * 128) * 4)
    scratch_bytes = tb * (kp + d_p) * 4
    vmem_limit = int(min(48 << 20, max(16 << 20,
                                       4 * (weight_bytes + stream_bytes + scratch_bytes))))

    flops = 2 * b_pad * (din_p * h0_p + h0_p * d_p            # DenseArch (MXU)
                         + P * d_p                             # pairwise dots (VPU)
                         + (kp + d_p) * o0_p + o0_p)           # OverArch (MXU)
    bytes_accessed = sum(int(a.size) * jnp.dtype(a.dtype).itemsize for a in args)
    bytes_accessed += (ntiles * tb + ntiles * 8 * 128) * 4

    kernel = functools.partial(_dlrm_kernel, b_total=B)
    logits_t, loss_part = pl.pallas_call(
        kernel,
        grid_spec=pltpu.PrefetchScalarGridSpec(
            num_scalar_prefetch=0,
            grid=(ntiles,),
            in_specs=in_specs,
            out_specs=out_specs,
            scratch_shapes=[pltpu.VMEM((tb, kp + d_p), jnp.float32)],
        ),
        out_shape=out_shape,
        compiler_params=pltpu.CompilerParams(
            dimension_semantics=("parallel",),   # batch tiles independent (megacore)
            vmem_limit_bytes=vmem_limit,
        ),
        cost_estimate=pl.CostEstimate(
            flops=int(flops),
            transcendentals=int(2 * b_pad),      # exp + log per logit
            bytes_accessed=int(bytes_accessed),
        ),
    )(*args)

    logits = logits_t.reshape(b_pad)[:B]                      # matches logits.squeeze()
    loss = jnp.sum(loss_part[:, 0, 0]) / B
    return loss, (loss, logits, labels.astype(f32))


# --------------------------- pure-JAX reference -------------------------------


def _reference_forward(dense, sparse_idx, labels, params):
    hi = jax.lax.Precision.HIGHEST
    tables = params["emb_tables"]
    F = sparse_idx.shape[1]
    feat = jnp.arange(F, dtype=sparse_idx.dtype).reshape(1, F, 1)
    pooled = tables[feat, sparse_idx].sum(axis=2)
    h = jax.nn.relu(jnp.dot(dense, params["w0"], precision=hi) + params["b0"])
    d = jax.nn.relu(jnp.dot(h, params["w1"], precision=hi) + params["b1"])
    comb = jnp.concatenate([d[:, None, :], pooled], axis=1)
    z = jnp.einsum("bnd,bmd->bnm", comb, comb, precision=hi)
    N = F + 1
    tri = jnp.stack([z[:, i, j] for i in range(N) for j in range(i + 1, N)], axis=1)
    cat = jnp.concatenate([d, tri], axis=1)
    y = jax.nn.relu(jnp.dot(cat, params["wo0"], precision=hi) + params["bo0"])
    logits = (jnp.dot(y, params["wo1"], precision=hi) + params["bo1"])[:, 0]
    lbl = labels.astype(jnp.float32)
    per = (jnp.maximum(logits, 0.0) - logits * lbl
           + jnp.log1p(jnp.exp(-jnp.abs(logits))))
    return per.mean(), logits


# --------------------------------- main ---------------------------------------


if __name__ == "__main__":
    key = jax.random.PRNGKey(0)

    # Small config (DLRM constraints: dense_arch_layer_sizes[-1] == embedding_dim,
    # over_arch_layer_sizes[-1] == 1).  B is deliberately NOT a multiple of the
    # batch tile so the padding / loss-mask path is exercised.
    B, Din, H0, D, F, E, L, O0 = 200, 16, 32, 16, 4, 64, 3, 32
    Dint = D + (F + 1) * F // 2

    ks = jax.random.split(key, 12)
    params = {
        "emb_tables": jax.random.normal(ks[0], (F, E, D), jnp.float32) * 0.1,
        "w0": jax.random.normal(ks[1], (Din, H0), jnp.float32) * (1.0 / jnp.sqrt(Din)),
        "b0": jax.random.normal(ks[2], (1, H0), jnp.float32) * 0.01,
        "w1": jax.random.normal(ks[3], (H0, D), jnp.float32) * (1.0 / jnp.sqrt(H0)),
        "b1": jax.random.normal(ks[4], (1, D), jnp.float32) * 0.01,
        "wo0": jax.random.normal(ks[5], (Dint, O0), jnp.float32) * (1.0 / jnp.sqrt(Dint)),
        "bo0": jax.random.normal(ks[6], (1, O0), jnp.float32) * 0.01,
        "wo1": jax.random.normal(ks[7], (O0, 1), jnp.float32) * (1.0 / jnp.sqrt(O0)),
        "bo1": jax.random.normal(ks[8], (1, 1), jnp.float32) * 0.01,
    }
    dense_features = jax.random.normal(ks[9], (B, Din), jnp.float32)
    sparse_indices = jax.random.randint(ks[10], (B, F, L), 0, E, jnp.int32)
    labels = jax.random.bernoulli(ks[11], 0.5, (B,)).astype(jnp.float32)

    # f32 operand path (numerically faithful to the PyTorch module), tb=128 so the
    # grid has 2 tiles and the batch-padding mask is exercised.
    loss, (loss_d, logits, labels_out) = dlrm_train_forward(
        dense_features, sparse_indices, labels, params, tb=128,
        matmul_dtype=jnp.float32)
    jax.block_until_ready((loss, logits, labels_out))

    assert loss.shape == ()
    assert logits.shape == (B,)
    assert labels_out.shape == (B,)

    ref_loss, ref_logits = _reference_forward(
        dense_features, sparse_indices, labels, params)
    assert jnp.allclose(logits, ref_logits, atol=5e-2, rtol=5e-2), (
        float(jnp.max(jnp.abs(logits - ref_logits))))
    assert abs(float(loss) - float(ref_loss)) < 2e-2, (float(loss), float(ref_loss))

    # Default path: bf16 matmul operands (f32 accumulate) and tb=256 (single tile).
    loss_bf16, (_, logits_bf16, _) = dlrm_train_forward(
        dense_features, sparse_indices, labels, params)
    jax.block_until_ready(loss_bf16)
    assert logits_bf16.shape == (B,)
    assert bool(jnp.isfinite(loss_bf16))
    assert abs(float(loss_bf16) - float(ref_loss)) < 0.1

    print("KERNEL_OK")
</pallas_src>

<mosaic_0001>
module attributes {stable_mosaic.version = 11 : i64} {
  func.func @_dlrm_kernel(%arg0: i32, %arg1: memref<128x128xf32, #tpu.memory_space<vmem>>, %arg2: memref<128x4x128xf32, #tpu.memory_space<vmem>>, %arg3: memref<1x1x128xf32, #tpu.memory_space<vmem>>, %arg4: memref<128x128xf32, #tpu.memory_space<vmem>>, %arg5: memref<1x128xf32, #tpu.memory_space<vmem>>, %arg6: memref<128x128xf32, #tpu.memory_space<vmem>>, %arg7: memref<1x128xf32, #tpu.memory_space<vmem>>, %arg8: memref<256x128xf32, #tpu.memory_space<vmem>>, %arg9: memref<1x128xf32, #tpu.memory_space<vmem>>, %arg10: memref<1x128xf32, #tpu.memory_space<vmem>>, %arg11: memref<1x1xf32, #tpu.memory_space<vmem>>, %arg12: memref<1x1x128xf32, #tpu.memory_space<vmem>>, %arg13: memref<1x8x128xf32, #tpu.memory_space<vmem>>, %arg14: memref<128x256xf32, #tpu.memory_space<vmem>>) attributes {dimension_semantics = [#tpu.dimension_semantics<parallel>], iteration_bounds = array<i64: 2>, scalar_prefetch = 0 : i64, scratch_operands = 1 : i64, tpu.core_type = #tpu.core_type<tc>, window_params = [{transform_indices = @transform_0, window_bounds = array<i64: 128, 128>}, {transform_indices = @transform_1, window_bounds = array<i64: 128, 4, 128>}, {transform_indices = @transform_2, window_bounds = array<i64: 1, 1, 128>}, {pipeline_mode = #tpu.pipeline_mode<synchronous>, transform_indices = @transform_3, window_bounds = array<i64: 128, 128>}, {pipeline_mode = #tpu.pipeline_mode<synchronous>, transform_indices = @transform_4, window_bounds = array<i64: 1, 128>}, {pipeline_mode = #tpu.pipeline_mode<synchronous>, transform_indices = @transform_5, window_bounds = array<i64: 128, 128>}, {pipeline_mode = #tpu.pipeline_mode<synchronous>, transform_indices = @transform_6, window_bounds = array<i64: 1, 128>}, {pipeline_mode = #tpu.pipeline_mode<synchronous>, transform_indices = @transform_7, window_bounds = array<i64: 256, 128>}, {pipeline_mode = #tpu.pipeline_mode<synchronous>, transform_indices = @transform_8, window_bounds = array<i64: 1, 128>}, {pipeline_mode = #tpu.pipeline_mode<synchronous>, transform_indices = @transform_9, window_bounds = array<i64: 1, 128>}, {pipeline_mode = #tpu.pipeline_mode<synchronous>, transform_indices = @transform_10, window_bounds = array<i64: 1, 1>}, {transform_indices = @transform_11, window_bounds = array<i64: 1, 1, 128>}, {transform_indices = @transform_12, window_bounds = array<i64: 1, 8, 128>}]} {
    %c0 = arith.constant 0 : index
    %c0_0 = arith.constant 0 : index
    %0 = vector.load %arg1[%c0, %c0_0] : memref<128x128xf32, #tpu.memory_space<vmem>>, vector<128x128xf32>
    %c0_1 = arith.constant 0 : index
    %c0_2 = arith.constant 0 : index
    %1 = vector.load %arg4[%c0_1, %c0_2] : memref<128x128xf32, #tpu.memory_space<vmem>>, vector<128x128xf32>
    %cst = arith.constant dense<0.000000e+00> : vector<128x128xf32>
    %2 = tpu.matmul %0, %1, %cst {dimension_numbers = #tpu.dot_dimension_numbers<[1], [0], [0], [1], [0, 0, 1, 1], [], []>} : vector<128x128xf32>, vector<128x128xf32>, vector<128x128xf32> -> vector<128x128xf32>
    %c0_3 = arith.constant 0 : index
    %c0_4 = arith.constant 0 : index
    %3 = vector.load %arg5[%c0_3, %c0_4] : memref<1x128xf32, #tpu.memory_space<vmem>>, vector<1x128xf32>
    %4 = vector.broadcast %3 : vector<1x128xf32> to vector<128x128xf32>
    %5 = arith.addf %2, %4 : vector<128x128xf32>
    %cst_5 = arith.constant 0.000000e+00 : f32
    %6 = vector.broadcast %cst_5 : f32 to vector<128x128xf32>
    %7 = arith.maximumf %5, %6 : vector<128x128xf32>
    %c0_6 = arith.constant 0 : index
    %c0_7 = arith.constant 0 : index
    %8 = vector.load %arg6[%c0_6, %c0_7] : memref<128x128xf32, #tpu.memory_space<vmem>>, vector<128x128xf32>
    %cst_8 = arith.constant dense<0.000000e+00> : vector<128x128xf32>
    %9 = tpu.matmul %7, %8, %cst_8 {dimension_numbers = #tpu.dot_dimension_numbers<[1], [0], [0], [1], [0, 0, 1, 1], [], []>} : vector<128x128xf32>, vector<128x128xf32>, vector<128x128xf32> -> vector<128x128xf32>
    %c0_9 = arith.constant 0 : index
    %c0_10 = arith.constant 0 : index
    %10 = vector.load %arg7[%c0_9, %c0_10] : memref<1x128xf32, #tpu.memory_space<vmem>>, vector<1x128xf32>
    %11 = vector.broadcast %10 : vector<1x128xf32> to vector<128x128xf32>
    %12 = arith.addf %9, %11 : vector<128x128xf32>
    %cst_11 = arith.constant 0.000000e+00 : f32
    %13 = vector.broadcast %cst_11 : f32 to vector<128x128xf32>
    %14 = arith.maximumf %12, %13 : vector<128x128xf32>
    %c0_12 = arith.constant 0 : index
    %c0_13 = arith.constant 0 : index
    %c0_14 = arith.constant 0 : index
    %15 = vector.load %arg2[%c0_12, %c0_13, %c0_14] : memref<128x4x128xf32, #tpu.memory_space<vmem>>, vector<128x1x128xf32>
    %c0_15 = arith.constant 0 : index
    %c1 = arith.constant 1 : index
    %c0_16 = arith.constant 0 : index
    %16 = vector.load %arg2[%c0_15, %c1, %c0_16] : memref<128x4x128xf32, #tpu.memory_space<vmem>>, vector<128x3x128xf32>
    %17 = vector.broadcast %15 : vector<128x1x128xf32> to vector<128x3x128xf32>
    %18 = arith.mulf %17, %16 : vector<128x3x128xf32>
    %cst_17 = arith.constant dense<0.000000e+00> : vector<128x3xf32>
    %19 = vector.multi_reduction <add>, %18, %cst_17 [2] : vector<128x3x128xf32> to vector<128x3xf32>
    %c0_18 = arith.constant 0 : index
    %c0_19 = arith.constant 0 : index
    %20 = vector.load %arg14[%c0_18, %c0_19] : memref<128x256xf32, #tpu.memory_space<vmem>>, vector<128x3xf32>
    tpu.vector_store %arg14[%c0_18, %c0_19], %19 {strides = array<i32>} : memref<128x256xf32, #tpu.memory_space<vmem>>, vector<128x3xf32>,
    %c0_20 = arith.constant 0 : index
    %c1_21 = arith.constant 1 : index
    %c0_22 = arith.constant 0 : index
    %21 = vector.load %arg2[%c0_20, %c1_21, %c0_22] : memref<128x4x128xf32, #tpu.memory_space<vmem>>, vector<128x1x128xf32>
    %c0_23 = arith.constant 0 : index
    %c2 = arith.constant 2 : index
    %c0_24 = arith.constant 0 : index
    %22 = vector.load %arg2[%c0_23, %c2, %c0_24] : memref<128x4x128xf32, #tpu.memory_space<vmem>>, vector<128x2x128xf32>
    %23 = vector.broadcast %21 : vector<128x1x128xf32> to vector<128x2x128xf32>
    %24 = arith.mulf %23, %22 : vector<128x2x128xf32>
    %cst_25 = arith.constant dense<0.000000e+00> : vector<128x2xf32>
    %25 = vector.multi_reduction <add>, %24, %cst_25 [2] : vector<128x2x128xf32> to vector<128x2xf32>
    %c0_26 = arith.constant 0 : index
    %c3 = arith.constant 3 : index
    %26 = vector.load %arg14[%c0_26, %c3] : memref<128x256xf32, #tpu.memory_space<vmem>>, vector<128x2xf32>
    tpu.vector_store %arg14[%c0_26, %c3], %25 {strides = array<i32>} : memref<128x256xf32, #tpu.memory_space<vmem>>, vector<128x2xf32>,
    %c0_27 = arith.constant 0 : index
    %c2_28 = arith.constant 2 : index
    %c0_29 = arith.constant 0 : index
    %27 = vector.load %arg2[%c0_27, %c2_28, %c0_29] : memref<128x4x128xf32, #tpu.memory_space<vmem>>, vector<128x1x128xf32>
    %c0_30 = arith.constant 0 : index
    %c3_31 = arith.constant 3 : index
    %c0_32 = arith.constant 0 : index
    %28 = vector.load %arg2[%c0_30, %c3_31, %c0_32] : memref<128x4x128xf32, #tpu.memory_space<vmem>>, vector<128x1x128xf32>
    %29 = arith.mulf %27, %28 : vector<128x1x128xf32>
    %cst_33 = arith.constant dense<0.000000e+00> : vector<128x1xf32>
    %30 = vector.multi_reduction <add>, %29, %cst_33 [2] : vector<128x1x128xf32> to vector<128x1xf32>
    %c0_34 = arith.constant 0 : index
    %c5 = arith.constant 5 : index
    %31 = vector.load %arg14[%c0_34, %c5] : memref<128x256xf32, #tpu.memory_space<vmem>>, vector<128x1xf32>
    tpu.vector_store %arg14[%c0_34, %c5], %30 {strides = array<i32>} : memref<128x256xf32, #tpu.memory_space<vmem>>, vector<128x1xf32>,
    %32 = vector.shape_cast %14 : vector<128x128xf32> to vector<128x1x128xf32>
    %c0_35 = arith.constant 0 : index
    %c0_36 = arith.constant 0 : index
    %c0_37 = arith.constant 0 : index
    %33 = vector.load %arg2[%c0_35, %c0_36, %c0_37] : memref<128x4x128xf32, #tpu.memory_space<vmem>>, vector<128x4x128xf32>
    %34 = vector.broadcast %32 : vector<128x1x128xf32> to vector<128x4x128xf32>
    %35 = arith.mulf %34, %33 : vector<128x4x128xf32>
    %cst_38 = arith.constant dense<0.000000e+00> : vector<128x4xf32>
    %36 = vector.multi_reduction <add>, %35, %cst_38 [2] : vector<128x4x128xf32> to vector<128x4xf32>
    %c0_39 = arith.constant 0 : index
    %c6 = arith.constant 6 : index
    %37 = vector.load %arg14[%c0_39, %c6] : memref<128x256xf32, #tpu.memory_space<vmem>>, vector<128x4xf32>
    tpu.vector_store %arg14[%c0_39, %c6], %36 {strides = array<i32>} : memref<128x256xf32, #tpu.memory_space<vmem>>, vector<128x4xf32>,
    %cst_40 = arith.constant 0.000000e+00 : f32
    %38 = vector.broadcast %cst_40 : f32 to vector<128x118xf32>
    %c0_41 = arith.constant 0 : index
    %c10 = arith.constant 10 : index
    %39 = vector.load %arg14[%c0_41, %c10] : memref<128x256xf32, #tpu.memory_space<vmem>>, vector<128x118xf32>
    tpu.vector_store %arg14[%c0_41, %c10], %38 {strides = array<i32>} : memref<128x256xf32, #tpu.memory_space<vmem>>, vector<128x118xf32>,
    %c0_42 = arith.constant 0 : index
    %c128 = arith.constant 128 : index
    %40 = vector.load %arg14[%c0_42, %c128] : memref<128x256xf32, #tpu.memory_space<vmem>>, vector<128x128xf32>
    tpu.vector_store %arg14[%c0_42, %c128], %14 {strides = array<i32>} : memref<128x256xf32, #tpu.memory_space<vmem>>, vector<128x128xf32>,
    %c0_43 = arith.constant 0 : index
    %c0_44 = arith.constant 0 : index
    %41 = vector.load %arg14[%c0_43, %c0_44] : memref<128x256xf32, #tpu.memory_space<vmem>>, vector<128x256xf32>
    %c0_45 = arith.constant 0 : index
    %c0_46 = arith.constant 0 : index
    %42 = vector.load %arg8[%c0_45, %c0_46] : memref<256x128xf32, #tpu.memory_space<vmem>>, vector<256x128xf32>
    %cst_47 = arith.constant dense<0.000000e+00> : vector<128x128xf32>
    %43 = tpu.matmul %41, %42, %cst_47 {dimension_numbers = #tpu.dot_dimension_numbers<[1], [0], [0], [1], [0, 0, 1, 1], [], []>} : vector<128x256xf32>, vector<256x128xf32>, vector<128x128xf32> -> vector<128x128xf32>
    %c0_48 = arith.constant 0 : index
    %c0_49 = arith.constant 0 : index
    %44 = vector.load %arg9[%c0_48, %c0_49] : memref<1x128xf32, #tpu.memory_space<vmem>>, vector<1x128xf32>
    %45 = vector.broadcast %44 : vector<1x128xf32> to vector<128x128xf32>
    %46 = arith.addf %43, %45 : vector<128x128xf32>
    %cst_50 = arith.constant 0.000000e+00 : f32
    %47 = vector.broadcast %cst_50 : f32 to vector<128x128xf32>
    %48 = arith.maximumf %46, %47 : vector<128x128xf32>
    %c0_51 = arith.constant 0 : index
    %c0_52 = arith.constant 0 : index
    %49 = vector.load %arg10[%c0_51, %c0_52] : memref<1x128xf32, #tpu.memory_space<vmem>>, vector<1x128xf32>
    %cst_53 = arith.constant dense<0.000000e+00> : vector<1x128xf32>
    %50 = tpu.matmul %49, %48, %cst_53 {dimension_numbers = #tpu.dot_dimension_numbers<[1], [1], [0], [0], [0, 0, 1, 0], [], []>} : vector<1x128xf32>, vector<128x128xf32>, vector<1x128xf32> -> vector<1x128xf32>
    %c0_54 = arith.constant 0 : index
    %c0_55 = arith.constant 0 : index
    %51 = vector.load %arg11[%c0_54, %c0_55] : memref<1x1xf32, #tpu.memory_space<vmem>>, vector<1x1xf32>
    %52 = vector.broadcast %51 : vector<1x1xf32> to vector<1x128xf32>
    %53 = arith.addf %50, %52 : vector<1x128xf32>
    %54 = vector.shape_cast %53 : vector<1x128xf32> to vector<1x1x128xf32>
    %c0_56 = arith.constant 0 : index
    %c0_57 = arith.constant 0 : index
    %c0_58 = arith.constant 0 : index
    %55 = vector.load %arg12[%c0_56, %c0_57, %c0_58] : memref<1x1x128xf32, #tpu.memory_space<vmem>>, vector<1x1x128xf32>
    tpu.vector_store %arg12[%c0_56, %c0_57, %c0_58], %54 {strides = array<i32>} : memref<1x1x128xf32, #tpu.memory_space<vmem>>, vector<1x1x128xf32>,
    %c0_59 = arith.constant 0 : index
    %c0_60 = arith.constant 0 : index
    %c0_61 = arith.constant 0 : index
    %56 = vector.load %arg3[%c0_59, %c0_60, %c0_61] : memref<1x1x128xf32, #tpu.memory_space<vmem>>, vector<1x1x128xf32>
    %57 = vector.shape_cast %56 : vector<1x1x128xf32> to vector<1x128xf32>
    %c128_i32 = arith.constant 128 : i32
    %58 = arith.muli %arg0, %c128_i32 : i32
    %59 = tpu.iota {dimensions = array<i32: 1>} : vector<1x128xi32>
    %60 = vector.broadcast %58 : i32 to vector<1x128xi32>
    %61 = arith.addi %60, %59 : vector<1x128xi32>
    %c200_i32 = arith.constant 200 : i32
    %62 = vector.broadcast %c200_i32 : i32 to vector<1x128xi32>
    %63 = arith.cmpi slt, %61, %62 : vector<1x128xi32>
    %64 = arith.extui %63 : vector<1x128xi1> to vector<1x128xi32>
    %65 = arith.sitofp %64 : vector<1x128xi32> to vector<1x128xf32>
    %cst_62 = arith.constant 0.000000e+00 : f32
    %66 = vector.broadcast %cst_62 : f32 to vector<1x128xf32>
    %67 = arith.maximumf %53, %66 : vector<1x128xf32>
    %68 = arith.mulf %53, %57 : vector<1x128xf32>
    %69 = arith.subf %67, %68 : vector<1x128xf32>
    %70 = math.absf %53 : vector<1x128xf32>
    %cst_63 = arith.constant 0.000000e+00 : f32
    %71 = vector.broadcast %cst_63 : f32 to vector<1x128xf32>
    %72 = arith.subf %71, %70 : vector<1x128xf32>
    %73 = math.exp %72 : vector<1x128xf32>
    %cst_64 = arith.constant 1.000000e+00 : f32
    %74 = vector.broadcast %cst_64 : f32 to vector<1x128xf32>
    %75 = arith.addf %74, %73 : vector<1x128xf32>
    %76 = math.log %75 : vector<1x128xf32>
    %77 = arith.addf %69, %76 : vector<1x128xf32>
    %78 = arith.mulf %77, %65 : vector<1x128xf32>
    %cst_65 = arith.constant dense<0.000000e+00> : vector<1xf32>
    %79 = vector.multi_reduction <add>, %78, %cst_65 [1] : vector<1x128xf32> to vector<1xf32>
    %80 = vector.shape_cast %79 : vector<1xf32> to vector<1x1xf32>
    %81 = vector.shape_cast %80 : vector<1x1xf32> to vector<1x1xf32>
    %82 = vector.broadcast %81 : vector<1x1xf32> to vector<8x128xf32>
    %83 = vector.shape_cast %82 : vector<8x128xf32> to vector<1x8x128xf32>
    %c0_66 = arith.constant 0 : index
    %c0_67 = arith.constant 0 : index
    %c0_68 = arith.constant 0 : index
    %84 = vector.load %arg13[%c0_66, %c0_67, %c0_68] : memref<1x8x128xf32, #tpu.memory_space<vmem>>, vector<1x8x128xf32>
    tpu.vector_store %arg13[%c0_66, %c0_67, %c0_68], %83 {strides = array<i32>} : memref<1x8x128xf32, #tpu.memory_space<vmem>>, vector<1x8x128xf32>,
    return
  }
  func.func @transform_0(%arg0: i32) -> (i32, i32) {
    %c0_i32 = arith.constant 0 : i32
    %c0_i32_0 = arith.constant 0 : i32
    return %arg0, %c0_i32 : i32, i32
  }
  func.func @transform_1(%arg0: i32) -> (i32, i32, i32) {
    %c0_i32 = arith.constant 0 : i32
    %c0_i32_0 = arith.constant 0 : i32
    %c0_i32_1 = arith.constant 0 : i32
    return %arg0, %c0_i32, %c0_i32_0 : i32, i32, i32
  }
  func.func @transform_2(%arg0: i32) -> (i32, i32, i32) {
    %c0_i32 = arith.constant 0 : i32
    %c0_i32_0 = arith.constant 0 : i32
    %c0_i32_1 = arith.constant 0 : i32
    return %arg0, %c0_i32, %c0_i32_0 : i32, i32, i32
  }
  func.func @transform_3(%arg0: i32) -> (i32, i32) {
    %c0_i32 = arith.constant 0 : i32
    %c0_i32_0 = arith.constant 0 : i32
    %c0_i32_1 = arith.constant 0 : i32
    return %c0_i32, %c0_i32_0 : i32, i32
  }
  func.func @transform_4(%arg0: i32) -> (i32, i32) {
    %c0_i32 = arith.constant 0 : i32
    %c0_i32_0 = arith.constant 0 : i32
    %c0_i32_1 = arith.constant 0 : i32
    return %c0_i32, %c0_i32_0 : i32, i32
  }
  func.func @transform_5(%arg0: i32) -> (i32, i32) {
    %c0_i32 = arith.constant 0 : i32
    %c0_i32_0 = arith.constant 0 : i32
    %c0_i32_1 = arith.constant 0 : i32
    return %c0_i32, %c0_i32_0 : i32, i32
  }
  func.func @transform_6(%arg0: i32) -> (i32, i32) {
    %c0_i32 = arith.constant 0 : i32
    %c0_i32_0 = arith.constant 0 : i32
    %c0_i32_1 = arith.constant 0 : i32
    return %c0_i32, %c0_i32_0 : i32, i32
  }
  func.func @transform_7(%arg0: i32) -> (i32, i32) {
    %c0_i32 = arith.constant 0 : i32
    %c0_i32_0 = arith.constant 0 : i32
    %c0_i32_1 = arith.constant 0 : i32
    return %c0_i32, %c0_i32_0 : i32, i32
  }
  func.func @transform_8(%arg0: i32) -> (i32, i32) {
    %c0_i32 = arith.constant 0 : i32
    %c0_i32_0 = arith.constant 0 : i32
    %c0_i32_1 = arith.constant 0 : i32
    return %c0_i32, %c0_i32_0 : i32, i32
  }
  func.func @transform_9(%arg0: i32) -> (i32, i32) {
    %c0_i32 = arith.constant 0 : i32
    %c0_i32_0 = arith.constant 0 : i32
    %c0_i32_1 = arith.constant 0 : i32
    return %c0_i32, %c0_i32_0 : i32, i32
  }
  func.func @transform_10(%arg0: i32) -> (i32, i32) {
    %c0_i32 = arith.constant 0 : i32
    %c0_i32_0 = arith.constant 0 : i32
    %c0_i32_1 = arith.constant 0 : i32
    return %c0_i32, %c0_i32_0 : i32, i32
  }
  func.func @transform_11(%arg0: i32) -> (i32, i32, i32) {
    %c0_i32 = arith.constant 0 : i32
    %c0_i32_0 = arith.constant 0 : i32
    %c0_i32_1 = arith.constant 0 : i32
    return %arg0, %c0_i32, %c0_i32_0 : i32, i32, i32
  }
  func.func @transform_12(%arg0: i32) -> (i32, i32, i32) {
    %c0_i32 = arith.constant 0 : i32
    %c0_i32_0 = arith.constant 0 : i32
    %c0_i32_1 = arith.constant 0 : i32
    return %arg0, %c0_i32, %c0_i32_0 : i32, i32, i32
  }
}

</mosaic_0001>

<llo_original>
// kernel: dlrm_train_forward.1
$region0: #{dlrm_train_forward.1}
  #allocation0 [shape = 'u32[]', space=smem, size = 0x4, offset = 0x4, fixed_abs, tag = 'smem constant byte address 0x4 - core index']
  #allocation1 [shape = 'u32[144,128]{1,0:T(1,128)}', space=vmem, size = 0x12000, scoped, tag = 'internal scratch']
  #allocation2 [shape = 'f32[128,256]{1,0:T(8,128)}', space=vmem, size = 0x20000, scoped, tag = 'scratch operand']
  #allocation3 [shape = 'f32[1,1]{1,0:T(1,128)S(1)}', space=vmem, size = 0x200, scoped, tag = 'scoped memory for dlrm_train_forward.1']
  %s0 = inlined_call_operand.vmem [shape: f32[256,128], index: 0, kind: input, shape index: {}]
  %s1 = inlined_call_operand.vmem [shape: f32[256,4,128], index: 1, kind: input, shape index: {}]
  %s2 = inlined_call_operand.vmem [shape: f32[2,1,128], index: 2, kind: input, shape index: {}]
  %s3 = inlined_call_operand.vmem [shape: f32[128,128], index: 3, kind: input, shape index: {}]
  %s4 = inlined_call_operand.vmem [shape: f32[1,128], index: 4, kind: input, shape index: {}]
  %s5 = inlined_call_operand.vmem [shape: f32[128,128], index: 5, kind: input, shape index: {}]
  %s6 = inlined_call_operand.vmem [shape: f32[1,128], index: 6, kind: input, shape index: {}]
  %s7 = inlined_call_operand.vmem [shape: f32[256,128], index: 7, kind: input, shape index: {}]
  %s8 = inlined_call_operand.vmem [shape: f32[1,128], index: 8, kind: input, shape index: {}]
  %s9 = inlined_call_operand.vmem [shape: f32[1,128], index: 9, kind: input, shape index: {}]
  %s10 = inlined_call_operand.<no memory space> [shape: f32[1,1], index: 10, kind: input, shape index: {}]
  %s11 = inlined_call_operand.hbm [shape: f32[2,1,128], index: 11, kind: output, shape index: {0}]
  %s12 = inlined_call_operand.vmem [shape: f32[2,8,128], index: 12, kind: output, shape index: {1}]
  %13 = xla_tuple %s11, %s12
  %s14 = sld [smem:[#allocation0]]
  $region85: #{dlrm_train_forward.1} parent=0
    _
  %s16 = ssub.s32 1, %s14
  %s17 = scalar_select 0, %s16, %s14
  %v18 = vstv %s10
  %19 = vst [vmem:[#allocation3] sm:$0x1] %v18
  $region1: #{dlrm_train_forward.1} parent=0
    #allocation4 [shape = 'u8[1024]{0}', space=vmem, size = 0x400, scoped, tag = 'output window, operand 0']
    #allocation5 [shape = 's32[2]{0}', space=sflag, size = 0x8, scoped, tag = 'scoped memory for dlrm_train_forward.1']
    %20 = vsyncpa [#allocation5], 0
    %s21 = scalar_lea.sflag [#allocation5], 1
    %22 = vsyncpa %s21, 0
    loop: start=0, step=1, limit=4
    $region2: #{dlrm_train_forward.1} parent=1 // loop_pre_header
      _
    $region3: #{dlrm_train_forward.1} parent=1 // loop_header
      %s24 = sphi 0, %s28
      %p25 = scmp.ge.s32.totalorder %s24, 4
      %s34 = sphi 0, %s36
      %s37 = sphi 0, %s34
      %s38 = sphi 0, %s37
      %s54 = sphi 0, %s38
      %s60 = sphi 0, %s62
      %s63 = sphi 0, %s60
      %s64 = sphi 0, %s63
      %s80 = sphi 0, %s64
      %s86 = sphi 0, %s88
      %s89 = sphi 0, %s86
      %s90 = sphi 0, %s89
      %s106 = sphi 0, %s90
      %s110 = sphi 0, %s110
      %s112 = sphi 0, %s110
      %s113 = sphi 0, %s112
      %s127 = sphi 0, %s113
      %s131 = sphi 0, %s131
      %s133 = sphi 0, %s131
      %s134 = sphi 0, %s133
      %s148 = sphi 0, %s134
      %s152 = sphi 0, %s152
      %s154 = sphi 0, %s152
      %s155 = sphi 0, %s154
      %s169 = sphi 0, %s155
      %s173 = sphi 0, %s173
      %s175 = sphi 0, %s173
      %s176 = sphi 0, %s175
      %s190 = sphi 0, %s176
      %s194 = sphi 0, %s194
      %s196 = sphi 0, %s194
      %s197 = sphi 0, %s196
      %s211 = sphi 0, %s197
      %s215 = sphi 0, %s215
      %s217 = sphi 0, %s215
      %s218 = sphi 0, %s217
      %s232 = sphi 0, %s218
      %s236 = sphi 0, %s236
      %s238 = sphi 0, %s236
      %s239 = sphi 0, %s238
      %s253 = sphi 0, %s239
      %s257 = sphi 0, %s257
      %s259 = sphi 0, %s257
      %s260 = sphi 0, %s259
      %s274 = sphi 0, %s260
      %s280 = sphi 0, %s282
      %s283 = sphi 0, %s280
      %s284 = sphi 0, %s283
      %s300 = sphi 0, %s284
      %s306 = sphi 0, %s308
      %s309 = sphi 0, %s306
      %s310 = sphi 0, %s309
      %s326 = sphi 0, %s310
    $region4: #{dlrm_train_forward.1} parent=1 // loop_header_branch
      %27 = sbr.rel (%p25) target = $region8
    $region5: #{dlrm_train_forward.1} parent=1 // loop_body
      %s29 = ssub.s32 %s24, 1
      %s30 = ssub.s32 %s24, 2
      %s31 = sadd.s32 %s24, 1
      %s32 = ssub.s32 %s24, %s31
      %p33 = scmp.eq.s32.totalorder %s32, 0
      %s35 = sadd.s32 %s34, 1
      %s36 = scalar_select %p33, %s34, %s35
      %p39 = pneg %p33
      %p40 = scmp.eq.s32.totalorder %s24, 1
      %p41 = por %p39, %p40
      %p42 = scmp.ne.s32.totalorder %s34, %s37
      %p43 = scmp.eq.s32.totalorder %s24, 0
      %p44 = por %p42, %p43
      %p45 = scmp.ne.s32.totalorder %s34, %s37
      %p46 = scmp.eq.s32.totalorder %s29, 1
      %p47 = por %p45, %p46
      %p48 = scmp.ne.s32.totalorder %s37, %s38
      %p49 = scmp.eq.s32.totalorder %s29, 0
      %p50 = por %p48, %p49
      %p51 = scmp.ne.s32.totalorder %s37, %s38
      %p52 = scmp.eq.s32.totalorder %s30, 1
      %p53 = por %p51, %p52
      %p55 = scmp.ne.s32.totalorder %s38, %s54
      %p56 = scmp.eq.s32.totalorder %s30, 0
      %p57 = por %p55, %p56
      %s58 = ssub.s32 %s24, %s31
      %p59 = scmp.eq.s32.totalorder %s58, 0
      %s61 = sadd.s32 %s60, 1
      %s62 = scalar_select %p59, %s60, %s61
      %p65 = pneg %p59
      %p66 = scmp.eq.s32.totalorder %s24, 1
      %p67 = por %p65, %p66
      %p68 = scmp.ne.s32.totalorder %s60, %s63
      %p69 = scmp.eq.s32.totalorder %s24, 0
      %p70 = por %p68, %p69
      %p71 = scmp.ne.s32.totalorder %s60, %s63
      %p72 = scmp.eq.s32.totalorder %s29, 1
      %p73 = por %p71, %p72
      %p74 = scmp.ne.s32.totalorder %s63, %s64
      %p75 = scmp.eq.s32.totalorder %s29, 0
      %p76 = por %p74, %p75
      %p77 = scmp.ne.s32.totalorder %s63, %s64
      %p78 = scmp.eq.s32.totalorder %s30, 1
      %p79 = por %p77, %p78
      %p81 = scmp.ne.s32.totalorder %s64, %s80
      %p82 = scmp.eq.s32.totalorder %s30, 0
      %p83 = por %p81, %p82
      %s84 = ssub.s32 %s24, %s31
      %p85 = scmp.eq.s32.totalorder %s84, 0
      %s87 = sadd.s32 %s86, 1
      %s88 = scalar_select %p85, %s86, %s87
      %p91 = pneg %p85
      %p92 = scmp.eq.s32.totalorder %s24, 1
      %p93 = por %p91, %p92
      %p94 = scmp.ne.s32.totalorder %s86, %s89
      %p95 = scmp.eq.s32.totalorder %s24, 0
      %p96 = por %p94, %p95
      %p97 = scmp.ne.s32.totalorder %s86, %s89
      %p98 = scmp.eq.s32.totalorder %s29, 1
      %p99 = por %p97, %p98
      %p100 = scmp.ne.s32.totalorder %s89, %s90
      %p101 = scmp.eq.s32.totalorder %s29, 0
      %p102 = por %p100, %p101
      %p103 = scmp.ne.s32.totalorder %s89, %s90
      %p104 = scmp.eq.s32.totalorder %s30, 1
      %p105 = por %p103, %p104
      %p107 = scmp.ne.s32.totalorder %s90, %s106
      %p108 = scmp.eq.s32.totalorder %s30, 0
      %p109 = por %p107, %p108
      %s111 = sadd.s32 %s110, 1
      %p114 = scmp.eq.s32.totalorder %s24, 1
      %p115 = scmp.ne.s32.totalorder %s110, %s112
      %p116 = scmp.eq.s32.totalorder %s24, 0
      %p117 = por %p115, %p116
      %p118 = scmp.ne.s32.totalorder %s110, %s112
      %p119 = scmp.eq.s32.totalorder %s29, 1
      %p120 = por %p118, %p119
      %p121 = scmp.ne.s32.totalorder %s112, %s113
      %p122 = scmp.eq.s32.totalorder %s29, 0
      %p123 = por %p121, %p122
      %p124 = scmp.ne.s32.totalorder %s112, %s113
      %p125 = scmp.eq.s32.totalorder %s30, 1
      %p126 = por %p124, %p125
      %p128 = scmp.ne.s32.totalorder %s113, %s127
      %p129 = scmp.eq.s32.totalorder %s30, 0
      %p130 = por %p128, %p129
      %s132 = sadd.s32 %s131, 1
      %p135 = scmp.eq.s32.totalorder %s24, 1
      %p136 = scmp.ne.s32.totalorder %s131, %s133
      %p137 = scmp.eq.s32.totalorder %s24, 0
      %p138 = por %p136, %p137
      %p139 = scmp.ne.s32.totalorder %s131, %s133
      %p140 = scmp.eq.s32.totalorder %s29, 1
      %p141 = por %p139, %p140
      %p142 = scmp.ne.s32.totalorder %s133, %s134
      %p143 = scmp.eq.s32.totalorder %s29, 0
      %p144 = por %p142, %p143
      %p145 = scmp.ne.s32.totalorder %s133, %s134
      %p146 = scmp.eq.s32.totalorder %s30, 1
      %p147 = por %p145, %p146
      %p149 = scmp.ne.s32.totalorder %s134, %s148
      %p150 = scmp.eq.s32.totalorder %s30, 0
      %p151 = por %p149, %p150
      %s153 = sadd.s32 %s152, 1
      %p156 = scmp.eq.s32.totalorder %s24, 1
      %p157 = scmp.ne.s32.totalorder %s152, %s154
      %p158 = scmp.eq.s32.totalorder %s24, 0
      %p159 = por %p157, %p158
      %p160 = scmp.ne.s32.totalorder %s152, %s154
      %p161 = scmp.eq.s32.totalorder %s29, 1
      %p162 = por %p160, %p161
      %p163 = scmp.ne.s32.totalorder %s154, %s155
      %p164 = scmp.eq.s32.totalorder %s29, 0
      %p165 = por %p163, %p164
      %p166 = scmp.ne.s32.totalorder %s154, %s155
      %p167 = scmp.eq.s32.totalorder %s30, 1
      %p168 = por %p166, %p167
      %p170 = scmp.ne.s32.totalorder %s155, %s169
      %p171 = scmp.eq.s32.totalorder %s30, 0
      %p172 = por %p170, %p171
      %s174 = sadd.s32 %s173, 1
      %p177 = scmp.eq.s32.totalorder %s24, 1
      %p178 = scmp.ne.s32.totalorder %s173, %s175
      %p179 = scmp.eq.s32.totalorder %s24, 0
      %p180 = por %p178, %p179
      %p181 = scmp.ne.s32.totalorder %s173, %s175
      %p182 = scmp.eq.s32.totalorder %s29, 1
      %p183 = por %p181, %p182
      %p184 = scmp.ne.s32.totalorder %s175, %s176
      %p185 = scmp.eq.s32.totalorder %s29, 0
      %p186 = por %p184, %p185
      %p187 = scmp.ne.s32.totalorder %s175, %s176
      %p188 = scmp.eq.s32.totalorder %s30, 1
      %p189 = por %p187, %p188
      %p191 = scmp.ne.s32.totalorder %s176, %s190
      %p192 = scmp.eq.s32.totalorder %s30, 0
      %p193 = por %p191, %p192
      %s195 = sadd.s32 %s194, 1
      %p198 = scmp.eq.s32.totalorder %s24, 1
      %p199 = scmp.ne.s32.totalorder %s194, %s196
      %p200 = scmp.eq.s32.totalorder %s24, 0
      %p201 = por %p199, %p200
      %p202 = scmp.ne.s32.totalorder %s194, %s196
      %p203 = scmp.eq.s32.totalorder %s29, 1
      %p204 = por %p202, %p203
      %p205 = scmp.ne.s32.totalorder %s196, %s197
      %p206 = scmp.eq.s32.totalorder %s29, 0
      %p207 = por %p205, %p206
      %p208 = scmp.ne.s32.totalorder %s196, %s197
      %p209 = scmp.eq.s32.totalorder %s30, 1
      %p210 = por %p208, %p209
      %p212 = scmp.ne.s32.totalorder %s197, %s211
      %p213 = scmp.eq.s32.totalorder %s30, 0
      %p214 = por %p212, %p213
      %s216 = sadd.s32 %s215, 1
      %p219 = scmp.eq.s32.totalorder %s24, 1
      %p220 = scmp.ne.s32.totalorder %s215, %s217
      %p221 = scmp.eq.s32.totalorder %s24, 0
      %p222 = por %p220, %p221
      %p223 = scmp.ne.s32.totalorder %s215, %s217
      %p224 = scmp.eq.s32.totalorder %s29, 1
      %p225 = por %p223, %p224
      %p226 = scmp.ne.s32.totalorder %s217, %s218
      %p227 = scmp.eq.s32.totalorder %s29, 0
      %p228 = por %p226, %p227
      %p229 = scmp.ne.s32.totalorder %s217, %s218
      %p230 = scmp.eq.s32.totalorder %s30, 1
      %p231 = por %p229, %p230
      %p233 = scmp.ne.s32.totalorder %s218, %s232
      %p234 = scmp.eq.s32.totalorder %s30, 0
      %p235 = por %p233, %p234
      %s237 = sadd.s32 %s236, 1
      %p240 = scmp.eq.s32.totalorder %s24, 1
      %p241 = scmp.ne.s32.totalorder %s236, %s238
      %p242 = scmp.eq.s32.totalorder %s24, 0
      %p243 = por %p241, %p242
      %p244 = scmp.ne.s32.totalorder %s236, %s238
      %p245 = scmp.eq.s32.totalorder %s29, 1
      %p246 = por %p244, %p245
      %p247 = scmp.ne.s32.totalorder %s238, %s239
      %p248 = scmp.eq.s32.totalorder %s29, 0
      %p249 = por %p247, %p248
      %p250 = scmp.ne.s32.totalorder %s238, %s239
      %p251 = scmp.eq.s32.totalorder %s30, 1
      %p252 = por %p250, %p251
      %p254 = scmp.ne.s32.totalorder %s239, %s253
      %p255 = scmp.eq.s32.totalorder %s30, 0
      %p256 = por %p254, %p255
      %s258 = sadd.s32 %s257, 1
      %p261 = scmp.eq.s32.totalorder %s24, 1
      %p262 = scmp.ne.s32.totalorder %s257, %s259
      %p263 = scmp.eq.s32.totalorder %s24, 0
      %p264 = por %p262, %p263
      %p265 = scmp.ne.s32.totalorder %s257, %s259
      %p266 = scmp.eq.s32.totalorder %s29, 1
      %p267 = por %p265, %p266
      %p268 = scmp.ne.s32.totalorder %s259, %s260
      %p269 = scmp.eq.s32.totalorder %s29, 0
      %p270 = por %p268, %p269
      %p271 = scmp.ne.s32.totalorder %s259, %s260
      %p272 = scmp.eq.s32.totalorder %s30, 1
      %p273 = por %p271, %p272
      %p275 = scmp.ne.s32.totalorder %s260, %s274
      %p276 = scmp.eq.s32.totalorder %s30, 0
      %p277 = por %p275, %p276
      %s278 = ssub.s32 %s24, %s31
      %p279 = scmp.eq.s32.totalorder %s278, 0
      %s281 = sadd.s32 %s280, 1
      %s282 = scalar_select %p279, %s280, %s281
      %p285 = pneg %p279
      %p286 = scmp.eq.s32.totalorder %s24, 1
      %p287 = por %p285, %p286
      %p288 = scmp.ne.s32.totalorder %s280, %s283
      %p289 = scmp.eq.s32.totalorder %s24, 0
      %p290 = por %p288, %p289
      %p291 = scmp.ne.s32.totalorder %s280, %s283
      %p292 = scmp.eq.s32.totalorder %s29, 1
      %p293 = por %p291, %p292
      %p294 = scmp.ne.s32.totalorder %s283, %s284
      %p295 = scmp.eq.s32.totalorder %s29, 0
      %p296 = por %p294, %p295
      %p297 = scmp.ne.s32.totalorder %s283, %s284
      %p298 = scmp.eq.s32.totalorder %s30, 1
      %p299 = por %p297, %p298
      %p301 = scmp.ne.s32.totalorder %s284, %s300
      %p302 = scmp.eq.s32.totalorder %s30, 0
      %p303 = por %p301, %p302
      %s304 = ssub.s32 %s24, %s31
      %p305 = scmp.eq.s32.totalorder %s304, 0
      %s307 = sadd.s32 %s306, 1
      %s308 = scalar_select %p305, %s306, %s307
      %p311 = pneg %p305
      %p312 = scmp.eq.s32.totalorder %s24, 1
      %p313 = por %p311, %p312
      %p314 = scmp.ne.s32.totalorder %s306, %s309
      %p315 = scmp.eq.s32.totalorder %s24, 0
      %p316 = por %p314, %p315
      %p317 = scmp.ne.s32.totalorder %s306, %s309
      %p318 = scmp.eq.s32.totalorder %s29, 1
      %p319 = por %p317, %p318
      %p320 = scmp.ne.s32.totalorder %s309, %s310
      %p321 = scmp.eq.s32.totalorder %s29, 0
      %p322 = por %p320, %p321
      %p323 = scmp.ne.s32.totalorder %s309, %s310
      %p324 = scmp.eq.s32.totalorder %s30, 1
      %p325 = por %p323, %p324
      %p327 = scmp.ne.s32.totalorder %s310, %s326
      %p328 = scmp.eq.s32.totalorder %s30, 0
      %p329 = por %p327, %p328
      %p330 = scmp.le.s32.totalorder 1, %s24
      %p331 = scmp.lt.s32.totalorder %s24, 3
      %p332 = pnand %p330, %p331
      %p333 = pneg %p332
      // Predicated region
      $region9: #{dlrm_train_forward.1} parent=5 // pred_check
        _
      $region10: #{dlrm_train_forward.1} parent=5 // pred_check_branch
        %335 = sbr.rel (%p332) target = $region12
      $region11: #{dlrm_train_forward.1} parent=5 // pred_region
        %s336 = ssub.s32 %s24, 1
        // Predicated region
        $region13: #{dlrm_train_forward.1} parent=11 // pred_check
          %p337 = pneg %p123
        $region14: #{dlrm_train_forward.1} parent=11 // pred_check_branch
          %339 = sbr.rel (%p337) target = $region16
        $region15: #{dlrm_train_forward.1} parent=11 // pred_region
          _
        $region16: #{dlrm_train_forward.1} parent=11 // pred_fallthru
          _
        // Predicated region
        $region17: #{dlrm_train_forward.1} parent=11 // pred_check
          %p340 = pneg %p144
        $region18: #{dlrm_train_forward.1} parent=11 // pred_check_branch
          %342 = sbr.rel (%p340) target = $region20
        $region19: #{dlrm_train_forward.1} parent=11 // pred_region
          _
        $region20: #{dlrm_train_forward.1} parent=11 // pred_fallthru
          _
        // Predicated region
        $region21: #{dlrm_train_forward.1} parent=11 // pred_check
          %p343 = pneg %p165
        $region22: #{dlrm_train_forward.1} parent=11 // pred_check_branch
          %345 = sbr.rel (%p343) target = $region24
        $region23: #{dlrm_train_forward.1} parent=11 // pred_region
          _
        $region24: #{dlrm_train_forward.1} parent=11 // pred_fallthru
          _
        // Predicated region
        $region25: #{dlrm_train_forward.1} parent=11 // pred_check
          %p346 = pneg %p186
        $region26: #{dlrm_train_forward.1} parent=11 // pred_check_branch
          %348 = sbr.rel (%p346) target = $region28
        $region27: #{dlrm_train_forward.1} parent=11 // pred_region
          _
        $region28: #{dlrm_train_forward.1} parent=11 // pred_fallthru
          _
        // Predicated region
        $region29: #{dlrm_train_forward.1} parent=11 // pred_check
          %p349 = pneg %p207
        $region30: #{dlrm_train_forward.1} parent=11 // pred_check_branch
          %351 = sbr.rel (%p349) target = $region32
        $region31: #{dlrm_train_forward.1} parent=11 // pred_region
          _
        $region32: #{dlrm_train_forward.1} parent=11 // pred_fallthru
          _
        // Predicated region
        $region33: #{dlrm_train_forward.1} parent=11 // pred_check
          %p352 = pneg %p228
        $region34: #{dlrm_train_forward.1} parent=11 // pred_check_branch
          %354 = sbr.rel (%p352) target = $region36
        $region35: #{dlrm_train_forward.1} parent=11 // pred_region
          _
        $region36: #{dlrm_train_forward.1} parent=11 // pred_fallthru
          _
        // Predicated region
        $region37: #{dlrm_train_forward.1} parent=11 // pred_check
          %p355 = pneg %p249
        $region38: #{dlrm_train_forward.1} parent=11 // pred_check_branch
          %357 = sbr.rel (%p355) target = $region40
        $region39: #{dlrm_train_forward.1} parent=11 // pred_region
          _
        $region40: #{dlrm_train_forward.1} parent=11 // pred_fallthru
          _
        // Predicated region
        $region41: #{dlrm_train_forward.1} parent=11 // pred_check
          %p358 = pneg %p270
        $region42: #{dlrm_train_forward.1} parent=11 // pred_check_branch
          %360 = sbr.rel (%p358) target = $region44
        $region43: #{dlrm_train_forward.1} parent=11 // pred_region
          _
        $region44: #{dlrm_train_forward.1} parent=11 // pred_fallthru
          _
      $region12: #{dlrm_train_forward.1} parent=5 // pred_fallthru
        _
      %p361 = scmp.lt.s32.totalorder %s24, 2
      // Predicated region
      $region45: #{dlrm_train_forward.1} parent=5 // pred_check
        %p362 = pneg %p361
      $region46: #{dlrm_train_forward.1} parent=5 // pred_check_branch
        %364 = sbr.rel (%p362) target = $region48
      $region47: #{dlrm_train_forward.1} parent=5 // pred_region
        // Predicated region
        $region49: #{dlrm_train_forward.1} parent=47 // pred_check
          %p365 = pneg %p44
        $region50: #{dlrm_train_forward.1} parent=47 // pred_check_branch
          %367 = sbr.rel (%p365) target = $region52
        $region51: #{dlrm_train_forward.1} parent=47 // pred_region
          %s368 = smul.u32 16, %s24
          %p369 = scmp.lt.s32.totalorder %s368, 31
          %s370 = scalar_select %p369, %s368, 31
          %s371 = smul.addr %s370, 8
          %s372 = scalar_lea.vmem %s0, %s371
          %s373 = smul.u32 16, %s24
        $region52: #{dlrm_train_forward.1} parent=47 // pred_fallthru
          _
        // Predicated region
        $region53: #{dlrm_train_forward.1} parent=47 // pred_check
          %p374 = pneg %p70
        $region54: #{dlrm_train_forward.1} parent=47 // pred_check_branch
          %376 = sbr.rel (%p374) target = $region56
        $region55: #{dlrm_train_forward.1} parent=47 // pred_region
          %s377 = smul.u32 128, %s24
          %p378 = scmp.lt.s32.totalorder %s377, 255
          %s379 = scalar_select %p378, %s377, 255
          %s380 = smul.addr %s379, 4
          %s381 = scalar_lea.vmem %s1, %s380
          %s382 = smul.u32 128, %s24
        $region56: #{dlrm_train_forward.1} parent=47 // pred_fallthru
          _
        // Predicated region
        $region57: #{dlrm_train_forward.1} parent=47 // pred_check
          %p383 = pneg %p96
        $region58: #{dlrm_train_forward.1} parent=47 // pred_check_branch
          %385 = sbr.rel (%p383) target = $region60
        $region59: #{dlrm_train_forward.1} parent=47 // pred_region
          %p386 = scmp.lt.s32.totalorder %s24, 1
          %s387 = scalar_select %p386, %s24, 1
          %s388 = scalar_lea.vmem %s2, %s387
        $region60: #{dlrm_train_forward.1} parent=47 // pred_fallthru
          _
      $region48: #{dlrm_train_forward.1} parent=5 // pred_fallthru
        _
      %p389 = scmp.le.s32.totalorder 1, %s24
      %p390 = scmp.lt.s32.totalorder %s24, 3
      %p391 = pnand %p389, %p390
      %p392 = pneg %p391
      // Predicated region
      $region61: #{dlrm_train_forward.1} parent=5 // pred_check
        _
      $region62: #{dlrm_train_forward.1} parent=5 // pred_check_branch
        %394 = sbr.rel (%p391) target = $region64
      $region63: #{dlrm_train_forward.1} parent=5 // pred_region
        %s395 = ssub.s32 %s24, 1
        %s396 = smul.u32 16, %s29
        %p397 = scmp.lt.s32.totalorder %s396, 31
        %s398 = scalar_select %p397, %s396, 31
        %s399 = smul.addr %s398, 8
        %s400 = scalar_lea.vmem %s0, %s399
        %p401 = pneg %p50
        %p402 = pneg %p47
        %s403 = smul.u32 128, %s29
        %p404 = scmp.lt.s32.totalorder %s403, 255
        %s405 = scalar_select %p404, %s403, 255
        %s406 = smul.addr %s405, 4
        %s407 = scalar_lea.vmem %s1, %s406
        %p408 = pneg %p76
        %p409 = pneg %p73
        %p410 = scmp.lt.s32.totalorder %s29, 1
        %s411 = scalar_select %p410, %s29, 1
        %s412 = scalar_lea.vmem %s2, %s411
        %p413 = pneg %p102
        %p414 = pneg %p99
        %p415 = pneg %p123
        %p416 = pneg %p120
        %p417 = pneg %p144
        %p418 = pneg %p141
        %p419 = pneg %p165
        %p420 = pneg %p162
        %p421 = pneg %p186
        %p422 = pneg %p183
        %p423 = pneg %p207
        %p424 = pneg %p204
        %p425 = pneg %p228
        %p426 = pneg %p225
        %p427 = pneg %p249
        %p428 = pneg %p246
        %p429 = pneg %p270
        %p430 = pneg %p267
        %p431 = pneg %p296
        %p432 = pneg %p293
        %s433 = sand.u32 %s283, 1
        %s434 = scalar_lea.sflag [#allocation5], %s433
        %s435 = sand.u32 %s283, 1
        %s436 = scalar_lea.vmem [#allocation4], %s435
        %p437 = pneg %p322
        %p438 = pneg %p319
        %p439 = scmp.lt.s32.totalorder %s29, 1
        %s440 = scalar_select %p439, %s29, 1
        %s441 = smul.addr %s440, 8
        %s442 = scalar_lea.vmem %s12, %s441
        %s443 = smul.u32 16, %s29
        %p444 = scmp.lt.s32.totalorder %s443, 31
        %s445 = scalar_select %p444, %s443, 31
        %s446 = smul.addr %s445, 8
        %s447 = scalar_lea.vmem %s0, %s446
        %s448 = smul.u32 16, %s29
        %s449 = smul.u32 128, %s29
        %p450 = scmp.lt.s32.totalorder %s449, 255
        %s451 = scalar_select %p450, %s449, 255
        %s452 = smul.addr %s451, 4
        %s453 = scalar_lea.vmem %s1, %s452
        %s454 = smul.u32 128, %s29
        %p455 = scmp.lt.s32.totalorder %s29, 1
        %s456 = scalar_select %p455, %s29, 1
        %s457 = scalar_lea.vmem %s2, %s456
        %p458 = scmp.lt.s32.totalorder %s29, 1
        %s459 = scalar_select %p458, %s29, 1
        %s460 = smul.addr %s459, 8
        %s461 = scalar_lea.vmem %s12, %s460
        %v462 = vld [vmem:[%s447] sm:$0xff]
        %v463 = vld [vmem:[%s447 + $0x8] sm:$0xff]
        %v464 = vld [vmem:[%s447 + $0x10] sm:$0xff]
        %v465 = vld [vmem:[%s447 + $0x18] sm:$0xff]
        %v466 = vld [vmem:[%s447 + $0x20] sm:$0xff]
        %v467 = vld [vmem:[%s447 + $0x28] sm:$0xff]
        %v468 = vld [vmem:[%s447 + $0x30] sm:$0xff]
        %v469 = vld [vmem:[%s447 + $0x38] sm:$0xff]
        %v470 = vld [vmem:[%s447 + $0x40] sm:$0xff]
        %v471 = vld [vmem:[%s447 + $0x48] sm:$0xff]
        %v472 = vld [vmem:[%s447 + $0x50] sm:$0xff]
        %v473 = vld [vmem:[%s447 + $0x58] sm:$0xff]
        %v474 = vld [vmem:[%s447 + $0x60] sm:$0xff]
        %v475 = vld [vmem:[%s447 + $0x68] sm:$0xff]
        %v476 = vld [vmem:[%s447 + $0x70] sm:$0xff]
        %v477 = vld [vmem:[%s447 + $0x78] sm:$0xff]
        %v478 = vld [vmem:[%s3] sm:$0xff]
        %v479 = vld [vmem:[%s3 + $0x8] sm:$0xff]
        %v480 = vld [vmem:[%s3 + $0x10] sm:$0xff]
        %v481 = vld [vmem:[%s3 + $0x18] sm:$0xff]
        %v482 = vld [vmem:[%s3 + $0x20] sm:$0xff]
        %v483 = vld [vmem:[%s3 + $0x28] sm:$0xff]
        %v484 = vld [vmem:[%s3 + $0x30] sm:$0xff]
        %v485 = vld [vmem:[%s3 + $0x38] sm:$0xff]
        %v486 = vld [vmem:[%s3 + $0x40] sm:$0xff]
        %v487 = vld [vmem:[%s3 + $0x48] sm:$0xff]
        %v488 = vld [vmem:[%s3 + $0x50] sm:$0xff]
        %v489 = vld [vmem:[%s3 + $0x58] sm:$0xff]
        %v490 = vld [vmem:[%s3 + $0x60] sm:$0xff]
        %v491 = vld [vmem:[%s3 + $0x68] sm:$0xff]
        %v492 = vld [vmem:[%s3 + $0x70] sm:$0xff]
        %v493 = vld [vmem:[%s3 + $0x78] sm:$0xff]
        %v494 = vld [vmem:[%s4] sm:$0x1]
        %v496 = vlaneseq
        %v497 = vshrl.u32 %v496, 7
        %v498 = vsub.s32 0, %v497
        %v499 = vrot.slane %v494, %v498
        %501 = vmatprep.subr.mxu0 0.0
        %502 = vmatpush1.msra.mxu0 %v493
        %503 = vmatprep.subr.mxu0 0.0
        %504 = vmatpush1.msra.mxu0 %v492
        %505 = vmatprep.subr.mxu0 0.0
        %506 = vmatpush1.msra.mxu0 %v491
        %507 = vmatprep.subr.mxu0 0.0
        %508 = vmatpush1.msra.mxu0 %v490
        %509 = vmatprep.subr.mxu0 0.0
        %510 = vmatpush1.msra.mxu0 %v489
        %511 = vmatprep.subr.mxu0 0.0
        %512 = vmatpush1.msra.mxu0 %v488
        %513 = vmatprep.subr.mxu0 0.0
        %514 = vmatpush1.msra.mxu0 %v487
        %515 = vmatprep.subr.mxu0 0.0
        %516 = vmatpush1.msra.mxu0 %v486
        %517 = vmatprep.subr.mxu0 0.0
        %518 = vmatpush1.msra.mxu0 %v485
        %519 = vmatprep.subr.mxu0 0.0
        %520 = vmatpush1.msra.mxu0 %v484
        %521 = vmatprep.subr.mxu0 0.0
        %522 = vmatpush1.msra.mxu0 %v483
        %523 = vmatprep.subr.mxu0 0.0
        %524 = vmatpush1.msra.mxu0 %v482
        %525 = vmatprep.subr.mxu0 0.0
        %526 = vmatpush1.msra.mxu0 %v481
        %527 = vmatprep.subr.mxu0 0.0
        %528 = vmatpush1.msra.mxu0 %v480
        %529 = vmatprep.subr.mxu0 0.0
        %530 = vmatpush1.msra.mxu0 %v479
        %531 = vmatprep.subr.mxu0 0.0
        %532 = vmatpush1.msra.mxu0 %v478
        %533 = vmatprep.subr.mxu0 0.0
        %534 = vmatpush2.msra.mxu0 0.0
        %535 = vmatprep.subr.mxu0 0.0
        %536 = vmatpush2.msra.mxu0 0.0
        %537 = vmatprep.subr.mxu0 0.0
        %538 = vmatpush2.msra.mxu0 0.0
        %539 = vmatprep.subr.mxu0 0.0
        %540 = vmatpush2.msra.mxu0 0.0
        %541 = vmatprep.subr.mxu0 0.0
        %542 = vmatpush2.msra.mxu0 0.0
        %543 = vmatprep.subr.mxu0 0.0
        %544 = vmatpush2.msra.mxu0 0.0
        %545 = vmatprep.subr.mxu0 0.0
        %546 = vmatpush2.msra.mxu0 0.0
        %547 = vmatprep.subr.mxu0 0.0
        %548 = vmatpush2.msra.mxu0 0.0
        %549 = vmatprep.subr.mxu0 0.0
        %550 = vmatpush2.msra.mxu0 0.0
        %551 = vmatprep.subr.mxu0 0.0
        %552 = vmatpush2.msra.mxu0 0.0
        %553 = vmatprep.subr.mxu0 0.0
        %554 = vmatpush2.msra.mxu0 0.0
        %555 = vmatprep.subr.mxu0 0.0
        %556 = vmatpush2.msra.mxu0 0.0
        %557 = vmatprep.subr.mxu0 0.0
        %558 = vmatpush2.msra.mxu0 0.0
        %559 = vmatprep.subr.mxu0 0.0
        %560 = vmatpush2.msra.mxu0 0.0
        %561 = vmatprep.subr.mxu0 0.0
        %562 = vmatpush2.msra.mxu0 0.0
        %563 = vmatprep.subr.mxu0 0.0
        %564 = vmatpush2.msra.mxu0 0.0
        %565 = vmatprep.mubr.f32.mxu0 0.0
        %566 = vmatmul.mubr.f32.gmra.mxu0 %v462
        %v567 = vpop.f32.mrf.mxu0
        %v568 = vadd.f32 %v499, %v567
        %v569 = vpop.f32.mrf.mxu0
        %570 = vmatprep.mubr.f32.mxu0 0.0
        %571 = vmatmul.mubr.f32.gmra.mxu0 %v463
        %v572 = vpop.f32.mrf.mxu0
        %v573 = vadd.f32 %v499, %v572
        %v574 = vpop.f32.mrf.mxu0
        %575 = vmatprep.mubr.f32.mxu0 0.0
        %576 = vmatmul.mubr.f32.gmra.mxu0 %v464
        %v577 = vpop.f32.mrf.mxu0
        %v578 = vadd.f32 %v499, %v577
        %v579 = vpop.f32.mrf.mxu0
        %580 = vmatprep.mubr.f32.mxu0 0.0
        %581 = vmatmul.mubr.f32.gmra.mxu0 %v465
        %v582 = vpop.f32.mrf.mxu0
        %v583 = vadd.f32 %v499, %v582
        %v584 = vpop.f32.mrf.mxu0
        %585 = vmatprep.mubr.f32.mxu0 0.0
        %586 = vmatmul.mubr.f32.gmra.mxu0 %v466
        %v587 = vpop.f32.mrf.mxu0
        %v588 = vadd.f32 %v499, %v587
        %v589 = vpop.f32.mrf.mxu0
        %590 = vmatprep.mubr.f32.mxu0 0.0
        %591 = vmatmul.mubr.f32.gmra.mxu0 %v467
        %v592 = vpop.f32.mrf.mxu0
        %v593 = vadd.f32 %v499, %v592
        %v594 = vpop.f32.mrf.mxu0
        %595 = vmatprep.mubr.f32.mxu0 0.0
        %596 = vmatmul.mubr.f32.gmra.mxu0 %v468
        %v597 = vpop.f32.mrf.mxu0
        %v598 = vadd.f32 %v499, %v597
        %v599 = vpop.f32.mrf.mxu0
        %600 = vmatprep.mubr.f32.mxu0 0.0
        %601 = vmatmul.mubr.f32.gmra.mxu0 %v469
        %v602 = vpop.f32.mrf.mxu0
        %v603 = vadd.f32 %v499, %v602
        %v604 = vpop.f32.mrf.mxu0
        %605 = vmatprep.mubr.f32.mxu0 0.0
        %606 = vmatmul.mubr.f32.gmra.mxu0 %v470
        %v607 = vpop.f32.mrf.mxu0
        %v608 = vadd.f32 %v499, %v607
        %v609 = vpop.f32.mrf.mxu0
        %610 = vmatprep.mubr.f32.mxu0 0.0
        %611 = vmatmul.mubr.f32.gmra.mxu0 %v471
        %v612 = vpop.f32.mrf.mxu0
        %v613 = vadd.f32 %v499, %v612
        %v614 = vpop.f32.mrf.mxu0
        %615 = vmatprep.mubr.f32.mxu0 0.0
        %616 = vmatmul.mubr.f32.gmra.mxu0 %v472
        %v617 = vpop.f32.mrf.mxu0
        %v618 = vadd.f32 %v499, %v617
        %v619 = vpop.f32.mrf.mxu0
        %620 = vmatprep.mubr.f32.mxu0 0.0
        %621 = vmatmul.mubr.f32.gmra.mxu0 %v473
        %v622 = vpop.f32.mrf.mxu0
        %v623 = vadd.f32 %v499, %v622
        %v624 = vpop.f32.mrf.mxu0
        %625 = vmatprep.mubr.f32.mxu0 0.0
        %626 = vmatmul.mubr.f32.gmra.mxu0 %v474
        %v627 = vpop.f32.mrf.mxu0
        %v628 = vadd.f32 %v499, %v627
        %v629 = vpop.f32.mrf.mxu0
        %630 = vmatprep.mubr.f32.mxu0 0.0
        %631 = vmatmul.mubr.f32.gmra.mxu0 %v475
        %v632 = vpop.f32.mrf.mxu0
        %v633 = vadd.f32 %v499, %v632
        %v634 = vpop.f32.mrf.mxu0
        %635 = vmatprep.mubr.f32.mxu0 0.0
        %636 = vmatmul.mubr.f32.gmra.mxu0 %v476
        %v637 = vpop.f32.mrf.mxu0
        %v638 = vadd.f32 %v499, %v637
        %v639 = vpop.f32.mrf.mxu0
        %640 = vmatprep.mubr.f32.mxu0 0.0
        %641 = vmatmul.mubr.f32.gmra.mxu0 %v477
        %v642 = vpop.f32.mrf.mxu0
        %v643 = vadd.f32 %v499, %v642
        %v644 = vpop.f32.mrf.mxu0
        %645 = vdwg.mxu0
        %v646 = vmax.f32 %v568, 0.0
        %v647 = vmax.f32 %v573, 0.0
        %v648 = vmax.f32 %v578, 0.0
        %v649 = vmax.f32 %v583, 0.0
        %v650 = vmax.f32 %v588, 0.0
        %v651 = vmax.f32 %v593, 0.0
        %v652 = vmax.f32 %v598, 0.0
        %v653 = vmax.f32 %v603, 0.0
        %v654 = vmax.f32 %v608, 0.0
        %v655 = vmax.f32 %v613, 0.0
        %v656 = vmax.f32 %v618, 0.0
        %v657 = vmax.f32 %v623, 0.0
        %v658 = vmax.f32 %v628, 0.0
        %v659 = vmax.f32 %v633, 0.0
        %v660 = vmax.f32 %v638, 0.0
        %v661 = vmax.f32 %v643, 0.0
        %v662 = vld [vmem:[%s5] sm:$0xff]
        %v663 = vld [vmem:[%s5 + $0x8] sm:$0xff]
        %v664 = vld [vmem:[%s5 + $0x10] sm:$0xff]
        %v665 = vld [vmem:[%s5 + $0x18] sm:$0xff]
        %v666 = vld [vmem:[%s5 + $0x20] sm:$0xff]
        %v667 = vld [vmem:[%s5 + $0x28] sm:$0xff]
        %v668 = vld [vmem:[%s5 + $0x30] sm:$0xff]
        %v669 = vld [vmem:[%s5 + $0x38] sm:$0xff]
        %v670 = vld [vmem:[%s5 + $0x40] sm:$0xff]
        %v671 = vld [vmem:[%s5 + $0x48] sm:$0xff]
        %v672 = vld [vmem:[%s5 + $0x50] sm:$0xff]
        %v673 = vld [vmem:[%s5 + $0x58] sm:$0xff]
        %v674 = vld [vmem:[%s5 + $0x60] sm:$0xff]
        %v675 = vld [vmem:[%s5 + $0x68] sm:$0xff]
        %v676 = vld [vmem:[%s5 + $0x70] sm:$0xff]
        %v677 = vld [vmem:[%s5 + $0x78] sm:$0xff]
        %v678 = vld [vmem:[%s6] sm:$0x1]
        %v680 = vlaneseq
        %v681 = vshrl.u32 %v680, 7
        %v682 = vsub.s32 0, %v681
        %v683 = vrot.slane %v678, %v682
        %685 = vmatprep.subr.mxu0 0.0
        %686 = vmatpush1.msra.mxu0 %v677
        %687 = vmatprep.subr.mxu0 0.0
        %688 = vmatpush1.msra.mxu0 %v676
        %689 = vmatprep.subr.mxu0 0.0
        %690 = vmatpush1.msra.mxu0 %v675
        %691 = vmatprep.subr.mxu0 0.0
        %692 = vmatpush1.msra.mxu0 %v674
        %693 = vmatprep.subr.mxu0 0.0
        %694 = vmatpush1.msra.mxu0 %v673
        %695 = vmatprep.subr.mxu0 0.0
        %696 = vmatpush1.msra.mxu0 %v672
        %697 = vmatprep.subr.mxu0 0.0
        %698 = vmatpush1.msra.mxu0 %v671
        %699 = vmatprep.subr.mxu0 0.0
        %700 = vmatpush1.msra.mxu0 %v670
        %701 = vmatprep.subr.mxu0 0.0
        %702 = vmatpush1.msra.mxu0 %v669
        %703 = vmatprep.subr.mxu0 0.0
        %704 = vmatpush1.msra.mxu0 %v668
        %705 = vmatprep.subr.mxu0 0.0
        %706 = vmatpush1.msra.mxu0 %v667
        %707 = vmatprep.subr.mxu0 0.0
        %708 = vmatpush1.msra.mxu0 %v666
        %709 = vmatprep.subr.mxu0 0.0
        %710 = vmatpush1.msra.mxu0 %v665
        %711 = vmatprep.subr.mxu0 0.0
        %712 = vmatpush1.msra.mxu0 %v664
        %713 = vmatprep.subr.mxu0 0.0
        %714 = vmatpush1.msra.mxu0 %v663
        %715 = vmatprep.subr.mxu0 0.0
        %716 = vmatpush1.msra.mxu0 %v662
        %717 = vmatprep.subr.mxu0 0.0
        %718 = vmatpush2.msra.mxu0 0.0
        %719 = vmatprep.subr.mxu0 0.0
        %720 = vmatpush2.msra.mxu0 0.0
        %721 = vmatprep.subr.mxu0 0.0
        %722 = vmatpush2.msra.mxu0 0.0
        %723 = vmatprep.subr.mxu0 0.0
        %724 = vmatpush2.msra.mxu0 0.0
        %725 = vmatprep.subr.mxu0 0.0
        %726 = vmatpush2.msra.mxu0 0.0
        %727 = vmatprep.subr.mxu0 0.0
        %728 = vmatpush2.msra.mxu0 0.0
        %729 = vmatprep.subr.mxu0 0.0
        %730 = vmatpush2.msra.mxu0 0.0
        %731 = vmatprep.subr.mxu0 0.0
        %732 = vmatpush2.msra.mxu0 0.0
        %733 = vmatprep.subr.mxu0 0.0
        %734 = vmatpush2.msra.mxu0 0.0
        %735 = vmatprep.subr.mxu0 0.0
        %736 = vmatpush2.msra.mxu0 0.0
        %737 = vmatprep.subr.mxu0 0.0
        %738 = vmatpush2.msra.mxu0 0.0
        %739 = vmatprep.subr.mxu0 0.0
        %740 = vmatpush2.msra.mxu0 0.0
        %741 = vmatprep.subr.mxu0 0.0
        %742 = vmatpush2.msra.mxu0 0.0
        %743 = vmatprep.subr.mxu0 0.0
        %744 = vmatpush2.msra.mxu0 0.0
        %745 = vmatprep.subr.mxu0 0.0
        %746 = vmatpush2.msra.mxu0 0.0
        %747 = vmatprep.subr.mxu0 0.0
        %748 = vmatpush2.msra.mxu0 0.0
        %749 = vmatprep.mubr.f32.mxu0 0.0
        %750 = vmatmul.mubr.f32.gmra.mxu0 %v646
        %v751 = vpop.f32.mrf.mxu0
        %v752 = vadd.f32 %v683, %v751
        %v753 = vpop.f32.mrf.mxu0
        %754 = vmatprep.mubr.f32.mxu0 0.0
        %755 = vmatmul.mubr.f32.gmra.mxu0 %v647
        %v756 = vpop.f32.mrf.mxu0
        %v757 = vadd.f32 %v683, %v756
        %v758 = vpop.f32.mrf.mxu0
        %759 = vmatprep.mubr.f32.mxu0 0.0
        %760 = vmatmul.mubr.f32.gmra.mxu0 %v648
        %v761 = vpop.f32.mrf.mxu0
        %v762 = vadd.f32 %v683, %v761
        %v763 = vpop.f32.mrf.mxu0
        %764 = vmatprep.mubr.f32.mxu0 0.0
        %765 = vmatmul.mubr.f32.gmra.mxu0 %v649
        %v766 = vpop.f32.mrf.mxu0
        %v767 = vadd.f32 %v683, %v766
        %v768 = vpop.f32.mrf.mxu0
        %769 = vmatprep.mubr.f32.mxu0 0.0
        %770 = vmatmul.mubr.f32.gmra.mxu0 %v650
        %v771 = vpop.f32.mrf.mxu0
        %v772 = vadd.f32 %v683, %v771
        %v773 = vpop.f32.mrf.mxu0
        %774 = vmatprep.mubr.f32.mxu0 0.0
        %775 = vmatmul.mubr.f32.gmra.mxu0 %v651
        %v776 = vpop.f32.mrf.mxu0
        %v777 = vadd.f32 %v683, %v776
        %v778 = vpop.f32.mrf.mxu0
        %779 = vmatprep.mubr.f32.mxu0 0.0
        %780 = vmatmul.mubr.f32.gmra.mxu0 %v652
        %v781 = vpop.f32.mrf.mxu0
        %v782 = vadd.f32 %v683, %v781
        %v783 = vpop.f32.mrf.mxu0
        %784 = vmatprep.mubr.f32.mxu0 0.0
        %785 = vmatmul.mubr.f32.gmra.mxu0 %v653
        %v786 = vpop.f32.mrf.mxu0
        %v787 = vadd.f32 %v683, %v786
        %v788 = vpop.f32.mrf.mxu0
        %789 = vmatprep.mubr.f32.mxu0 0.0
        %790 = vmatmul.mubr.f32.gmra.mxu0 %v654
        %v791 = vpop.f32.mrf.mxu0
        %v792 = vadd.f32 %v683, %v791
        %v793 = vpop.f32.mrf.mxu0
        %794 = vmatprep.mubr.f32.mxu0 0.0
        %795 = vmatmul.mubr.f32.gmra.mxu0 %v655
        %v796 = vpop.f32.mrf.mxu0
        %v797 = vadd.f32 %v683, %v796
        %v798 = vpop.f32.mrf.mxu0
        %799 = vmatprep.mubr.f32.mxu0 0.0
        %800 = vmatmul.mubr.f32.gmra.mxu0 %v656
        %v801 = vpop.f32.mrf.mxu0
        %v802 = vadd.f32 %v683, %v801
        %v803 = vpop.f32.mrf.mxu0
        %804 = vmatprep.mubr.f32.mxu0 0.0
        %805 = vmatmul.mubr.f32.gmra.mxu0 %v657
        %v806 = vpop.f32.mrf.mxu0
        %v807 = vadd.f32 %v683, %v806
        %v808 = vpop.f32.mrf.mxu0
        %809 = vmatprep.mubr.f32.mxu0 0.0
        %810 = vmatmul.mubr.f32.gmra.mxu0 %v658
        %v811 = vpop.f32.mrf.mxu0
        %v812 = vadd.f32 %v683, %v811
        %v813 = vpop.f32.mrf.mxu0
        %814 = vmatprep.mubr.f32.mxu0 0.0
        %815 = vmatmul.mubr.f32.gmra.mxu0 %v659
        %v816 = vpop.f32.mrf.mxu0
        %v817 = vadd.f32 %v683, %v816
        %v818 = vpop.f32.mrf.mxu0
        %819 = vmatprep.mubr.f32.mxu0 0.0
        %820 = vmatmul.mubr.f32.gmra.mxu0 %v660
        %v821 = vpop.f32.mrf.mxu0
        %v822 = vadd.f32 %v683, %v821
        %v823 = vpop.f32.mrf.mxu0
        %824 = vmatprep.mubr.f32.mxu0 0.0
        %825 = vmatmul.mubr.f32.gmra.mxu0 %v661
        %v826 = vpop.f32.mrf.mxu0
        %v827 = vadd.f32 %v683, %v826
        %v828 = vpop.f32.mrf.mxu0
        %829 = vdwg.mxu0
        %v830 = vmax.f32 %v752, 0.0
        %v831 = vmax.f32 %v757, 0.0
        %v832 = vmax.f32 %v762, 0.0
        %v833 = vmax.f32 %v767, 0.0
        %v834 = vmax.f32 %v772, 0.0
        %v835 = vmax.f32 %v777, 0.0
        %v836 = vmax.f32 %v782, 0.0
        %v837 = vmax.f32 %v787, 0.0
        %v838 = vmax.f32 %v792, 0.0
        %v839 = vmax.f32 %v797, 0.0
        %v840 = vmax.f32 %v802, 0.0
        %v841 = vmax.f32 %v807, 0.0
        %v842 = vmax.f32 %v812, 0.0
        %v843 = vmax.f32 %v817, 0.0
        %v844 = vmax.f32 %v822, 0.0
        %v845 = vmax.f32 %v827, 0.0
        %v846 = vld [vmem:[%s453] sm:$0x1]
        %v847 = vld [vmem:[%s453 + $0x4] sm:$0x1]
        %v848 = vld [vmem:[%s453 + $0x8] sm:$0x1]
        %v849 = vld [vmem:[%s453 + $0xc] sm:$0x1]
        %v850 = vld [vmem:[%s453 + $0x10] sm:$0x1]
        %v851 = vld [vmem:[%s453 + $0x14] sm:$0x1]
        %v852 = vld [vmem:[%s453 + $0x18] sm:$0x1]
        %v853 = vld [vmem:[%s453 + $0x1c] sm:$0x1]
        %v854 = vld [vmem:[%s453 + $0x20] sm:$0x1]
        %v855 = vld [vmem:[%s453 + $0x24] sm:$0x1]
        %v856 = vld [vmem:[%s453 + $0x28] sm:$0x1]
        %v857 = vld [vmem:[%s453 + $0x2c] sm:$0x1]
        %v858 = vld [vmem:[%s453 + $0x30] sm:$0x1]
        %v859 = vld [vmem:[%s453 + $0x34] sm:$0x1]
        %v860 = vld [vmem:[%s453 + $0x38] sm:$0x1]
        %v861 = vld [vmem:[%s453 + $0x3c] sm:$0x1]
        %v862 = vld [vmem:[%s453 + $0x40] sm:$0x1]
        %v863 = vld [vmem:[%s453 + $0x44] sm:$0x1]
        %v864 = vld [vmem:[%s453 + $0x48] sm:$0x1]
        %v865 = vld [vmem:[%s453 + $0x4c] sm:$0x1]
        %v866 = vld [vmem:[%s453 + $0x50] sm:$0x1]
        %v867 = vld [vmem:[%s453 + $0x54] sm:$0x1]
        %v868 = vld [vmem:[%s453 + $0x58] sm:$0x1]
        %v869 = vld [vmem:[%s453 + $0x5c] sm:$0x1]
        %v870 = vld [vmem:[%s453 + $0x60] sm:$0x1]
        %v871 = vld [vmem:[%s453 + $0x64] sm:$0x1]
        %v872 = vld [vmem:[%s453 + $0x68] sm:$0x1]
        %v873 = vld [vmem:[%s453 + $0x6c] sm:$0x1]
        %v874 = vld [vmem:[%s453 + $0x70] sm:$0x1]
        %v875 = vld [vmem:[%s453 + $0x74] sm:$0x1]
        %v876 = vld [vmem:[%s453 + $0x78] sm:$0x1]
        %v877 = vld [vmem:[%s453 + $0x7c] sm:$0x1]
        %v878 = vld [vmem:[%s453 + $0x80] sm:$0x1]
        %v879 = vld [vmem:[%s453 + $0x84] sm:$0x1]
        %v880 = vld [vmem:[%s453 + $0x88] sm:$0x1]
        %v881 = vld [vmem:[%s453 + $0x8c] sm:$0x1]
        %v882 = vld [vmem:[%s453 + $0x90] sm:$0x1]
        %v883 = vld [vmem:[%s453 + $0x94] sm:$0x1]
        %v884 = vld [vmem:[%s453 + $0x98] sm:$0x1]
        %v885 = vld [vmem:[%s453 + $0x9c] sm:$0x1]
        %v886 = vld [vmem:[%s453 + $0xa0] sm:$0x1]
        %v887 = vld [vmem:[%s453 + $0xa4] sm:$0x1]
        %v888 = vld [vmem:[%s453 + $0xa8] sm:$0x1]
        %v889 = vld [vmem:[%s453 + $0xac] sm:$0x1]
        %v890 = vld [vmem:[%s453 + $0xb0] sm:$0x1]
        %v891 = vld [vmem:[%s453 + $0xb4] sm:$0x1]
        %v892 = vld [vmem:[%s453 + $0xb8] sm:$0x1]
        %v893 = vld [vmem:[%s453 + $0xbc] sm:$0x1]
        %v894 = vld [vmem:[%s453 + $0xc0] sm:$0x1]
        %v895 = vld [vmem:[%s453 + $0xc4] sm:$0x1]
        %v896 = vld [vmem:[%s453 + $0xc8] sm:$0x1]
        %v897 = vld [vmem:[%s453 + $0xcc] sm:$0x1]
        %v898 = vld [vmem:[%s453 + $0xd0] sm:$0x1]
        %v899 = vld [vmem:[%s453 + $0xd4] sm:$0x1]
        %v900 = vld [vmem:[%s453 + $0xd8] sm:$0x1]
        %v901 = vld [vmem:[%s453 + $0xdc] sm:$0x1]
        %v902 = vld [vmem:[%s453 + $0xe0] sm:$0x1]
        %v903 = vld [vmem:[%s453 + $0xe4] sm:$0x1]
        %v904 = vld [vmem:[%s453 + $0xe8] sm:$0x1]
        %v905 = vld [vmem:[%s453 + $0xec] sm:$0x1]
        %v906 = vld [vmem:[%s453 + $0xf0] sm:$0x1]
        %v907 = vld [vmem:[%s453 + $0xf4] sm:$0x1]
        %v908 = vld [vmem:[%s453 + $0xf8] sm:$0x1]
        %v909 = vld [vmem:[%s453 + $0xfc] sm:$0x1]
        %v910 = vld [vmem:[%s453 + $0x100] sm:$0x1]
        %v911 = vld [vmem:[%s453 + $0x104] sm:$0x1]
        %v912 = vld [vmem:[%s453 + $0x108] sm:$0x1]
        %v913 = vld [vmem:[%s453 + $0x10c] sm:$0x1]
        %v914 = vld [vmem:[%s453 + $0x110] sm:$0x1]
        %v915 = vld [vmem:[%s453 + $0x114] sm:$0x1]
        %v916 = vld [vmem:[%s453 + $0x118] sm:$0x1]
        %v917 = vld [vmem:[%s453 + $0x11c] sm:$0x1]
        %v918 = vld [vmem:[%s453 + $0x120] sm:$0x1]
        %v919 = vld [vmem:[%s453 + $0x124] sm:$0x1]
        %v920 = vld [vmem:[%s453 + $0x128] sm:$0x1]
        %v921 = vld [vmem:[%s453 + $0x12c] sm:$0x1]
        %v922 = vld [vmem:[%s453 + $0x130] sm:$0x1]
        %v923 = vld [vmem:[%s453 + $0x134] sm:$0x1]
        %v924 = vld [vmem:[%s453 + $0x138] sm:$0x1]
        %v925 = vld [vmem:[%s453 + $0x13c] sm:$0x1]
        %v926 = vld [vmem:[%s453 + $0x140] sm:$0x1]
        %v927 = vld [vmem:[%s453 + $0x144] sm:$0x1]
        %v928 = vld [vmem:[%s453 + $0x148] sm:$0x1]
        %v929 = vld [vmem:[%s453 + $0x14c] sm:$0x1]
        %v930 = vld [vmem:[%s453 + $0x150] sm:$0x1]
        %v931 = vld [vmem:[%s453 + $0x154] sm:$0x1]
        %v932 = vld [vmem:[%s453 + $0x158] sm:$0x1]
        %v933 = vld [vmem:[%s453 + $0x15c] sm:$0x1]
        %v934 = vld [vmem:[%s453 + $0x160] sm:$0x1]
        %v935 = vld [vmem:[%s453 + $0x164] sm:$0x1]
        %v936 = vld [vmem:[%s453 + $0x168] sm:$0x1]
        %v937 = vld [vmem:[%s453 + $0x16c] sm:$0x1]
        %v938 = vld [vmem:[%s453 + $0x170] sm:$0x1]
        %v939 = vld [vmem:[%s453 + $0x174] sm:$0x1]
        %v940 = vld [vmem:[%s453 + $0x178] sm:$0x1]
        %v941 = vld [vmem:[%s453 + $0x17c] sm:$0x1]
        %v942 = vld [vmem:[%s453 + $0x180] sm:$0x1]
        %v943 = vld [vmem:[%s453 + $0x184] sm:$0x1]
        %v944 = vld [vmem:[%s453 + $0x188] sm:$0x1]
        %v945 = vld [vmem:[%s453 + $0x18c] sm:$0x1]
        %v946 = vld [vmem:[%s453 + $0x190] sm:$0x1]
        %v947 = vld [vmem:[%s453 + $0x194] sm:$0x1]
        %v948 = vld [vmem:[%s453 + $0x198] sm:$0x1]
        %v949 = vld [vmem:[%s453 + $0x19c] sm:$0x1]
        %v950 = vld [vmem:[%s453 + $0x1a0] sm:$0x1]
        %v951 = vld [vmem:[%s453 + $0x1a4] sm:$0x1]
        %v952 = vld [vmem:[%s453 + $0x1a8] sm:$0x1]
        %v953 = vld [vmem:[%s453 + $0x1ac] sm:$0x1]
        %v954 = vld [vmem:[%s453 + $0x1b0] sm:$0x1]
        %v955 = vld [vmem:[%s453 + $0x1b4] sm:$0x1]
        %v956 = vld [vmem:[%s453 + $0x1b8] sm:$0x1]
        %v957 = vld [vmem:[%s453 + $0x1bc] sm:$0x1]
        %v958 = vld [vmem:[%s453 + $0x1c0] sm:$0x1]
        %v959 = vld [vmem:[%s453 + $0x1c4] sm:$0x1]
        %v960 = vld [vmem:[%s453 + $0x1c8] sm:$0x1]
        %v961 = vld [vmem:[%s453 + $0x1cc] sm:$0x1]
        %v962 = vld [vmem:[%s453 + $0x1d0] sm:$0x1]
        %v963 = vld [vmem:[%s453 + $0x1d4] sm:$0x1]
        %v964 = vld [vmem:[%s453 + $0x1d8] sm:$0x1]
        %v965 = vld [vmem:[%s453 + $0x1dc] sm:$0x1]
        %v966 = vld [vmem:[%s453 + $0x1e0] sm:$0x1]
        %v967 = vld [vmem:[%s453 + $0x1e4] sm:$0x1]
        %v968 = vld [vmem:[%s453 + $0x1e8] sm:$0x1]
        %v969 = vld [vmem:[%s453 + $0x1ec] sm:$0x1]
        %v970 = vld [vmem:[%s453 + $0x1f0] sm:$0x1]
        %v971 = vld [vmem:[%s453 + $0x1f4] sm:$0x1]
        %v972 = vld [vmem:[%s453 + $0x1f8] sm:$0x1]
        %v973 = vld [vmem:[%s453 + $0x1fc] sm:$0x1]
        %v974 = vld [vmem:[%s453 + $0x1] sm:$0x7]
        %v975 = vld [vmem:[%s453 + $0x5] sm:$0x7]
        %v976 = vld [vmem:[%s453 + $0x9] sm:$0x7]
        %v977 = vld [vmem:[%s453 + $0xd] sm:$0x7]
        %v978 = vld [vmem:[%s453 + $0x11] sm:$0x7]
        %v979 = vld [vmem:[%s453 + $0x15] sm:$0x7]
        %v980 = vld [vmem:[%s453 + $0x19] sm:$0x7]
        %v981 = vld [vmem:[%s453 + $0x1d] sm:$0x7]
        %v982 = vld [vmem:[%s453 + $0x21] sm:$0x7]
        %v983 = vld [vmem:[%s453 + $0x25] sm:$0x7]
        %v984 = vld [vmem:[%s453 + $0x29] sm:$0x7]
        %v985 = vld [vmem:[%s453 + $0x2d] sm:$0x7]
        %v986 = vld [vmem:[%s453 + $0x31] sm:$0x7]
        %v987 = vld [vmem:[%s453 + $0x35] sm:$0x7]
        %v988 = vld [vmem:[%s453 + $0x39] sm:$0x7]
        %v989 = vld [vmem:[%s453 + $0x3d] sm:$0x7]
        %v990 = vld [vmem:[%s453 + $0x41] sm:$0x7]
        %v991 = vld [vmem:[%s453 + $0x45] sm:$0x7]
        %v992 = vld [vmem:[%s453 + $0x49] sm:$0x7]
        %v993 = vld [vmem:[%s453 + $0x4d] sm:$0x7]
        %v994 = vld [vmem:[%s453 + $0x51] sm:$0x7]
        %v995 = vld [vmem:[%s453 + $0x55] sm:$0x7]
        %v996 = vld [vmem:[%s453 + $0x59] sm:$0x7]
        %v997 = vld [vmem:[%s453 + $0x5d] sm:$0x7]
        %v998 = vld [vmem:[%s453 + $0x61] sm:$0x7]
        %v999 = vld [vmem:[%s453 + $0x65] sm:$0x7]
        %v1000 = vld [vmem:[%s453 + $0x69] sm:$0x7]
        %v1001 = vld [vmem:[%s453 + $0x6d] sm:$0x7]
        %v1002 = vld [vmem:[%s453 + $0x71] sm:$0x7]
        %v1003 = vld [vmem:[%s453 + $0x75] sm:$0x7]
        %v1004 = vld [vmem:[%s453 + $0x79] sm:$0x7]
        %v1005 = vld [vmem:[%s453 + $0x7d] sm:$0x7]
        %v1006 = vld [vmem:[%s453 + $0x81] sm:$0x7]
        %v1007 = vld [vmem:[%s453 + $0x85] sm:$0x7]
        %v1008 = vld [vmem:[%s453 + $0x89] sm:$0x7]
        %v1009 = vld [vmem:[%s453 + $0x8d] sm:$0x7]
        %v1010 = vld [vmem:[%s453 + $0x91] sm:$0x7]
        %v1011 = vld [vmem:[%s453 + $0x95] sm:$0x7]
        %v1012 = vld [vmem:[%s453 + $0x99] sm:$0x7]
        %v1013 = vld [vmem:[%s453 + $0x9d] sm:$0x7]
        %v1014 = vld [vmem:[%s453 + $0xa1] sm:$0x7]
        %v1015 = vld [vmem:[%s453 + $0xa5] sm:$0x7]
        %v1016 = vld [vmem:[%s453 + $0xa9] sm:$0x7]
        %v1017 = vld [vmem:[%s453 + $0xad] sm:$0x7]
        %v1018 = vld [vmem:[%s453 + $0xb1] sm:$0x7]
        %v1019 = vld [vmem:[%s453 + $0xb5] sm:$0x7]
        %v1020 = vld [vmem:[%s453 + $0xb9] sm:$0x7]
        %v1021 = vld [vmem:[%s453 + $0xbd] sm:$0x7]
        %v1022 = vld [vmem:[%s453 + $0xc1] sm:$0x7]
        %v1023 = vld [vmem:[%s453 + $0xc5] sm:$0x7]
        %v1024 = vld [vmem:[%s453 + $0xc9] sm:$0x7]
        %v1025 = vld [vmem:[%s453 + $0xcd] sm:$0x7]
        %v1026 = vld [vmem:[%s453 + $0xd1] sm:$0x7]
        %v1027 = vld [vmem:[%s453 + $0xd5] sm:$0x7]
        %v1028 = vld [vmem:[%s453 + $0xd9] sm:$0x7]
        %v1029 = vld [vmem:[%s453 + $0xdd] sm:$0x7]
        %v1030 = vld [vmem:[%s453 + $0xe1] sm:$0x7]
        %v1031 = vld [vmem:[%s453 + $0xe5] sm:$0x7]
        %v1032 = vld [vmem:[%s453 + $0xe9] sm:$0x7]
        %v1033 = vld [vmem:[%s453 + $0xed] sm:$0x7]
        %v1034 = vld [vmem:[%s453 + $0xf1] sm:$0x7]
        %v1035 = vld [vmem:[%s453 + $0xf5] sm:$0x7]
        %v1036 = vld [vmem:[%s453 + $0xf9] sm:$0x7]
        %v1037 = vld [vmem:[%s453 + $0xfd] sm:$0x7]
        %v1038 = vld [vmem:[%s453 + $0x101] sm:$0x7]
        %v1039 = vld [vmem:[%s453 + $0x105] sm:$0x7]
        %v1040 = vld [vmem:[%s453 + $0x109] sm:$0x7]
        %v1041 = vld [vmem:[%s453 + $0x10d] sm:$0x7]
        %v1042 = vld [vmem:[%s453 + $0x111] sm:$0x7]
        %v1043 = vld [vmem:[%s453 + $0x115] sm:$0x7]
        %v1044 = vld [vmem:[%s453 + $0x119] sm:$0x7]
        %v1045 = vld [vmem:[%s453 + $0x11d] sm:$0x7]
        %v1046 = vld [vmem:[%s453 + $0x121] sm:$0x7]
        %v1047 = vld [vmem:[%s453 + $0x125] sm:$0x7]
        %v1048 = vld [vmem:[%s453 + $0x129] sm:$0x7]
        %v1049 = vld [vmem:[%s453 + $0x12d] sm:$0x7]
        %v1050 = vld [vmem:[%s453 + $0x131] sm:$0x7]
        %v1051 = vld [vmem:[%s453 + $0x135] sm:$0x7]
        %v1052 = vld [vmem:[%s453 + $0x139] sm:$0x7]
        %v1053 = vld [vmem:[%s453 + $0x13d] sm:$0x7]
        %v1054 = vld [vmem:[%s453 + $0x141] sm:$0x7]
        %v1055 = vld [vmem:[%s453 + $0x145] sm:$0x7]
        %v1056 = vld [vmem:[%s453 + $0x149] sm:$0x7]
        %v1057 = vld [vmem:[%s453 + $0x14d] sm:$0x7]
        %v1058 = vld [vmem:[%s453 + $0x151] sm:$0x7]
        %v1059 = vld [vmem:[%s453 + $0x155] sm:$0x7]
        %v1060 = vld [vmem:[%s453 + $0x159] sm:$0x7]
        %v1061 = vld [vmem:[%s453 + $0x15d] sm:$0x7]
        %v1062 = vld [vmem:[%s453 + $0x161] sm:$0x7]
        %v1063 = vld [vmem:[%s453 + $0x165] sm:$0x7]
        %v1064 = vld [vmem:[%s453 + $0x169] sm:$0x7]
        %v1065 = vld [vmem:[%s453 + $0x16d] sm:$0x7]
        %v1066 = vld [vmem:[%s453 + $0x171] sm:$0x7]
        %v1067 = vld [vmem:[%s453 + $0x175] sm:$0x7]
        %v1068 = vld [vmem:[%s453 + $0x179] sm:$0x7]
        %v1069 = vld [vmem:[%s453 + $0x17d] sm:$0x7]
        %v1070 = vld [vmem:[%s453 + $0x181] sm:$0x7]
        %v1071 = vld [vmem:[%s453 + $0x185] sm:$0x7]
        %v1072 = vld [vmem:[%s453 + $0x189] sm:$0x7]
        %v1073 = vld [vmem:[%s453 + $0x18d] sm:$0x7]
        %v1074 = vld [vmem:[%s453 + $0x191] sm:$0x7]
        %v1075 = vld [vmem:[%s453 + $0x195] sm:$0x7]
        %v1076 = vld [vmem:[%s453 + $0x199] sm:$0x7]
        %v1077 = vld [vmem:[%s453 + $0x19d] sm:$0x7]
        %v1078 = vld [vmem:[%s453 + $0x1a1] sm:$0x7]
        %v1079 = vld [vmem:[%s453 + $0x1a5] sm:$0x7]
        %v1080 = vld [vmem:[%s453 + $0x1a9] sm:$0x7]
        %v1081 = vld [vmem:[%s453 + $0x1ad] sm:$0x7]
        %v1082 = vld [vmem:[%s453 + $0x1b1] sm:$0x7]
        %v1083 = vld [vmem:[%s453 + $0x1b5] sm:$0x7]
        %v1084 = vld [vmem:[%s453 + $0x1b9] sm:$0x7]
        %v1085 = vld [vmem:[%s453 + $0x1bd] sm:$0x7]
        %v1086 = vld [vmem:[%s453 + $0x1c1] sm:$0x7]
        %v1087 = vld [vmem:[%s453 + $0x1c5] sm:$0x7]
        %v1088 = vld [vmem:[%s453 + $0x1c9] sm:$0x7]
        %v1089 = vld [vmem:[%s453 + $0x1cd] sm:$0x7]
        %v1090 = vld [vmem:[%s453 + $0x1d1] sm:$0x7]
        %v1091 = vld [vmem:[%s453 + $0x1d5] sm:$0x7]
        %v1092 = vld [vmem:[%s453 + $0x1d9] sm:$0x7]
        %v1093 = vld [vmem:[%s453 + $0x1dd] sm:$0x7]
        %v1094 = vld [vmem:[%s453 + $0x1e1] sm:$0x7]
        %v1095 = vld [vmem:[%s453 + $0x1e5] sm:$0x7]
        %v1096 = vld [vmem:[%s453 + $0x1e9] sm:$0x7]
        %v1097 = vld [vmem:[%s453 + $0x1ed] sm:$0x7]
        %v1098 = vld [vmem:[%s453 + $0x1f1] sm:$0x7]
        %v1099 = vld [vmem:[%s453 + $0x1f5] sm:$0x7]
        %v1100 = vld [vmem:[%s453 + $0x1f9] sm:$0x7]
        %v1101 = vld [vmem:[%s453 + $0x1fd] sm:$0x7]
        %v1102 = vlaneseq
        %v1103 = vshrl.u32 %v1102, 7
        %v1104 = vsub.s32 0, %v1103
        %v1105 = vrot.slane %v846, %v1104
        %v1106 = vlaneseq
        %v1107 = vshrl.u32 %v1106, 7
        %v1108 = vsub.s32 0, %v1107
        %v1109 = vrot.slane %v847, %v1108
        %v1110 = vlaneseq
        %v1111 = vshrl.u32 %v1110, 7
        %v1112 = vsub.s32 0, %v1111
        %v1113 = vrot.slane %v848, %v1112
        %v1114 = vlaneseq
        %v1115 = vshrl.u32 %v1114, 7
        %v1116 = vsub.s32 0, %v1115
        %v1117 = vrot.slane %v849, %v1116
        %v1118 = vlaneseq
        %v1119 = vshrl.u32 %v1118, 7
        %v1120 = vsub.s32 0, %v1119
        %v1121 = vrot.slane %v850, %v1120
        %v1122 = vlaneseq
        %v1123 = vshrl.u32 %v1122, 7
        %v1124 = vsub.s32 0, %v1123
        %v1125 = vrot.slane %v851, %v1124
        %v1126 = vlaneseq
        %v1127 = vshrl.u32 %v1126, 7
        %v1128 = vsub.s32 0, %v1127
        %v1129 = vrot.slane %v852, %v1128
        %v1130 = vlaneseq
        %v1131 = vshrl.u32 %v1130, 7
        %v1132 = vsub.s32 0, %v1131
        %v1133 = vrot.slane %v853, %v1132
        %v1134 = vlaneseq
        %v1135 = vshrl.u32 %v1134, 7
        %v1136 = vsub.s32 0, %v1135
        %v1137 = vrot.slane %v854, %v1136
        %v1138 = vlaneseq
        %v1139 = vshrl.u32 %v1138, 7
        %v1140 = vsub.s32 0, %v1139
        %v1141 = vrot.slane %v855, %v1140
        %v1142 = vlaneseq
        %v1143 = vshrl.u32 %v1142, 7
        %v1144 = vsub.s32 0, %v1143
        %v1145 = vrot.slane %v856, %v1144
        %v1146 = vlaneseq
        %v1147 = vshrl.u32 %v1146, 7
        %v1148 = vsub.s32 0, %v1147
        %v1149 = vrot.slane %v857, %v1148
        %v1150 = vlaneseq
        %v1151 = vshrl.u32 %v1150, 7
        %v1152 = vsub.s32 0, %v1151
        %v1153 = vrot.slane %v858, %v1152
        %v1154 = vlaneseq
        %v1155 = vshrl.u32 %v1154, 7
        %v1156 = vsub.s32 0, %v1155
        %v1157 = vrot.slane %v859, %v1156
        %v1158 = vlaneseq
        %v1159 = vshrl.u32 %v1158, 7
        %v1160 = vsub.s32 0, %v1159
        %v1161 = vrot.slane %v860, %v1160
        %v1162 = vlaneseq
        %v1163 = vshrl.u32 %v1162, 7
        %v1164 = vsub.s32 0, %v1163
        %v1165 = vrot.slane %v861, %v1164
        %v1166 = vlaneseq
        %v1167 = vshrl.u32 %v1166, 7
        %v1168 = vsub.s32 0, %v1167
        %v1169 = vrot.slane %v862, %v1168
        %v1170 = vlaneseq
        %v1171 = vshrl.u32 %v1170, 7
        %v1172 = vsub.s32 0, %v1171
        %v1173 = vrot.slane %v863, %v1172
        %v1174 = vlaneseq
        %v1175 = vshrl.u32 %v1174, 7
        %v1176 = vsub.s32 0, %v1175
        %v1177 = vrot.slane %v864, %v1176
        %v1178 = vlaneseq
        %v1179 = vshrl.u32 %v1178, 7
        %v1180 = vsub.s32 0, %v1179
        %v1181 = vrot.slane %v865, %v1180
        %v1182 = vlaneseq
        %v1183 = vshrl.u32 %v1182, 7
        %v1184 = vsub.s32 0, %v1183
        %v1185 = vrot.slane %v866, %v1184
        %v1186 = vlaneseq
        %v1187 = vshrl.u32 %v1186, 7
        %v1188 = vsub.s32 0, %v1187
        %v1189 = vrot.slane %v867, %v1188
        %v1190 = vlaneseq
        %v1191 = vshrl.u32 %v1190, 7
        %v1192 = vsub.s32 0, %v1191
        %v1193 = vrot.slane %v868, %v1192
        %v1194 = vlaneseq
        %v1195 = vshrl.u32 %v1194, 7
        %v1196 = vsub.s32 0, %v1195
        %v1197 = vrot.slane %v869, %v1196
        %v1198 = vlaneseq
        %v1199 = vshrl.u32 %v1198, 7
        %v1200 = vsub.s32 0, %v1199
        %v1201 = vrot.slane %v870, %v1200
        %v1202 = vlaneseq
        %v1203 = vshrl.u32 %v1202, 7
        %v1204 = vsub.s32 0, %v1203
        %v1205 = vrot.slane %v871, %v1204
        %v1206 = vlaneseq
        %v1207 = vshrl.u32 %v1206, 7
        %v1208 = vsub.s32 0, %v1207
        %v1209 = vrot.slane %v872, %v1208
        %v1210 = vlaneseq
        %v1211 = vshrl.u32 %v1210, 7
        %v1212 = vsub.s32 0, %v1211
        %v1213 = vrot.slane %v873, %v1212
        %v1214 = vlaneseq
        %v1215 = vshrl.u32 %v1214, 7
        %v1216 = vsub.s32 0, %v1215
        %v1217 = vrot.slane %v874, %v1216
        %v1218 = vlaneseq
        %v1219 = vshrl.u32 %v1218, 7
        %v1220 = vsub.s32 0, %v1219
        %v1221 = vrot.slane %v875, %v1220
        %v1222 = vlaneseq
        %v1223 = vshrl.u32 %v1222, 7
        %v1224 = vsub.s32 0, %v1223
        %v1225 = vrot.slane %v876, %v1224
        %v1226 = vlaneseq
        %v1227 = vshrl.u32 %v1226, 7
        %v1228 = vsub.s32 0, %v1227
        %v1229 = vrot.slane %v877, %v1228
        %v1230 = vlaneseq
        %v1231 = vshrl.u32 %v1230, 7
        %v1232 = vsub.s32 0, %v1231
        %v1233 = vrot.slane %v878, %v1232
        %v1234 = vlaneseq
        %v1235 = vshrl.u32 %v1234, 7
        %v1236 = vsub.s32 0, %v1235
        %v1237 = vrot.slane %v879, %v1236
        %v1238 = vlaneseq
        %v1239 = vshrl.u32 %v1238, 7
        %v1240 = vsub.s32 0, %v1239
        %v1241 = vrot.slane %v880, %v1240
        %v1242 = vlaneseq
        %v1243 = vshrl.u32 %v1242, 7
        %v1244 = vsub.s32 0, %v1243
        %v1245 = vrot.slane %v881, %v1244
        %v1246 = vlaneseq
        %v1247 = vshrl.u32 %v1246, 7
        %v1248 = vsub.s32 0, %v1247
        %v1249 = vrot.slane %v882, %v1248
        %v1250 = vlaneseq
        %v1251 = vshrl.u32 %v1250, 7
        %v1252 = vsub.s32 0, %v1251
        %v1253 = vrot.slane %v883, %v1252
        %v1254 = vlaneseq
        %v1255 = vshrl.u32 %v1254, 7
        %v1256 = vsub.s32 0, %v1255
        %v1257 = vrot.slane %v884, %v1256
        %v1258 = vlaneseq
        %v1259 = vshrl.u32 %v1258, 7
        %v1260 = vsub.s32 0, %v1259
        %v1261 = vrot.slane %v885, %v1260
        %v1262 = vlaneseq
        %v1263 = vshrl.u32 %v1262, 7
        %v1264 = vsub.s32 0, %v1263
        %v1265 = vrot.slane %v886, %v1264
        %v1266 = vlaneseq
        %v1267 = vshrl.u32 %v1266, 7
        %v1268 = vsub.s32 0, %v1267
        %v1269 = vrot.slane %v887, %v1268
        %v1270 = vlaneseq
        %v1271 = vshrl.u32 %v1270, 7
        %v1272 = vsub.s32 0, %v1271
        %v1273 = vrot.slane %v888, %v1272
        %v1274 = vlaneseq
        %v1275 = vshrl.u32 %v1274, 7
        %v1276 = vsub.s32 0, %v1275
        %v1277 = vrot.slane %v889, %v1276
        %v1278 = vlaneseq
        %v1279 = vshrl.u32 %v1278, 7
        %v1280 = vsub.s32 0, %v1279
        %v1281 = vrot.slane %v890, %v1280
        %v1282 = vlaneseq
        %v1283 = vshrl.u32 %v1282, 7
        %v1284 = vsub.s32 0, %v1283
        %v1285 = vrot.slane %v891, %v1284
        %v1286 = vlaneseq
        %v1287 = vshrl.u32 %v1286, 7
        %v1288 = vsub.s32 0, %v1287
        %v1289 = vrot.slane %v892, %v1288
        %v1290 = vlaneseq
        %v1291 = vshrl.u32 %v1290, 7
        %v1292 = vsub.s32 0, %v1291
        %v1293 = vrot.slane %v893, %v1292
        %v1294 = vlaneseq
        %v1295 = vshrl.u32 %v1294, 7
        %v1296 = vsub.s32 0, %v1295
        %v1297 = vrot.slane %v894, %v1296
        %v1298 = vlaneseq
        %v1299 = vshrl.u32 %v1298, 7
        %v1300 = vsub.s32 0, %v1299
        %v1301 = vrot.slane %v895, %v1300
        %v1302 = vlaneseq
        %v1303 = vshrl.u32 %v1302, 7
        %v1304 = vsub.s32 0, %v1303
        %v1305 = vrot.slane %v896, %v1304
        %v1306 = vlaneseq
        %v1307 = vshrl.u32 %v1306, 7
        %v1308 = vsub.s32 0, %v1307
        %v1309 = vrot.slane %v897, %v1308
        %v1310 = vlaneseq
        %v1311 = vshrl.u32 %v1310, 7
        %v1312 = vsub.s32 0, %v1311
        %v1313 = vrot.slane %v898, %v1312
        %v1314 = vlaneseq
        %v1315 = vshrl.u32 %v1314, 7
        %v1316 = vsub.s32 0, %v1315
        %v1317 = vrot.slane %v899, %v1316
        %v1318 = vlaneseq
        %v1319 = vshrl.u32 %v1318, 7
        %v1320 = vsub.s32 0, %v1319
        %v1321 = vrot.slane %v900, %v1320
        %v1322 = vlaneseq
        %v1323 = vshrl.u32 %v1322, 7
        %v1324 = vsub.s32 0, %v1323
        %v1325 = vrot.slane %v901, %v1324
        %v1326 = vlaneseq
        %v1327 = vshrl.u32 %v1326, 7
        %v1328 = vsub.s32 0, %v1327
        %v1329 = vrot.slane %v902, %v1328
        %v1330 = vlaneseq
        %v1331 = vshrl.u32 %v1330, 7
        %v1332 = vsub.s32 0, %v1331
        %v1333 = vrot.slane %v903, %v1332
        %v1334 = vlaneseq
        %v1335 = vshrl.u32 %v1334, 7
        %v1336 = vsub.s32 0, %v1335
        %v1337 = vrot.slane %v904, %v1336
        %v1338 = vlaneseq
        %v1339 = vshrl.u32 %v1338, 7
        %v1340 = vsub.s32 0, %v1339
        %v1341 = vrot.slane %v905, %v1340
        %v1342 = vlaneseq
        %v1343 = vshrl.u32 %v1342, 7
        %v1344 = vsub.s32 0, %v1343
        %v1345 = vrot.slane %v906, %v1344
        %v1346 = vlaneseq
        %v1347 = vshrl.u32 %v1346, 7
        %v1348 = vsub.s32 0, %v1347
        %v1349 = vrot.slane %v907, %v1348
        %v1350 = vlaneseq
        %v1351 = vshrl.u32 %v1350, 7
        %v1352 = vsub.s32 0, %v1351
        %v1353 = vrot.slane %v908, %v1352
        %v1354 = vlaneseq
        %v1355 = vshrl.u32 %v1354, 7
        %v1356 = vsub.s32 0, %v1355
        %v1357 = vrot.slane %v909, %v1356
        %v1358 = vlaneseq
        %v1359 = vshrl.u32 %v1358, 7
        %v1360 = vsub.s32 0, %v1359
        %v1361 = vrot.slane %v910, %v1360
        %v1362 = vlaneseq
        %v1363 = vshrl.u32 %v1362, 7
        %v1364 = vsub.s32 0, %v1363
        %v1365 = vrot.slane %v911, %v1364
        %v1366 = vlaneseq
        %v1367 = vshrl.u32 %v1366, 7
        %v1368 = vsub.s32 0, %v1367
        %v1369 = vrot.slane %v912, %v1368
        %v1370 = vlaneseq
        %v1371 = vshrl.u32 %v1370, 7
        %v1372 = vsub.s32 0, %v1371
        %v1373 = vrot.slane %v913, %v1372
        %v1374 = vlaneseq
        %v1375 = vshrl.u32 %v1374, 7
        %v1376 = vsub.s32 0, %v1375
        %v1377 = vrot.slane %v914, %v1376
        %v1378 = vlaneseq
        %v1379 = vshrl.u32 %v1378, 7
        %v1380 = vsub.s32 0, %v1379
        %v1381 = vrot.slane %v915, %v1380
        %v1382 = vlaneseq
        %v1383 = vshrl.u32 %v1382, 7
        %v1384 = vsub.s32 0, %v1383
        %v1385 = vrot.slane %v916, %v1384
        %v1386 = vlaneseq
        %v1387 = vshrl.u32 %v1386, 7
        %v1388 = vsub.s32 0, %v1387
        %v1389 = vrot.slane %v917, %v1388
        %v1390 = vlaneseq
        %v1391 = vshrl.u32 %v1390, 7
        %v1392 = vsub.s32 0, %v1391
        %v1393 = vrot.slane %v918, %v1392
        %v1394 = vlaneseq
        %v1395 = vshrl.u32 %v1394, 7
        %v1396 = vsub.s32 0, %v1395
        %v1397 = vrot.slane %v919, %v1396
        %v1398 = vlaneseq
        %v1399 = vshrl.u32 %v1398, 7
        %v1400 = vsub.s32 0, %v1399
        %v1401 = vrot.slane %v920, %v1400
        %v1402 = vlaneseq
        %v1403 = vshrl.u32 %v1402, 7
        %v1404 = vsub.s32 0, %v1403
        %v1405 = vrot.slane %v921, %v1404
        %v1406 = vlaneseq
        %v1407 = vshrl.u32 %v1406, 7
        %v1408 = vsub.s32 0, %v1407
        %v1409 = vrot.slane %v922, %v1408
        %v1410 = vlaneseq
        %v1411 = vshrl.u32 %v1410, 7
        %v1412 = vsub.s32 0, %v1411
        %v1413 = vrot.slane %v923, %v1412
        %v1414 = vlaneseq
        %v1415 = vshrl.u32 %v1414, 7
        %v1416 = vsub.s32 0, %v1415
        %v1417 = vrot.slane %v924, %v1416
        %v1418 = vlaneseq
        %v1419 = vshrl.u32 %v1418, 7
        %v1420 = vsub.s32 0, %v1419
        %v1421 = vrot.slane %v925, %v1420
        %v1422 = vlaneseq
        %v1423 = vshrl.u32 %v1422, 7
        %v1424 = vsub.s32 0, %v1423
        %v1425 = vrot.slane %v926, %v1424
        %v1426 = vlaneseq
        %v1427 = vshrl.u32 %v1426, 7
        %v1428 = vsub.s32 0, %v1427
        %v1429 = vrot.slane %v927, %v1428
        %v1430 = vlaneseq
        %v1431 = vshrl.u32 %v1430, 7
        %v1432 = vsub.s32 0, %v1431
        %v1433 = vrot.slane %v928, %v1432
        %v1434 = vlaneseq
        %v1435 = vshrl.u32 %v1434, 7
        %v1436 = vsub.s32 0, %v1435
        %v1437 = vrot.slane %v929, %v1436
        %v1438 = vlaneseq
        %v1439 = vshrl.u32 %v1438, 7
        %v1440 = vsub.s32 0, %v1439
        %v1441 = vrot.slane %v930, %v1440
        %v1442 = vlaneseq
        %v1443 = vshrl.u32 %v1442, 7
        %v1444 = vsub.s32 0, %v1443
        %v1445 = vrot.slane %v931, %v1444
        %v1446 = vlaneseq
        %v1447 = vshrl.u32 %v1446, 7
        %v1448 = vsub.s32 0, %v1447
        %v1449 = vrot.slane %v932, %v1448
        %v1450 = vlaneseq
        %v1451 = vshrl.u32 %v1450, 7
        %v1452 = vsub.s32 0, %v1451
        %v1453 = vrot.slane %v933, %v1452
        %v1454 = vlaneseq
        %v1455 = vshrl.u32 %v1454, 7
        %v1456 = vsub.s32 0, %v1455
        %v1457 = vrot.slane %v934, %v1456
        %v1458 = vlaneseq
        %v1459 = vshrl.u32 %v1458, 7
        %v1460 = vsub.s32 0, %v1459
        %v1461 = vrot.slane %v935, %v1460
        %v1462 = vlaneseq
        %v1463 = vshrl.u32 %v1462, 7
        %v1464 = vsub.s32 0, %v1463
        %v1465 = vrot.slane %v936, %v1464
        %v1466 = vlaneseq
        %v1467 = vshrl.u32 %v1466, 7
        %v1468 = vsub.s32 0, %v1467
        %v1469 = vrot.slane %v937, %v1468
        %v1470 = vlaneseq
        %v1471 = vshrl.u32 %v1470, 7
        %v1472 = vsub.s32 0, %v1471
        %v1473 = vrot.slane %v938, %v1472
        %v1474 = vlaneseq
        %v1475 = vshrl.u32 %v1474, 7
        %v1476 = vsub.s32 0, %v1475
        %v1477 = vrot.slane %v939, %v1476
        %v1478 = vlaneseq
        %v1479 = vshrl.u32 %v1478, 7
        %v1480 = vsub.s32 0, %v1479
        %v1481 = vrot.slane %v940, %v1480
        %v1482 = vlaneseq
        %v1483 = vshrl.u32 %v1482, 7
        %v1484 = vsub.s32 0, %v1483
        %v1485 = vrot.slane %v941, %v1484
        %v1486 = vlaneseq
        %v1487 = vshrl.u32 %v1486, 7
        %v1488 = vsub.s32 0, %v1487
        %v1489 = vrot.slane %v942, %v1488
        %v1490 = vlaneseq
        %v1491 = vshrl.u32 %v1490, 7
        %v1492 = vsub.s32 0, %v1491
        %v1493 = vrot.slane %v943, %v1492
        %v1494 = vlaneseq
        %v1495 = vshrl.u32 %v1494, 7
        %v1496 = vsub.s32 0, %v1495
        %v1497 = vrot.slane %v944, %v1496
        %v1498 = vlaneseq
        %v1499 = vshrl.u32 %v1498, 7
        %v1500 = vsub.s32 0, %v1499
        %v1501 = vrot.slane %v945, %v1500
        %v1502 = vlaneseq
        %v1503 = vshrl.u32 %v1502, 7
        %v1504 = vsub.s32 0, %v1503
        %v1505 = vrot.slane %v946, %v1504
        %v1506 = vlaneseq
        %v1507 = vshrl.u32 %v1506, 7
        %v1508 = vsub.s32 0, %v1507
        %v1509 = vrot.slane %v947, %v1508
        %v1510 = vlaneseq
        %v1511 = vshrl.u32 %v1510, 7
        %v1512 = vsub.s32 0, %v1511
        %v1513 = vrot.slane %v948, %v1512
        %v1514 = vlaneseq
        %v1515 = vshrl.u32 %v1514, 7
        %v1516 = vsub.s32 0, %v1515
        %v1517 = vrot.slane %v949, %v1516
        %v1518 = vlaneseq
        %v1519 = vshrl.u32 %v1518, 7
        %v1520 = vsub.s32 0, %v1519
        %v1521 = vrot.slane %v950, %v1520
        %v1522 = vlaneseq
        %v1523 = vshrl.u32 %v1522, 7
        %v1524 = vsub.s32 0, %v1523
        %v1525 = vrot.slane %v951, %v1524
        %v1526 = vlaneseq
        %v1527 = vshrl.u32 %v1526, 7
        %v1528 = vsub.s32 0, %v1527
        %v1529 = vrot.slane %v952, %v1528
        %v1530 = vlaneseq
        %v1531 = vshrl.u32 %v1530, 7
        %v1532 = vsub.s32 0, %v1531
        %v1533 = vrot.slane %v953, %v1532
        %v1534 = vlaneseq
        %v1535 = vshrl.u32 %v1534, 7
        %v1536 = vsub.s32 0, %v1535
        %v1537 = vrot.slane %v954, %v1536
        %v1538 = vlaneseq
        %v1539 = vshrl.u32 %v1538, 7
        %v1540 = vsub.s32 0, %v1539
        %v1541 = vrot.slane %v955, %v1540
        %v1542 = vlaneseq
        %v1543 = vshrl.u32 %v1542, 7
        %v1544 = vsub.s32 0, %v1543
        %v1545 = vrot.slane %v956, %v1544
        %v1546 = vlaneseq
        %v1547 = vshrl.u32 %v1546, 7
        %v1548 = vsub.s32 0, %v1547
        %v1549 = vrot.slane %v957, %v1548
        %v1550 = vlaneseq
        %v1551 = vshrl.u32 %v1550, 7
        %v1552 = vsub.s32 0, %v1551
        %v1553 = vrot.slane %v958, %v1552
        %v1554 = vlaneseq
        %v1555 = vshrl.u32 %v1554, 7
        %v1556 = vsub.s32 0, %v1555
        %v1557 = vrot.slane %v959, %v1556
        %v1558 = vlaneseq
        %v1559 = vshrl.u32 %v1558, 7
        %v1560 = vsub.s32 0, %v1559
        %v1561 = vrot.slane %v960, %v1560
        %v1562 = vlaneseq
        %v1563 = vshrl.u32 %v1562, 7
        %v1564 = vsub.s32 0, %v1563
        %v1565 = vrot.slane %v961, %v1564
        %v1566 = vlaneseq
        %v1567 = vshrl.u32 %v1566, 7
        %v1568 = vsub.s32 0, %v1567
        %v1569 = vrot.slane %v962, %v1568
        %v1570 = vlaneseq
        %v1571 = vshrl.u32 %v1570, 7
        %v1572 = vsub.s32 0, %v1571
        %v1573 = vrot.slane %v963, %v1572
        %v1574 = vlaneseq
        %v1575 = vshrl.u32 %v1574, 7
        %v1576 = vsub.s32 0, %v1575
        %v1577 = vrot.slane %v964, %v1576
        %v1578 = vlaneseq
        %v1579 = vshrl.u32 %v1578, 7
        %v1580 = vsub.s32 0, %v1579
        %v1581 = vrot.slane %v965, %v1580
        %v1582 = vlaneseq
        %v1583 = vshrl.u32 %v1582, 7
        %v1584 = vsub.s32 0, %v1583
        %v1585 = vrot.slane %v966, %v1584
        %v1586 = vlaneseq
        %v1587 = vshrl.u32 %v1586, 7
        %v1588 = vsub.s32 0, %v1587
        %v1589 = vrot.slane %v967, %v1588
        %v1590 = vlaneseq
        %v1591 = vshrl.u32 %v1590, 7
        %v1592 = vsub.s32 0, %v1591
        %v1593 = vrot.slane %v968, %v1592
        %v1594 = vlaneseq
        %v1595 = vshrl.u32 %v1594, 7
        %v1596 = vsub.s32 0, %v1595
        %v1597 = vrot.slane %v969, %v1596
        %v1598 = vlaneseq
        %v1599 = vshrl.u32 %v1598, 7
        %v1600 = vsub.s32 0, %v1599
        %v1601 = vrot.slane %v970, %v1600
        %v1602 = vlaneseq
        %v1603 = vshrl.u32 %v1602, 7
        %v1604 = vsub.s32 0, %v1603
        %v1605 = vrot.slane %v971, %v1604
        %v1606 = vlaneseq
        %v1607 = vshrl.u32 %v1606, 7
        %v1608 = vsub.s32 0, %v1607
        %v1609 = vrot.slane %v972, %v1608
        %v1610 = vlaneseq
        %v1611 = vshrl.u32 %v1610, 7
        %v1612 = vsub.s32 0, %v1611
        %v1613 = vrot.slane %v973, %v1612
        %v1614 = vmul.f32 %v1105, %v974
        %v1615 = vmul.f32 %v1109, %v975
        %v1616 = vmul.f32 %v1113, %v976
        %v1617 = vmul.f32 %v1117, %v977
        %v1618 = vmul.f32 %v1121, %v978
        %v1619 = vmul.f32 %v1125, %v979
        %v1620 = vmul.f32 %v1129, %v980
        %v1621 = vmul.f32 %v1133, %v981
        %v1622 = vmul.f32 %v1137, %v982
        %v1623 = vmul.f32 %v1141, %v983
        %v1624 = vmul.f32 %v1145, %v984
        %v1625 = vmul.f32 %v1149, %v985
        %v1626 = vmul.f32 %v1153, %v986
        %v1627 = vmul.f32 %v1157, %v987
        %v1628 = vmul.f32 %v1161, %v988
        %v1629 = vmul.f32 %v1165, %v989
        %v1630 = vmul.f32 %v1169, %v990
        %v1631 = vmul.f32 %v1173, %v991
        %v1632 = vmul.f32 %v1177, %v992
        %v1633 = vmul.f32 %v1181, %v993
        %v1634 = vmul.f32 %v1185, %v994
        %v1635 = vmul.f32 %v1189, %v995
        %v1636 = vmul.f32 %v1193, %v996
        %v1637 = vmul.f32 %v1197, %v997
        %v1638 = vmul.f32 %v1201, %v998
        %v1639 = vmul.f32 %v1205, %v999
        %v1640 = vmul.f32 %v1209, %v1000
        %v1641 = vmul.f32 %v1213, %v1001
        %v1642 = vmul.f32 %v1217, %v1002
        %v1643 = vmul.f32 %v1221, %v1003
        %v1644 = vmul.f32 %v1225, %v1004
        %v1645 = vmul.f32 %v1229, %v1005
        %v1646 = vmul.f32 %v1233, %v1006
        %v1647 = vmul.f32 %v1237, %v1007
        %v1648 = vmul.f32 %v1241, %v1008
        %v1649 = vmul.f32 %v1245, %v1009
        %v1650 = vmul.f32 %v1249, %v1010
        %v1651 = vmul.f32 %v1253, %v1011
        %v1652 = vmul.f32 %v1257, %v1012
        %v1653 = vmul.f32 %v1261, %v1013
        %v1654 = vmul.f32 %v1265, %v1014
        %v1655 = vmul.f32 %v1269, %v1015
        %v1656 = vmul.f32 %v1273, %v1016
        %v1657 = vmul.f32 %v1277, %v1017
        %v1658 = vmul.f32 %v1281, %v1018
        %v1659 = vmul.f32 %v1285, %v1019
        %v1660 = vmul.f32 %v1289, %v1020
        %v1661 = vmul.f32 %v1293, %v1021
        %v1662 = vmul.f32 %v1297, %v1022
        %v1663 = vmul.f32 %v1301, %v1023
        %v1664 = vmul.f32 %v1305, %v1024
        %v1665 = vmul.f32 %v1309, %v1025
        %v1666 = vmul.f32 %v1313, %v1026
        %v1667 = vmul.f32 %v1317, %v1027
        %v1668 = vmul.f32 %v1321, %v1028
        %v1669 = vmul.f32 %v1325, %v1029
        %v1670 = vmul.f32 %v1329, %v1030
        %v1671 = vmul.f32 %v1333, %v1031
        %v1672 = vmul.f32 %v1337, %v1032
        %v1673 = vmul.f32 %v1341, %v1033
        %v1674 = vmul.f32 %v1345, %v1034
        %v1675 = vmul.f32 %v1349, %v1035
        %v1676 = vmul.f32 %v1353, %v1036
        %v1677 = vmul.f32 %v1357, %v1037
        %v1678 = vmul.f32 %v1361, %v1038
        %v1679 = vmul.f32 %v1365, %v1039
        %v1680 = vmul.f32 %v1369, %v1040
        %v1681 = vmul.f32 %v1373, %v1041
        %v1682 = vmul.f32 %v1377, %v1042
        %v1683 = vmul.f32 %v1381, %v1043
        %v1684 = vmul.f32 %v1385, %v1044
        %v1685 = vmul.f32 %v1389, %v1045
        %v1686 = vmul.f32 %v1393, %v1046
        %v1687 = vmul.f32 %v1397, %v1047
        %v1688 = vmul.f32 %v1401, %v1048
        %v1689 = vmul.f32 %v1405, %v1049
        %v1690 = vmul.f32 %v1409, %v1050
        %v1691 = vmul.f32 %v1413, %v1051
        %v1692 = vmul.f32 %v1417, %v1052
        %v1693 = vmul.f32 %v1421, %v1053
        %v1694 = vmul.f32 %v1425, %v1054
        %v1695 = vmul.f32 %v1429, %v1055
        %v1696 = vmul.f32 %v1433, %v1056
        %v1697 = vmul.f32 %v1437, %v1057
        %v1698 = vmul.f32 %v1441, %v1058
        %v1699 = vmul.f32 %v1445, %v1059
        %v1700 = vmul.f32 %v1449, %v1060
        %v1701 = vmul.f32 %v1453, %v1061
        %v1702 = vmul.f32 %v1457, %v1062
        %v1703 = vmul.f32 %v1461, %v1063
        %v1704 = vmul.f32 %v1465, %v1064
        %v1705 = vmul.f32 %v1469, %v1065
        %v1706 = vmul.f32 %v1473, %v1066
        %v1707 = vmul.f32 %v1477, %v1067
        %v1708 = vmul.f32 %v1481, %v1068
        %v1709 = vmul.f32 %v1485, %v1069
        %v1710 = vmul.f32 %v1489, %v1070
        %v1711 = vmul.f32 %v1493, %v1071
        %v1712 = vmul.f32 %v1497, %v1072
        %v1713 = vmul.f32 %v1501, %v1073
        %v1714 = vmul.f32 %v1505, %v1074
        %v1715 = vmul.f32 %v1509, %v1075
        %v1716 = vmul.f32 %v1513, %v1076
        %v1717 = vmul.f32 %v1517, %v1077
        %v1718 = vmul.f32 %v1521, %v1078
        %v1719 = vmul.f32 %v1525, %v1079
        %v1720 = vmul.f32 %v1529, %v1080
        %v1721 = vmul.f32 %v1533, %v1081
        %v1722 = vmul.f32 %v1537, %v1082
        %v1723 = vmul.f32 %v1541, %v1083
        %v1724 = vmul.f32 %v1545, %v1084
        %v1725 = vmul.f32 %v1549, %v1085
        %v1726 = vmul.f32 %v1553, %v1086
        %v1727 = vmul.f32 %v1557, %v1087
        %v1728 = vmul.f32 %v1561, %v1088
        %v1729 = vmul.f32 %v1565, %v1089
        %v1730 = vmul.f32 %v1569, %v1090
        %v1731 = vmul.f32 %v1573, %v1091
        %v1732 = vmul.f32 %v1577, %v1092
        %v1733 = vmul.f32 %v1581, %v1093
        %v1734 = vmul.f32 %v1585, %v1094
        %v1735 = vmul.f32 %v1589, %v1095
        %v1736 = vmul.f32 %v1593, %v1096
        %v1737 = vmul.f32 %v1597, %v1097
        %v1738 = vmul.f32 %v1601, %v1098
        %v1739 = vmul.f32 %v1605, %v1099
        %v1740 = vmul.f32 %v1609, %v1100
        %v1741 = vmul.f32 %v1613, %v1101
        %vm1742 = vcmask 1042432
        %v1743 = vsel %vm1742, %v1614, 0.0
        %1744 = vadd.xlane.f32.xlu0 %v1743
        %v1745 = vpop.xlane.xlu0 %1744
        %v1746 = vsel %vm1742, %v1615, 0.0
        %1747 = vadd.xlane.f32.xlu0 %v1746
        %v1748 = vpop.xlane.xlu0 %1747
        %v1749 = vsel %vm1742, %v1616, 0.0
        %1750 = vadd.xlane.f32.xlu0 %v1749
        %v1751 = vpop.xlane.xlu0 %1750
        %v1752 = vsel %vm1742, %v1617, 0.0
        %1753 = vadd.xlane.f32.xlu0 %v1752
        %v1754 = vpop.xlane.xlu0 %1753
        %v1755 = vsel %vm1742, %v1618, 0.0
        %1756 = vadd.xlane.f32.xlu0 %v1755
        %v1757 = vpop.xlane.xlu0 %1756
        %v1758 = vsel %vm1742, %v1619, 0.0
        %1759 = vadd.xlane.f32.xlu0 %v1758
        %v1760 = vpop.xlane.xlu0 %1759
        %v1761 = vsel %vm1742, %v1620, 0.0
        %1762 = vadd.xlane.f32.xlu0 %v1761
        %v1763 = vpop.xlane.xlu0 %1762
        %v1764 = vsel %vm1742, %v1621, 0.0
        %1765 = vadd.xlane.f32.xlu0 %v1764
        %v1766 = vpop.xlane.xlu0 %1765
        %v1767 = vsel %vm1742, %v1622, 0.0
        %1768 = vadd.xlane.f32.xlu0 %v1767
        %v1769 = vpop.xlane.xlu0 %1768
        %v1770 = vsel %vm1742, %v1623, 0.0
        %1771 = vadd.xlane.f32.xlu0 %v1770
        %v1772 = vpop.xlane.xlu0 %1771
        %v1773 = vsel %vm1742, %v1624, 0.0
        %1774 = vadd.xlane.f32.xlu0 %v1773
        %v1775 = vpop.xlane.xlu0 %1774
        %v1776 = vsel %vm1742, %v1625, 0.0
        %1777 = vadd.xlane.f32.xlu0 %v1776
        %v1778 = vpop.xlane.xlu0 %1777
        %v1779 = vsel %vm1742, %v1626, 0.0
        %1780 = vadd.xlane.f32.xlu0 %v1779
        %v1781 = vpop.xlane.xlu0 %1780
        %v1782 = vsel %vm1742, %v1627, 0.0
        %1783 = vadd.xlane.f32.xlu0 %v1782
        %v1784 = vpop.xlane.xlu0 %1783
        %v1785 = vsel %vm1742, %v1628, 0.0
        %1786 = vadd.xlane.f32.xlu0 %v1785
        %v1787 = vpop.xlane.xlu0 %1786
        %v1788 = vsel %vm1742, %v1629, 0.0
        %1789 = vadd.xlane.f32.xlu0 %v1788
        %v1790 = vpop.xlane.xlu0 %1789
        %v1791 = vsel %vm1742, %v1630, 0.0
        %1792 = vadd.xlane.f32.xlu0 %v1791
        %v1793 = vpop.xlane.xlu0 %1792
        %v1794 = vsel %vm1742, %v1631, 0.0
        %1795 = vadd.xlane.f32.xlu0 %v1794
        %v1796 = vpop.xlane.xlu0 %1795
        %v1797 = vsel %vm1742, %v1632, 0.0
        %1798 = vadd.xlane.f32.xlu0 %v1797
        %v1799 = vpop.xlane.xlu0 %1798
        %v1800 = vsel %vm1742, %v1633, 0.0
        %1801 = vadd.xlane.f32.xlu0 %v1800
        %v1802 = vpop.xlane.xlu0 %1801
        %v1803 = vsel %vm1742, %v1634, 0.0
        %1804 = vadd.xlane.f32.xlu0 %v1803
        %v1805 = vpop.xlane.xlu0 %1804
        %v1806 = vsel %vm1742, %v1635, 0.0
        %1807 = vadd.xlane.f32.xlu0 %v1806
        %v1808 = vpop.xlane.xlu0 %1807
        %v1809 = vsel %vm1742, %v1636, 0.0
        %1810 = vadd.xlane.f32.xlu0 %v1809
        %v1811 = vpop.xlane.xlu0 %1810
        %v1812 = vsel %vm1742, %v1637, 0.0
        %1813 = vadd.xlane.f32.xlu0 %v1812
        %v1814 = vpop.xlane.xlu0 %1813
        %v1815 = vsel %vm1742, %v1638, 0.0
        %1816 = vadd.xlane.f32.xlu0 %v1815
        %v1817 = vpop.xlane.xlu0 %1816
        %v1818 = vsel %vm1742, %v1639, 0.0
        %1819 = vadd.xlane.f32.xlu0 %v1818
        %v1820 = vpop.xlane.xlu0 %1819
        %v1821 = vsel %vm1742, %v1640, 0.0
        %1822 = vadd.xlane.f32.xlu0 %v1821
        %v1823 = vpop.xlane.xlu0 %1822
        %v1824 = vsel %vm1742, %v1641, 0.0
        %1825 = vadd.xlane.f32.xlu0 %v1824
        %v1826 = vpop.xlane.xlu0 %1825
        %v1827 = vsel %vm1742, %v1642, 0.0
        %1828 = vadd.xlane.f32.xlu0 %v1827
        %v1829 = vpop.xlane.xlu0 %1828
        %v1830 = vsel %vm1742, %v1643, 0.0
        %1831 = vadd.xlane.f32.xlu0 %v1830
        %v1832 = vpop.xlane.xlu0 %1831
        %v1833 = vsel %vm1742, %v1644, 0.0
        %1834 = vadd.xlane.f32.xlu0 %v1833
        %v1835 = vpop.xlane.xlu0 %1834
        %v1836 = vsel %vm1742, %v1645, 0.0
        %1837 = vadd.xlane.f32.xlu0 %v1836
        %v1838 = vpop.xlane.xlu0 %1837
        %v1839 = vsel %vm1742, %v1646, 0.0
        %1840 = vadd.xlane.f32.xlu0 %v1839
        %v1841 = vpop.xlane.xlu0 %1840
        %v1842 = vsel %vm1742, %v1647, 0.0
        %1843 = vadd.xlane.f32.xlu0 %v1842
        %v1844 = vpop.xlane.xlu0 %1843
        %v1845 = vsel %vm1742, %v1648, 0.0
        %1846 = vadd.xlane.f32.xlu0 %v1845
        %v1847 = vpop.xlane.xlu0 %1846
        %v1848 = vsel %vm1742, %v1649, 0.0
        %1849 = vadd.xlane.f32.xlu0 %v1848
        %v1850 = vpop.xlane.xlu0 %1849
        %v1851 = vsel %vm1742, %v1650, 0.0
        %1852 = vadd.xlane.f32.xlu0 %v1851
        %v1853 = vpop.xlane.xlu0 %1852
        %v1854 = vsel %vm1742, %v1651, 0.0
        %1855 = vadd.xlane.f32.xlu0 %v1854
        %v1856 = vpop.xlane.xlu0 %1855
        %v1857 = vsel %vm1742, %v1652, 0.0
        %1858 = vadd.xlane.f32.xlu0 %v1857
        %v1859 = vpop.xlane.xlu0 %1858
        %v1860 = vsel %vm1742, %v1653, 0.0
        %1861 = vadd.xlane.f32.xlu0 %v1860
        %v1862 = vpop.xlane.xlu0 %1861
        %v1863 = vsel %vm1742, %v1654, 0.0
        %1864 = vadd.xlane.f32.xlu0 %v1863
        %v1865 = vpop.xlane.xlu0 %1864
        %v1866 = vsel %vm1742, %v1655, 0.0
        %1867 = vadd.xlane.f32.xlu0 %v1866
        %v1868 = vpop.xlane.xlu0 %1867
        %v1869 = vsel %vm1742, %v1656, 0.0
        %1870 = vadd.xlane.f32.xlu0 %v1869
        %v1871 = vpop.xlane.xlu0 %1870
        %v1872 = vsel %vm1742, %v1657, 0.0
        %1873 = vadd.xlane.f32.xlu0 %v1872
        %v1874 = vpop.xlane.xlu0 %1873
        %v1875 = vsel %vm1742, %v1658, 0.0
        %1876 = vadd.xlane.f32.xlu0 %v1875
        %v1877 = vpop.xlane.xlu0 %1876
        %v1878 = vsel %vm1742, %v1659, 0.0
        %1879 = vadd.xlane.f32.xlu0 %v1878
        %v1880 = vpop.xlane.xlu0 %1879
        %v1881 = vsel %vm1742, %v1660, 0.0
        %1882 = vadd.xlane.f32.xlu0 %v1881
        %v1883 = vpop.xlane.xlu0 %1882
        %v1884 = vsel %vm1742, %v1661, 0.0
        %1885 = vadd.xlane.f32.xlu0 %v1884
        %v1886 = vpop.xlane.xlu0 %1885
        %v1887 = vsel %vm1742, %v1662, 0.0
        %1888 = vadd.xlane.f32.xlu0 %v1887
        %v1889 = vpop.xlane.xlu0 %1888
        %v1890 = vsel %vm1742, %v1663, 0.0
        %1891 = vadd.xlane.f32.xlu0 %v1890
        %v1892 = vpop.xlane.xlu0 %1891
        %v1893 = vsel %vm1742, %v1664, 0.0
        %1894 = vadd.xlane.f32.xlu0 %v1893
        %v1895 = vpop.xlane.xlu0 %1894
        %v1896 = vsel %vm1742, %v1665, 0.0
        %1897 = vadd.xlane.f32.xlu0 %v1896
        %v1898 = vpop.xlane.xlu0 %1897
        %v1899 = vsel %vm1742, %v1666, 0.0
        %1900 = vadd.xlane.f32.xlu0 %v1899
        %v1901 = vpop.xlane.xlu0 %1900
        %v1902 = vsel %vm1742, %v1667, 0.0
        %1903 = vadd.xlane.f32.xlu0 %v1902
        %v1904 = vpop.xlane.xlu0 %1903
        %v1905 = vsel %vm1742, %v1668, 0.0
        %1906 = vadd.xlane.f32.xlu0 %v1905
        %v1907 = vpop.xlane.xlu0 %1906
        %v1908 = vsel %vm1742, %v1669, 0.0
        %1909 = vadd.xlane.f32.xlu0 %v1908
        %v1910 = vpop.xlane.xlu0 %1909
        %v1911 = vsel %vm1742, %v1670, 0.0
        %1912 = vadd.xlane.f32.xlu0 %v1911
        %v1913 = vpop.xlane.xlu0 %1912
        %v1914 = vsel %vm1742, %v1671, 0.0
        %1915 = vadd.xlane.f32.xlu0 %v1914
        %v1916 = vpop.xlane.xlu0 %1915
        %v1917 = vsel %vm1742, %v1672, 0.0
        %1918 = vadd.xlane.f32.xlu0 %v1917
        %v1919 = vpop.xlane.xlu0 %1918
        %v1920 = vsel %vm1742, %v1673, 0.0
        %1921 = vadd.xlane.f32.xlu0 %v1920
        %v1922 = vpop.xlane.xlu0 %1921
        %v1923 = vsel %vm1742, %v1674, 0.0
        %1924 = vadd.xlane.f32.xlu0 %v1923
        %v1925 = vpop.xlane.xlu0 %1924
        %v1926 = vsel %vm1742, %v1675, 0.0
        %1927 = vadd.xlane.f32.xlu0 %v1926
        %v1928 = vpop.xlane.xlu0 %1927
        %v1929 = vsel %vm1742, %v1676, 0.0
        %1930 = vadd.xlane.f32.xlu0 %v1929
        %v1931 = vpop.xlane.xlu0 %1930
        %v1932 = vsel %vm1742, %v1677, 0.0
        %1933 = vadd.xlane.f32.xlu0 %v1932
        %v1934 = vpop.xlane.xlu0 %1933
        %v1935 = vsel %vm1742, %v1678, 0.0
        %1936 = vadd.xlane.f32.xlu0 %v1935
        %v1937 = vpop.xlane.xlu0 %1936
        %v1938 = vsel %vm1742, %v1679, 0.0
        %1939 = vadd.xlane.f32.xlu0 %v1938
        %v1940 = vpop.xlane.xlu0 %1939
        %v1941 = vsel %vm1742, %v1680, 0.0
        %1942 = vadd.xlane.f32.xlu0 %v1941
        %v1943 = vpop.xlane.xlu0 %1942
        %v1944 = vsel %vm1742, %v1681, 0.0
        %1945 = vadd.xlane.f32.xlu0 %v1944
        %v1946 = vpop.xlane.xlu0 %1945
        %v1947 = vsel %vm1742, %v1682, 0.0
        %1948 = vadd.xlane.f32.xlu0 %v1947
        %v1949 = vpop.xlane.xlu0 %1948
        %v1950 = vsel %vm1742, %v1683, 0.0
        %1951 = vadd.xlane.f32.xlu0 %v1950
        %v1952 = vpop.xlane.xlu0 %1951
        %v1953 = vsel %vm1742, %v1684, 0.0
        %1954 = vadd.xlane.f32.xlu0 %v1953
        %v1955 = vpop.xlane.xlu0 %1954
        %v1956 = vsel %vm1742, %v1685, 0.0
        %1957 = vadd.xlane.f32.xlu0 %v1956
        %v1958 = vpop.xlane.xlu0 %1957
        %v1959 = vsel %vm1742, %v1686, 0.0
        %1960 = vadd.xlane.f32.xlu0 %v1959
        %v1961 = vpop.xlane.xlu0 %1960
        %v1962 = vsel %vm1742, %v1687, 0.0
        %1963 = vadd.xlane.f32.xlu0 %v1962
        %v1964 = vpop.xlane.xlu0 %1963
        %v1965 = vsel %vm1742, %v1688, 0.0
        %1966 = vadd.xlane.f32.xlu0 %v1965
        %v1967 = vpop.xlane.xlu0 %1966
        %v1968 = vsel %vm1742, %v1689, 0.0
        %1969 = vadd.xlane.f32.xlu0 %v1968
        %v1970 = vpop.xlane.xlu0 %1969
        %v1971 = vsel %vm1742, %v1690, 0.0
        %1972 = vadd.xlane.f32.xlu0 %v1971
        %v1973 = vpop.xlane.xlu0 %1972
        %v1974 = vsel %vm1742, %v1691, 0.0
        %1975 = vadd.xlane.f32.xlu0 %v1974
        %v1976 = vpop.xlane.xlu0 %1975
        %v1977 = vsel %vm1742, %v1692, 0.0
        %1978 = vadd.xlane.f32.xlu0 %v1977
        %v1979 = vpop.xlane.xlu0 %1978
        %v1980 = vsel %vm1742, %v1693, 0.0
        %1981 = vadd.xlane.f32.xlu0 %v1980
        %v1982 = vpop.xlane.xlu0 %1981
        %v1983 = vsel %vm1742, %v1694, 0.0
        %1984 = vadd.xlane.f32.xlu0 %v1983
        %v1985 = vpop.xlane.xlu0 %1984
        %v1986 = vsel %vm1742, %v1695, 0.0
        %1987 = vadd.xlane.f32.xlu0 %v1986
        %v1988 = vpop.xlane.xlu0 %1987
        %v1989 = vsel %vm1742, %v1696, 0.0
        %1990 = vadd.xlane.f32.xlu0 %v1989
        %v1991 = vpop.xlane.xlu0 %1990
        %v1992 = vsel %vm1742, %v1697, 0.0
        %1993 = vadd.xlane.f32.xlu0 %v1992
        %v1994 = vpop.xlane.xlu0 %1993
        %v1995 = vsel %vm1742, %v1698, 0.0
        %1996 = vadd.xlane.f32.xlu0 %v1995
        %v1997 = vpop.xlane.xlu0 %1996
        %v1998 = vsel %vm1742, %v1699, 0.0
        %1999 = vadd.xlane.f32.xlu0 %v1998
        %v2000 = vpop.xlane.xlu0 %1999
        %v2001 = vsel %vm1742, %v1700, 0.0
        %2002 = vadd.xlane.f32.xlu0 %v2001
        %v2003 = vpop.xlane.xlu0 %2002
        %v2004 = vsel %vm1742, %v1701, 0.0
        %2005 = vadd.xlane.f32.xlu0 %v2004
        %v2006 = vpop.xlane.xlu0 %2005
        %v2007 = vsel %vm1742, %v1702, 0.0
        %2008 = vadd.xlane.f32.xlu0 %v2007
        %v2009 = vpop.xlane.xlu0 %2008
        %v2010 = vsel %vm1742, %v1703, 0.0
        %2011 = vadd.xlane.f32.xlu0 %v2010
        %v2012 = vpop.xlane.xlu0 %2011
        %v2013 = vsel %vm1742, %v1704, 0.0
        %2014 = vadd.xlane.f32.xlu0 %v2013
        %v2015 = vpop.xlane.xlu0 %2014
        %v2016 = vsel %vm1742, %v1705, 0.0
        %2017 = vadd.xlane.f32.xlu0 %v2016
        %v2018 = vpop.xlane.xlu0 %2017
        %v2019 = vsel %vm1742, %v1706, 0.0
        %2020 = vadd.xlane.f32.xlu0 %v2019
        %v2021 = vpop.xlane.xlu0 %2020
        %v2022 = vsel %vm1742, %v1707, 0.0
        %2023 = vadd.xlane.f32.xlu0 %v2022
        %v2024 = vpop.xlane.xlu0 %2023
        %v2025 = vsel %vm1742, %v1708, 0.0
        %2026 = vadd.xlane.f32.xlu0 %v2025
        %v2027 = vpop.xlane.xlu0 %2026
        %v2028 = vsel %vm1742, %v1709, 0.0
        %2029 = vadd.xlane.f32.xlu0 %v2028
        %v2030 = vpop.xlane.xlu0 %2029
        %v2031 = vsel %vm1742, %v1710, 0.0
        %2032 = vadd.xlane.f32.xlu0 %v2031
        %v2033 = vpop.xlane.xlu0 %2032
        %v2034 = vsel %vm1742, %v1711, 0.0
        %2035 = vadd.xlane.f32.xlu0 %v2034
        %v2036 = vpop.xlane.xlu0 %2035
        %v2037 = vsel %vm1742, %v1712, 0.0
        %2038 = vadd.xlane.f32.xlu0 %v2037
        %v2039 = vpop.xlane.xlu0 %2038
        %v2040 = vsel %vm1742, %v1713, 0.0
        %2041 = vadd.xlane.f32.xlu0 %v2040
        %v2042 = vpop.xlane.xlu0 %2041
        %v2043 = vsel %vm1742, %v1714, 0.0
        %2044 = vadd.xlane.f32.xlu0 %v2043
        %v2045 = vpop.xlane.xlu0 %2044
        %v2046 = vsel %vm1742, %v1715, 0.0
        %2047 = vadd.xlane.f32.xlu0 %v2046
        %v2048 = vpop.xlane.xlu0 %2047
        %v2049 = vsel %vm1742, %v1716, 0.0
        %2050 = vadd.xlane.f32.xlu0 %v2049
        %v2051 = vpop.xlane.xlu0 %2050
        %v2052 = vsel %vm1742, %v1717, 0.0
        %2053 = vadd.xlane.f32.xlu0 %v2052
        %v2054 = vpop.xlane.xlu0 %2053
        %v2055 = vsel %vm1742, %v1718, 0.0
        %2056 = vadd.xlane.f32.xlu0 %v2055
        %v2057 = vpop.xlane.xlu0 %2056
        %v2058 = vsel %vm1742, %v1719, 0.0
        %2059 = vadd.xlane.f32.xlu0 %v2058
        %v2060 = vpop.xlane.xlu0 %2059
        %v2061 = vsel %vm1742, %v1720, 0.0
        %2062 = vadd.xlane.f32.xlu0 %v2061
        %v2063 = vpop.xlane.xlu0 %2062
        %v2064 = vsel %vm1742, %v1721, 0.0
        %2065 = vadd.xlane.f32.xlu0 %v2064
        %v2066 = vpop.xlane.xlu0 %2065
        %v2067 = vsel %vm1742, %v1722, 0.0
        %2068 = vadd.xlane.f32.xlu0 %v2067
        %v2069 = vpop.xlane.xlu0 %2068
        %v2070 = vsel %vm1742, %v1723, 0.0
        %2071 = vadd.xlane.f32.xlu0 %v2070
        %v2072 = vpop.xlane.xlu0 %2071
        %v2073 = vsel %vm1742, %v1724, 0.0
        %2074 = vadd.xlane.f32.xlu0 %v2073
        %v2075 = vpop.xlane.xlu0 %2074
        %v2076 = vsel %vm1742, %v1725, 0.0
        %2077 = vadd.xlane.f32.xlu0 %v2076
        %v2078 = vpop.xlane.xlu0 %2077
        %v2079 = vsel %vm1742, %v1726, 0.0
        %2080 = vadd.xlane.f32.xlu0 %v2079
        %v2081 = vpop.xlane.xlu0 %2080
        %v2082 = vsel %vm1742, %v1727, 0.0
        %2083 = vadd.xlane.f32.xlu0 %v2082
        %v2084 = vpop.xlane.xlu0 %2083
        %v2085 = vsel %vm1742, %v1728, 0.0
        %2086 = vadd.xlane.f32.xlu0 %v2085
        %v2087 = vpop.xlane.xlu0 %2086
        %v2088 = vsel %vm1742, %v1729, 0.0
        %2089 = vadd.xlane.f32.xlu0 %v2088
        %v2090 = vpop.xlane.xlu0 %2089
        %v2091 = vsel %vm1742, %v1730, 0.0
        %2092 = vadd.xlane.f32.xlu0 %v2091
        %v2093 = vpop.xlane.xlu0 %2092
        %v2094 = vsel %vm1742, %v1731, 0.0
        %2095 = vadd.xlane.f32.xlu0 %v2094
        %v2096 = vpop.xlane.xlu0 %2095
        %v2097 = vsel %vm1742, %v1732, 0.0
        %2098 = vadd.xlane.f32.xlu0 %v2097
        %v2099 = vpop.xlane.xlu0 %2098
        %v2100 = vsel %vm1742, %v1733, 0.0
        %2101 = vadd.xlane.f32.xlu0 %v2100
        %v2102 = vpop.xlane.xlu0 %2101
        %v2103 = vsel %vm1742, %v1734, 0.0
        %2104 = vadd.xlane.f32.xlu0 %v2103
        %v2105 = vpop.xlane.xlu0 %2104
        %v2106 = vsel %vm1742, %v1735, 0.0
        %2107 = vadd.xlane.f32.xlu0 %v2106
        %v2108 = vpop.xlane.xlu0 %2107
        %v2109 = vsel %vm1742, %v1736, 0.0
        %2110 = vadd.xlane.f32.xlu0 %v2109
        %v2111 = vpop.xlane.xlu0 %2110
        %v2112 = vsel %vm1742, %v1737, 0.0
        %2113 = vadd.xlane.f32.xlu0 %v2112
        %v2114 = vpop.xlane.xlu0 %2113
        %v2115 = vsel %vm1742, %v1738, 0.0
        %2116 = vadd.xlane.f32.xlu0 %v2115
        %v2117 = vpop.xlane.xlu0 %2116
        %v2118 = vsel %vm1742, %v1739, 0.0
        %2119 = vadd.xlane.f32.xlu0 %v2118
        %v2120 = vpop.xlane.xlu0 %2119
        %v2121 = vsel %vm1742, %v1740, 0.0
        %2122 = vadd.xlane.f32.xlu0 %v2121
        %v2123 = vpop.xlane.xlu0 %2122
        %v2124 = vsel %vm1742, %v1741, 0.0
        %2125 = vadd.xlane.f32.xlu0 %v2124
        %v2126 = vpop.xlane.xlu0 %2125
        %v2255 = vlaneseq
        %v2256 = vand.u32 %v2255, 127
        %v2257 = vlaneseq
        %v2258 = vshrl.u32 %v2257, 7
        %v2259 = vsub.s32 %v2256, %v2258
        %v2260 = vrot.slane %v1745, %v2259
        %v2261 = vlaneseq
        %v2262 = vshrl.u32 %v2261, 7
        %v2263 = vsub.s32 %v2256, %v2262
        %v2264 = vrot.slane %v1748, %v2263
        %v2265 = vlaneseq
        %v2266 = vshrl.u32 %v2265, 7
        %v2267 = vsub.s32 %v2256, %v2266
        %v2268 = vrot.slane %v1751, %v2267
        %v2269 = vlaneseq
        %v2270 = vshrl.u32 %v2269, 7
        %v2271 = vsub.s32 %v2256, %v2270
        %v2272 = vrot.slane %v1754, %v2271
        %v2273 = vlaneseq
        %v2274 = vshrl.u32 %v2273, 7
        %v2275 = vsub.s32 %v2256, %v2274
        %v2276 = vrot.slane %v1757, %v2275
        %v2277 = vlaneseq
        %v2278 = vshrl.u32 %v2277, 7
        %v2279 = vsub.s32 %v2256, %v2278
        %v2280 = vrot.slane %v1760, %v2279
        %v2281 = vlaneseq
        %v2282 = vshrl.u32 %v2281, 7
        %v2283 = vsub.s32 %v2256, %v2282
        %v2284 = vrot.slane %v1763, %v2283
        %v2285 = vlaneseq
        %v2286 = vshrl.u32 %v2285, 7
        %v2287 = vsub.s32 %v2256, %v2286
        %v2288 = vrot.slane %v1766, %v2287
        %v2289 = vlaneseq
        %v2290 = vshrl.u32 %v2289, 7
        %v2291 = vsub.s32 %v2256, %v2290
        %v2292 = vrot.slane %v1769, %v2291
        %v2293 = vlaneseq
        %v2294 = vshrl.u32 %v2293, 7
        %v2295 = vsub.s32 %v2256, %v2294
        %v2296 = vrot.slane %v1772, %v2295
        %v2297 = vlaneseq
        %v2298 = vshrl.u32 %v2297, 7
        %v2299 = vsub.s32 %v2256, %v2298
        %v2300 = vrot.slane %v1775, %v2299
        %v2301 = vlaneseq
        %v2302 = vshrl.u32 %v2301, 7
        %v2303 = vsub.s32 %v2256, %v2302
        %v2304 = vrot.slane %v1778, %v2303
        %v2305 = vlaneseq
        %v2306 = vshrl.u32 %v2305, 7
        %v2307 = vsub.s32 %v2256, %v2306
        %v2308 = vrot.slane %v1781, %v2307
        %v2309 = vlaneseq
        %v2310 = vshrl.u32 %v2309, 7
        %v2311 = vsub.s32 %v2256, %v2310
        %v2312 = vrot.slane %v1784, %v2311
        %v2313 = vlaneseq
        %v2314 = vshrl.u32 %v2313, 7
        %v2315 = vsub.s32 %v2256, %v2314
        %v2316 = vrot.slane %v1787, %v2315
        %v2317 = vlaneseq
        %v2318 = vshrl.u32 %v2317, 7
        %v2319 = vsub.s32 %v2256, %v2318
        %v2320 = vrot.slane %v1790, %v2319
        %v2321 = vlaneseq
        %v2322 = vshrl.u32 %v2321, 7
        %v2323 = vsub.s32 %v2256, %v2322
        %v2324 = vrot.slane %v1793, %v2323
        %v2325 = vlaneseq
        %v2326 = vshrl.u32 %v2325, 7
        %v2327 = vsub.s32 %v2256, %v2326
        %v2328 = vrot.slane %v1796, %v2327
        %v2329 = vlaneseq
        %v2330 = vshrl.u32 %v2329, 7
        %v2331 = vsub.s32 %v2256, %v2330
        %v2332 = vrot.slane %v1799, %v2331
        %v2333 = vlaneseq
        %v2334 = vshrl.u32 %v2333, 7
        %v2335 = vsub.s32 %v2256, %v2334
        %v2336 = vrot.slane %v1802, %v2335
        %v2337 = vlaneseq
        %v2338 = vshrl.u32 %v2337, 7
        %v2339 = vsub.s32 %v2256, %v2338
        %v2340 = vrot.slane %v1805, %v2339
        %v2341 = vlaneseq
        %v2342 = vshrl.u32 %v2341, 7
        %v2343 = vsub.s32 %v2256, %v2342
        %v2344 = vrot.slane %v1808, %v2343
        %v2345 = vlaneseq
        %v2346 = vshrl.u32 %v2345, 7
        %v2347 = vsub.s32 %v2256, %v2346
        %v2348 = vrot.slane %v1811, %v2347
        %v2349 = vlaneseq
        %v2350 = vshrl.u32 %v2349, 7
        %v2351 = vsub.s32 %v2256, %v2350
        %v2352 = vrot.slane %v1814, %v2351
        %v2353 = vlaneseq
        %v2354 = vshrl.u32 %v2353, 7
        %v2355 = vsub.s32 %v2256, %v2354
        %v2356 = vrot.slane %v1817, %v2355
        %v2357 = vlaneseq
        %v2358 = vshrl.u32 %v2357, 7
        %v2359 = vsub.s32 %v2256, %v2358
        %v2360 = vrot.slane %v1820, %v2359
        %v2361 = vlaneseq
        %v2362 = vshrl.u32 %v2361, 7
        %v2363 = vsub.s32 %v2256, %v2362
        %v2364 = vrot.slane %v1823, %v2363
        %v2365 = vlaneseq
        %v2366 = vshrl.u32 %v2365, 7
        %v2367 = vsub.s32 %v2256, %v2366
        %v2368 = vrot.slane %v1826, %v2367
        %v2369 = vlaneseq
        %v2370 = vshrl.u32 %v2369, 7
        %v2371 = vsub.s32 %v2256, %v2370
        %v2372 = vrot.slane %v1829, %v2371
        %v2373 = vlaneseq
        %v2374 = vshrl.u32 %v2373, 7
        %v2375 = vsub.s32 %v2256, %v2374
        %v2376 = vrot.slane %v1832, %v2375
        %v2377 = vlaneseq
        %v2378 = vshrl.u32 %v2377, 7
        %v2379 = vsub.s32 %v2256, %v2378
        %v2380 = vrot.slane %v1835, %v2379
        %v2381 = vlaneseq
        %v2382 = vshrl.u32 %v2381, 7
        %v2383 = vsub.s32 %v2256, %v2382
        %v2384 = vrot.slane %v1838, %v2383
        %v2385 = vlaneseq
        %v2386 = vshrl.u32 %v2385, 7
        %v2387 = vsub.s32 %v2256, %v2386
        %v2388 = vrot.slane %v1841, %v2387
        %v2389 = vlaneseq
        %v2390 = vshrl.u32 %v2389, 7
        %v2391 = vsub.s32 %v2256, %v2390
        %v2392 = vrot.slane %v1844, %v2391
        %v2393 = vlaneseq
        %v2394 = vshrl.u32 %v2393, 7
        %v2395 = vsub.s32 %v2256, %v2394
        %v2396 = vrot.slane %v1847, %v2395
        %v2397 = vlaneseq
        %v2398 = vshrl.u32 %v2397, 7
        %v2399 = vsub.s32 %v2256, %v2398
        %v2400 = vrot.slane %v1850, %v2399
        %v2401 = vlaneseq
        %v2402 = vshrl.u32 %v2401, 7
        %v2403 = vsub.s32 %v2256, %v2402
        %v2404 = vrot.slane %v1853, %v2403
        %v2405 = vlaneseq
        %v2406 = vshrl.u32 %v2405, 7
        %v2407 = vsub.s32 %v2256, %v2406
        %v2408 = vrot.slane %v1856, %v2407
        %v2409 = vlaneseq
        %v2410 = vshrl.u32 %v2409, 7
        %v2411 = vsub.s32 %v2256, %v2410
        %v2412 = vrot.slane %v1859, %v2411
        %v2413 = vlaneseq
        %v2414 = vshrl.u32 %v2413, 7
        %v2415 = vsub.s32 %v2256, %v2414
        %v2416 = vrot.slane %v1862, %v2415
        %v2417 = vlaneseq
        %v2418 = vshrl.u32 %v2417, 7
        %v2419 = vsub.s32 %v2256, %v2418
        %v2420 = vrot.slane %v1865, %v2419
        %v2421 = vlaneseq
        %v2422 = vshrl.u32 %v2421, 7
        %v2423 = vsub.s32 %v2256, %v2422
        %v2424 = vrot.slane %v1868, %v2423
        %v2425 = vlaneseq
        %v2426 = vshrl.u32 %v2425, 7
        %v2427 = vsub.s32 %v2256, %v2426
        %v2428 = vrot.slane %v1871, %v2427
        %v2429 = vlaneseq
        %v2430 = vshrl.u32 %v2429, 7
        %v2431 = vsub.s32 %v2256, %v2430
        %v2432 = vrot.slane %v1874, %v2431
        %v2433 = vlaneseq
        %v2434 = vshrl.u32 %v2433, 7
        %v2435 = vsub.s32 %v2256, %v2434
        %v2436 = vrot.slane %v1877, %v2435
        %v2437 = vlaneseq
        %v2438 = vshrl.u32 %v2437, 7
        %v2439 = vsub.s32 %v2256, %v2438
        %v2440 = vrot.slane %v1880, %v2439
        %v2441 = vlaneseq
        %v2442 = vshrl.u32 %v2441, 7
        %v2443 = vsub.s32 %v2256, %v2442
        %v2444 = vrot.slane %v1883, %v2443
        %v2445 = vlaneseq
        %v2446 = vshrl.u32 %v2445, 7
        %v2447 = vsub.s32 %v2256, %v2446
        %v2448 = vrot.slane %v1886, %v2447
        %v2449 = vlaneseq
        %v2450 = vshrl.u32 %v2449, 7
        %v2451 = vsub.s32 %v2256, %v2450
        %v2452 = vrot.slane %v1889, %v2451
        %v2453 = vlaneseq
        %v2454 = vshrl.u32 %v2453, 7
        %v2455 = vsub.s32 %v2256, %v2454
        %v2456 = vrot.slane %v1892, %v2455
        %v2457 = vlaneseq
        %v2458 = vshrl.u32 %v2457, 7
        %v2459 = vsub.s32 %v2256, %v2458
        %v2460 = vrot.slane %v1895, %v2459
        %v2461 = vlaneseq
        %v2462 = vshrl.u32 %v2461, 7
        %v2463 = vsub.s32 %v2256, %v2462
        %v2464 = vrot.slane %v1898, %v2463
        %v2465 = vlaneseq
        %v2466 = vshrl.u32 %v2465, 7
        %v2467 = vsub.s32 %v2256, %v2466
        %v2468 = vrot.slane %v1901, %v2467
        %v2469 = vlaneseq
        %v2470 = vshrl.u32 %v2469, 7
        %v2471 = vsub.s32 %v2256, %v2470
        %v2472 = vrot.slane %v1904, %v2471
        %v2473 = vlaneseq
        %v2474 = vshrl.u32 %v2473, 7
        %v2475 = vsub.s32 %v2256, %v2474
        %v2476 = vrot.slane %v1907, %v2475
        %v2477 = vlaneseq
        %v2478 = vshrl.u32 %v2477, 7
        %v2479 = vsub.s32 %v2256, %v2478
        %v2480 = vrot.slane %v1910, %v2479
        %v2481 = vlaneseq
        %v2482 = vshrl.u32 %v2481, 7
        %v2483 = vsub.s32 %v2256, %v2482
        %v2484 = vrot.slane %v1913, %v2483
        %v2485 = vlaneseq
        %v2486 = vshrl.u32 %v2485, 7
        %v2487 = vsub.s32 %v2256, %v2486
        %v2488 = vrot.slane %v1916, %v2487
        %v2489 = vlaneseq
        %v2490 = vshrl.u32 %v2489, 7
        %v2491 = vsub.s32 %v2256, %v2490
        %v2492 = vrot.slane %v1919, %v2491
        %v2493 = vlaneseq
        %v2494 = vshrl.u32 %v2493, 7
        %v2495 = vsub.s32 %v2256, %v2494
        %v2496 = vrot.slane %v1922, %v2495
        %v2497 = vlaneseq
        %v2498 = vshrl.u32 %v2497, 7
        %v2499 = vsub.s32 %v2256, %v2498
        %v2500 = vrot.slane %v1925, %v2499
        %v2501 = vlaneseq
        %v2502 = vshrl.u32 %v2501, 7
        %v2503 = vsub.s32 %v2256, %v2502
        %v2504 = vrot.slane %v1928, %v2503
        %v2505 = vlaneseq
        %v2506 = vshrl.u32 %v2505, 7
        %v2507 = vsub.s32 %v2256, %v2506
        %v2508 = vrot.slane %v1931, %v2507
        %v2509 = vlaneseq
        %v2510 = vshrl.u32 %v2509, 7
        %v2511 = vsub.s32 %v2256, %v2510
        %v2512 = vrot.slane %v1934, %v2511
        %v2513 = vlaneseq
        %v2514 = vshrl.u32 %v2513, 7
        %v2515 = vsub.s32 %v2256, %v2514
        %v2516 = vrot.slane %v1937, %v2515
        %v2517 = vlaneseq
        %v2518 = vshrl.u32 %v2517, 7
        %v2519 = vsub.s32 %v2256, %v2518
        %v2520 = vrot.slane %v1940, %v2519
        %v2521 = vlaneseq
        %v2522 = vshrl.u32 %v2521, 7
        %v2523 = vsub.s32 %v2256, %v2522
        %v2524 = vrot.slane %v1943, %v2523
        %v2525 = vlaneseq
        %v2526 = vshrl.u32 %v2525, 7
        %v2527 = vsub.s32 %v2256, %v2526
        %v2528 = vrot.slane %v1946, %v2527
        %v2529 = vlaneseq
        %v2530 = vshrl.u32 %v2529, 7
        %v2531 = vsub.s32 %v2256, %v2530
        %v2532 = vrot.slane %v1949, %v2531
        %v2533 = vlaneseq
        %v2534 = vshrl.u32 %v2533, 7
        %v2535 = vsub.s32 %v2256, %v2534
        %v2536 = vrot.slane %v1952, %v2535
        %v2537 = vlaneseq
        %v2538 = vshrl.u32 %v2537, 7
        %v2539 = vsub.s32 %v2256, %v2538
        %v2540 = vrot.slane %v1955, %v2539
        %v2541 = vlaneseq
        %v2542 = vshrl.u32 %v2541, 7
        %v2543 = vsub.s32 %v2256, %v2542
        %v2544 = vrot.slane %v1958, %v2543
        %v2545 = vlaneseq
        %v2546 = vshrl.u32 %v2545, 7
        %v2547 = vsub.s32 %v2256, %v2546
        %v2548 = vrot.slane %v1961, %v2547
        %v2549 = vlaneseq
        %v2550 = vshrl.u32 %v2549, 7
        %v2551 = vsub.s32 %v2256, %v2550
        %v2552 = vrot.slane %v1964, %v2551
        %v2553 = vlaneseq
        %v2554 = vshrl.u32 %v2553, 7
        %v2555 = vsub.s32 %v2256, %v2554
        %v2556 = vrot.slane %v1967, %v2555
        %v2557 = vlaneseq
        %v2558 = vshrl.u32 %v2557, 7
        %v2559 = vsub.s32 %v2256, %v2558
        %v2560 = vrot.slane %v1970, %v2559
        %v2561 = vlaneseq
        %v2562 = vshrl.u32 %v2561, 7
        %v2563 = vsub.s32 %v2256, %v2562
        %v2564 = vrot.slane %v1973, %v2563
        %v2565 = vlaneseq
        %v2566 = vshrl.u32 %v2565, 7
        %v2567 = vsub.s32 %v2256, %v2566
        %v2568 = vrot.slane %v1976, %v2567
        %v2569 = vlaneseq
        %v2570 = vshrl.u32 %v2569, 7
        %v2571 = vsub.s32 %v2256, %v2570
        %v2572 = vrot.slane %v1979, %v2571
        %v2573 = vlaneseq
        %v2574 = vshrl.u32 %v2573, 7
        %v2575 = vsub.s32 %v2256, %v2574
        %v2576 = vrot.slane %v1982, %v2575
        %v2577 = vlaneseq
        %v2578 = vshrl.u32 %v2577, 7
        %v2579 = vsub.s32 %v2256, %v2578
        %v2580 = vrot.slane %v1985, %v2579
        %v2581 = vlaneseq
        %v2582 = vshrl.u32 %v2581, 7
        %v2583 = vsub.s32 %v2256, %v2582
        %v2584 = vrot.slane %v1988, %v2583
        %v2585 = vlaneseq
        %v2586 = vshrl.u32 %v2585, 7
        %v2587 = vsub.s32 %v2256, %v2586
        %v2588 = vrot.slane %v1991, %v2587
        %v2589 = vlaneseq
        %v2590 = vshrl.u32 %v2589, 7
        %v2591 = vsub.s32 %v2256, %v2590
        %v2592 = vrot.slane %v1994, %v2591
        %v2593 = vlaneseq
        %v2594 = vshrl.u32 %v2593, 7
        %v2595 = vsub.s32 %v2256, %v2594
        %v2596 = vrot.slane %v1997, %v2595
        %v2597 = vlaneseq
        %v2598 = vshrl.u32 %v2597, 7
        %v2599 = vsub.s32 %v2256, %v2598
        %v2600 = vrot.slane %v2000, %v2599
        %v2601 = vlaneseq
        %v2602 = vshrl.u32 %v2601, 7
        %v2603 = vsub.s32 %v2256, %v2602
        %v2604 = vrot.slane %v2003, %v2603
        %v2605 = vlaneseq
        %v2606 = vshrl.u32 %v2605, 7
        %v2607 = vsub.s32 %v2256, %v2606
        %v2608 = vrot.slane %v2006, %v2607
        %v2609 = vlaneseq
        %v2610 = vshrl.u32 %v2609, 7
        %v2611 = vsub.s32 %v2256, %v2610
        %v2612 = vrot.slane %v2009, %v2611
        %v2613 = vlaneseq
        %v2614 = vshrl.u32 %v2613, 7
        %v2615 = vsub.s32 %v2256, %v2614
        %v2616 = vrot.slane %v2012, %v2615
        %v2617 = vlaneseq
        %v2618 = vshrl.u32 %v2617, 7
        %v2619 = vsub.s32 %v2256, %v2618
        %v2620 = vrot.slane %v2015, %v2619
        %v2621 = vlaneseq
        %v2622 = vshrl.u32 %v2621, 7
        %v2623 = vsub.s32 %v2256, %v2622
        %v2624 = vrot.slane %v2018, %v2623
        %v2625 = vlaneseq
        %v2626 = vshrl.u32 %v2625, 7
        %v2627 = vsub.s32 %v2256, %v2626
        %v2628 = vrot.slane %v2021, %v2627
        %v2629 = vlaneseq
        %v2630 = vshrl.u32 %v2629, 7
        %v2631 = vsub.s32 %v2256, %v2630
        %v2632 = vrot.slane %v2024, %v2631
        %v2633 = vlaneseq
        %v2634 = vshrl.u32 %v2633, 7
        %v2635 = vsub.s32 %v2256, %v2634
        %v2636 = vrot.slane %v2027, %v2635
        %v2637 = vlaneseq
        %v2638 = vshrl.u32 %v2637, 7
        %v2639 = vsub.s32 %v2256, %v2638
        %v2640 = vrot.slane %v2030, %v2639
        %v2641 = vlaneseq
        %v2642 = vshrl.u32 %v2641, 7
        %v2643 = vsub.s32 %v2256, %v2642
        %v2644 = vrot.slane %v2033, %v2643
        %v2645 = vlaneseq
        %v2646 = vshrl.u32 %v2645, 7
        %v2647 = vsub.s32 %v2256, %v2646
        %v2648 = vrot.slane %v2036, %v2647
        %v2649 = vlaneseq
        %v2650 = vshrl.u32 %v2649, 7
        %v2651 = vsub.s32 %v2256, %v2650
        %v2652 = vrot.slane %v2039, %v2651
        %v2653 = vlaneseq
        %v2654 = vshrl.u32 %v2653, 7
        %v2655 = vsub.s32 %v2256, %v2654
        %v2656 = vrot.slane %v2042, %v2655
        %v2657 = vlaneseq
        %v2658 = vshrl.u32 %v2657, 7
        %v2659 = vsub.s32 %v2256, %v2658
        %v2660 = vrot.slane %v2045, %v2659
        %v2661 = vlaneseq
        %v2662 = vshrl.u32 %v2661, 7
        %v2663 = vsub.s32 %v2256, %v2662
        %v2664 = vrot.slane %v2048, %v2663
        %v2665 = vlaneseq
        %v2666 = vshrl.u32 %v2665, 7
        %v2667 = vsub.s32 %v2256, %v2666
        %v2668 = vrot.slane %v2051, %v2667
        %v2669 = vlaneseq
        %v2670 = vshrl.u32 %v2669, 7
        %v2671 = vsub.s32 %v2256, %v2670
        %v2672 = vrot.slane %v2054, %v2671
        %v2673 = vlaneseq
        %v2674 = vshrl.u32 %v2673, 7
        %v2675 = vsub.s32 %v2256, %v2674
        %v2676 = vrot.slane %v2057, %v2675
        %v2677 = vlaneseq
        %v2678 = vshrl.u32 %v2677, 7
        %v2679 = vsub.s32 %v2256, %v2678
        %v2680 = vrot.slane %v2060, %v2679
        %v2681 = vlaneseq
        %v2682 = vshrl.u32 %v2681, 7
        %v2683 = vsub.s32 %v2256, %v2682
        %v2684 = vrot.slane %v2063, %v2683
        %v2685 = vlaneseq
        %v2686 = vshrl.u32 %v2685, 7
        %v2687 = vsub.s32 %v2256, %v2686
        %v2688 = vrot.slane %v2066, %v2687
        %v2689 = vlaneseq
        %v2690 = vshrl.u32 %v2689, 7
        %v2691 = vsub.s32 %v2256, %v2690
        %v2692 = vrot.slane %v2069, %v2691
        %v2693 = vlaneseq
        %v2694 = vshrl.u32 %v2693, 7
        %v2695 = vsub.s32 %v2256, %v2694
        %v2696 = vrot.slane %v2072, %v2695
        %v2697 = vlaneseq
        %v2698 = vshrl.u32 %v2697, 7
        %v2699 = vsub.s32 %v2256, %v2698
        %v2700 = vrot.slane %v2075, %v2699
        %v2701 = vlaneseq
        %v2702 = vshrl.u32 %v2701, 7
        %v2703 = vsub.s32 %v2256, %v2702
        %v2704 = vrot.slane %v2078, %v2703
        %v2705 = vlaneseq
        %v2706 = vshrl.u32 %v2705, 7
        %v2707 = vsub.s32 %v2256, %v2706
        %v2708 = vrot.slane %v2081, %v2707
        %v2709 = vlaneseq
        %v2710 = vshrl.u32 %v2709, 7
        %v2711 = vsub.s32 %v2256, %v2710
        %v2712 = vrot.slane %v2084, %v2711
        %v2713 = vlaneseq
        %v2714 = vshrl.u32 %v2713, 7
        %v2715 = vsub.s32 %v2256, %v2714
        %v2716 = vrot.slane %v2087, %v2715
        %v2717 = vlaneseq
        %v2718 = vshrl.u32 %v2717, 7
        %v2719 = vsub.s32 %v2256, %v2718
        %v2720 = vrot.slane %v2090, %v2719
        %v2721 = vlaneseq
        %v2722 = vshrl.u32 %v2721, 7
        %v2723 = vsub.s32 %v2256, %v2722
        %v2724 = vrot.slane %v2093, %v2723
        %v2725 = vlaneseq
        %v2726 = vshrl.u32 %v2725, 7
        %v2727 = vsub.s32 %v2256, %v2726
        %v2728 = vrot.slane %v2096, %v2727
        %v2729 = vlaneseq
        %v2730 = vshrl.u32 %v2729, 7
        %v2731 = vsub.s32 %v2256, %v2730
        %v2732 = vrot.slane %v2099, %v2731
        %v2733 = vlaneseq
        %v2734 = vshrl.u32 %v2733, 7
        %v2735 = vsub.s32 %v2256, %v2734
        %v2736 = vrot.slane %v2102, %v2735
        %v2737 = vlaneseq
        %v2738 = vshrl.u32 %v2737, 7
        %v2739 = vsub.s32 %v2256, %v2738
        %v2740 = vrot.slane %v2105, %v2739
        %v2741 = vlaneseq
        %v2742 = vshrl.u32 %v2741, 7
        %v2743 = vsub.s32 %v2256, %v2742
        %v2744 = vrot.slane %v2108, %v2743
        %v2745 = vlaneseq
        %v2746 = vshrl.u32 %v2745, 7
        %v2747 = vsub.s32 %v2256, %v2746
        %v2748 = vrot.slane %v2111, %v2747
        %v2749 = vlaneseq
        %v2750 = vshrl.u32 %v2749, 7
        %v2751 = vsub.s32 %v2256, %v2750
        %v2752 = vrot.slane %v2114, %v2751
        %v2753 = vlaneseq
        %v2754 = vshrl.u32 %v2753, 7
        %v2755 = vsub.s32 %v2256, %v2754
        %v2756 = vrot.slane %v2117, %v2755
        %v2757 = vlaneseq
        %v2758 = vshrl.u32 %v2757, 7
        %v2759 = vsub.s32 %v2256, %v2758
        %v2760 = vrot.slane %v2120, %v2759
        %v2761 = vlaneseq
        %v2762 = vshrl.u32 %v2761, 7
        %v2763 = vsub.s32 %v2256, %v2762
        %v2764 = vrot.slane %v2123, %v2763
        %v2765 = vlaneseq
        %v2766 = vshrl.u32 %v2765, 7
        %v2767 = vsub.s32 %v2256, %v2766
        %v2768 = vrot.slane %v2126, %v2767
        %vm2769 = vcmask 1041409
        %v2770 = vsel %vm2769, %v2264, %v2260
        %vm2771 = vcmask 1042434
        %v2772 = vsel %vm2771, %v2268, %v2770
        %vm2773 = vcmask 1043459
        %v2774 = vsel %vm2773, %v2272, %v2772
        %vm2775 = vcmask 1044484
        %v2776 = vsel %vm2775, %v2276, %v2774
        %vm2777 = vcmask 1045509
        %v2778 = vsel %vm2777, %v2280, %v2776
        %vm2779 = vcmask 1046534
        %v2780 = vsel %vm2779, %v2284, %v2778
        %vm2781 = vcmask 1047559
        %v2782 = vsel %vm2781, %v2288, %v2780
        %v2783 = vsel %vm2769, %v2296, %v2292
        %v2784 = vsel %vm2771, %v2300, %v2783
        %v2785 = vsel %vm2773, %v2304, %v2784
        %v2786 = vsel %vm2775, %v2308, %v2785
        %v2787 = vsel %vm2777, %v2312, %v2786
        %v2788 = vsel %vm2779, %v2316, %v2787
        %v2789 = vsel %vm2781, %v2320, %v2788
        %v2790 = vsel %vm2769, %v2328, %v2324
        %v2791 = vsel %vm2771, %v2332, %v2790
        %v2792 = vsel %vm2773, %v2336, %v2791
        %v2793 = vsel %vm2775, %v2340, %v2792
        %v2794 = vsel %vm2777, %v2344, %v2793
        %v2795 = vsel %vm2779, %v2348, %v2794
        %v2796 = vsel %vm2781, %v2352, %v2795
        %v2797 = vsel %vm2769, %v2360, %v2356
        %v2798 = vsel %vm2771, %v2364, %v2797
        %v2799 = vsel %vm2773, %v2368, %v2798
        %v2800 = vsel %vm2775, %v2372, %v2799
        %v2801 = vsel %vm2777, %v2376, %v2800
        %v2802 = vsel %vm2779, %v2380, %v2801
        %v2803 = vsel %vm2781, %v2384, %v2802
        %v2804 = vsel %vm2769, %v2392, %v2388
        %v2805 = vsel %vm2771, %v2396, %v2804
        %v2806 = vsel %vm2773, %v2400, %v2805
        %v2807 = vsel %vm2775, %v2404, %v2806
        %v2808 = vsel %vm2777, %v2408, %v2807
        %v2809 = vsel %vm2779, %v2412, %v2808
        %v2810 = vsel %vm2781, %v2416, %v2809
        %v2811 = vsel %vm2769, %v2424, %v2420
        %v2812 = vsel %vm2771, %v2428, %v2811
        %v2813 = vsel %vm2773, %v2432, %v2812
        %v2814 = vsel %vm2775, %v2436, %v2813
        %v2815 = vsel %vm2777, %v2440, %v2814
        %v2816 = vsel %vm2779, %v2444, %v2815
        %v2817 = vsel %vm2781, %v2448, %v2816
        %v2818 = vsel %vm2769, %v2456, %v2452
        %v2819 = vsel %vm2771, %v2460, %v2818
        %v2820 = vsel %vm2773, %v2464, %v2819
        %v2821 = vsel %vm2775, %v2468, %v2820
        %v2822 = vsel %vm2777, %v2472, %v2821
        %v2823 = vsel %vm2779, %v2476, %v2822
        %v2824 = vsel %vm2781, %v2480, %v2823
        %v2825 = vsel %vm2769, %v2488, %v2484
        %v2826 = vsel %vm2771, %v2492, %v2825
        %v2827 = vsel %vm2773, %v2496, %v2826
        %v2828 = vsel %vm2775, %v2500, %v2827
        %v2829 = vsel %vm2777, %v2504, %v2828
        %v2830 = vsel %vm2779, %v2508, %v2829
        %v2831 = vsel %vm2781, %v2512, %v2830
        %v2832 = vsel %vm2769, %v2520, %v2516
        %v2833 = vsel %vm2771, %v2524, %v2832
        %v2834 = vsel %vm2773, %v2528, %v2833
        %v2835 = vsel %vm2775, %v2532, %v2834
        %v2836 = vsel %vm2777, %v2536, %v2835
        %v2837 = vsel %vm2779, %v2540, %v2836
        %v2838 = vsel %vm2781, %v2544, %v2837
        %v2839 = vsel %vm2769, %v2552, %v2548
        %v2840 = vsel %vm2771, %v2556, %v2839
        %v2841 = vsel %vm2773, %v2560, %v2840
        %v2842 = vsel %vm2775, %v2564, %v2841
        %v2843 = vsel %vm2777, %v2568, %v2842
        %v2844 = vsel %vm2779, %v2572, %v2843
        %v2845 = vsel %vm2781, %v2576, %v2844
        %v2846 = vsel %vm2769, %v2584, %v2580
        %v2847 = vsel %vm2771, %v2588, %v2846
        %v2848 = vsel %vm2773, %v2592, %v2847
        %v2849 = vsel %vm2775, %v2596, %v2848
        %v2850 = vsel %vm2777, %v2600, %v2849
        %v2851 = vsel %vm2779, %v2604, %v2850
        %v2852 = vsel %vm2781, %v2608, %v2851
        %v2853 = vsel %vm2769, %v2616, %v2612
        %v2854 = vsel %vm2771, %v2620, %v2853
        %v2855 = vsel %vm2773, %v2624, %v2854
        %v2856 = vsel %vm2775, %v2628, %v2855
        %v2857 = vsel %vm2777, %v2632, %v2856
        %v2858 = vsel %vm2779, %v2636, %v2857
        %v2859 = vsel %vm2781, %v2640, %v2858
        %v2860 = vsel %vm2769, %v2648, %v2644
        %v2861 = vsel %vm2771, %v2652, %v2860
        %v2862 = vsel %vm2773, %v2656, %v2861
        %v2863 = vsel %vm2775, %v2660, %v2862
        %v2864 = vsel %vm2777, %v2664, %v2863
        %v2865 = vsel %vm2779, %v2668, %v2864
        %v2866 = vsel %vm2781, %v2672, %v2865
        %v2867 = vsel %vm2769, %v2680, %v2676
        %v2868 = vsel %vm2771, %v2684, %v2867
        %v2869 = vsel %vm2773, %v2688, %v2868
        %v2870 = vsel %vm2775, %v2692, %v2869
        %v2871 = vsel %vm2777, %v2696, %v2870
        %v2872 = vsel %vm2779, %v2700, %v2871
        %v2873 = vsel %vm2781, %v2704, %v2872
        %v2874 = vsel %vm2769, %v2712, %v2708
        %v2875 = vsel %vm2771, %v2716, %v2874
        %v2876 = vsel %vm2773, %v2720, %v2875
        %v2877 = vsel %vm2775, %v2724, %v2876
        %v2878 = vsel %vm2777, %v2728, %v2877
        %v2879 = vsel %vm2779, %v2732, %v2878
        %v2880 = vsel %vm2781, %v2736, %v2879
        %v2881 = vsel %vm2769, %v2744, %v2740
        %v2882 = vsel %vm2771, %v2748, %v2881
        %v2883 = vsel %vm2773, %v2752, %v2882
        %v2884 = vsel %vm2775, %v2756, %v2883
        %v2885 = vsel %vm2777, %v2760, %v2884
        %v2886 = vsel %vm2779, %v2764, %v2885
        %v2887 = vsel %vm2781, %v2768, %v2886
        %vm2904 = vcmask 23552
        %2905 = vst.msk [vmem:[#allocation2] sm:$0xff] %vm2904, %v2782
        %2906 = vst.msk [vmem:[#allocation2 + $0x10] sm:$0xff] %vm2904, %v2789
        %2907 = vst.msk [vmem:[#allocation2 + $0x20] sm:$0xff] %vm2904, %v2796
        %2908 = vst.msk [vmem:[#allocation2 + $0x30] sm:$0xff] %vm2904, %v2803
        %2909 = vst.msk [vmem:[#allocation2 + $0x40] sm:$0xff] %vm2904, %v2810
        %2910 = vst.msk [vmem:[#allocation2 + $0x50] sm:$0xff] %vm2904, %v2817
        %2911 = vst.msk [vmem:[#allocation2 + $0x60] sm:$0xff] %vm2904, %v2824
        %2912 = vst.msk [vmem:[#allocation2 + $0x70] sm:$0xff] %vm2904, %v2831
        %2913 = vst.msk [vmem:[#allocation2 + $0x80] sm:$0xff] %vm2904, %v2838
        %2914 = vst.msk [vmem:[#allocation2 + $0x90] sm:$0xff] %vm2904, %v2845
        %2915 = vst.msk [vmem:[#allocation2 + $0xa0] sm:$0xff] %vm2904, %v2852
        %2916 = vst.msk [vmem:[#allocation2 + $0xb0] sm:$0xff] %vm2904, %v2859
        %2917 = vst.msk [vmem:[#allocation2 + $0xc0] sm:$0xff] %vm2904, %v2866
        %2918 = vst.msk [vmem:[#allocation2 + $0xd0] sm:$0xff] %vm2904, %v2873
        %2919 = vst.msk [vmem:[#allocation2 + $0xe0] sm:$0xff] %vm2904, %v2880
        %2920 = vst.msk [vmem:[#allocation2 + $0xf0] sm:$0xff] %vm2904, %v2887
        %v2921 = vld [vmem:[%s453 + $0x1] sm:$0x1]
        %v2922 = vld [vmem:[%s453 + $0x5] sm:$0x1]
        %v2923 = vld [vmem:[%s453 + $0x9] sm:$0x1]
        %v2924 = vld [vmem:[%s453 + $0xd] sm:$0x1]
        %v2925 = vld [vmem:[%s453 + $0x11] sm:$0x1]
        %v2926 = vld [vmem:[%s453 + $0x15] sm:$0x1]
        %v2927 = vld [vmem:[%s453 + $0x19] sm:$0x1]
        %v2928 = vld [vmem:[%s453 + $0x1d] sm:$0x1]
        %v2929 = vld [vmem:[%s453 + $0x21] sm:$0x1]
        %v2930 = vld [vmem:[%s453 + $0x25] sm:$0x1]
        %v2931 = vld [vmem:[%s453 + $0x29] sm:$0x1]
        %v2932 = vld [vmem:[%s453 + $0x2d] sm:$0x1]
        %v2933 = vld [vmem:[%s453 + $0x31] sm:$0x1]
        %v2934 = vld [vmem:[%s453 + $0x35] sm:$0x1]
        %v2935 = vld [vmem:[%s453 + $0x39] sm:$0x1]
        %v2936 = vld [vmem:[%s453 + $0x3d] sm:$0x1]
        %v2937 = vld [vmem:[%s453 + $0x41] sm:$0x1]
        %v2938 = vld [vmem:[%s453 + $0x45] sm:$0x1]
        %v2939 = vld [vmem:[%s453 + $0x49] sm:$0x1]
        %v2940 = vld [vmem:[%s453 + $0x4d] sm:$0x1]
        %v2941 = vld [vmem:[%s453 + $0x51] sm:$0x1]
        %v2942 = vld [vmem:[%s453 + $0x55] sm:$0x1]
        %v2943 = vld [vmem:[%s453 + $0x59] sm:$0x1]
        %v2944 = vld [vmem:[%s453 + $0x5d] sm:$0x1]
        %v2945 = vld [vmem:[%s453 + $0x61] sm:$0x1]
        %v2946 = vld [vmem:[%s453 + $0x65] sm:$0x1]
        %v2947 = vld [vmem:[%s453 + $0x69] sm:$0x1]
        %v2948 = vld [vmem:[%s453 + $0x6d] sm:$0x1]
        %v2949 = vld [vmem:[%s453 + $0x71] sm:$0x1]
        %v2950 = vld [vmem:[%s453 + $0x75] sm:$0x1]
        %v2951 = vld [vmem:[%s453 + $0x79] sm:$0x1]
        %v2952 = vld [vmem:[%s453 + $0x7d] sm:$0x1]
        %v2953 = vld [vmem:[%s453 + $0x81] sm:$0x1]
        %v2954 = vld [vmem:[%s453 + $0x85] sm:$0x1]
        %v2955 = vld [vmem:[%s453 + $0x89] sm:$0x1]
        %v2956 = vld [vmem:[%s453 + $0x8d] sm:$0x1]
        %v2957 = vld [vmem:[%s453 + $0x91] sm:$0x1]
        %v2958 = vld [vmem:[%s453 + $0x95] sm:$0x1]
        %v2959 = vld [vmem:[%s453 + $0x99] sm:$0x1]
        %v2960 = vld [vmem:[%s453 + $0x9d] sm:$0x1]
        %v2961 = vld [vmem:[%s453 + $0xa1] sm:$0x1]
        %v2962 = vld [vmem:[%s453 + $0xa5] sm:$0x1]
        %v2963 = vld [vmem:[%s453 + $0xa9] sm:$0x1]
        %v2964 = vld [vmem:[%s453 + $0xad] sm:$0x1]
        %v2965 = vld [vmem:[%s453 + $0xb1] sm:$0x1]
        %v2966 = vld [vmem:[%s453 + $0xb5] sm:$0x1]
        %v2967 = vld [vmem:[%s453 + $0xb9] sm:$0x1]
        %v2968 = vld [vmem:[%s453 + $0xbd] sm:$0x1]
        %v2969 = vld [vmem:[%s453 + $0xc1] sm:$0x1]
        %v2970 = vld [vmem:[%s453 + $0xc5] sm:$0x1]
        %v2971 = vld [vmem:[%s453 + $0xc9] sm:$0x1]
        %v2972 = vld [vmem:[%s453 + $0xcd] sm:$0x1]
        %v2973 = vld [vmem:[%s453 + $0xd1] sm:$0x1]
        %v2974 = vld [vmem:[%s453 + $0xd5] sm:$0x1]
        %v2975 = vld [vmem:[%s453 + $0xd9] sm:$0x1]
        %v2976 = vld [vmem:[%s453 + $0xdd] sm:$0x1]
        %v2977 = vld [vmem:[%s453 + $0xe1] sm:$0x1]
        %v2978 = vld [vmem:[%s453 + $0xe5] sm:$0x1]
        %v2979 = vld [vmem:[%s453 + $0xe9] sm:$0x1]
        %v2980 = vld [vmem:[%s453 + $0xed] sm:$0x1]
        %v2981 = vld [vmem:[%s453 + $0xf1] sm:$0x1]
        %v2982 = vld [vmem:[%s453 + $0xf5] sm:$0x1]
        %v2983 = vld [vmem:[%s453 + $0xf9] sm:$0x1]
        %v2984 = vld [vmem:[%s453 + $0xfd] sm:$0x1]
        %v2985 = vld [vmem:[%s453 + $0x101] sm:$0x1]
        %v2986 = vld [vmem:[%s453 + $0x105] sm:$0x1]
        %v2987 = vld [vmem:[%s453 + $0x109] sm:$0x1]
        %v2988 = vld [vmem:[%s453 + $0x10d] sm:$0x1]
        %v2989 = vld [vmem:[%s453 + $0x111] sm:$0x1]
        %v2990 = vld [vmem:[%s453 + $0x115] sm:$0x1]
        %v2991 = vld [vmem:[%s453 + $0x119] sm:$0x1]
        %v2992 = vld [vmem:[%s453 + $0x11d] sm:$0x1]
        %v2993 = vld [vmem:[%s453 + $0x121] sm:$0x1]
        %v2994 = vld [vmem:[%s453 + $0x125] sm:$0x1]
        %v2995 = vld [vmem:[%s453 + $0x129] sm:$0x1]
        %v2996 = vld [vmem:[%s453 + $0x12d] sm:$0x1]
        %v2997 = vld [vmem:[%s453 + $0x131] sm:$0x1]
        %v2998 = vld [vmem:[%s453 + $0x135] sm:$0x1]
        %v2999 = vld [vmem:[%s453 + $0x139] sm:$0x1]
        %v3000 = vld [vmem:[%s453 + $0x13d] sm:$0x1]
        %v3001 = vld [vmem:[%s453 + $0x141] sm:$0x1]
        %v3002 = vld [vmem:[%s453 + $0x145] sm:$0x1]
        %v3003 = vld [vmem:[%s453 + $0x149] sm:$0x1]
        %v3004 = vld [vmem:[%s453 + $0x14d] sm:$0x1]
        %v3005 = vld [vmem:[%s453 + $0x151] sm:$0x1]
        %v3006 = vld [vmem:[%s453 + $0x155] sm:$0x1]
        %v3007 = vld [vmem:[%s453 + $0x159] sm:$0x1]
        %v3008 = vld [vmem:[%s453 + $0x15d] sm:$0x1]
        %v3009 = vld [vmem:[%s453 + $0x161] sm:$0x1]
        %v3010 = vld [vmem:[%s453 + $0x165] sm:$0x1]
        %v3011 = vld [vmem:[%s453 + $0x169] sm:$0x1]
        %v3012 = vld [vmem:[%s453 + $0x16d] sm:$0x1]
        %v3013 = vld [vmem:[%s453 + $0x171] sm:$0x1]
        %v3014 = vld [vmem:[%s453 + $0x175] sm:$0x1]
        %v3015 = vld [vmem:[%s453 + $0x179] sm:$0x1]
        %v3016 = vld [vmem:[%s453 + $0x17d] sm:$0x1]
        %v3017 = vld [vmem:[%s453 + $0x181] sm:$0x1]
        %v3018 = vld [vmem:[%s453 + $0x185] sm:$0x1]
        %v3019 = vld [vmem:[%s453 + $0x189] sm:$0x1]
        %v3020 = vld [vmem:[%s453 + $0x18d] sm:$0x1]
        %v3021 = vld [vmem:[%s453 + $0x191] sm:$0x1]
        %v3022 = vld [vmem:[%s453 + $0x195] sm:$0x1]
        %v3023 = vld [vmem:[%s453 + $0x199] sm:$0x1]
        %v3024 = vld [vmem:[%s453 + $0x19d] sm:$0x1]
        %v3025 = vld [vmem:[%s453 + $0x1a1] sm:$0x1]
        %v3026 = vld [vmem:[%s453 + $0x1a5] sm:$0x1]
        %v3027 = vld [vmem:[%s453 + $0x1a9] sm:$0x1]
        %v3028 = vld [vmem:[%s453 + $0x1ad] sm:$0x1]
        %v3029 = vld [vmem:[%s453 + $0x1b1] sm:$0x1]
        %v3030 = vld [vmem:[%s453 + $0x1b5] sm:$0x1]
        %v3031 = vld [vmem:[%s453 + $0x1b9] sm:$0x1]
        %v3032 = vld [vmem:[%s453 + $0x1bd] sm:$0x1]
        %v3033 = vld [vmem:[%s453 + $0x1c1] sm:$0x1]
        %v3034 = vld [vmem:[%s453 + $0x1c5] sm:$0x1]
        %v3035 = vld [vmem:[%s453 + $0x1c9] sm:$0x1]
        %v3036 = vld [vmem:[%s453 + $0x1cd] sm:$0x1]
        %v3037 = vld [vmem:[%s453 + $0x1d1] sm:$0x1]
        %v3038 = vld [vmem:[%s453 + $0x1d5] sm:$0x1]
        %v3039 = vld [vmem:[%s453 + $0x1d9] sm:$0x1]
        %v3040 = vld [vmem:[%s453 + $0x1dd] sm:$0x1]
        %v3041 = vld [vmem:[%s453 + $0x1e1] sm:$0x1]
        %v3042 = vld [vmem:[%s453 + $0x1e5] sm:$0x1]
        %v3043 = vld [vmem:[%s453 + $0x1e9] sm:$0x1]
        %v3044 = vld [vmem:[%s453 + $0x1ed] sm:$0x1]
        %v3045 = vld [vmem:[%s453 + $0x1f1] sm:$0x1]
        %v3046 = vld [vmem:[%s453 + $0x1f5] sm:$0x1]
        %v3047 = vld [vmem:[%s453 + $0x1f9] sm:$0x1]
        %v3048 = vld [vmem:[%s453 + $0x1fd] sm:$0x1]
        %v3049 = vld [vmem:[%s453 + $0x2] sm:$0x3]
        %v3050 = vld [vmem:[%s453 + $0x6] sm:$0x3]
        %v3051 = vld [vmem:[%s453 + $0xa] sm:$0x3]
        %v3052 = vld [vmem:[%s453 + $0xe] sm:$0x3]
        %v3053 = vld [vmem:[%s453 + $0x12] sm:$0x3]
        %v3054 = vld [vmem:[%s453 + $0x16] sm:$0x3]
        %v3055 = vld [vmem:[%s453 + $0x1a] sm:$0x3]
        %v3056 = vld [vmem:[%s453 + $0x1e] sm:$0x3]
        %v3057 = vld [vmem:[%s453 + $0x22] sm:$0x3]
        %v3058 = vld [vmem:[%s453 + $0x26] sm:$0x3]
        %v3059 = vld [vmem:[%s453 + $0x2a] sm:$0x3]
        %v3060 = vld [vmem:[%s453 + $0x2e] sm:$0x3]
        %v3061 = vld [vmem:[%s453 + $0x32] sm:$0x3]
        %v3062 = vld [vmem:[%s453 + $0x36] sm:$0x3]
        %v3063 = vld [vmem:[%s453 + $0x3a] sm:$0x3]
        %v3064 = vld [vmem:[%s453 + $0x3e] sm:$0x3]
        %v3065 = vld [vmem:[%s453 + $0x42] sm:$0x3]
        %v3066 = vld [vmem:[%s453 + $0x46] sm:$0x3]
        %v3067 = vld [vmem:[%s453 + $0x4a] sm:$0x3]
        %v3068 = vld [vmem:[%s453 + $0x4e] sm:$0x3]
        %v3069 = vld [vmem:[%s453 + $0x52] sm:$0x3]
        %v3070 = vld [vmem:[%s453 + $0x56] sm:$0x3]
        %v3071 = vld [vmem:[%s453 + $0x5a] sm:$0x3]
        %v3072 = vld [vmem:[%s453 + $0x5e] sm:$0x3]
        %v3073 = vld [vmem:[%s453 + $0x62] sm:$0x3]
        %v3074 = vld [vmem:[%s453 + $0x66] sm:$0x3]
        %v3075 = vld [vmem:[%s453 + $0x6a] sm:$0x3]
        %v3076 = vld [vmem:[%s453 + $0x6e] sm:$0x3]
        %v3077 = vld [vmem:[%s453 + $0x72] sm:$0x3]
        %v3078 = vld [vmem:[%s453 + $0x76] sm:$0x3]
        %v3079 = vld [vmem:[%s453 + $0x7a] sm:$0x3]
        %v3080 = vld [vmem:[%s453 + $0x7e] sm:$0x3]
        %v3081 = vld [vmem:[%s453 + $0x82] sm:$0x3]
        %v3082 = vld [vmem:[%s453 + $0x86] sm:$0x3]
        %v3083 = vld [vmem:[%s453 + $0x8a] sm:$0x3]
        %v3084 = vld [vmem:[%s453 + $0x8e] sm:$0x3]
        %v3085 = vld [vmem:[%s453 + $0x92] sm:$0x3]
        %v3086 = vld [vmem:[%s453 + $0x96] sm:$0x3]
        %v3087 = vld [vmem:[%s453 + $0x9a] sm:$0x3]
        %v3088 = vld [vmem:[%s453 + $0x9e] sm:$0x3]
        %v3089 = vld [vmem:[%s453 + $0xa2] sm:$0x3]
        %v3090 = vld [vmem:[%s453 + $0xa6] sm:$0x3]
        %v3091 = vld [vmem:[%s453 + $0xaa] sm:$0x3]
        %v3092 = vld [vmem:[%s453 + $0xae] sm:$0x3]
        %v3093 = vld [vmem:[%s453 + $0xb2] sm:$0x3]
        %v3094 = vld [vmem:[%s453 + $0xb6] sm:$0x3]
        %v3095 = vld [vmem:[%s453 + $0xba] sm:$0x3]
        %v3096 = vld [vmem:[%s453 + $0xbe] sm:$0x3]
        %v3097 = vld [vmem:[%s453 + $0xc2] sm:$0x3]
        %v3098 = vld [vmem:[%s453 + $0xc6] sm:$0x3]
        %v3099 = vld [vmem:[%s453 + $0xca] sm:$0x3]
        %v3100 = vld [vmem:[%s453 + $0xce] sm:$0x3]
        %v3101 = vld [vmem:[%s453 + $0xd2] sm:$0x3]
        %v3102 = vld [vmem:[%s453 + $0xd6] sm:$0x3]
        %v3103 = vld [vmem:[%s453 + $0xda] sm:$0x3]
        %v3104 = vld [vmem:[%s453 + $0xde] sm:$0x3]
        %v3105 = vld [vmem:[%s453 + $0xe2] sm:$0x3]
        %v3106 = vld [vmem:[%s453 + $0xe6] sm:$0x3]
        %v3107 = vld [vmem:[%s453 + $0xea] sm:$0x3]
        %v3108 = vld [vmem:[%s453 + $0xee] sm:$0x3]
        %v3109 = vld [vmem:[%s453 + $0xf2] sm:$0x3]
        %v3110 = vld [vmem:[%s453 + $0xf6] sm:$0x3]
        %v3111 = vld [vmem:[%s453 + $0xfa] sm:$0x3]
        %v3112 = vld [vmem:[%s453 + $0xfe] sm:$0x3]
        %v3113 = vld [vmem:[%s453 + $0x102] sm:$0x3]
        %v3114 = vld [vmem:[%s453 + $0x106] sm:$0x3]
        %v3115 = vld [vmem:[%s453 + $0x10a] sm:$0x3]
        %v3116 = vld [vmem:[%s453 + $0x10e] sm:$0x3]
        %v3117 = vld [vmem:[%s453 + $0x112] sm:$0x3]
        %v3118 = vld [vmem:[%s453 + $0x116] sm:$0x3]
        %v3119 = vld [vmem:[%s453 + $0x11a] sm:$0x3]
        %v3120 = vld [vmem:[%s453 + $0x11e] sm:$0x3]
        %v3121 = vld [vmem:[%s453 + $0x122] sm:$0x3]
        %v3122 = vld [vmem:[%s453 + $0x126] sm:$0x3]
        %v3123 = vld [vmem:[%s453 + $0x12a] sm:$0x3]
        %v3124 = vld [vmem:[%s453 + $0x12e] sm:$0x3]
        %v3125 = vld [vmem:[%s453 + $0x132] sm:$0x3]
        %v3126 = vld [vmem:[%s453 + $0x136] sm:$0x3]
        %v3127 = vld [vmem:[%s453 + $0x13a] sm:$0x3]
        %v3128 = vld [vmem:[%s453 + $0x13e] sm:$0x3]
        %v3129 = vld [vmem:[%s453 + $0x142] sm:$0x3]
        %v3130 = vld [vmem:[%s453 + $0x146] sm:$0x3]
        %v3131 = vld [vmem:[%s453 + $0x14a] sm:$0x3]
        %v3132 = vld [vmem:[%s453 + $0x14e] sm:$0x3]
        %v3133 = vld [vmem:[%s453 + $0x152] sm:$0x3]
        %v3134 = vld [vmem:[%s453 + $0x156] sm:$0x3]
        %v3135 = vld [vmem:[%s453 + $0x15a] sm:$0x3]
        %v3136 = vld [vmem:[%s453 + $0x15e] sm:$0x3]
        %v3137 = vld [vmem:[%s453 + $0x162] sm:$0x3]
        %v3138 = vld [vmem:[%s453 + $0x166] sm:$0x3]
        %v3139 = vld [vmem:[%s453 + $0x16a] sm:$0x3]
        %v3140 = vld [vmem:[%s453 + $0x16e] sm:$0x3]
        %v3141 = vld [vmem:[%s453 + $0x172] sm:$0x3]
        %v3142 = vld [vmem:[%s453 + $0x176] sm:$0x3]
        %v3143 = vld [vmem:[%s453 + $0x17a] sm:$0x3]
        %v3144 = vld [vmem:[%s453 + $0x17e] sm:$0x3]
        %v3145 = vld [vmem:[%s453 + $0x182] sm:$0x3]
        %v3146 = vld [vmem:[%s453 + $0x186] sm:$0x3]
        %v3147 = vld [vmem:[%s453 + $0x18a] sm:$0x3]
        %v3148 = vld [vmem:[%s453 + $0x18e] sm:$0x3]
        %v3149 = vld [vmem:[%s453 + $0x192] sm:$0x3]
        %v3150 = vld [vmem:[%s453 + $0x196] sm:$0x3]
        %v3151 = vld [vmem:[%s453 + $0x19a] sm:$0x3]
        %v3152 = vld [vmem:[%s453 + $0x19e] sm:$0x3]
        %v3153 = vld [vmem:[%s453 + $0x1a2] sm:$0x3]
        %v3154 = vld [vmem:[%s453 + $0x1a6] sm:$0x3]
        %v3155 = vld [vmem:[%s453 + $0x1aa] sm:$0x3]
        %v3156 = vld [vmem:[%s453 + $0x1ae] sm:$0x3]
        %v3157 = vld [vmem:[%s453 + $0x1b2] sm:$0x3]
        %v3158 = vld [vmem:[%s453 + $0x1b6] sm:$0x3]
        %v3159 = vld [vmem:[%s453 + $0x1ba] sm:$0x3]
        %v3160 = vld [vmem:[%s453 + $0x1be] sm:$0x3]
        %v3161 = vld [vmem:[%s453 + $0x1c2] sm:$0x3]
        %v3162 = vld [vmem:[%s453 + $0x1c6] sm:$0x3]
        %v3163 = vld [vmem:[%s453 + $0x1ca] sm:$0x3]
        %v3164 = vld [vmem:[%s453 + $0x1ce] sm:$0x3]
        %v3165 = vld [vmem:[%s453 + $0x1d2] sm:$0x3]
        %v3166 = vld [vmem:[%s453 + $0x1d6] sm:$0x3]
        %v3167 = vld [vmem:[%s453 + $0x1da] sm:$0x3]
        %v3168 = vld [vmem:[%s453 + $0x1de] sm:$0x3]
        %v3169 = vld [vmem:[%s453 + $0x1e2] sm:$0x3]
        %v3170 = vld [vmem:[%s453 + $0x1e6] sm:$0x3]
        %v3171 = vld [vmem:[%s453 + $0x1ea] sm:$0x3]
        %v3172 = vld [vmem:[%s453 + $0x1ee] sm:$0x3]
        %v3173 = vld [vmem:[%s453 + $0x1f2] sm:$0x3]
        %v3174 = vld [vmem:[%s453 + $0x1f6] sm:$0x3]
        %v3175 = vld [vmem:[%s453 + $0x1fa] sm:$0x3]
        %v3176 = vld [vmem:[%s453 + $0x1fe] sm:$0x3]
        %v3177 = vlaneseq
        %v3178 = vshrl.u32 %v3177, 7
        %v3179 = vsub.s32 0, %v3178
        %v3180 = vrot.slane %v2921, %v3179
        %v3181 = vlaneseq
        %v3182 = vshrl.u32 %v3181, 7
        %v3183 = vsub.s32 0, %v3182
        %v3184 = vrot.slane %v2922, %v3183
        %v3185 = vlaneseq
        %v3186 = vshrl.u32 %v3185, 7
        %v3187 = vsub.s32 0, %v3186
        %v3188 = vrot.slane %v2923, %v3187
        %v3189 = vlaneseq
        %v3190 = vshrl.u32 %v3189, 7
        %v3191 = vsub.s32 0, %v3190
        %v3192 = vrot.slane %v2924, %v3191
        %v3193 = vlaneseq
        %v3194 = vshrl.u32 %v3193, 7
        %v3195 = vsub.s32 0, %v3194
        %v3196 = vrot.slane %v2925, %v3195
        %v3197 = vlaneseq
        %v3198 = vshrl.u32 %v3197, 7
        %v3199 = vsub.s32 0, %v3198
        %v3200 = vrot.slane %v2926, %v3199
        %v3201 = vlaneseq
        %v3202 = vshrl.u32 %v3201, 7
        %v3203 = vsub.s32 0, %v3202
        %v3204 = vrot.slane %v2927, %v3203
        %v3205 = vlaneseq
        %v3206 = vshrl.u32 %v3205, 7
        %v3207 = vsub.s32 0, %v3206
        %v3208 = vrot.slane %v2928, %v3207
        %v3209 = vlaneseq
        %v3210 = vshrl.u32 %v3209, 7
        %v3211 = vsub.s32 0, %v3210
        %v3212 = vrot.slane %v2929, %v3211
        %v3213 = vlaneseq
        %v3214 = vshrl.u32 %v3213, 7
        %v3215 = vsub.s32 0, %v3214
        %v3216 = vrot.slane %v2930, %v3215
        %v3217 = vlaneseq
        %v3218 = vshrl.u32 %v3217, 7
        %v3219 = vsub.s32 0, %v3218
        %v3220 = vrot.slane %v2931, %v3219
        %v3221 = vlaneseq
        %v3222 = vshrl.u32 %v3221, 7
        %v3223 = vsub.s32 0, %v3222
        %v3224 = vrot.slane %v2932, %v3223
        %v3225 = vlaneseq
        %v3226 = vshrl.u32 %v3225, 7
        %v3227 = vsub.s32 0, %v3226
        %v3228 = vrot.slane %v2933, %v3227
        %v3229 = vlaneseq
        %v3230 = vshrl.u32 %v3229, 7
        %v3231 = vsub.s32 0, %v3230
        %v3232 = vrot.slane %v2934, %v3231
        %v3233 = vlaneseq
        %v3234 = vshrl.u32 %v3233, 7
        %v3235 = vsub.s32 0, %v3234
        %v3236 = vrot.slane %v2935, %v3235
        %v3237 = vlaneseq
        %v3238 = vshrl.u32 %v3237, 7
        %v3239 = vsub.s32 0, %v3238
        %v3240 = vrot.slane %v2936, %v3239
        %v3241 = vlaneseq
        %v3242 = vshrl.u32 %v3241, 7
        %v3243 = vsub.s32 0, %v3242
        %v3244 = vrot.slane %v2937, %v3243
        %v3245 = vlaneseq
        %v3246 = vshrl.u32 %v3245, 7
        %v3247 = vsub.s32 0, %v3246
        %v3248 = vrot.slane %v2938, %v3247
        %v3249 = vlaneseq
        %v3250 = vshrl.u32 %v3249, 7
        %v3251 = vsub.s32 0, %v3250
        %v3252 = vrot.slane %v2939, %v3251
        %v3253 = vlaneseq
        %v3254 = vshrl.u32 %v3253, 7
        %v3255 = vsub.s32 0, %v3254
        %v3256 = vrot.slane %v2940, %v3255
        %v3257 = vlaneseq
        %v3258 = vshrl.u32 %v3257, 7
        %v3259 = vsub.s32 0, %v3258
        %v3260 = vrot.slane %v2941, %v3259
        %v3261 = vlaneseq
        %v3262 = vshrl.u32 %v3261, 7
        %v3263 = vsub.s32 0, %v3262
        %v3264 = vrot.slane %v2942, %v3263
        %v3265 = vlaneseq
        %v3266 = vshrl.u32 %v3265, 7
        %v3267 = vsub.s32 0, %v3266
        %v3268 = vrot.slane %v2943, %v3267
        %v3269 = vlaneseq
        %v3270 = vshrl.u32 %v3269, 7
        %v3271 = vsub.s32 0, %v3270
        %v3272 = vrot.slane %v2944, %v3271
        %v3273 = vlaneseq
        %v3274 = vshrl.u32 %v3273, 7
        %v3275 = vsub.s32 0, %v3274
        %v3276 = vrot.slane %v2945, %v3275
        %v3277 = vlaneseq
        %v3278 = vshrl.u32 %v3277, 7
        %v3279 = vsub.s32 0, %v3278
        %v3280 = vrot.slane %v2946, %v3279
        %v3281 = vlaneseq
        %v3282 = vshrl.u32 %v3281, 7
        %v3283 = vsub.s32 0, %v3282
        %v3284 = vrot.slane %v2947, %v3283
        %v3285 = vlaneseq
        %v3286 = vshrl.u32 %v3285, 7
        %v3287 = vsub.s32 0, %v3286
        %v3288 = vrot.slane %v2948, %v3287
        %v3289 = vlaneseq
        %v3290 = vshrl.u32 %v3289, 7
        %v3291 = vsub.s32 0, %v3290
        %v3292 = vrot.slane %v2949, %v3291
        %v3293 = vlaneseq
        %v3294 = vshrl.u32 %v3293, 7
        %v3295 = vsub.s32 0, %v3294
        %v3296 = vrot.slane %v2950, %v3295
        %v3297 = vlaneseq
        %v3298 = vshrl.u32 %v3297, 7
        %v3299 = vsub.s32 0, %v3298
        %v3300 = vrot.slane %v2951, %v3299
        %v3301 = vlaneseq
        %v3302 = vshrl.u32 %v3301, 7
        %v3303 = vsub.s32 0, %v3302
        %v3304 = vrot.slane %v2952, %v3303
        %v3305 = vlaneseq
        %v3306 = vshrl.u32 %v3305, 7
        %v3307 = vsub.s32 0, %v3306
        %v3308 = vrot.slane %v2953, %v3307
        %v3309 = vlaneseq
        %v3310 = vshrl.u32 %v3309, 7
        %v3311 = vsub.s32 0, %v3310
        %v3312 = vrot.slane %v2954, %v3311
        %v3313 = vlaneseq
        %v3314 = vshrl.u32 %v3313, 7
        %v3315 = vsub.s32 0, %v3314
        %v3316 = vrot.slane %v2955, %v3315
        %v3317 = vlaneseq
        %v3318 = vshrl.u32 %v3317, 7
        %v3319 = vsub.s32 0, %v3318
        %v3320 = vrot.slane %v2956, %v3319
        %v3321 = vlaneseq
        %v3322 = vshrl.u32 %v3321, 7
        %v3323 = vsub.s32 0, %v3322
        %v3324 = vrot.slane %v2957, %v3323
        %v3325 = vlaneseq
        %v3326 = vshrl.u32 %v3325, 7
        %v3327 = vsub.s32 0, %v3326
        %v3328 = vrot.slane %v2958, %v3327
        %v3329 = vlaneseq
        %v3330 = vshrl.u32 %v3329, 7
        %v3331 = vsub.s32 0, %v3330
        %v3332 = vrot.slane %v2959, %v3331
        %v3333 = vlaneseq
        %v3334 = vshrl.u32 %v3333, 7
        %v3335 = vsub.s32 0, %v3334
        %v3336 = vrot.slane %v2960, %v3335
        %v3337 = vlaneseq
        %v3338 = vshrl.u32 %v3337, 7
        %v3339 = vsub.s32 0, %v3338
        %v3340 = vrot.slane %v2961, %v3339
        %v3341 = vlaneseq
        %v3342 = vshrl.u32 %v3341, 7
        %v3343 = vsub.s32 0, %v3342
        %v3344 = vrot.slane %v2962, %v3343
        %v3345 = vlaneseq
        %v3346 = vshrl.u32 %v3345, 7
        %v3347 = vsub.s32 0, %v3346
        %v3348 = vrot.slane %v2963, %v3347
        %v3349 = vlaneseq
        %v3350 = vshrl.u32 %v3349, 7
        %v3351 = vsub.s32 0, %v3350
        %v3352 = vrot.slane %v2964, %v3351
        %v3353 = vlaneseq
        %v3354 = vshrl.u32 %v3353, 7
        %v3355 = vsub.s32 0, %v3354
        %v3356 = vrot.slane %v2965, %v3355
        %v3357 = vlaneseq
        %v3358 = vshrl.u32 %v3357, 7
        %v3359 = vsub.s32 0, %v3358
        %v3360 = vrot.slane %v2966, %v3359
        %v3361 = vlaneseq
        %v3362 = vshrl.u32 %v3361, 7
        %v3363 = vsub.s32 0, %v3362
        %v3364 = vrot.slane %v2967, %v3363
        %v3365 = vlaneseq
        %v3366 = vshrl.u32 %v3365, 7
        %v3367 = vsub.s32 0, %v3366
        %v3368 = vrot.slane %v2968, %v3367
        %v3369 = vlaneseq
        %v3370 = vshrl.u32 %v3369, 7
        %v3371 = vsub.s32 0, %v3370
        %v3372 = vrot.slane %v2969, %v3371
        %v3373 = vlaneseq
        %v3374 = vshrl.u32 %v3373, 7
        %v3375 = vsub.s32 0, %v3374
        %v3376 = vrot.slane %v2970, %v3375
        %v3377 = vlaneseq
        %v3378 = vshrl.u32 %v3377, 7
        %v3379 = vsub.s32 0, %v3378
        %v3380 = vrot.slane %v2971, %v3379
        %v3381 = vlaneseq
        %v3382 = vshrl.u32 %v3381, 7
        %v3383 = vsub.s32 0, %v3382
        %v3384 = vrot.slane %v2972, %v3383
        %v3385 = vlaneseq
        %v3386 = vshrl.u32 %v3385, 7
        %v3387 = vsub.s32 0, %v3386
        %v3388 = vrot.slane %v2973, %v3387
        %v3389 = vlaneseq
        %v3390 = vshrl.u32 %v3389, 7
        %v3391 = vsub.s32 0, %v3390
        %v3392 = vrot.slane %v2974, %v3391
        %v3393 = vlaneseq
        %v3394 = vshrl.u32 %v3393, 7
        %v3395 = vsub.s32 0, %v3394
        %v3396 = vrot.slane %v2975, %v3395
        %v3397 = vlaneseq
        %v3398 = vshrl.u32 %v3397, 7
        %v3399 = vsub.s32 0, %v3398
        %v3400 = vrot.slane %v2976, %v3399
        %v3401 = vlaneseq
        %v3402 = vshrl.u32 %v3401, 7
        %v3403 = vsub.s32 0, %v3402
        %v3404 = vrot.slane %v2977, %v3403
        %v3405 = vlaneseq
        %v3406 = vshrl.u32 %v3405, 7
        %v3407 = vsub.s32 0, %v3406
        %v3408 = vrot.slane %v2978, %v3407
        %v3409 = vlaneseq
        %v3410 = vshrl.u32 %v3409, 7
        %v3411 = vsub.s32 0, %v3410
        %v3412 = vrot.slane %v2979, %v3411
        %v3413 = vlaneseq
        %v3414 = vshrl.u32 %v3413, 7
        %v3415 = vsub.s32 0, %v3414
        %v3416 = vrot.slane %v2980, %v3415
        %v3417 = vlaneseq
        %v3418 = vshrl.u32 %v3417, 7
        %v3419 = vsub.s32 0, %v3418
        %v3420 = vrot.slane %v2981, %v3419
        %v3421 = vlaneseq
        %v3422 = vshrl.u32 %v3421, 7
        %v3423 = vsub.s32 0, %v3422
        %v3424 = vrot.slane %v2982, %v3423
        %v3425 = vlaneseq
        %v3426 = vshrl.u32 %v3425, 7
        %v3427 = vsub.s32 0, %v3426
        %v3428 = vrot.slane %v2983, %v3427
        %v3429 = vlaneseq
        %v3430 = vshrl.u32 %v3429, 7
        %v3431 = vsub.s32 0, %v3430
        %v3432 = vrot.slane %v2984, %v3431
        %v3433 = vlaneseq
        %v3434 = vshrl.u32 %v3433, 7
        %v3435 = vsub.s32 0, %v3434
        %v3436 = vrot.slane %v2985, %v3435
        %v3437 = vlaneseq
        %v3438 = vshrl.u32 %v3437, 7
        %v3439 = vsub.s32 0, %v3438
        %v3440 = vrot.slane %v2986, %v3439
        %v3441 = vlaneseq
        %v3442 = vshrl.u32 %v3441, 7
        %v3443 = vsub.s32 0, %v3442
        %v3444 = vrot.slane %v2987, %v3443
        %v3445 = vlaneseq
        %v3446 = vshrl.u32 %v3445, 7
        %v3447 = vsub.s32 0, %v3446
        %v3448 = vrot.slane %v2988, %v3447
        %v3449 = vlaneseq
        %v3450 = vshrl.u32 %v3449, 7
        %v3451 = vsub.s32 0, %v3450
        %v3452 = vrot.slane %v2989, %v3451
        %v3453 = vlaneseq
        %v3454 = vshrl.u32 %v3453, 7
        %v3455 = vsub.s32 0, %v3454
        %v3456 = vrot.slane %v2990, %v3455
        %v3457 = vlaneseq
        %v3458 = vshrl.u32 %v3457, 7
        %v3459 = vsub.s32 0, %v3458
        %v3460 = vrot.slane %v2991, %v3459
        %v3461 = vlaneseq
        %v3462 = vshrl.u32 %v3461, 7
        %v3463 = vsub.s32 0, %v3462
        %v3464 = vrot.slane %v2992, %v3463
        %v3465 = vlaneseq
        %v3466 = vshrl.u32 %v3465, 7
        %v3467 = vsub.s32 0, %v3466
        %v3468 = vrot.slane %v2993, %v3467
        %v3469 = vlaneseq
        %v3470 = vshrl.u32 %v3469, 7
        %v3471 = vsub.s32 0, %v3470
        %v3472 = vrot.slane %v2994, %v3471
        %v3473 = vlaneseq
        %v3474 = vshrl.u32 %v3473, 7
        %v3475 = vsub.s32 0, %v3474
        %v3476 = vrot.slane %v2995, %v3475
        %v3477 = vlaneseq
        %v3478 = vshrl.u32 %v3477, 7
        %v3479 = vsub.s32 0, %v3478
        %v3480 = vrot.slane %v2996, %v3479
        %v3481 = vlaneseq
        %v3482 = vshrl.u32 %v3481, 7
        %v3483 = vsub.s32 0, %v3482
        %v3484 = vrot.slane %v2997, %v3483
        %v3485 = vlaneseq
        %v3486 = vshrl.u32 %v3485, 7
        %v3487 = vsub.s32 0, %v3486
        %v3488 = vrot.slane %v2998, %v3487
        %v3489 = vlaneseq
        %v3490 = vshrl.u32 %v3489, 7
        %v3491 = vsub.s32 0, %v3490
        %v3492 = vrot.slane %v2999, %v3491
        %v3493 = vlaneseq
        %v3494 = vshrl.u32 %v3493, 7
        %v3495 = vsub.s32 0, %v3494
        %v3496 = vrot.slane %v3000, %v3495
        %v3497 = vlaneseq
        %v3498 = vshrl.u32 %v3497, 7
        %v3499 = vsub.s32 0, %v3498
        %v3500 = vrot.slane %v3001, %v3499
        %v3501 = vlaneseq
        %v3502 = vshrl.u32 %v3501, 7
        %v3503 = vsub.s32 0, %v3502
        %v3504 = vrot.slane %v3002, %v3503
        %v3505 = vlaneseq
        %v3506 = vshrl.u32 %v3505, 7
        %v3507 = vsub.s32 0, %v3506
        %v3508 = vrot.slane %v3003, %v3507
        %v3509 = vlaneseq
        %v3510 = vshrl.u32 %v3509, 7
        %v3511 = vsub.s32 0, %v3510
        %v3512 = vrot.slane %v3004, %v3511
        %v3513 = vlaneseq
        %v3514 = vshrl.u32 %v3513, 7
        %v3515 = vsub.s32 0, %v3514
        %v3516 = vrot.slane %v3005, %v3515
        %v3517 = vlaneseq
        %v3518 = vshrl.u32 %v3517, 7
        %v3519 = vsub.s32 0, %v3518
        %v3520 = vrot.slane %v3006, %v3519
        %v3521 = vlaneseq
        %v3522 = vshrl.u32 %v3521, 7
        %v3523 = vsub.s32 0, %v3522
        %v3524 = vrot.slane %v3007, %v3523
        %v3525 = vlaneseq
        %v3526 = vshrl.u32 %v3525, 7
        %v3527 = vsub.s32 0, %v3526
        %v3528 = vrot.slane %v3008, %v3527
        %v3529 = vlaneseq
        %v3530 = vshrl.u32 %v3529, 7
        %v3531 = vsub.s32 0, %v3530
        %v3532 = vrot.slane %v3009, %v3531
        %v3533 = vlaneseq
        %v3534 = vshrl.u32 %v3533, 7
        %v3535 = vsub.s32 0, %v3534
        %v3536 = vrot.slane %v3010, %v3535
        %v3537 = vlaneseq
        %v3538 = vshrl.u32 %v3537, 7
        %v3539 = vsub.s32 0, %v3538
        %v3540 = vrot.slane %v3011, %v3539
        %v3541 = vlaneseq
        %v3542 = vshrl.u32 %v3541, 7
        %v3543 = vsub.s32 0, %v3542
        %v3544 = vrot.slane %v3012, %v3543
        %v3545 = vlaneseq
        %v3546 = vshrl.u32 %v3545, 7
        %v3547 = vsub.s32 0, %v3546
        %v3548 = vrot.slane %v3013, %v3547
        %v3549 = vlaneseq
        %v3550 = vshrl.u32 %v3549, 7
        %v3551 = vsub.s32 0, %v3550
        %v3552 = vrot.slane %v3014, %v3551
        %v3553 = vlaneseq
        %v3554 = vshrl.u32 %v3553, 7
        %v3555 = vsub.s32 0, %v3554
        %v3556 = vrot.slane %v3015, %v3555
        %v3557 = vlaneseq
        %v3558 = vshrl.u32 %v3557, 7
        %v3559 = vsub.s32 0, %v3558
        %v3560 = vrot.slane %v3016, %v3559
        %v3561 = vlaneseq
        %v3562 = vshrl.u32 %v3561, 7
        %v3563 = vsub.s32 0, %v3562
        %v3564 = vrot.slane %v3017, %v3563
        %v3565 = vlaneseq
        %v3566 = vshrl.u32 %v3565, 7
        %v3567 = vsub.s32 0, %v3566
        %v3568 = vrot.slane %v3018, %v3567
        %v3569 = vlaneseq
        %v3570 = vshrl.u32 %v3569, 7
        %v3571 = vsub.s32 0, %v3570
        %v3572 = vrot.slane %v3019, %v3571
        %v3573 = vlaneseq
        %v3574 = vshrl.u32 %v3573, 7
        %v3575 = vsub.s32 0, %v3574
        %v3576 = vrot.slane %v3020, %v3575
        %v3577 = vlaneseq
        %v3578 = vshrl.u32 %v3577, 7
        %v3579 = vsub.s32 0, %v3578
        %v3580 = vrot.slane %v3021, %v3579
        %v3581 = vlaneseq
        %v3582 = vshrl.u32 %v3581, 7
        %v3583 = vsub.s32 0, %v3582
        %v3584 = vrot.slane %v3022, %v3583
        %v3585 = vlaneseq
        %v3586 = vshrl.u32 %v3585, 7
        %v3587 = vsub.s32 0, %v3586
        %v3588 = vrot.slane %v3023, %v3587
        %v3589 = vlaneseq
        %v3590 = vshrl.u32 %v3589, 7
        %v3591 = vsub.s32 0, %v3590
        %v3592 = vrot.slane %v3024, %v3591
        %v3593 = vlaneseq
        %v3594 = vshrl.u32 %v3593, 7
        %v3595 = vsub.s32 0, %v3594
        %v3596 = vrot.slane %v3025, %v3595
        %v3597 = vlaneseq
        %v3598 = vshrl.u32 %v3597, 7
        %v3599 = vsub.s32 0, %v3598
        %v3600 = vrot.slane %v3026, %v3599
        %v3601 = vlaneseq
        %v3602 = vshrl.u32 %v3601, 7
        %v3603 = vsub.s32 0, %v3602
        %v3604 = vrot.slane %v3027, %v3603
        %v3605 = vlaneseq
        %v3606 = vshrl.u32 %v3605, 7
        %v3607 = vsub.s32 0, %v3606
        %v3608 = vrot.slane %v3028, %v3607
        %v3609 = vlaneseq
        %v3610 = vshrl.u32 %v3609, 7
        %v3611 = vsub.s32 0, %v3610
        %v3612 = vrot.slane %v3029, %v3611
        %v3613 = vlaneseq
        %v3614 = vshrl.u32 %v3613, 7
        %v3615 = vsub.s32 0, %v3614
        %v3616 = vrot.slane %v3030, %v3615
        %v3617 = vlaneseq
        %v3618 = vshrl.u32 %v3617, 7
        %v3619 = vsub.s32 0, %v3618
        %v3620 = vrot.slane %v3031, %v3619
        %v3621 = vlaneseq
        %v3622 = vshrl.u32 %v3621, 7
        %v3623 = vsub.s32 0, %v3622
        %v3624 = vrot.slane %v3032, %v3623
        %v3625 = vlaneseq
        %v3626 = vshrl.u32 %v3625, 7
        %v3627 = vsub.s32 0, %v3626
        %v3628 = vrot.slane %v3033, %v3627
        %v3629 = vlaneseq
        %v3630 = vshrl.u32 %v3629, 7
        %v3631 = vsub.s32 0, %v3630
        %v3632 = vrot.slane %v3034, %v3631
        %v3633 = vlaneseq
        %v3634 = vshrl.u32 %v3633, 7
        %v3635 = vsub.s32 0, %v3634
        %v3636 = vrot.slane %v3035, %v3635
        %v3637 = vlaneseq
        %v3638 = vshrl.u32 %v3637, 7
        %v3639 = vsub.s32 0, %v3638
        %v3640 = vrot.slane %v3036, %v3639
        %v3641 = vlaneseq
        %v3642 = vshrl.u32 %v3641, 7
        %v3643 = vsub.s32 0, %v3642
        %v3644 = vrot.slane %v3037, %v3643
        %v3645 = vlaneseq
        %v3646 = vshrl.u32 %v3645, 7
        %v3647 = vsub.s32 0, %v3646
        %v3648 = vrot.slane %v3038, %v3647
        %v3649 = vlaneseq
        %v3650 = vshrl.u32 %v3649, 7
        %v3651 = vsub.s32 0, %v3650
        %v3652 = vrot.slane %v3039, %v3651
        %v3653 = vlaneseq
        %v3654 = vshrl.u32 %v3653, 7
        %v3655 = vsub.s32 0, %v3654
        %v3656 = vrot.slane %v3040, %v3655
        %v3657 = vlaneseq
        %v3658 = vshrl.u32 %v3657, 7
        %v3659 = vsub.s32 0, %v3658
        %v3660 = vrot.slane %v3041, %v3659
        %v3661 = vlaneseq
        %v3662 = vshrl.u32 %v3661, 7
        %v3663 = vsub.s32 0, %v3662
        %v3664 = vrot.slane %v3042, %v3663
        %v3665 = vlaneseq
        %v3666 = vshrl.u32 %v3665, 7
        %v3667 = vsub.s32 0, %v3666
        %v3668 = vrot.slane %v3043, %v3667
        %v3669 = vlaneseq
        %v3670 = vshrl.u32 %v3669, 7
        %v3671 = vsub.s32 0, %v3670
        %v3672 = vrot.slane %v3044, %v3671
        %v3673 = vlaneseq
        %v3674 = vshrl.u32 %v3673, 7
        %v3675 = vsub.s32 0, %v3674
        %v3676 = vrot.slane %v3045, %v3675
        %v3677 = vlaneseq
        %v3678 = vshrl.u32 %v3677, 7
        %v3679 = vsub.s32 0, %v3678
        %v3680 = vrot.slane %v3046, %v3679
        %v3681 = vlaneseq
        %v3682 = vshrl.u32 %v3681, 7
        %v3683 = vsub.s32 0, %v3682
        %v3684 = vrot.slane %v3047, %v3683
        %v3685 = vlaneseq
        %v3686 = vshrl.u32 %v3685, 7
        %v3687 = vsub.s32 0, %v3686
        %v3688 = vrot.slane %v3048, %v3687
        %v3689 = vmul.f32 %v3180, %v3049
        %v3690 = vmul.f32 %v3184, %v3050
        %v3691 = vmul.f32 %v3188, %v3051
        %v3692 = vmul.f32 %v3192, %v3052
        %v3693 = vmul.f32 %v3196, %v3053
        %v3694 = vmul.f32 %v3200, %v3054
        %v3695 = vmul.f32 %v3204, %v3055
        %v3696 = vmul.f32 %v3208, %v3056
        %v3697 = vmul.f32 %v3212, %v3057
        %v3698 = vmul.f32 %v3216, %v3058
        %v3699 = vmul.f32 %v3220, %v3059
        %v3700 = vmul.f32 %v3224, %v3060
        %v3701 = vmul.f32 %v3228, %v3061
        %v3702 = vmul.f32 %v3232, %v3062
        %v3703 = vmul.f32 %v3236, %v3063
        %v3704 = vmul.f32 %v3240, %v3064
        %v3705 = vmul.f32 %v3244, %v3065
        %v3706 = vmul.f32 %v3248, %v3066
        %v3707 = vmul.f32 %v3252, %v3067
        %v3708 = vmul.f32 %v3256, %v3068
        %v3709 = vmul.f32 %v3260, %v3069
        %v3710 = vmul.f32 %v3264, %v3070
        %v3711 = vmul.f32 %v3268, %v3071
        %v3712 = vmul.f32 %v3272, %v3072
        %v3713 = vmul.f32 %v3276, %v3073
        %v3714 = vmul.f32 %v3280, %v3074
        %v3715 = vmul.f32 %v3284, %v3075
        %v3716 = vmul.f32 %v3288, %v3076
        %v3717 = vmul.f32 %v3292, %v3077
        %v3718 = vmul.f32 %v3296, %v3078
        %v3719 = vmul.f32 %v3300, %v3079
        %v3720 = vmul.f32 %v3304, %v3080
        %v3721 = vmul.f32 %v3308, %v3081
        %v3722 = vmul.f32 %v3312, %v3082
        %v3723 = vmul.f32 %v3316, %v3083
        %v3724 = vmul.f32 %v3320, %v3084
        %v3725 = vmul.f32 %v3324, %v3085
        %v3726 = vmul.f32 %v3328, %v3086
        %v3727 = vmul.f32 %v3332, %v3087
        %v3728 = vmul.f32 %v3336, %v3088
        %v3729 = vmul.f32 %v3340, %v3089
        %v3730 = vmul.f32 %v3344, %v3090
        %v3731 = vmul.f32 %v3348, %v3091
        %v3732 = vmul.f32 %v3352, %v3092
        %v3733 = vmul.f32 %v3356, %v3093
        %v3734 = vmul.f32 %v3360, %v3094
        %v3735 = vmul.f32 %v3364, %v3095
        %v3736 = vmul.f32 %v3368, %v3096
        %v3737 = vmul.f32 %v3372, %v3097
        %v3738 = vmul.f32 %v3376, %v3098
        %v3739 = vmul.f32 %v3380, %v3099
        %v3740 = vmul.f32 %v3384, %v3100
        %v3741 = vmul.f32 %v3388, %v3101
        %v3742 = vmul.f32 %v3392, %v3102
        %v3743 = vmul.f32 %v3396, %v3103
        %v3744 = vmul.f32 %v3400, %v3104
        %v3745 = vmul.f32 %v3404, %v3105
        %v3746 = vmul.f32 %v3408, %v3106
        %v3747 = vmul.f32 %v3412, %v3107
        %v3748 = vmul.f32 %v3416, %v3108
        %v3749 = vmul.f32 %v3420, %v3109
        %v3750 = vmul.f32 %v3424, %v3110
        %v3751 = vmul.f32 %v3428, %v3111
        %v3752 = vmul.f32 %v3432, %v3112
        %v3753 = vmul.f32 %v3436, %v3113
        %v3754 = vmul.f32 %v3440, %v3114
        %v3755 = vmul.f32 %v3444, %v3115
        %v3756 = vmul.f32 %v3448, %v3116
        %v3757 = vmul.f32 %v3452, %v3117
        %v3758 = vmul.f32 %v3456, %v3118
        %v3759 = vmul.f32 %v3460, %v3119
        %v3760 = vmul.f32 %v3464, %v3120
        %v3761 = vmul.f32 %v3468, %v3121
        %v3762 = vmul.f32 %v3472, %v3122
        %v3763 = vmul.f32 %v3476, %v3123
        %v3764 = vmul.f32 %v3480, %v3124
        %v3765 = vmul.f32 %v3484, %v3125
        %v3766 = vmul.f32 %v3488, %v3126
        %v3767 = vmul.f32 %v3492, %v3127
        %v3768 = vmul.f32 %v3496, %v3128
        %v3769 = vmul.f32 %v3500, %v3129
        %v3770 = vmul.f32 %v3504, %v3130
        %v3771 = vmul.f32 %v3508, %v3131
        %v3772 = vmul.f32 %v3512, %v3132
        %v3773 = vmul.f32 %v3516, %v3133
        %v3774 = vmul.f32 %v3520, %v3134
        %v3775 = vmul.f32 %v3524, %v3135
        %v3776 = vmul.f32 %v3528, %v3136
        %v3777 = vmul.f32 %v3532, %v3137
        %v3778 = vmul.f32 %v3536, %v3138
        %v3779 = vmul.f32 %v3540, %v3139
        %v3780 = vmul.f32 %v3544, %v3140
        %v3781 = vmul.f32 %v3548, %v3141
        %v3782 = vmul.f32 %v3552, %v3142
        %v3783 = vmul.f32 %v3556, %v3143
        %v3784 = vmul.f32 %v3560, %v3144
        %v3785 = vmul.f32 %v3564, %v3145
        %v3786 = vmul.f32 %v3568, %v3146
        %v3787 = vmul.f32 %v3572, %v3147
        %v3788 = vmul.f32 %v3576, %v3148
        %v3789 = vmul.f32 %v3580, %v3149
        %v3790 = vmul.f32 %v3584, %v3150
        %v3791 = vmul.f32 %v3588, %v3151
        %v3792 = vmul.f32 %v3592, %v3152
        %v3793 = vmul.f32 %v3596, %v3153
        %v3794 = vmul.f32 %v3600, %v3154
        %v3795 = vmul.f32 %v3604, %v3155
        %v3796 = vmul.f32 %v3608, %v3156
        %v3797 = vmul.f32 %v3612, %v3157
        %v3798 = vmul.f32 %v3616, %v3158
        %v3799 = vmul.f32 %v3620, %v3159
        %v3800 = vmul.f32 %v3624, %v3160
        %v3801 = vmul.f32 %v3628, %v3161
        %v3802 = vmul.f32 %v3632, %v3162
        %v3803 = vmul.f32 %v3636, %v3163
        %v3804 = vmul.f32 %v3640, %v3164
        %v3805 = vmul.f32 %v3644, %v3165
        %v3806 = vmul.f32 %v3648, %v3166
        %v3807 = vmul.f32 %v3652, %v3167
        %v3808 = vmul.f32 %v3656, %v3168
        %v3809 = vmul.f32 %v3660, %v3169
        %v3810 = vmul.f32 %v3664, %v3170
        %v3811 = vmul.f32 %v3668, %v3171
        %v3812 = vmul.f32 %v3672, %v3172
        %v3813 = vmul.f32 %v3676, %v3173
        %v3814 = vmul.f32 %v3680, %v3174
        %v3815 = vmul.f32 %v3684, %v3175
        %v3816 = vmul.f32 %v3688, %v3176
        %vm3817 = vcmask 1041408
        %v3818 = vsel %vm3817, %v3689, 0.0
        %3819 = vadd.xlane.f32.xlu0 %v3818
        %v3820 = vpop.xlane.xlu0 %3819
        %v3821 = vsel %vm3817, %v3690, 0.0
        %3822 = vadd.xlane.f32.xlu0 %v3821
        %v3823 = vpop.xlane.xlu0 %3822
        %v3824 = vsel %vm3817, %v3691, 0.0
        %3825 = vadd.xlane.f32.xlu0 %v3824
        %v3826 = vpop.xlane.xlu0 %3825
        %v3827 = vsel %vm3817, %v3692, 0.0
        %3828 = vadd.xlane.f32.xlu0 %v3827
        %v3829 = vpop.xlane.xlu0 %3828
        %v3830 = vsel %vm3817, %v3693, 0.0
        %3831 = vadd.xlane.f32.xlu0 %v3830
        %v3832 = vpop.xlane.xlu0 %3831
        %v3833 = vsel %vm3817, %v3694, 0.0
        %3834 = vadd.xlane.f32.xlu0 %v3833
        %v3835 = vpop.xlane.xlu0 %3834
        %v3836 = vsel %vm3817, %v3695, 0.0
        %3837 = vadd.xlane.f32.xlu0 %v3836
        %v3838 = vpop.xlane.xlu0 %3837
        %v3839 = vsel %vm3817, %v3696, 0.0
        %3840 = vadd.xlane.f32.xlu0 %v3839
        %v3841 = vpop.xlane.xlu0 %3840
        %v3842 = vsel %vm3817, %v3697, 0.0
        %3843 = vadd.xlane.f32.xlu0 %v3842
        %v3844 = vpop.xlane.xlu0 %3843
        %v3845 = vsel %vm3817, %v3698, 0.0
        %3846 = vadd.xlane.f32.xlu0 %v3845
        %v3847 = vpop.xlane.xlu0 %3846
        %v3848 = vsel %vm3817, %v3699, 0.0
        %3849 = vadd.xlane.f32.xlu0 %v3848
        %v3850 = vpop.xlane.xlu0 %3849
        %v3851 = vsel %vm3817, %v3700, 0.0
        %3852 = vadd.xlane.f32.xlu0 %v3851
        %v3853 = vpop.xlane.xlu0 %3852
        %v3854 = vsel %vm3817, %v3701, 0.0
        %3855 = vadd.xlane.f32.xlu0 %v3854
        %v3856 = vpop.xlane.xlu0 %3855
        %v3857 = vsel %vm3817, %v3702, 0.0
        %3858 = vadd.xlane.f32.xlu0 %v3857
        %v3859 = vpop.xlane.xlu0 %3858
        %v3860 = vsel %vm3817, %v3703, 0.0
        %3861 = vadd.xlane.f32.xlu0 %v3860
        %v3862 = vpop.xlane.xlu0 %3861
        %v3863 = vsel %vm3817, %v3704, 0.0
        %3864 = vadd.xlane.f32.xlu0 %v3863
        %v3865 = vpop.xlane.xlu0 %3864
        %v3866 = vsel %vm3817, %v3705, 0.0
        %3867 = vadd.xlane.f32.xlu0 %v3866
        %v3868 = vpop.xlane.xlu0 %3867
        %v3869 = vsel %vm3817, %v3706, 0.0
        %3870 = vadd.xlane.f32.xlu0 %v3869
        %v3871 = vpop.xlane.xlu0 %3870
        %v3872 = vsel %vm3817, %v3707, 0.0
        %3873 = vadd.xlane.f32.xlu0 %v3872
        %v3874 = vpop.xlane.xlu0 %3873
        %v3875 = vsel %vm3817, %v3708, 0.0
        %3876 = vadd.xlane.f32.xlu0 %v3875
        %v3877 = vpop.xlane.xlu0 %3876
        %v3878 = vsel %vm3817, %v3709, 0.0
        %3879 = vadd.xlane.f32.xlu0 %v3878
        %v3880 = vpop.xlane.xlu0 %3879
        %v3881 = vsel %vm3817, %v3710, 0.0
        %3882 = vadd.xlane.f32.xlu0 %v3881
        %v3883 = vpop.xlane.xlu0 %3882
        %v3884 = vsel %vm3817, %v3711, 0.0
        %3885 = vadd.xlane.f32.xlu0 %v3884
        %v3886 = vpop.xlane.xlu0 %3885
        %v3887 = vsel %vm3817, %v3712, 0.0
        %3888 = vadd.xlane.f32.xlu0 %v3887
        %v3889 = vpop.xlane.xlu0 %3888
        %v3890 = vsel %vm3817, %v3713, 0.0
        %3891 = vadd.xlane.f32.xlu0 %v3890
        %v3892 = vpop.xlane.xlu0 %3891
        %v3893 = vsel %vm3817, %v3714, 0.0
        %3894 = vadd.xlane.f32.xlu0 %v3893
        %v3895 = vpop.xlane.xlu0 %3894
        %v3896 = vsel %vm3817, %v3715, 0.0
        %3897 = vadd.xlane.f32.xlu0 %v3896
        %v3898 = vpop.xlane.xlu0 %3897
        %v3899 = vsel %vm3817, %v3716, 0.0
        %3900 = vadd.xlane.f32.xlu0 %v3899
        %v3901 = vpop.xlane.xlu0 %3900
        %v3902 = vsel %vm3817, %v3717, 0.0
        %3903 = vadd.xlane.f32.xlu0 %v3902
        %v3904 = vpop.xlane.xlu0 %3903
        %v3905 = vsel %vm3817, %v3718, 0.0
        %3906 = vadd.xlane.f32.xlu0 %v3905
        %v3907 = vpop.xlane.xlu0 %3906
        %v3908 = vsel %vm3817, %v3719, 0.0
        %3909 = vadd.xlane.f32.xlu0 %v3908
        %v3910 = vpop.xlane.xlu0 %3909
        %v3911 = vsel %vm3817, %v3720, 0.0
        %3912 = vadd.xlane.f32.xlu0 %v3911
        %v3913 = vpop.xlane.xlu0 %3912
        %v3914 = vsel %vm3817, %v3721, 0.0
        %3915 = vadd.xlane.f32.xlu0 %v3914
        %v3916 = vpop.xlane.xlu0 %3915
        %v3917 = vsel %vm3817, %v3722, 0.0
        %3918 = vadd.xlane.f32.xlu0 %v3917
        %v3919 = vpop.xlane.xlu0 %3918
        %v3920 = vsel %vm3817, %v3723, 0.0
        %3921 = vadd.xlane.f32.xlu0 %v3920
        %v3922 = vpop.xlane.xlu0 %3921
        %v3923 = vsel %vm3817, %v3724, 0.0
        %3924 = vadd.xlane.f32.xlu0 %v3923
        %v3925 = vpop.xlane.xlu0 %3924
        %v3926 = vsel %vm3817, %v3725, 0.0
        %3927 = vadd.xlane.f32.xlu0 %v3926
        %v3928 = vpop.xlane.xlu0 %3927
        %v3929 = vsel %vm3817, %v3726, 0.0
        %3930 = vadd.xlane.f32.xlu0 %v3929
        %v3931 = vpop.xlane.xlu0 %3930
        %v3932 = vsel %vm3817, %v3727, 0.0
        %3933 = vadd.xlane.f32.xlu0 %v3932
        %v3934 = vpop.xlane.xlu0 %3933
        %v3935 = vsel %vm3817, %v3728, 0.0
        %3936 = vadd.xlane.f32.xlu0 %v3935
        %v3937 = vpop.xlane.xlu0 %3936
        %v3938 = vsel %vm3817, %v3729, 0.0
        %3939 = vadd.xlane.f32.xlu0 %v3938
        %v3940 = vpop.xlane.xlu0 %3939
        %v3941 = vsel %vm3817, %v3730, 0.0
        %3942 = vadd.xlane.f32.xlu0 %v3941
        %v3943 = vpop.xlane.xlu0 %3942
        %v3944 = vsel %vm3817, %v3731, 0.0
        %3945 = vadd.xlane.f32.xlu0 %v3944
        %v3946 = vpop.xlane.xlu0 %3945
        %v3947 = vsel %vm3817, %v3732, 0.0
        %3948 = vadd.xlane.f32.xlu0 %v3947
        %v3949 = vpop.xlane.xlu0 %3948
        %v3950 = vsel %vm3817, %v3733, 0.0
        %3951 = vadd.xlane.f32.xlu0 %v3950
        %v3952 = vpop.xlane.xlu0 %3951
        %v3953 = vsel %vm3817, %v3734, 0.0
        %3954 = vadd.xlane.f32.xlu0 %v3953
        %v3955 = vpop.xlane.xlu0 %3954
        %v3956 = vsel %vm3817, %v3735, 0.0
        %3957 = vadd.xlane.f32.xlu0 %v3956
        %v3958 = vpop.xlane.xlu0 %3957
        %v3959 = vsel %vm3817, %v3736, 0.0
        %3960 = vadd.xlane.f32.xlu0 %v3959
        %v3961 = vpop.xlane.xlu0 %3960
        %v3962 = vsel %vm3817, %v3737, 0.0
        %3963 = vadd.xlane.f32.xlu0 %v3962
        %v3964 = vpop.xlane.xlu0 %3963
        %v3965 = vsel %vm3817, %v3738, 0.0
        %3966 = vadd.xlane.f32.xlu0 %v3965
        %v3967 = vpop.xlane.xlu0 %3966
        %v3968 = vsel %vm3817, %v3739, 0.0
        %3969 = vadd.xlane.f32.xlu0 %v3968
        %v3970 = vpop.xlane.xlu0 %3969
        %v3971 = vsel %vm3817, %v3740, 0.0
        %3972 = vadd.xlane.f32.xlu0 %v3971
        %v3973 = vpop.xlane.xlu0 %3972
        %v3974 = vsel %vm3817, %v3741, 0.0
        %3975 = vadd.xlane.f32.xlu0 %v3974
        %v3976 = vpop.xlane.xlu0 %3975
        %v3977 = vsel %vm3817, %v3742, 0.0
        %3978 = vadd.xlane.f32.xlu0 %v3977
        %v3979 = vpop.xlane.xlu0 %3978
        %v3980 = vsel %vm3817, %v3743, 0.0
        %3981 = vadd.xlane.f32.xlu0 %v3980
        %v3982 = vpop.xlane.xlu0 %3981
        %v3983 = vsel %vm3817, %v3744, 0.0
        %3984 = vadd.xlane.f32.xlu0 %v3983
        %v3985 = vpop.xlane.xlu0 %3984
        %v3986 = vsel %vm3817, %v3745, 0.0
        %3987 = vadd.xlane.f32.xlu0 %v3986
        %v3988 = vpop.xlane.xlu0 %3987
        %v3989 = vsel %vm3817, %v3746, 0.0
        %3990 = vadd.xlane.f32.xlu0 %v3989
        %v3991 = vpop.xlane.xlu0 %3990
        %v3992 = vsel %vm3817, %v3747, 0.0
        %3993 = vadd.xlane.f32.xlu0 %v3992
        %v3994 = vpop.xlane.xlu0 %3993
        %v3995 = vsel %vm3817, %v3748, 0.0
        %3996 = vadd.xlane.f32.xlu0 %v3995
        %v3997 = vpop.xlane.xlu0 %3996
        %v3998 = vsel %vm3817, %v3749, 0.0
        %3999 = vadd.xlane.f32.xlu0 %v3998
        %v4000 = vpop.xlane.xlu0 %3999
        %v4001 = vsel %vm3817, %v3750, 0.0
        %4002 = vadd.xlane.f32.xlu0 %v4001
        %v4003 = vpop.xlane.xlu0 %4002
        %v4004 = vsel %vm3817, %v3751, 0.0
        %4005 = vadd.xlane.f32.xlu0 %v4004
        %v4006 = vpop.xlane.xlu0 %4005
        %v4007 = vsel %vm3817, %v3752, 0.0
        %4008 = vadd.xlane.f32.xlu0 %v4007
        %v4009 = vpop.xlane.xlu0 %4008
        %v4010 = vsel %vm3817, %v3753, 0.0
        %4011 = vadd.xlane.f32.xlu0 %v4010
        %v4012 = vpop.xlane.xlu0 %4011
        %v4013 = vsel %vm3817, %v3754, 0.0
        %4014 = vadd.xlane.f32.xlu0 %v4013
        %v4015 = vpop.xlane.xlu0 %4014
        %v4016 = vsel %vm3817, %v3755, 0.0
        %4017 = vadd.xlane.f32.xlu0 %v4016
        %v4018 = vpop.xlane.xlu0 %4017
        %v4019 = vsel %vm3817, %v3756, 0.0
        %4020 = vadd.xlane.f32.xlu0 %v4019
        %v4021 = vpop.xlane.xlu0 %4020
        %v4022 = vsel %vm3817, %v3757, 0.0
        %4023 = vadd.xlane.f32.xlu0 %v4022
        %v4024 = vpop.xlane.xlu0 %4023
        %v4025 = vsel %vm3817, %v3758, 0.0
        %4026 = vadd.xlane.f32.xlu0 %v4025
        %v4027 = vpop.xlane.xlu0 %4026
        %v4028 = vsel %vm3817, %v3759, 0.0
        %4029 = vadd.xlane.f32.xlu0 %v4028
        %v4030 = vpop.xlane.xlu0 %4029
        %v4031 = vsel %vm3817, %v3760, 0.0
        %4032 = vadd.xlane.f32.xlu0 %v4031
        %v4033 = vpop.xlane.xlu0 %4032
        %v4034 = vsel %vm3817, %v3761, 0.0
        %4035 = vadd.xlane.f32.xlu0 %v4034
        %v4036 = vpop.xlane.xlu0 %4035
        %v4037 = vsel %vm3817, %v3762, 0.0
        %4038 = vadd.xlane.f32.xlu0 %v4037
        %v4039 = vpop.xlane.xlu0 %4038
        %v4040 = vsel %vm3817, %v3763, 0.0
        %4041 = vadd.xlane.f32.xlu0 %v4040
        %v4042 = vpop.xlane.xlu0 %4041
        %v4043 = vsel %vm3817, %v3764, 0.0
        %4044 = vadd.xlane.f32.xlu0 %v4043
        %v4045 = vpop.xlane.xlu0 %4044
        %v4046 = vsel %vm3817, %v3765, 0.0
        %4047 = vadd.xlane.f32.xlu0 %v4046
        %v4048 = vpop.xlane.xlu0 %4047
        %v4049 = vsel %vm3817, %v3766, 0.0
        %4050 = vadd.xlane.f32.xlu0 %v4049
        %v4051 = vpop.xlane.xlu0 %4050
        %v4052 = vsel %vm3817, %v3767, 0.0
        %4053 = vadd.xlane.f32.xlu0 %v4052
        %v4054 = vpop.xlane.xlu0 %4053
        %v4055 = vsel %vm3817, %v3768, 0.0
        %4056 = vadd.xlane.f32.xlu0 %v4055
        %v4057 = vpop.xlane.xlu0 %4056
        %v4058 = vsel %vm3817, %v3769, 0.0
        %4059 = vadd.xlane.f32.xlu0 %v4058
        %v4060 = vpop.xlane.xlu0 %4059
        %v4061 = vsel %vm3817, %v3770, 0.0
        %4062 = vadd.xlane.f32.xlu0 %v4061
        %v4063 = vpop.xlane.xlu0 %4062
        %v4064 = vsel %vm3817, %v3771, 0.0
        %4065 = vadd.xlane.f32.xlu0 %v4064
        %v4066 = vpop.xlane.xlu0 %4065
        %v4067 = vsel %vm3817, %v3772, 0.0
        %4068 = vadd.xlane.f32.xlu0 %v4067
        %v4069 = vpop.xlane.xlu0 %4068
        %v4070 = vsel %vm3817, %v3773, 0.0
        %4071 = vadd.xlane.f32.xlu0 %v4070
        %v4072 = vpop.xlane.xlu0 %4071
        %v4073 = vsel %vm3817, %v3774, 0.0
        %4074 = vadd.xlane.f32.xlu0 %v4073
        %v4075 = vpop.xlane.xlu0 %4074
        %v4076 = vsel %vm3817, %v3775, 0.0
        %4077 = vadd.xlane.f32.xlu0 %v4076
        %v4078 = vpop.xlane.xlu0 %4077
        %v4079 = vsel %vm3817, %v3776, 0.0
        %4080 = vadd.xlane.f32.xlu0 %v4079
        %v4081 = vpop.xlane.xlu0 %4080
        %v4082 = vsel %vm3817, %v3777, 0.0
        %4083 = vadd.xlane.f32.xlu0 %v4082
        %v4084 = vpop.xlane.xlu0 %4083
        %v4085 = vsel %vm3817, %v3778, 0.0
        %4086 = vadd.xlane.f32.xlu0 %v4085
        %v4087 = vpop.xlane.xlu0 %4086
        %v4088 = vsel %vm3817, %v3779, 0.0
        %4089 = vadd.xlane.f32.xlu0 %v4088
        %v4090 = vpop.xlane.xlu0 %4089
        %v4091 = vsel %vm3817, %v3780, 0.0
        %4092 = vadd.xlane.f32.xlu0 %v4091
        %v4093 = vpop.xlane.xlu0 %4092
        %v4094 = vsel %vm3817, %v3781, 0.0
        %4095 = vadd.xlane.f32.xlu0 %v4094
        %v4096 = vpop.xlane.xlu0 %4095
        %v4097 = vsel %vm3817, %v3782, 0.0
        %4098 = vadd.xlane.f32.xlu0 %v4097
        %v4099 = vpop.xlane.xlu0 %4098
        %v4100 = vsel %vm3817, %v3783, 0.0
        %4101 = vadd.xlane.f32.xlu0 %v4100
        %v4102 = vpop.xlane.xlu0 %4101
        %v4103 = vsel %vm3817, %v3784, 0.0
        %4104 = vadd.xlane.f32.xlu0 %v4103
        %v4105 = vpop.xlane.xlu0 %4104
        %v4106 = vsel %vm3817, %v3785, 0.0
        %4107 = vadd.xlane.f32.xlu0 %v4106
        %v4108 = vpop.xlane.xlu0 %4107
        %v4109 = vsel %vm3817, %v3786, 0.0
        %4110 = vadd.xlane.f32.xlu0 %v4109
        %v4111 = vpop.xlane.xlu0 %4110
        %v4112 = vsel %vm3817, %v3787, 0.0
        %4113 = vadd.xlane.f32.xlu0 %v4112
        %v4114 = vpop.xlane.xlu0 %4113
        %v4115 = vsel %vm3817, %v3788, 0.0
        %4116 = vadd.xlane.f32.xlu0 %v4115
        %v4117 = vpop.xlane.xlu0 %4116
        %v4118 = vsel %vm3817, %v3789, 0.0
        %4119 = vadd.xlane.f32.xlu0 %v4118
        %v4120 = vpop.xlane.xlu0 %4119
        %v4121 = vsel %vm3817, %v3790, 0.0
        %4122 = vadd.xlane.f32.xlu0 %v4121
        %v4123 = vpop.xlane.xlu0 %4122
        %v4124 = vsel %vm3817, %v3791, 0.0
        %4125 = vadd.xlane.f32.xlu0 %v4124
        %v4126 = vpop.xlane.xlu0 %4125
        %v4127 = vsel %vm3817, %v3792, 0.0
        %4128 = vadd.xlane.f32.xlu0 %v4127
        %v4129 = vpop.xlane.xlu0 %4128
        %v4130 = vsel %vm3817, %v3793, 0.0
        %4131 = vadd.xlane.f32.xlu0 %v4130
        %v4132 = vpop.xlane.xlu0 %4131
        %v4133 = vsel %vm3817, %v3794, 0.0
        %4134 = vadd.xlane.f32.xlu0 %v4133
        %v4135 = vpop.xlane.xlu0 %4134
        %v4136 = vsel %vm3817, %v3795, 0.0
        %4137 = vadd.xlane.f32.xlu0 %v4136
        %v4138 = vpop.xlane.xlu0 %4137
        %v4139 = vsel %vm3817, %v3796, 0.0
        %4140 = vadd.xlane.f32.xlu0 %v4139
        %v4141 = vpop.xlane.xlu0 %4140
        %v4142 = vsel %vm3817, %v3797, 0.0
        %4143 = vadd.xlane.f32.xlu0 %v4142
        %v4144 = vpop.xlane.xlu0 %4143
        %v4145 = vsel %vm3817, %v3798, 0.0
        %4146 = vadd.xlane.f32.xlu0 %v4145
        %v4147 = vpop.xlane.xlu0 %4146
        %v4148 = vsel %vm3817, %v3799, 0.0
        %4149 = vadd.xlane.f32.xlu0 %v4148
        %v4150 = vpop.xlane.xlu0 %4149
        %v4151 = vsel %vm3817, %v3800, 0.0
        %4152 = vadd.xlane.f32.xlu0 %v4151
        %v4153 = vpop.xlane.xlu0 %4152
        %v4154 = vsel %vm3817, %v3801, 0.0
        %4155 = vadd.xlane.f32.xlu0 %v4154
        %v4156 = vpop.xlane.xlu0 %4155
        %v4157 = vsel %vm3817, %v3802, 0.0
        %4158 = vadd.xlane.f32.xlu0 %v4157
        %v4159 = vpop.xlane.xlu0 %4158
        %v4160 = vsel %vm3817, %v3803, 0.0
        %4161 = vadd.xlane.f32.xlu0 %v4160
        %v4162 = vpop.xlane.xlu0 %4161
        %v4163 = vsel %vm3817, %v3804, 0.0
        %4164 = vadd.xlane.f32.xlu0 %v4163
        %v4165 = vpop.xlane.xlu0 %4164
        %v4166 = vsel %vm3817, %v3805, 0.0
        %4167 = vadd.xlane.f32.xlu0 %v4166
        %v4168 = vpop.xlane.xlu0 %4167
        %v4169 = vsel %vm3817, %v3806, 0.0
        %4170 = vadd.xlane.f32.xlu0 %v4169
        %v4171 = vpop.xlane.xlu0 %4170
        %v4172 = vsel %vm3817, %v3807, 0.0
        %4173 = vadd.xlane.f32.xlu0 %v4172
        %v4174 = vpop.xlane.xlu0 %4173
        %v4175 = vsel %vm3817, %v3808, 0.0
        %4176 = vadd.xlane.f32.xlu0 %v4175
        %v4177 = vpop.xlane.xlu0 %4176
        %v4178 = vsel %vm3817, %v3809, 0.0
        %4179 = vadd.xlane.f32.xlu0 %v4178
        %v4180 = vpop.xlane.xlu0 %4179
        %v4181 = vsel %vm3817, %v3810, 0.0
        %4182 = vadd.xlane.f32.xlu0 %v4181
        %v4183 = vpop.xlane.xlu0 %4182
        %v4184 = vsel %vm3817, %v3811, 0.0
        %4185 = vadd.xlane.f32.xlu0 %v4184
        %v4186 = vpop.xlane.xlu0 %4185
        %v4187 = vsel %vm3817, %v3812, 0.0
        %4188 = vadd.xlane.f32.xlu0 %v4187
        %v4189 = vpop.xlane.xlu0 %4188
        %v4190 = vsel %vm3817, %v3813, 0.0
        %4191 = vadd.xlane.f32.xlu0 %v4190
        %v4192 = vpop.xlane.xlu0 %4191
        %v4193 = vsel %vm3817, %v3814, 0.0
        %4194 = vadd.xlane.f32.xlu0 %v4193
        %v4195 = vpop.xlane.xlu0 %4194
        %v4196 = vsel %vm3817, %v3815, 0.0
        %4197 = vadd.xlane.f32.xlu0 %v4196
        %v4198 = vpop.xlane.xlu0 %4197
        %v4199 = vsel %vm3817, %v3816, 0.0
        %4200 = vadd.xlane.f32.xlu0 %v4199
        %v4201 = vpop.xlane.xlu0 %4200
        %v4330 = vadd.s32 %v2256, 4294967293
        %v4331 = vlaneseq
        %v4332 = vshrl.u32 %v4331, 7
        %v4333 = vsub.s32 %v4330, %v4332
        %v4334 = vrot.slane %v3820, %v4333
        %v4335 = vlaneseq
        %v4336 = vshrl.u32 %v4335, 7
        %v4337 = vsub.s32 %v4330, %v4336
        %v4338 = vrot.slane %v3823, %v4337
        %v4339 = vlaneseq
        %v4340 = vshrl.u32 %v4339, 7
        %v4341 = vsub.s32 %v4330, %v4340
        %v4342 = vrot.slane %v3826, %v4341
        %v4343 = vlaneseq
        %v4344 = vshrl.u32 %v4343, 7
        %v4345 = vsub.s32 %v4330, %v4344
        %v4346 = vrot.slane %v3829, %v4345
        %v4347 = vlaneseq
        %v4348 = vshrl.u32 %v4347, 7
        %v4349 = vsub.s32 %v4330, %v4348
        %v4350 = vrot.slane %v3832, %v4349
        %v4351 = vlaneseq
        %v4352 = vshrl.u32 %v4351, 7
        %v4353 = vsub.s32 %v4330, %v4352
        %v4354 = vrot.slane %v3835, %v4353
        %v4355 = vlaneseq
        %v4356 = vshrl.u32 %v4355, 7
        %v4357 = vsub.s32 %v4330, %v4356
        %v4358 = vrot.slane %v3838, %v4357
        %v4359 = vlaneseq
        %v4360 = vshrl.u32 %v4359, 7
        %v4361 = vsub.s32 %v4330, %v4360
        %v4362 = vrot.slane %v3841, %v4361
        %v4363 = vlaneseq
        %v4364 = vshrl.u32 %v4363, 7
        %v4365 = vsub.s32 %v4330, %v4364
        %v4366 = vrot.slane %v3844, %v4365
        %v4367 = vlaneseq
        %v4368 = vshrl.u32 %v4367, 7
        %v4369 = vsub.s32 %v4330, %v4368
        %v4370 = vrot.slane %v3847, %v4369
        %v4371 = vlaneseq
        %v4372 = vshrl.u32 %v4371, 7
        %v4373 = vsub.s32 %v4330, %v4372
        %v4374 = vrot.slane %v3850, %v4373
        %v4375 = vlaneseq
        %v4376 = vshrl.u32 %v4375, 7
        %v4377 = vsub.s32 %v4330, %v4376
        %v4378 = vrot.slane %v3853, %v4377
        %v4379 = vlaneseq
        %v4380 = vshrl.u32 %v4379, 7
        %v4381 = vsub.s32 %v4330, %v4380
        %v4382 = vrot.slane %v3856, %v4381
        %v4383 = vlaneseq
        %v4384 = vshrl.u32 %v4383, 7
        %v4385 = vsub.s32 %v4330, %v4384
        %v4386 = vrot.slane %v3859, %v4385
        %v4387 = vlaneseq
        %v4388 = vshrl.u32 %v4387, 7
        %v4389 = vsub.s32 %v4330, %v4388
        %v4390 = vrot.slane %v3862, %v4389
        %v4391 = vlaneseq
        %v4392 = vshrl.u32 %v4391, 7
        %v4393 = vsub.s32 %v4330, %v4392
        %v4394 = vrot.slane %v3865, %v4393
        %v4395 = vlaneseq
        %v4396 = vshrl.u32 %v4395, 7
        %v4397 = vsub.s32 %v4330, %v4396
        %v4398 = vrot.slane %v3868, %v4397
        %v4399 = vlaneseq
        %v4400 = vshrl.u32 %v4399, 7
        %v4401 = vsub.s32 %v4330, %v4400
        %v4402 = vrot.slane %v3871, %v4401
        %v4403 = vlaneseq
        %v4404 = vshrl.u32 %v4403, 7
        %v4405 = vsub.s32 %v4330, %v4404
        %v4406 = vrot.slane %v3874, %v4405
        %v4407 = vlaneseq
        %v4408 = vshrl.u32 %v4407, 7
        %v4409 = vsub.s32 %v4330, %v4408
        %v4410 = vrot.slane %v3877, %v4409
        %v4411 = vlaneseq
        %v4412 = vshrl.u32 %v4411, 7
        %v4413 = vsub.s32 %v4330, %v4412
        %v4414 = vrot.slane %v3880, %v4413
        %v4415 = vlaneseq
        %v4416 = vshrl.u32 %v4415, 7
        %v4417 = vsub.s32 %v4330, %v4416
        %v4418 = vrot.slane %v3883, %v4417
        %v4419 = vlaneseq
        %v4420 = vshrl.u32 %v4419, 7
        %v4421 = vsub.s32 %v4330, %v4420
        %v4422 = vrot.slane %v3886, %v4421
        %v4423 = vlaneseq
        %v4424 = vshrl.u32 %v4423, 7
        %v4425 = vsub.s32 %v4330, %v4424
        %v4426 = vrot.slane %v3889, %v4425
        %v4427 = vlaneseq
        %v4428 = vshrl.u32 %v4427, 7
        %v4429 = vsub.s32 %v4330, %v4428
        %v4430 = vrot.slane %v3892, %v4429
        %v4431 = vlaneseq
        %v4432 = vshrl.u32 %v4431, 7
        %v4433 = vsub.s32 %v4330, %v4432
        %v4434 = vrot.slane %v3895, %v4433
        %v4435 = vlaneseq
        %v4436 = vshrl.u32 %v4435, 7
        %v4437 = vsub.s32 %v4330, %v4436
        %v4438 = vrot.slane %v3898, %v4437
        %v4439 = vlaneseq
        %v4440 = vshrl.u32 %v4439, 7
        %v4441 = vsub.s32 %v4330, %v4440
        %v4442 = vrot.slane %v3901, %v4441
        %v4443 = vlaneseq
        %v4444 = vshrl.u32 %v4443, 7
        %v4445 = vsub.s32 %v4330, %v4444
        %v4446 = vrot.slane %v3904, %v4445
        %v4447 = vlaneseq
        %v4448 = vshrl.u32 %v4447, 7
        %v4449 = vsub.s32 %v4330, %v4448
        %v4450 = vrot.slane %v3907, %v4449
        %v4451 = vlaneseq
        %v4452 = vshrl.u32 %v4451, 7
        %v4453 = vsub.s32 %v4330, %v4452
        %v4454 = vrot.slane %v3910, %v4453
        %v4455 = vlaneseq
        %v4456 = vshrl.u32 %v4455, 7
        %v4457 = vsub.s32 %v4330, %v4456
        %v4458 = vrot.slane %v3913, %v4457
        %v4459 = vlaneseq
        %v4460 = vshrl.u32 %v4459, 7
        %v4461 = vsub.s32 %v4330, %v4460
        %v4462 = vrot.slane %v3916, %v4461
        %v4463 = vlaneseq
        %v4464 = vshrl.u32 %v4463, 7
        %v4465 = vsub.s32 %v4330, %v4464
        %v4466 = vrot.slane %v3919, %v4465
        %v4467 = vlaneseq
        %v4468 = vshrl.u32 %v4467, 7
        %v4469 = vsub.s32 %v4330, %v4468
        %v4470 = vrot.slane %v3922, %v4469
        %v4471 = vlaneseq
        %v4472 = vshrl.u32 %v4471, 7
        %v4473 = vsub.s32 %v4330, %v4472
        %v4474 = vrot.slane %v3925, %v4473
        %v4475 = vlaneseq
        %v4476 = vshrl.u32 %v4475, 7
        %v4477 = vsub.s32 %v4330, %v4476
        %v4478 = vrot.slane %v3928, %v4477
        %v4479 = vlaneseq
        %v4480 = vshrl.u32 %v4479, 7
        %v4481 = vsub.s32 %v4330, %v4480
        %v4482 = vrot.slane %v3931, %v4481
        %v4483 = vlaneseq
        %v4484 = vshrl.u32 %v4483, 7
        %v4485 = vsub.s32 %v4330, %v4484
        %v4486 = vrot.slane %v3934, %v4485
        %v4487 = vlaneseq
        %v4488 = vshrl.u32 %v4487, 7
        %v4489 = vsub.s32 %v4330, %v4488
        %v4490 = vrot.slane %v3937, %v4489
        %v4491 = vlaneseq
        %v4492 = vshrl.u32 %v4491, 7
        %v4493 = vsub.s32 %v4330, %v4492
        %v4494 = vrot.slane %v3940, %v4493
        %v4495 = vlaneseq
        %v4496 = vshrl.u32 %v4495, 7
        %v4497 = vsub.s32 %v4330, %v4496
        %v4498 = vrot.slane %v3943, %v4497
        %v4499 = vlaneseq
        %v4500 = vshrl.u32 %v4499, 7
        %v4501 = vsub.s32 %v4330, %v4500
        %v4502 = vrot.slane %v3946, %v4501
        %v4503 = vlaneseq
        %v4504 = vshrl.u32 %v4503, 7
        %v4505 = vsub.s32 %v4330, %v4504
        %v4506 = vrot.slane %v3949, %v4505
        %v4507 = vlaneseq
        %v4508 = vshrl.u32 %v4507, 7
        %v4509 = vsub.s32 %v4330, %v4508
        %v4510 = vrot.slane %v3952, %v4509
        %v4511 = vlaneseq
        %v4512 = vshrl.u32 %v4511, 7
        %v4513 = vsub.s32 %v4330, %v4512
        %v4514 = vrot.slane %v3955, %v4513
        %v4515 = vlaneseq
        %v4516 = vshrl.u32 %v4515, 7
        %v4517 = vsub.s32 %v4330, %v4516
        %v4518 = vrot.slane %v3958, %v4517
        %v4519 = vlaneseq
        %v4520 = vshrl.u32 %v4519, 7
        %v4521 = vsub.s32 %v4330, %v4520
        %v4522 = vrot.slane %v3961, %v4521
        %v4523 = vlaneseq
        %v4524 = vshrl.u32 %v4523, 7
        %v4525 = vsub.s32 %v4330, %v4524
        %v4526 = vrot.slane %v3964, %v4525
        %v4527 = vlaneseq
        %v4528 = vshrl.u32 %v4527, 7
        %v4529 = vsub.s32 %v4330, %v4528
        %v4530 = vrot.slane %v3967, %v4529
        %v4531 = vlaneseq
        %v4532 = vshrl.u32 %v4531, 7
        %v4533 = vsub.s32 %v4330, %v4532
        %v4534 = vrot.slane %v3970, %v4533
        %v4535 = vlaneseq
        %v4536 = vshrl.u32 %v4535, 7
        %v4537 = vsub.s32 %v4330, %v4536
        %v4538 = vrot.slane %v3973, %v4537
        %v4539 = vlaneseq
        %v4540 = vshrl.u32 %v4539, 7
        %v4541 = vsub.s32 %v4330, %v4540
        %v4542 = vrot.slane %v3976, %v4541
        %v4543 = vlaneseq
        %v4544 = vshrl.u32 %v4543, 7
        %v4545 = vsub.s32 %v4330, %v4544
        %v4546 = vrot.slane %v3979, %v4545
        %v4547 = vlaneseq
        %v4548 = vshrl.u32 %v4547, 7
        %v4549 = vsub.s32 %v4330, %v4548
        %v4550 = vrot.slane %v3982, %v4549
        %v4551 = vlaneseq
        %v4552 = vshrl.u32 %v4551, 7
        %v4553 = vsub.s32 %v4330, %v4552
        %v4554 = vrot.slane %v3985, %v4553
        %v4555 = vlaneseq
        %v4556 = vshrl.u32 %v4555, 7
        %v4557 = vsub.s32 %v4330, %v4556
        %v4558 = vrot.slane %v3988, %v4557
        %v4559 = vlaneseq
        %v4560 = vshrl.u32 %v4559, 7
        %v4561 = vsub.s32 %v4330, %v4560
        %v4562 = vrot.slane %v3991, %v4561
        %v4563 = vlaneseq
        %v4564 = vshrl.u32 %v4563, 7
        %v4565 = vsub.s32 %v4330, %v4564
        %v4566 = vrot.slane %v3994, %v4565
        %v4567 = vlaneseq
        %v4568 = vshrl.u32 %v4567, 7
        %v4569 = vsub.s32 %v4330, %v4568
        %v4570 = vrot.slane %v3997, %v4569
        %v4571 = vlaneseq
        %v4572 = vshrl.u32 %v4571, 7
        %v4573 = vsub.s32 %v4330, %v4572
        %v4574 = vrot.slane %v4000, %v4573
        %v4575 = vlaneseq
        %v4576 = vshrl.u32 %v4575, 7
        %v4577 = vsub.s32 %v4330, %v4576
        %v4578 = vrot.slane %v4003, %v4577
        %v4579 = vlaneseq
        %v4580 = vshrl.u32 %v4579, 7
        %v4581 = vsub.s32 %v4330, %v4580
        %v4582 = vrot.slane %v4006, %v4581
        %v4583 = vlaneseq
        %v4584 = vshrl.u32 %v4583, 7
        %v4585 = vsub.s32 %v4330, %v4584
        %v4586 = vrot.slane %v4009, %v4585
        %v4587 = vlaneseq
        %v4588 = vshrl.u32 %v4587, 7
        %v4589 = vsub.s32 %v4330, %v4588
        %v4590 = vrot.slane %v4012, %v4589
        %v4591 = vlaneseq
        %v4592 = vshrl.u32 %v4591, 7
        %v4593 = vsub.s32 %v4330, %v4592
        %v4594 = vrot.slane %v4015, %v4593
        %v4595 = vlaneseq
        %v4596 = vshrl.u32 %v4595, 7
        %v4597 = vsub.s32 %v4330, %v4596
        %v4598 = vrot.slane %v4018, %v4597
        %v4599 = vlaneseq
        %v4600 = vshrl.u32 %v4599, 7
        %v4601 = vsub.s32 %v4330, %v4600
        %v4602 = vrot.slane %v4021, %v4601
        %v4603 = vlaneseq
        %v4604 = vshrl.u32 %v4603, 7
        %v4605 = vsub.s32 %v4330, %v4604
        %v4606 = vrot.slane %v4024, %v4605
        %v4607 = vlaneseq
        %v4608 = vshrl.u32 %v4607, 7
        %v4609 = vsub.s32 %v4330, %v4608
        %v4610 = vrot.slane %v4027, %v4609
        %v4611 = vlaneseq
        %v4612 = vshrl.u32 %v4611, 7
        %v4613 = vsub.s32 %v4330, %v4612
        %v4614 = vrot.slane %v4030, %v4613
        %v4615 = vlaneseq
        %v4616 = vshrl.u32 %v4615, 7
        %v4617 = vsub.s32 %v4330, %v4616
        %v4618 = vrot.slane %v4033, %v4617
        %v4619 = vlaneseq
        %v4620 = vshrl.u32 %v4619, 7
        %v4621 = vsub.s32 %v4330, %v4620
        %v4622 = vrot.slane %v4036, %v4621
        %v4623 = vlaneseq
        %v4624 = vshrl.u32 %v4623, 7
        %v4625 = vsub.s32 %v4330, %v4624
        %v4626 = vrot.slane %v4039, %v4625
        %v4627 = vlaneseq
        %v4628 = vshrl.u32 %v4627, 7
        %v4629 = vsub.s32 %v4330, %v4628
        %v4630 = vrot.slane %v4042, %v4629
        %v4631 = vlaneseq
        %v4632 = vshrl.u32 %v4631, 7
        %v4633 = vsub.s32 %v4330, %v4632
        %v4634 = vrot.slane %v4045, %v4633
        %v4635 = vlaneseq
        %v4636 = vshrl.u32 %v4635, 7
        %v4637 = vsub.s32 %v4330, %v4636
        %v4638 = vrot.slane %v4048, %v4637
        %v4639 = vlaneseq
        %v4640 = vshrl.u32 %v4639, 7
        %v4641 = vsub.s32 %v4330, %v4640
        %v4642 = vrot.slane %v4051, %v4641
        %v4643 = vlaneseq
        %v4644 = vshrl.u32 %v4643, 7
        %v4645 = vsub.s32 %v4330, %v4644
        %v4646 = vrot.slane %v4054, %v4645
        %v4647 = vlaneseq
        %v4648 = vshrl.u32 %v4647, 7
        %v4649 = vsub.s32 %v4330, %v4648
        %v4650 = vrot.slane %v4057, %v4649
        %v4651 = vlaneseq
        %v4652 = vshrl.u32 %v4651, 7
        %v4653 = vsub.s32 %v4330, %v4652
        %v4654 = vrot.slane %v4060, %v4653
        %v4655 = vlaneseq
        %v4656 = vshrl.u32 %v4655, 7
        %v4657 = vsub.s32 %v4330, %v4656
        %v4658 = vrot.slane %v4063, %v4657
        %v4659 = vlaneseq
        %v4660 = vshrl.u32 %v4659, 7
        %v4661 = vsub.s32 %v4330, %v4660
        %v4662 = vrot.slane %v4066, %v4661
        %v4663 = vlaneseq
        %v4664 = vshrl.u32 %v4663, 7
        %v4665 = vsub.s32 %v4330, %v4664
        %v4666 = vrot.slane %v4069, %v4665
        %v4667 = vlaneseq
        %v4668 = vshrl.u32 %v4667, 7
        %v4669 = vsub.s32 %v4330, %v4668
        %v4670 = vrot.slane %v4072, %v4669
        %v4671 = vlaneseq
        %v4672 = vshrl.u32 %v4671, 7
        %v4673 = vsub.s32 %v4330, %v4672
        %v4674 = vrot.slane %v4075, %v4673
        %v4675 = vlaneseq
        %v4676 = vshrl.u32 %v4675, 7
        %v4677 = vsub.s32 %v4330, %v4676
        %v4678 = vrot.slane %v4078, %v4677
        %v4679 = vlaneseq
        %v4680 = vshrl.u32 %v4679, 7
        %v4681 = vsub.s32 %v4330, %v4680
        %v4682 = vrot.slane %v4081, %v4681
        %v4683 = vlaneseq
        %v4684 = vshrl.u32 %v4683, 7
        %v4685 = vsub.s32 %v4330, %v4684
        %v4686 = vrot.slane %v4084, %v4685
        %v4687 = vlaneseq
        %v4688 = vshrl.u32 %v4687, 7
        %v4689 = vsub.s32 %v4330, %v4688
        %v4690 = vrot.slane %v4087, %v4689
        %v4691 = vlaneseq
        %v4692 = vshrl.u32 %v4691, 7
        %v4693 = vsub.s32 %v4330, %v4692
        %v4694 = vrot.slane %v4090, %v4693
        %v4695 = vlaneseq
        %v4696 = vshrl.u32 %v4695, 7
        %v4697 = vsub.s32 %v4330, %v4696
        %v4698 = vrot.slane %v4093, %v4697
        %v4699 = vlaneseq
        %v4700 = vshrl.u32 %v4699, 7
        %v4701 = vsub.s32 %v4330, %v4700
        %v4702 = vrot.slane %v4096, %v4701
        %v4703 = vlaneseq
        %v4704 = vshrl.u32 %v4703, 7
        %v4705 = vsub.s32 %v4330, %v4704
        %v4706 = vrot.slane %v4099, %v4705
        %v4707 = vlaneseq
        %v4708 = vshrl.u32 %v4707, 7
        %v4709 = vsub.s32 %v4330, %v4708
        %v4710 = vrot.slane %v4102, %v4709
        %v4711 = vlaneseq
        %v4712 = vshrl.u32 %v4711, 7
        %v4713 = vsub.s32 %v4330, %v4712
        %v4714 = vrot.slane %v4105, %v4713
        %v4715 = vlaneseq
        %v4716 = vshrl.u32 %v4715, 7
        %v4717 = vsub.s32 %v4330, %v4716
        %v4718 = vrot.slane %v4108, %v4717
        %v4719 = vlaneseq
        %v4720 = vshrl.u32 %v4719, 7
        %v4721 = vsub.s32 %v4330, %v4720
        %v4722 = vrot.slane %v4111, %v4721
        %v4723 = vlaneseq
        %v4724 = vshrl.u32 %v4723, 7
        %v4725 = vsub.s32 %v4330, %v4724
        %v4726 = vrot.slane %v4114, %v4725
        %v4727 = vlaneseq
        %v4728 = vshrl.u32 %v4727, 7
        %v4729 = vsub.s32 %v4330, %v4728
        %v4730 = vrot.slane %v4117, %v4729
        %v4731 = vlaneseq
        %v4732 = vshrl.u32 %v4731, 7
        %v4733 = vsub.s32 %v4330, %v4732
        %v4734 = vrot.slane %v4120, %v4733
        %v4735 = vlaneseq
        %v4736 = vshrl.u32 %v4735, 7
        %v4737 = vsub.s32 %v4330, %v4736
        %v4738 = vrot.slane %v4123, %v4737
        %v4739 = vlaneseq
        %v4740 = vshrl.u32 %v4739, 7
        %v4741 = vsub.s32 %v4330, %v4740
        %v4742 = vrot.slane %v4126, %v4741
        %v4743 = vlaneseq
        %v4744 = vshrl.u32 %v4743, 7
        %v4745 = vsub.s32 %v4330, %v4744
        %v4746 = vrot.slane %v4129, %v4745
        %v4747 = vlaneseq
        %v4748 = vshrl.u32 %v4747, 7
        %v4749 = vsub.s32 %v4330, %v4748
        %v4750 = vrot.slane %v4132, %v4749
        %v4751 = vlaneseq
        %v4752 = vshrl.u32 %v4751, 7
        %v4753 = vsub.s32 %v4330, %v4752
        %v4754 = vrot.slane %v4135, %v4753
        %v4755 = vlaneseq
        %v4756 = vshrl.u32 %v4755, 7
        %v4757 = vsub.s32 %v4330, %v4756
        %v4758 = vrot.slane %v4138, %v4757
        %v4759 = vlaneseq
        %v4760 = vshrl.u32 %v4759, 7
        %v4761 = vsub.s32 %v4330, %v4760
        %v4762 = vrot.slane %v4141, %v4761
        %v4763 = vlaneseq
        %v4764 = vshrl.u32 %v4763, 7
        %v4765 = vsub.s32 %v4330, %v4764
        %v4766 = vrot.slane %v4144, %v4765
        %v4767 = vlaneseq
        %v4768 = vshrl.u32 %v4767, 7
        %v4769 = vsub.s32 %v4330, %v4768
        %v4770 = vrot.slane %v4147, %v4769
        %v4771 = vlaneseq
        %v4772 = vshrl.u32 %v4771, 7
        %v4773 = vsub.s32 %v4330, %v4772
        %v4774 = vrot.slane %v4150, %v4773
        %v4775 = vlaneseq
        %v4776 = vshrl.u32 %v4775, 7
        %v4777 = vsub.s32 %v4330, %v4776
        %v4778 = vrot.slane %v4153, %v4777
        %v4779 = vlaneseq
        %v4780 = vshrl.u32 %v4779, 7
        %v4781 = vsub.s32 %v4330, %v4780
        %v4782 = vrot.slane %v4156, %v4781
        %v4783 = vlaneseq
        %v4784 = vshrl.u32 %v4783, 7
        %v4785 = vsub.s32 %v4330, %v4784
        %v4786 = vrot.slane %v4159, %v4785
        %v4787 = vlaneseq
        %v4788 = vshrl.u32 %v4787, 7
        %v4789 = vsub.s32 %v4330, %v4788
        %v4790 = vrot.slane %v4162, %v4789
        %v4791 = vlaneseq
        %v4792 = vshrl.u32 %v4791, 7
        %v4793 = vsub.s32 %v4330, %v4792
        %v4794 = vrot.slane %v4165, %v4793
        %v4795 = vlaneseq
        %v4796 = vshrl.u32 %v4795, 7
        %v4797 = vsub.s32 %v4330, %v4796
        %v4798 = vrot.slane %v4168, %v4797
        %v4799 = vlaneseq
        %v4800 = vshrl.u32 %v4799, 7
        %v4801 = vsub.s32 %v4330, %v4800
        %v4802 = vrot.slane %v4171, %v4801
        %v4803 = vlaneseq
        %v4804 = vshrl.u32 %v4803, 7
        %v4805 = vsub.s32 %v4330, %v4804
        %v4806 = vrot.slane %v4174, %v4805
        %v4807 = vlaneseq
        %v4808 = vshrl.u32 %v4807, 7
        %v4809 = vsub.s32 %v4330, %v4808
        %v4810 = vrot.slane %v4177, %v4809
        %v4811 = vlaneseq
        %v4812 = vshrl.u32 %v4811, 7
        %v4813 = vsub.s32 %v4330, %v4812
        %v4814 = vrot.slane %v4180, %v4813
        %v4815 = vlaneseq
        %v4816 = vshrl.u32 %v4815, 7
        %v4817 = vsub.s32 %v4330, %v4816
        %v4818 = vrot.slane %v4183, %v4817
        %v4819 = vlaneseq
        %v4820 = vshrl.u32 %v4819, 7
        %v4821 = vsub.s32 %v4330, %v4820
        %v4822 = vrot.slane %v4186, %v4821
        %v4823 = vlaneseq
        %v4824 = vshrl.u32 %v4823, 7
        %v4825 = vsub.s32 %v4330, %v4824
        %v4826 = vrot.slane %v4189, %v4825
        %v4827 = vlaneseq
        %v4828 = vshrl.u32 %v4827, 7
        %v4829 = vsub.s32 %v4330, %v4828
        %v4830 = vrot.slane %v4192, %v4829
        %v4831 = vlaneseq
        %v4832 = vshrl.u32 %v4831, 7
        %v4833 = vsub.s32 %v4330, %v4832
        %v4834 = vrot.slane %v4195, %v4833
        %v4835 = vlaneseq
        %v4836 = vshrl.u32 %v4835, 7
        %v4837 = vsub.s32 %v4330, %v4836
        %v4838 = vrot.slane %v4198, %v4837
        %v4839 = vlaneseq
        %v4840 = vshrl.u32 %v4839, 7
        %v4841 = vsub.s32 %v4330, %v4840
        %v4842 = vrot.slane %v4201, %v4841
        %v4843 = vsel %vm2769, %v4338, %v4334
        %v4844 = vsel %vm2771, %v4342, %v4843
        %v4845 = vsel %vm2773, %v4346, %v4844
        %v4846 = vsel %vm2775, %v4350, %v4845
        %v4847 = vsel %vm2777, %v4354, %v4846
        %v4848 = vsel %vm2779, %v4358, %v4847
        %v4849 = vsel %vm2781, %v4362, %v4848
        %v4850 = vsel %vm2769, %v4370, %v4366
        %v4851 = vsel %vm2771, %v4374, %v4850
        %v4852 = vsel %vm2773, %v4378, %v4851
        %v4853 = vsel %vm2775, %v4382, %v4852
        %v4854 = vsel %vm2777, %v4386, %v4853
        %v4855 = vsel %vm2779, %v4390, %v4854
        %v4856 = vsel %vm2781, %v4394, %v4855
        %v4857 = vsel %vm2769, %v4402, %v4398
        %v4858 = vsel %vm2771, %v4406, %v4857
        %v4859 = vsel %vm2773, %v4410, %v4858
        %v4860 = vsel %vm2775, %v4414, %v4859
        %v4861 = vsel %vm2777, %v4418, %v4860
        %v4862 = vsel %vm2779, %v4422, %v4861
        %v4863 = vsel %vm2781, %v4426, %v4862
        %v4864 = vsel %vm2769, %v4434, %v4430
        %v4865 = vsel %vm2771, %v4438, %v4864
        %v4866 = vsel %vm2773, %v4442, %v4865
        %v4867 = vsel %vm2775, %v4446, %v4866
        %v4868 = vsel %vm2777, %v4450, %v4867
        %v4869 = vsel %vm2779, %v4454, %v4868
        %v4870 = vsel %vm2781, %v4458, %v4869
        %v4871 = vsel %vm2769, %v4466, %v4462
        %v4872 = vsel %vm2771, %v4470, %v4871
        %v4873 = vsel %vm2773, %v4474, %v4872
        %v4874 = vsel %vm2775, %v4478, %v4873
        %v4875 = vsel %vm2777, %v4482, %v4874
        %v4876 = vsel %vm2779, %v4486, %v4875
        %v4877 = vsel %vm2781, %v4490, %v4876
        %v4878 = vsel %vm2769, %v4498, %v4494
        %v4879 = vsel %vm2771, %v4502, %v4878
        %v4880 = vsel %vm2773, %v4506, %v4879
        %v4881 = vsel %vm2775, %v4510, %v4880
        %v4882 = vsel %vm2777, %v4514, %v4881
        %v4883 = vsel %vm2779, %v4518, %v4882
        %v4884 = vsel %vm2781, %v4522, %v4883
        %v4885 = vsel %vm2769, %v4530, %v4526
        %v4886 = vsel %vm2771, %v4534, %v4885
        %v4887 = vsel %vm2773, %v4538, %v4886
        %v4888 = vsel %vm2775, %v4542, %v4887
        %v4889 = vsel %vm2777, %v4546, %v4888
        %v4890 = vsel %vm2779, %v4550, %v4889
        %v4891 = vsel %vm2781, %v4554, %v4890
        %v4892 = vsel %vm2769, %v4562, %v4558
        %v4893 = vsel %vm2771, %v4566, %v4892
        %v4894 = vsel %vm2773, %v4570, %v4893
        %v4895 = vsel %vm2775, %v4574, %v4894
        %v4896 = vsel %vm2777, %v4578, %v4895
        %v4897 = vsel %vm2779, %v4582, %v4896
        %v4898 = vsel %vm2781, %v4586, %v4897
        %v4899 = vsel %vm2769, %v4594, %v4590
        %v4900 = vsel %vm2771, %v4598, %v4899
        %v4901 = vsel %vm2773, %v4602, %v4900
        %v4902 = vsel %vm2775, %v4606, %v4901
        %v4903 = vsel %vm2777, %v4610, %v4902
        %v4904 = vsel %vm2779, %v4614, %v4903
        %v4905 = vsel %vm2781, %v4618, %v4904
        %v4906 = vsel %vm2769, %v4626, %v4622
        %v4907 = vsel %vm2771, %v4630, %v4906
        %v4908 = vsel %vm2773, %v4634, %v4907
        %v4909 = vsel %vm2775, %v4638, %v4908
        %v4910 = vsel %vm2777, %v4642, %v4909
        %v4911 = vsel %vm2779, %v4646, %v4910
        %v4912 = vsel %vm2781, %v4650, %v4911
        %v4913 = vsel %vm2769, %v4658, %v4654
        %v4914 = vsel %vm2771, %v4662, %v4913
        %v4915 = vsel %vm2773, %v4666, %v4914
        %v4916 = vsel %vm2775, %v4670, %v4915
        %v4917 = vsel %vm2777, %v4674, %v4916
        %v4918 = vsel %vm2779, %v4678, %v4917
        %v4919 = vsel %vm2781, %v4682, %v4918
        %v4920 = vsel %vm2769, %v4690, %v4686
        %v4921 = vsel %vm2771, %v4694, %v4920
        %v4922 = vsel %vm2773, %v4698, %v4921
        %v4923 = vsel %vm2775, %v4702, %v4922
        %v4924 = vsel %vm2777, %v4706, %v4923
        %v4925 = vsel %vm2779, %v4710, %v4924
        %v4926 = vsel %vm2781, %v4714, %v4925
        %v4927 = vsel %vm2769, %v4722, %v4718
        %v4928 = vsel %vm2771, %v4726, %v4927
        %v4929 = vsel %vm2773, %v4730, %v4928
        %v4930 = vsel %vm2775, %v4734, %v4929
        %v4931 = vsel %vm2777, %v4738, %v4930
        %v4932 = vsel %vm2779, %v4742, %v4931
        %v4933 = vsel %vm2781, %v4746, %v4932
        %v4934 = vsel %vm2769, %v4754, %v4750
        %v4935 = vsel %vm2771, %v4758, %v4934
        %v4936 = vsel %vm2773, %v4762, %v4935
        %v4937 = vsel %vm2775, %v4766, %v4936
        %v4938 = vsel %vm2777, %v4770, %v4937
        %v4939 = vsel %vm2779, %v4774, %v4938
        %v4940 = vsel %vm2781, %v4778, %v4939
        %v4941 = vsel %vm2769, %v4786, %v4782
        %v4942 = vsel %vm2771, %v4790, %v4941
        %v4943 = vsel %vm2773, %v4794, %v4942
        %v4944 = vsel %vm2775, %v4798, %v4943
        %v4945 = vsel %vm2777, %v4802, %v4944
        %v4946 = vsel %vm2779, %v4806, %v4945
        %v4947 = vsel %vm2781, %v4810, %v4946
        %v4948 = vsel %vm2769, %v4818, %v4814
        %v4949 = vsel %vm2771, %v4822, %v4948
        %v4950 = vsel %vm2773, %v4826, %v4949
        %v4951 = vsel %vm2775, %v4830, %v4950
        %v4952 = vsel %vm2777, %v4834, %v4951
        %v4953 = vsel %vm2779, %v4838, %v4952
        %v4954 = vsel %vm2781, %v4842, %v4953
        %vm4971 = vcmask 39960
        %4972 = vst.msk [vmem:[#allocation2] sm:$0xff] %vm4971, %v4849
        %4973 = vst.msk [vmem:[#allocation2 + $0x10] sm:$0xff] %vm4971, %v4856
        %4974 = vst.msk [vmem:[#allocation2 + $0x20] sm:$0xff] %vm4971, %v4863
        %4975 = vst.msk [vmem:[#allocation2 + $0x30] sm:$0xff] %vm4971, %v4870
        %4976 = vst.msk [vmem:[#allocation2 + $0x40] sm:$0xff] %vm4971, %v4877
        %4977 = vst.msk [vmem:[#allocation2 + $0x50] sm:$0xff] %vm4971, %v4884
        %4978 = vst.msk [vmem:[#allocation2 + $0x60] sm:$0xff] %vm4971, %v4891
        %4979 = vst.msk [vmem:[#allocation2 + $0x70] sm:$0xff] %vm4971, %v4898
        %4980 = vst.msk [vmem:[#allocation2 + $0x80] sm:$0xff] %vm4971, %v4905
        %4981 = vst.msk [vmem:[#allocation2 + $0x90] sm:$0xff] %vm4971, %v4912
        %4982 = vst.msk [vmem:[#allocation2 + $0xa0] sm:$0xff] %vm4971, %v4919
        %4983 = vst.msk [vmem:[#allocation2 + $0xb0] sm:$0xff] %vm4971, %v4926
        %4984 = vst.msk [vmem:[#allocation2 + $0xc0] sm:$0xff] %vm4971, %v4933
        %4985 = vst.msk [vmem:[#allocation2 + $0xd0] sm:$0xff] %vm4971, %v4940
        %4986 = vst.msk [vmem:[#allocation2 + $0xe0] sm:$0xff] %vm4971, %v4947
        %4987 = vst.msk [vmem:[#allocation2 + $0xf0] sm:$0xff] %vm4971, %v4954
        %v4988 = vld [vmem:[%s453 + $0x2] sm:$0x1]
        %v4989 = vld [vmem:[%s453 + $0x6] sm:$0x1]
        %v4990 = vld [vmem:[%s453 + $0xa] sm:$0x1]
        %v4991 = vld [vmem:[%s453 + $0xe] sm:$0x1]
        %v4992 = vld [vmem:[%s453 + $0x12] sm:$0x1]
        %v4993 = vld [vmem:[%s453 + $0x16] sm:$0x1]
        %v4994 = vld [vmem:[%s453 + $0x1a] sm:$0x1]
        %v4995 = vld [vmem:[%s453 + $0x1e] sm:$0x1]
        %v4996 = vld [vmem:[%s453 + $0x22] sm:$0x1]
        %v4997 = vld [vmem:[%s453 + $0x26] sm:$0x1]
        %v4998 = vld [vmem:[%s453 + $0x2a] sm:$0x1]
        %v4999 = vld [vmem:[%s453 + $0x2e] sm:$0x1]
        %v5000 = vld [vmem:[%s453 + $0x32] sm:$0x1]
        %v5001 = vld [vmem:[%s453 + $0x36] sm:$0x1]
        %v5002 = vld [vmem:[%s453 + $0x3a] sm:$0x1]
        %v5003 = vld [vmem:[%s453 + $0x3e] sm:$0x1]
        %v5004 = vld [vmem:[%s453 + $0x42] sm:$0x1]
        %v5005 = vld [vmem:[%s453 + $0x46] sm:$0x1]
        %v5006 = vld [vmem:[%s453 + $0x4a] sm:$0x1]
        %v5007 = vld [vmem:[%s453 + $0x4e] sm:$0x1]
        %v5008 = vld [vmem:[%s453 + $0x52] sm:$0x1]
        %v5009 = vld [vmem:[%s453 + $0x56] sm:$0x1]
        %v5010 = vld [vmem:[%s453 + $0x5a] sm:$0x1]
        %v5011 = vld [vmem:[%s453 + $0x5e] sm:$0x1]
        %v5012 = vld [vmem:[%s453 + $0x62] sm:$0x1]
        %v5013 = vld [vmem:[%s453 + $0x66] sm:$0x1]
        %v5014 = vld [vmem:[%s453 + $0x6a] sm:$0x1]
        %v5015 = vld [vmem:[%s453 + $0x6e] sm:$0x1]
        %v5016 = vld [vmem:[%s453 + $0x72] sm:$0x1]
        %v5017 = vld [vmem:[%s453 + $0x76] sm:$0x1]
        %v5018 = vld [vmem:[%s453 + $0x7a] sm:$0x1]
        %v5019 = vld [vmem:[%s453 + $0x7e] sm:$0x1]
        %v5020 = vld [vmem:[%s453 + $0x82] sm:$0x1]
        %v5021 = vld [vmem:[%s453 + $0x86] sm:$0x1]
        %v5022 = vld [vmem:[%s453 + $0x8a] sm:$0x1]
        %v5023 = vld [vmem:[%s453 + $0x8e] sm:$0x1]
        %v5024 = vld [vmem:[%s453 + $0x92] sm:$0x1]
        %v5025 = vld [vmem:[%s453 + $0x96] sm:$0x1]
        %v5026 = vld [vmem:[%s453 + $0x9a] sm:$0x1]
        %v5027 = vld [vmem:[%s453 + $0x9e] sm:$0x1]
        %v5028 = vld [vmem:[%s453 + $0xa2] sm:$0x1]
        %v5029 = vld [vmem:[%s453 + $0xa6] sm:$0x1]
        %v5030 = vld [vmem:[%s453 + $0xaa] sm:$0x1]
        %v5031 = vld [vmem:[%s453 + $0xae] sm:$0x1]
        %v5032 = vld [vmem:[%s453 + $0xb2] sm:$0x1]
        %v5033 = vld [vmem:[%s453 + $0xb6] sm:$0x1]
        %v5034 = vld [vmem:[%s453 + $0xba] sm:$0x1]
        %v5035 = vld [vmem:[%s453 + $0xbe] sm:$0x1]
        %v5036 = vld [vmem:[%s453 + $0xc2] sm:$0x1]
        %v5037 = vld [vmem:[%s453 + $0xc6] sm:$0x1]
        %v5038 = vld [vmem:[%s453 + $0xca] sm:$0x1]
        %v5039 = vld [vmem:[%s453 + $0xce] sm:$0x1]
        %v5040 = vld [vmem:[%s453 + $0xd2] sm:$0x1]
        %v5041 = vld [vmem:[%s453 + $0xd6] sm:$0x1]
        %v5042 = vld [vmem:[%s453 + $0xda] sm:$0x1]
        %v5043 = vld [vmem:[%s453 + $0xde] sm:$0x1]
        %v5044 = vld [vmem:[%s453 + $0xe2] sm:$0x1]
        %v5045 = vld [vmem:[%s453 + $0xe6] sm:$0x1]
        %v5046 = vld [vmem:[%s453 + $0xea] sm:$0x1]
        %v5047 = vld [vmem:[%s453 + $0xee] sm:$0x1]
        %v5048 = vld [vmem:[%s453 + $0xf2] sm:$0x1]
        %v5049 = vld [vmem:[%s453 + $0xf6] sm:$0x1]
        %v5050 = vld [vmem:[%s453 + $0xfa] sm:$0x1]
        %v5051 = vld [vmem:[%s453 + $0xfe] sm:$0x1]
        %v5052 = vld [vmem:[%s453 + $0x102] sm:$0x1]
        %v5053 = vld [vmem:[%s453 + $0x106] sm:$0x1]
        %v5054 = vld [vmem:[%s453 + $0x10a] sm:$0x1]
        %v5055 = vld [vmem:[%s453 + $0x10e] sm:$0x1]
        %v5056 = vld [vmem:[%s453 + $0x112] sm:$0x1]
        %v5057 = vld [vmem:[%s453 + $0x116] sm:$0x1]
        %v5058 = vld [vmem:[%s453 + $0x11a] sm:$0x1]
        %v5059 = vld [vmem:[%s453 + $0x11e] sm:$0x1]
        %v5060 = vld [vmem:[%s453 + $0x122] sm:$0x1]
        %v5061 = vld [vmem:[%s453 + $0x126] sm:$0x1]
        %v5062 = vld [vmem:[%s453 + $0x12a] sm:$0x1]
        %v5063 = vld [vmem:[%s453 + $0x12e] sm:$0x1]
        %v5064 = vld [vmem:[%s453 + $0x132] sm:$0x1]
        %v5065 = vld [vmem:[%s453 + $0x136] sm:$0x1]
        %v5066 = vld [vmem:[%s453 + $0x13a] sm:$0x1]
        %v5067 = vld [vmem:[%s453 + $0x13e] sm:$0x1]
        %v5068 = vld [vmem:[%s453 + $0x142] sm:$0x1]
        %v5069 = vld [vmem:[%s453 + $0x146] sm:$0x1]
        %v5070 = vld [vmem:[%s453 + $0x14a] sm:$0x1]
        %v5071 = vld [vmem:[%s453 + $0x14e] sm:$0x1]
        %v5072 = vld [vmem:[%s453 + $0x152] sm:$0x1]
        %v5073 = vld [vmem:[%s453 + $0x156] sm:$0x1]
        %v5074 = vld [vmem:[%s453 + $0x15a] sm:$0x1]
        %v5075 = vld [vmem:[%s453 + $0x15e] sm:$0x1]
        %v5076 = vld [vmem:[%s453 + $0x162] sm:$0x1]
        %v5077 = vld [vmem:[%s453 + $0x166] sm:$0x1]
        %v5078 = vld [vmem:[%s453 + $0x16a] sm:$0x1]
        %v5079 = vld [vmem:[%s453 + $0x16e] sm:$0x1]
        %v5080 = vld [vmem:[%s453 + $0x172] sm:$0x1]
        %v5081 = vld [vmem:[%s453 + $0x176] sm:$0x1]
        %v5082 = vld [vmem:[%s453 + $0x17a] sm:$0x1]
        %v5083 = vld [vmem:[%s453 + $0x17e] sm:$0x1]
        %v5084 = vld [vmem:[%s453 + $0x182] sm:$0x1]
        %v5085 = vld [vmem:[%s453 + $0x186] sm:$0x1]
        %v5086 = vld [vmem:[%s453 + $0x18a] sm:$0x1]
        %v5087 = vld [vmem:[%s453 + $0x18e] sm:$0x1]
        %v5088 = vld [vmem:[%s453 + $0x192] sm:$0x1]
        %v5089 = vld [vmem:[%s453 + $0x196] sm:$0x1]
        %v5090 = vld [vmem:[%s453 + $0x19a] sm:$0x1]
        %v5091 = vld [vmem:[%s453 + $0x19e] sm:$0x1]
        %v5092 = vld [vmem:[%s453 + $0x1a2] sm:$0x1]
        %v5093 = vld [vmem:[%s453 + $0x1a6] sm:$0x1]
        %v5094 = vld [vmem:[%s453 + $0x1aa] sm:$0x1]
        %v5095 = vld [vmem:[%s453 + $0x1ae] sm:$0x1]
        %v5096 = vld [vmem:[%s453 + $0x1b2] sm:$0x1]
        %v5097 = vld [vmem:[%s453 + $0x1b6] sm:$0x1]
        %v5098 = vld [vmem:[%s453 + $0x1ba] sm:$0x1]
        %v5099 = vld [vmem:[%s453 + $0x1be] sm:$0x1]
        %v5100 = vld [vmem:[%s453 + $0x1c2] sm:$0x1]
        %v5101 = vld [vmem:[%s453 + $0x1c6] sm:$0x1]
        %v5102 = vld [vmem:[%s453 + $0x1ca] sm:$0x1]
        %v5103 = vld [vmem:[%s453 + $0x1ce] sm:$0x1]
        %v5104 = vld [vmem:[%s453 + $0x1d2] sm:$0x1]
        %v5105 = vld [vmem:[%s453 + $0x1d6] sm:$0x1]
        %v5106 = vld [vmem:[%s453 + $0x1da] sm:$0x1]
        %v5107 = vld [vmem:[%s453 + $0x1de] sm:$0x1]
        %v5108 = vld [vmem:[%s453 + $0x1e2] sm:$0x1]
        %v5109 = vld [vmem:[%s453 + $0x1e6] sm:$0x1]
        %v5110 = vld [vmem:[%s453 + $0x1ea] sm:$0x1]
        %v5111 = vld [vmem:[%s453 + $0x1ee] sm:$0x1]
        %v5112 = vld [vmem:[%s453 + $0x1f2] sm:$0x1]
        %v5113 = vld [vmem:[%s453 + $0x1f6] sm:$0x1]
        %v5114 = vld [vmem:[%s453 + $0x1fa] sm:$0x1]
        %v5115 = vld [vmem:[%s453 + $0x1fe] sm:$0x1]
        %v5116 = vld [vmem:[%s453 + $0x3] sm:$0x1]
        %v5117 = vld [vmem:[%s453 + $0x7] sm:$0x1]
        %v5118 = vld [vmem:[%s453 + $0xb] sm:$0x1]
        %v5119 = vld [vmem:[%s453 + $0xf] sm:$0x1]
        %v5120 = vld [vmem:[%s453 + $0x13] sm:$0x1]
        %v5121 = vld [vmem:[%s453 + $0x17] sm:$0x1]
        %v5122 = vld [vmem:[%s453 + $0x1b] sm:$0x1]
        %v5123 = vld [vmem:[%s453 + $0x1f] sm:$0x1]
        %v5124 = vld [vmem:[%s453 + $0x23] sm:$0x1]
        %v5125 = vld [vmem:[%s453 + $0x27] sm:$0x1]
        %v5126 = vld [vmem:[%s453 + $0x2b] sm:$0x1]
        %v5127 = vld [vmem:[%s453 + $0x2f] sm:$0x1]
        %v5128 = vld [vmem:[%s453 + $0x33] sm:$0x1]
        %v5129 = vld [vmem:[%s453 + $0x37] sm:$0x1]
        %v5130 = vld [vmem:[%s453 + $0x3b] sm:$0x1]
        %v5131 = vld [vmem:[%s453 + $0x3f] sm:$0x1]
        %v5132 = vld [vmem:[%s453 + $0x43] sm:$0x1]
        %v5133 = vld [vmem:[%s453 + $0x47] sm:$0x1]
        %v5134 = vld [vmem:[%s453 + $0x4b] sm:$0x1]
        %v5135 = vld [vmem:[%s453 + $0x4f] sm:$0x1]
        %v5136 = vld [vmem:[%s453 + $0x53] sm:$0x1]
        %v5137 = vld [vmem:[%s453 + $0x57] sm:$0x1]
        %v5138 = vld [vmem:[%s453 + $0x5b] sm:$0x1]
        %v5139 = vld [vmem:[%s453 + $0x5f] sm:$0x1]
        %v5140 = vld [vmem:[%s453 + $0x63] sm:$0x1]
        %v5141 = vld [vmem:[%s453 + $0x67] sm:$0x1]
        %v5142 = vld [vmem:[%s453 + $0x6b] sm:$0x1]
        %v5143 = vld [vmem:[%s453 + $0x6f] sm:$0x1]
        %v5144 = vld [vmem:[%s453 + $0x73] sm:$0x1]
        %v5145 = vld [vmem:[%s453 + $0x77] sm:$0x1]
        %v5146 = vld [vmem:[%s453 + $0x7b] sm:$0x1]
        %v5147 = vld [vmem:[%s453 + $0x7f] sm:$0x1]
        %v5148 = vld [vmem:[%s453 + $0x83] sm:$0x1]
        %v5149 = vld [vmem:[%s453 + $0x87] sm:$0x1]
        %v5150 = vld [vmem:[%s453 + $0x8b] sm:$0x1]
        %v5151 = vld [vmem:[%s453 + $0x8f] sm:$0x1]
        %v5152 = vld [vmem:[%s453 + $0x93] sm:$0x1]
        %v5153 = vld [vmem:[%s453 + $0x97] sm:$0x1]
        %v5154 = vld [vmem:[%s453 + $0x9b] sm:$0x1]
        %v5155 = vld [vmem:[%s453 + $0x9f] sm:$0x1]
        %v5156 = vld [vmem:[%s453 + $0xa3] sm:$0x1]
        %v5157 = vld [vmem:[%s453 + $0xa7] sm:$0x1]
        %v5158 = vld [vmem:[%s453 + $0xab] sm:$0x1]
        %v5159 = vld [vmem:[%s453 + $0xaf] sm:$0x1]
        %v5160 = vld [vmem:[%s453 + $0xb3] sm:$0x1]
        %v5161 = vld [vmem:[%s453 + $0xb7] sm:$0x1]
        %v5162 = vld [vmem:[%s453 + $0xbb] sm:$0x1]
        %v5163 = vld [vmem:[%s453 + $0xbf] sm:$0x1]
        %v5164 = vld [vmem:[%s453 + $0xc3] sm:$0x1]
        %v5165 = vld [vmem:[%s453 + $0xc7] sm:$0x1]
        %v5166 = vld [vmem:[%s453 + $0xcb] sm:$0x1]
        %v5167 = vld [vmem:[%s453 + $0xcf] sm:$0x1]
        %v5168 = vld [vmem:[%s453 + $0xd3] sm:$0x1]
        %v5169 = vld [vmem:[%s453 + $0xd7] sm:$0x1]
        %v5170 = vld [vmem:[%s453 + $0xdb] sm:$0x1]
        %v5171 = vld [vmem:[%s453 + $0xdf] sm:$0x1]
        %v5172 = vld [vmem:[%s453 + $0xe3] sm:$0x1]
        %v5173 = vld [vmem:[%s453 + $0xe7] sm:$0x1]
        %v5174 = vld [vmem:[%s453 + $0xeb] sm:$0x1]
        %v5175 = vld [vmem:[%s453 + $0xef] sm:$0x1]
        %v5176 = vld [vmem:[%s453 + $0xf3] sm:$0x1]
        %v5177 = vld [vmem:[%s453 + $0xf7] sm:$0x1]
        %v5178 = vld [vmem:[%s453 + $0xfb] sm:$0x1]
        %v5179 = vld [vmem:[%s453 + $0xff] sm:$0x1]
        %v5180 = vld [vmem:[%s453 + $0x103] sm:$0x1]
        %v5181 = vld [vmem:[%s453 + $0x107] sm:$0x1]
        %v5182 = vld [vmem:[%s453 + $0x10b] sm:$0x1]
        %v5183 = vld [vmem:[%s453 + $0x10f] sm:$0x1]
        %v5184 = vld [vmem:[%s453 + $0x113] sm:$0x1]
        %v5185 = vld [vmem:[%s453 + $0x117] sm:$0x1]
        %v5186 = vld [vmem:[%s453 + $0x11b] sm:$0x1]
        %v5187 = vld [vmem:[%s453 + $0x11f] sm:$0x1]
        %v5188 = vld [vmem:[%s453 + $0x123] sm:$0x1]
        %v5189 = vld [vmem:[%s453 + $0x127] sm:$0x1]
        %v5190 = vld [vmem:[%s453 + $0x12b] sm:$0x1]
        %v5191 = vld [vmem:[%s453 + $0x12f] sm:$0x1]
        %v5192 = vld [vmem:[%s453 + $0x133] sm:$0x1]
        %v5193 = vld [vmem:[%s453 + $0x137] sm:$0x1]
        %v5194 = vld [vmem:[%s453 + $0x13b] sm:$0x1]
        %v5195 = vld [vmem:[%s453 + $0x13f] sm:$0x1]
        %v5196 = vld [vmem:[%s453 + $0x143] sm:$0x1]
        %v5197 = vld [vmem:[%s453 + $0x147] sm:$0x1]
        %v5198 = vld [vmem:[%s453 + $0x14b] sm:$0x1]
        %v5199 = vld [vmem:[%s453 + $0x14f] sm:$0x1]
        %v5200 = vld [vmem:[%s453 + $0x153] sm:$0x1]
        %v5201 = vld [vmem:[%s453 + $0x157] sm:$0x1]
        %v5202 = vld [vmem:[%s453 + $0x15b] sm:$0x1]
        %v5203 = vld [vmem:[%s453 + $0x15f] sm:$0x1]
        %v5204 = vld [vmem:[%s453 + $0x163] sm:$0x1]
        %v5205 = vld [vmem:[%s453 + $0x167] sm:$0x1]
        %v5206 = vld [vmem:[%s453 + $0x16b] sm:$0x1]
        %v5207 = vld [vmem:[%s453 + $0x16f] sm:$0x1]
        %v5208 = vld [vmem:[%s453 + $0x173] sm:$0x1]
        %v5209 = vld [vmem:[%s453 + $0x177] sm:$0x1]
        %v5210 = vld [vmem:[%s453 + $0x17b] sm:$0x1]
        %v5211 = vld [vmem:[%s453 + $0x17f] sm:$0x1]
        %v5212 = vld [vmem:[%s453 + $0x183] sm:$0x1]
        %v5213 = vld [vmem:[%s453 + $0x187] sm:$0x1]
        %v5214 = vld [vmem:[%s453 + $0x18b] sm:$0x1]
        %v5215 = vld [vmem:[%s453 + $0x18f] sm:$0x1]
        %v5216 = vld [vmem:[%s453 + $0x193] sm:$0x1]
        %v5217 = vld [vmem:[%s453 + $0x197] sm:$0x1]
        %v5218 = vld [vmem:[%s453 + $0x19b] sm:$0x1]
        %v5219 = vld [vmem:[%s453 + $0x19f] sm:$0x1]
        %v5220 = vld [vmem:[%s453 + $0x1a3] sm:$0x1]
        %v5221 = vld [vmem:[%s453 + $0x1a7] sm:$0x1]
        %v5222 = vld [vmem:[%s453 + $0x1ab] sm:$0x1]
        %v5223 = vld [vmem:[%s453 + $0x1af] sm:$0x1]
        %v5224 = vld [vmem:[%s453 + $0x1b3] sm:$0x1]
        %v5225 = vld [vmem:[%s453 + $0x1b7] sm:$0x1]
        %v5226 = vld [vmem:[%s453 + $0x1bb] sm:$0x1]
        %v5227 = vld [vmem:[%s453 + $0x1bf] sm:$0x1]
        %v5228 = vld [vmem:[%s453 + $0x1c3] sm:$0x1]
        %v5229 = vld [vmem:[%s453 + $0x1c7] sm:$0x1]
        %v5230 = vld [vmem:[%s453 + $0x1cb] sm:$0x1]
        %v5231 = vld [vmem:[%s453 + $0x1cf] sm:$0x1]
        %v5232 = vld [vmem:[%s453 + $0x1d3] sm:$0x1]
        %v5233 = vld [vmem:[%s453 + $0x1d7] sm:$0x1]
        %v5234 = vld [vmem:[%s453 + $0x1db] sm:$0x1]
        %v5235 = vld [vmem:[%s453 + $0x1df] sm:$0x1]
        %v5236 = vld [vmem:[%s453 + $0x1e3] sm:$0x1]
        %v5237 = vld [vmem:[%s453 + $0x1e7] sm:$0x1]
        %v5238 = vld [vmem:[%s453 + $0x1eb] sm:$0x1]
        %v5239 = vld [vmem:[%s453 + $0x1ef] sm:$0x1]
        %v5240 = vld [vmem:[%s453 + $0x1f3] sm:$0x1]
        %v5241 = vld [vmem:[%s453 + $0x1f7] sm:$0x1]
        %v5242 = vld [vmem:[%s453 + $0x1fb] sm:$0x1]
        %v5243 = vld [vmem:[%s453 + $0x1ff] sm:$0x1]
        %v5244 = vmul.f32 %v4988, %v5116
        %v5245 = vmul.f32 %v4989, %v5117
        %v5246 = vmul.f32 %v4990, %v5118
        %v5247 = vmul.f32 %v4991, %v5119
        %v5248 = vmul.f32 %v4992, %v5120
        %v5249 = vmul.f32 %v4993, %v5121
        %v5250 = vmul.f32 %v4994, %v5122
        %v5251 = vmul.f32 %v4995, %v5123
        %v5252 = vmul.f32 %v4996, %v5124
        %v5253 = vmul.f32 %v4997, %v5125
        %v5254 = vmul.f32 %v4998, %v5126
        %v5255 = vmul.f32 %v4999, %v5127
        %v5256 = vmul.f32 %v5000, %v5128
        %v5257 = vmul.f32 %v5001, %v5129
        %v5258 = vmul.f32 %v5002, %v5130
        %v5259 = vmul.f32 %v5003, %v5131
        %v5260 = vmul.f32 %v5004, %v5132
        %v5261 = vmul.f32 %v5005, %v5133
        %v5262 = vmul.f32 %v5006, %v5134
        %v5263 = vmul.f32 %v5007, %v5135
        %v5264 = vmul.f32 %v5008, %v5136
        %v5265 = vmul.f32 %v5009, %v5137
        %v5266 = vmul.f32 %v5010, %v5138
        %v5267 = vmul.f32 %v5011, %v5139
        %v5268 = vmul.f32 %v5012, %v5140
        %v5269 = vmul.f32 %v5013, %v5141
        %v5270 = vmul.f32 %v5014, %v5142
        %v5271 = vmul.f32 %v5015, %v5143
        %v5272 = vmul.f32 %v5016, %v5144
        %v5273 = vmul.f32 %v5017, %v5145
        %v5274 = vmul.f32 %v5018, %v5146
        %v5275 = vmul.f32 %v5019, %v5147
        %v5276 = vmul.f32 %v5020, %v5148
        %v5277 = vmul.f32 %v5021, %v5149
        %v5278 = vmul.f32 %v5022, %v5150
        %v5279 = vmul.f32 %v5023, %v5151
        %v5280 = vmul.f32 %v5024, %v5152
        %v5281 = vmul.f32 %v5025, %v5153
        %v5282 = vmul.f32 %v5026, %v5154
        %v5283 = vmul.f32 %v5027, %v5155
        %v5284 = vmul.f32 %v5028, %v5156
        %v5285 = vmul.f32 %v5029, %v5157
        %v5286 = vmul.f32 %v5030, %v5158
        %v5287 = vmul.f32 %v5031, %v5159
        %v5288 = vmul.f32 %v5032, %v5160
        %v5289 = vmul.f32 %v5033, %v5161
        %v5290 = vmul.f32 %v5034, %v5162
        %v5291 = vmul.f32 %v5035, %v5163
        %v5292 = vmul.f32 %v5036, %v5164
        %v5293 = vmul.f32 %v5037, %v5165
        %v5294 = vmul.f32 %v5038, %v5166
        %v5295 = vmul.f32 %v5039, %v5167
        %v5296 = vmul.f32 %v5040, %v5168
        %v5297 = vmul.f32 %v5041, %v5169
        %v5298 = vmul.f32 %v5042, %v5170
        %v5299 = vmul.f32 %v5043, %v5171
        %v5300 = vmul.f32 %v5044, %v5172
        %v5301 = vmul.f32 %v5045, %v5173
        %v5302 = vmul.f32 %v5046, %v5174
        %v5303 = vmul.f32 %v5047, %v5175
        %v5304 = vmul.f32 %v5048, %v5176
        %v5305 = vmul.f32 %v5049, %v5177
        %v5306 = vmul.f32 %v5050, %v5178
        %v5307 = vmul.f32 %v5051, %v5179
        %v5308 = vmul.f32 %v5052, %v5180
        %v5309 = vmul.f32 %v5053, %v5181
        %v5310 = vmul.f32 %v5054, %v5182
        %v5311 = vmul.f32 %v5055, %v5183
        %v5312 = vmul.f32 %v5056, %v5184
        %v5313 = vmul.f32 %v5057, %v5185
        %v5314 = vmul.f32 %v5058, %v5186
        %v5315 = vmul.f32 %v5059, %v5187
        %v5316 = vmul.f32 %v5060, %v5188
        %v5317 = vmul.f32 %v5061, %v5189
        %v5318 = vmul.f32 %v5062, %v5190
        %v5319 = vmul.f32 %v5063, %v5191
        %v5320 = vmul.f32 %v5064, %v5192
        %v5321 = vmul.f32 %v5065, %v5193
        %v5322 = vmul.f32 %v5066, %v5194
        %v5323 = vmul.f32 %v5067, %v5195
        %v5324 = vmul.f32 %v5068, %v5196
        %v5325 = vmul.f32 %v5069, %v5197
        %v5326 = vmul.f32 %v5070, %v5198
        %v5327 = vmul.f32 %v5071, %v5199
        %v5328 = vmul.f32 %v5072, %v5200
        %v5329 = vmul.f32 %v5073, %v5201
        %v5330 = vmul.f32 %v5074, %v5202
        %v5331 = vmul.f32 %v5075, %v5203
        %v5332 = vmul.f32 %v5076, %v5204
        %v5333 = vmul.f32 %v5077, %v5205
        %v5334 = vmul.f32 %v5078, %v5206
        %v5335 = vmul.f32 %v5079, %v5207
        %v5336 = vmul.f32 %v5080, %v5208
        %v5337 = vmul.f32 %v5081, %v5209
        %v5338 = vmul.f32 %v5082, %v5210
        %v5339 = vmul.f32 %v5083, %v5211
        %v5340 = vmul.f32 %v5084, %v5212
        %v5341 = vmul.f32 %v5085, %v5213
        %v5342 = vmul.f32 %v5086, %v5214
        %v5343 = vmul.f32 %v5087, %v5215
        %v5344 = vmul.f32 %v5088, %v5216
        %v5345 = vmul.f32 %v5089, %v5217
        %v5346 = vmul.f32 %v5090, %v5218
        %v5347 = vmul.f32 %v5091, %v5219
        %v5348 = vmul.f32 %v5092, %v5220
        %v5349 = vmul.f32 %v5093, %v5221
        %v5350 = vmul.f32 %v5094, %v5222
        %v5351 = vmul.f32 %v5095, %v5223
        %v5352 = vmul.f32 %v5096, %v5224
        %v5353 = vmul.f32 %v5097, %v5225
        %v5354 = vmul.f32 %v5098, %v5226
        %v5355 = vmul.f32 %v5099, %v5227
        %v5356 = vmul.f32 %v5100, %v5228
        %v5357 = vmul.f32 %v5101, %v5229
        %v5358 = vmul.f32 %v5102, %v5230
        %v5359 = vmul.f32 %v5103, %v5231
        %v5360 = vmul.f32 %v5104, %v5232
        %v5361 = vmul.f32 %v5105, %v5233
        %v5362 = vmul.f32 %v5106, %v5234
        %v5363 = vmul.f32 %v5107, %v5235
        %v5364 = vmul.f32 %v5108, %v5236
        %v5365 = vmul.f32 %v5109, %v5237
        %v5366 = vmul.f32 %v5110, %v5238
        %v5367 = vmul.f32 %v5111, %v5239
        %v5368 = vmul.f32 %v5112, %v5240
        %v5369 = vmul.f32 %v5113, %v5241
        %v5370 = vmul.f32 %v5114, %v5242
        %v5371 = vmul.f32 %v5115, %v5243
        %vm5372 = vcmask 1040384
        %v5373 = vsel %vm5372, %v5244, 0.0
        %5374 = vadd.xlane.f32.xlu0 %v5373
        %v5375 = vpop.xlane.xlu0 %5374
        %v5376 = vsel %vm5372, %v5245, 0.0
        %5377 = vadd.xlane.f32.xlu0 %v5376
        %v5378 = vpop.xlane.xlu0 %5377
        %v5379 = vsel %vm5372, %v5246, 0.0
        %5380 = vadd.xlane.f32.xlu0 %v5379
        %v5381 = vpop.xlane.xlu0 %5380
        %v5382 = vsel %vm5372, %v5247, 0.0
        %5383 = vadd.xlane.f32.xlu0 %v5382
        %v5384 = vpop.xlane.xlu0 %5383
        %v5385 = vsel %vm5372, %v5248, 0.0
        %5386 = vadd.xlane.f32.xlu0 %v5385
        %v5387 = vpop.xlane.xlu0 %5386
        %v5388 = vsel %vm5372, %v5249, 0.0
        %5389 = vadd.xlane.f32.xlu0 %v5388
        %v5390 = vpop.xlane.xlu0 %5389
        %v5391 = vsel %vm5372, %v5250, 0.0
        %5392 = vadd.xlane.f32.xlu0 %v5391
        %v5393 = vpop.xlane.xlu0 %5392
        %v5394 = vsel %vm5372, %v5251, 0.0
        %5395 = vadd.xlane.f32.xlu0 %v5394
        %v5396 = vpop.xlane.xlu0 %5395
        %v5397 = vsel %vm5372, %v5252, 0.0
        %5398 = vadd.xlane.f32.xlu0 %v5397
        %v5399 = vpop.xlane.xlu0 %5398
        %v5400 = vsel %vm5372, %v5253, 0.0
        %5401 = vadd.xlane.f32.xlu0 %v5400
        %v5402 = vpop.xlane.xlu0 %5401
        %v5403 = vsel %vm5372, %v5254, 0.0
        %5404 = vadd.xlane.f32.xlu0 %v5403
        %v5405 = vpop.xlane.xlu0 %5404
        %v5406 = vsel %vm5372, %v5255, 0.0
        %5407 = vadd.xlane.f32.xlu0 %v5406
        %v5408 = vpop.xlane.xlu0 %5407
        %v5409 = vsel %vm5372, %v5256, 0.0
        %5410 = vadd.xlane.f32.xlu0 %v5409
        %v5411 = vpop.xlane.xlu0 %5410
        %v5412 = vsel %vm5372, %v5257, 0.0
        %5413 = vadd.xlane.f32.xlu0 %v5412
        %v5414 = vpop.xlane.xlu0 %5413
        %v5415 = vsel %vm5372, %v5258, 0.0
        %5416 = vadd.xlane.f32.xlu0 %v5415
        %v5417 = vpop.xlane.xlu0 %5416
        %v5418 = vsel %vm5372, %v5259, 0.0
        %5419 = vadd.xlane.f32.xlu0 %v5418
        %v5420 = vpop.xlane.xlu0 %5419
        %v5421 = vsel %vm5372, %v5260, 0.0
        %5422 = vadd.xlane.f32.xlu0 %v5421
        %v5423 = vpop.xlane.xlu0 %5422
        %v5424 = vsel %vm5372, %v5261, 0.0
        %5425 = vadd.xlane.f32.xlu0 %v5424
        %v5426 = vpop.xlane.xlu0 %5425
        %v5427 = vsel %vm5372, %v5262, 0.0
        %5428 = vadd.xlane.f32.xlu0 %v5427
        %v5429 = vpop.xlane.xlu0 %5428
        %v5430 = vsel %vm5372, %v5263, 0.0
        %5431 = vadd.xlane.f32.xlu0 %v5430
        %v5432 = vpop.xlane.xlu0 %5431
        %v5433 = vsel %vm5372, %v5264, 0.0
        %5434 = vadd.xlane.f32.xlu0 %v5433
        %v5435 = vpop.xlane.xlu0 %5434
        %v5436 = vsel %vm5372, %v5265, 0.0
        %5437 = vadd.xlane.f32.xlu0 %v5436
        %v5438 = vpop.xlane.xlu0 %5437
        %v5439 = vsel %vm5372, %v5266, 0.0
        %5440 = vadd.xlane.f32.xlu0 %v5439
        %v5441 = vpop.xlane.xlu0 %5440
        %v5442 = vsel %vm5372, %v5267, 0.0
        %5443 = vadd.xlane.f32.xlu0 %v5442
        %v5444 = vpop.xlane.xlu0 %5443
        %v5445 = vsel %vm5372, %v5268, 0.0
        %5446 = vadd.xlane.f32.xlu0 %v5445
        %v5447 = vpop.xlane.xlu0 %5446
        %v5448 = vsel %vm5372, %v5269, 0.0
        %5449 = vadd.xlane.f32.xlu0 %v5448
        %v5450 = vpop.xlane.xlu0 %5449
        %v5451 = vsel %vm5372, %v5270, 0.0
        %5452 = vadd.xlane.f32.xlu0 %v5451
        %v5453 = vpop.xlane.xlu0 %5452
        %v5454 = vsel %vm5372, %v5271, 0.0
        %5455 = vadd.xlane.f32.xlu0 %v5454
        %v5456 = vpop.xlane.xlu0 %5455
        %v5457 = vsel %vm5372, %v5272, 0.0
        %5458 = vadd.xlane.f32.xlu0 %v5457
        %v5459 = vpop.xlane.xlu0 %5458
        %v5460 = vsel %vm5372, %v5273, 0.0
        %5461 = vadd.xlane.f32.xlu0 %v5460
        %v5462 = vpop.xlane.xlu0 %5461
        %v5463 = vsel %vm5372, %v5274, 0.0
        %5464 = vadd.xlane.f32.xlu0 %v5463
        %v5465 = vpop.xlane.xlu0 %5464
        %v5466 = vsel %vm5372, %v5275, 0.0
        %5467 = vadd.xlane.f32.xlu0 %v5466
        %v5468 = vpop.xlane.xlu0 %5467
        %v5469 = vsel %vm5372, %v5276, 0.0
        %5470 = vadd.xlane.f32.xlu0 %v5469
        %v5471 = vpop.xlane.xlu0 %5470
        %v5472 = vsel %vm5372, %v5277, 0.0
        %5473 = vadd.xlane.f32.xlu0 %v5472
        %v5474 = vpop.xlane.xlu0 %5473
        %v5475 = vsel %vm5372, %v5278, 0.0
        %5476 = vadd.xlane.f32.xlu0 %v5475
        %v5477 = vpop.xlane.xlu0 %5476
        %v5478 = vsel %vm5372, %v5279, 0.0
        %5479 = vadd.xlane.f32.xlu0 %v5478
        %v5480 = vpop.xlane.xlu0 %5479
        %v5481 = vsel %vm5372, %v5280, 0.0
        %5482 = vadd.xlane.f32.xlu0 %v5481
        %v5483 = vpop.xlane.xlu0 %5482
        %v5484 = vsel %vm5372, %v5281, 0.0
        %5485 = vadd.xlane.f32.xlu0 %v5484
        %v5486 = vpop.xlane.xlu0 %5485
        %v5487 = vsel %vm5372, %v5282, 0.0
        %5488 = vadd.xlane.f32.xlu0 %v5487
        %v5489 = vpop.xlane.xlu0 %5488
        %v5490 = vsel %vm5372, %v5283, 0.0
        %5491 = vadd.xlane.f32.xlu0 %v5490
        %v5492 = vpop.xlane.xlu0 %5491
        %v5493 = vsel %vm5372, %v5284, 0.0
        %5494 = vadd.xlane.f32.xlu0 %v5493
        %v5495 = vpop.xlane.xlu0 %5494
        %v5496 = vsel %vm5372, %v5285, 0.0
        %5497 = vadd.xlane.f32.xlu0 %v5496
        %v5498 = vpop.xlane.xlu0 %5497
        %v5499 = vsel %vm5372, %v5286, 0.0
        %5500 = vadd.xlane.f32.xlu0 %v5499
        %v5501 = vpop.xlane.xlu0 %5500
        %v5502 = vsel %vm5372, %v5287, 0.0
        %5503 = vadd.xlane.f32.xlu0 %v5502
        %v5504 = vpop.xlane.xlu0 %5503
        %v5505 = vsel %vm5372, %v5288, 0.0
        %5506 = vadd.xlane.f32.xlu0 %v5505
        %v5507 = vpop.xlane.xlu0 %5506
        %v5508 = vsel %vm5372, %v5289, 0.0
        %5509 = vadd.xlane.f32.xlu0 %v5508
        %v5510 = vpop.xlane.xlu0 %5509
        %v5511 = vsel %vm5372, %v5290, 0.0
        %5512 = vadd.xlane.f32.xlu0 %v5511
        %v5513 = vpop.xlane.xlu0 %5512
        %v5514 = vsel %vm5372, %v5291, 0.0
        %5515 = vadd.xlane.f32.xlu0 %v5514
        %v5516 = vpop.xlane.xlu0 %5515
        %v5517 = vsel %vm5372, %v5292, 0.0
        %5518 = vadd.xlane.f32.xlu0 %v5517
        %v5519 = vpop.xlane.xlu0 %5518
        %v5520 = vsel %vm5372, %v5293, 0.0
        %5521 = vadd.xlane.f32.xlu0 %v5520
        %v5522 = vpop.xlane.xlu0 %5521
        %v5523 = vsel %vm5372, %v5294, 0.0
        %5524 = vadd.xlane.f32.xlu0 %v5523
        %v5525 = vpop.xlane.xlu0 %5524
        %v5526 = vsel %vm5372, %v5295, 0.0
        %5527 = vadd.xlane.f32.xlu0 %v5526
        %v5528 = vpop.xlane.xlu0 %5527
        %v5529 = vsel %vm5372, %v5296, 0.0
        %5530 = vadd.xlane.f32.xlu0 %v5529
        %v5531 = vpop.xlane.xlu0 %5530
        %v5532 = vsel %vm5372, %v5297, 0.0
        %5533 = vadd.xlane.f32.xlu0 %v5532
        %v5534 = vpop.xlane.xlu0 %5533
        %v5535 = vsel %vm5372, %v5298, 0.0
        %5536 = vadd.xlane.f32.xlu0 %v5535
        %v5537 = vpop.xlane.xlu0 %5536
        %v5538 = vsel %vm5372, %v5299, 0.0
        %5539 = vadd.xlane.f32.xlu0 %v5538
        %v5540 = vpop.xlane.xlu0 %5539
        %v5541 = vsel %vm5372, %v5300, 0.0
        %5542 = vadd.xlane.f32.xlu0 %v5541
        %v5543 = vpop.xlane.xlu0 %5542
        %v5544 = vsel %vm5372, %v5301, 0.0
        %5545 = vadd.xlane.f32.xlu0 %v5544
        %v5546 = vpop.xlane.xlu0 %5545
        %v5547 = vsel %vm5372, %v5302, 0.0
        %5548 = vadd.xlane.f32.xlu0 %v5547
        %v5549 = vpop.xlane.xlu0 %5548
        %v5550 = vsel %vm5372, %v5303, 0.0
        %5551 = vadd.xlane.f32.xlu0 %v5550
        %v5552 = vpop.xlane.xlu0 %5551
        %v5553 = vsel %vm5372, %v5304, 0.0
        %5554 = vadd.xlane.f32.xlu0 %v5553
        %v5555 = vpop.xlane.xlu0 %5554
        %v5556 = vsel %vm5372, %v5305, 0.0
        %5557 = vadd.xlane.f32.xlu0 %v5556
        %v5558 = vpop.xlane.xlu0 %5557
        %v5559 = vsel %vm5372, %v5306, 0.0
        %5560 = vadd.xlane.f32.xlu0 %v5559
        %v5561 = vpop.xlane.xlu0 %5560
        %v5562 = vsel %vm5372, %v5307, 0.0
        %5563 = vadd.xlane.f32.xlu0 %v5562
        %v5564 = vpop.xlane.xlu0 %5563
        %v5565 = vsel %vm5372, %v5308, 0.0
        %5566 = vadd.xlane.f32.xlu0 %v5565
        %v5567 = vpop.xlane.xlu0 %5566
        %v5568 = vsel %vm5372, %v5309, 0.0
        %5569 = vadd.xlane.f32.xlu0 %v5568
        %v5570 = vpop.xlane.xlu0 %5569
        %v5571 = vsel %vm5372, %v5310, 0.0
        %5572 = vadd.xlane.f32.xlu0 %v5571
        %v5573 = vpop.xlane.xlu0 %5572
        %v5574 = vsel %vm5372, %v5311, 0.0
        %5575 = vadd.xlane.f32.xlu0 %v5574
        %v5576 = vpop.xlane.xlu0 %5575
        %v5577 = vsel %vm5372, %v5312, 0.0
        %5578 = vadd.xlane.f32.xlu0 %v5577
        %v5579 = vpop.xlane.xlu0 %5578
        %v5580 = vsel %vm5372, %v5313, 0.0
        %5581 = vadd.xlane.f32.xlu0 %v5580
        %v5582 = vpop.xlane.xlu0 %5581
        %v5583 = vsel %vm5372, %v5314, 0.0
        %5584 = vadd.xlane.f32.xlu0 %v5583
        %v5585 = vpop.xlane.xlu0 %5584
        %v5586 = vsel %vm5372, %v5315, 0.0
        %5587 = vadd.xlane.f32.xlu0 %v5586
        %v5588 = vpop.xlane.xlu0 %5587
        %v5589 = vsel %vm5372, %v5316, 0.0
        %5590 = vadd.xlane.f32.xlu0 %v5589
        %v5591 = vpop.xlane.xlu0 %5590
        %v5592 = vsel %vm5372, %v5317, 0.0
        %5593 = vadd.xlane.f32.xlu0 %v5592
        %v5594 = vpop.xlane.xlu0 %5593
        %v5595 = vsel %vm5372, %v5318, 0.0
        %5596 = vadd.xlane.f32.xlu0 %v5595
        %v5597 = vpop.xlane.xlu0 %5596
        %v5598 = vsel %vm5372, %v5319, 0.0
        %5599 = vadd.xlane.f32.xlu0 %v5598
        %v5600 = vpop.xlane.xlu0 %5599
        %v5601 = vsel %vm5372, %v5320, 0.0
        %5602 = vadd.xlane.f32.xlu0 %v5601
        %v5603 = vpop.xlane.xlu0 %5602
        %v5604 = vsel %vm5372, %v5321, 0.0
        %5605 = vadd.xlane.f32.xlu0 %v5604
        %v5606 = vpop.xlane.xlu0 %5605
        %v5607 = vsel %vm5372, %v5322, 0.0
        %5608 = vadd.xlane.f32.xlu0 %v5607
        %v5609 = vpop.xlane.xlu0 %5608
        %v5610 = vsel %vm5372, %v5323, 0.0
        %5611 = vadd.xlane.f32.xlu0 %v5610
        %v5612 = vpop.xlane.xlu0 %5611
        %v5613 = vsel %vm5372, %v5324, 0.0
        %5614 = vadd.xlane.f32.xlu0 %v5613
        %v5615 = vpop.xlane.xlu0 %5614
        %v5616 = vsel %vm5372, %v5325, 0.0
        %5617 = vadd.xlane.f32.xlu0 %v5616
        %v5618 = vpop.xlane.xlu0 %5617
        %v5619 = vsel %vm5372, %v5326, 0.0
        %5620 = vadd.xlane.f32.xlu0 %v5619
        %v5621 = vpop.xlane.xlu0 %5620
        %v5622 = vsel %vm5372, %v5327, 0.0
        %5623 = vadd.xlane.f32.xlu0 %v5622
        %v5624 = vpop.xlane.xlu0 %5623
        %v5625 = vsel %vm5372, %v5328, 0.0
        %5626 = vadd.xlane.f32.xlu0 %v5625
        %v5627 = vpop.xlane.xlu0 %5626
        %v5628 = vsel %vm5372, %v5329, 0.0
        %5629 = vadd.xlane.f32.xlu0 %v5628
        %v5630 = vpop.xlane.xlu0 %5629
        %v5631 = vsel %vm5372, %v5330, 0.0
        %5632 = vadd.xlane.f32.xlu0 %v5631
        %v5633 = vpop.xlane.xlu0 %5632
        %v5634 = vsel %vm5372, %v5331, 0.0
        %5635 = vadd.xlane.f32.xlu0 %v5634
        %v5636 = vpop.xlane.xlu0 %5635
        %v5637 = vsel %vm5372, %v5332, 0.0
        %5638 = vadd.xlane.f32.xlu0 %v5637
        %v5639 = vpop.xlane.xlu0 %5638
        %v5640 = vsel %vm5372, %v5333, 0.0
        %5641 = vadd.xlane.f32.xlu0 %v5640
        %v5642 = vpop.xlane.xlu0 %5641
        %v5643 = vsel %vm5372, %v5334, 0.0
        %5644 = vadd.xlane.f32.xlu0 %v5643
        %v5645 = vpop.xlane.xlu0 %5644
        %v5646 = vsel %vm5372, %v5335, 0.0
        %5647 = vadd.xlane.f32.xlu0 %v5646
        %v5648 = vpop.xlane.xlu0 %5647
        %v5649 = vsel %vm5372, %v5336, 0.0
        %5650 = vadd.xlane.f32.xlu0 %v5649
        %v5651 = vpop.xlane.xlu0 %5650
        %v5652 = vsel %vm5372, %v5337, 0.0
        %5653 = vadd.xlane.f32.xlu0 %v5652
        %v5654 = vpop.xlane.xlu0 %5653
        %v5655 = vsel %vm5372, %v5338, 0.0
        %5656 = vadd.xlane.f32.xlu0 %v5655
        %v5657 = vpop.xlane.xlu0 %5656
        %v5658 = vsel %vm5372, %v5339, 0.0
        %5659 = vadd.xlane.f32.xlu0 %v5658
        %v5660 = vpop.xlane.xlu0 %5659
        %v5661 = vsel %vm5372, %v5340, 0.0
        %5662 = vadd.xlane.f32.xlu0 %v5661
        %v5663 = vpop.xlane.xlu0 %5662
        %v5664 = vsel %vm5372, %v5341, 0.0
        %5665 = vadd.xlane.f32.xlu0 %v5664
        %v5666 = vpop.xlane.xlu0 %5665
        %v5667 = vsel %vm5372, %v5342, 0.0
        %5668 = vadd.xlane.f32.xlu0 %v5667
        %v5669 = vpop.xlane.xlu0 %5668
        %v5670 = vsel %vm5372, %v5343, 0.0
        %5671 = vadd.xlane.f32.xlu0 %v5670
        %v5672 = vpop.xlane.xlu0 %5671
        %v5673 = vsel %vm5372, %v5344, 0.0
        %5674 = vadd.xlane.f32.xlu0 %v5673
        %v5675 = vpop.xlane.xlu0 %5674
        %v5676 = vsel %vm5372, %v5345, 0.0
        %5677 = vadd.xlane.f32.xlu0 %v5676
        %v5678 = vpop.xlane.xlu0 %5677
        %v5679 = vsel %vm5372, %v5346, 0.0
        %5680 = vadd.xlane.f32.xlu0 %v5679
        %v5681 = vpop.xlane.xlu0 %5680
        %v5682 = vsel %vm5372, %v5347, 0.0
        %5683 = vadd.xlane.f32.xlu0 %v5682
        %v5684 = vpop.xlane.xlu0 %5683
        %v5685 = vsel %vm5372, %v5348, 0.0
        %5686 = vadd.xlane.f32.xlu0 %v5685
        %v5687 = vpop.xlane.xlu0 %5686
        %v5688 = vsel %vm5372, %v5349, 0.0
        %5689 = vadd.xlane.f32.xlu0 %v5688
        %v5690 = vpop.xlane.xlu0 %5689
        %v5691 = vsel %vm5372, %v5350, 0.0
        %5692 = vadd.xlane.f32.xlu0 %v5691
        %v5693 = vpop.xlane.xlu0 %5692
        %v5694 = vsel %vm5372, %v5351, 0.0
        %5695 = vadd.xlane.f32.xlu0 %v5694
        %v5696 = vpop.xlane.xlu0 %5695
        %v5697 = vsel %vm5372, %v5352, 0.0
        %5698 = vadd.xlane.f32.xlu0 %v5697
        %v5699 = vpop.xlane.xlu0 %5698
        %v5700 = vsel %vm5372, %v5353, 0.0
        %5701 = vadd.xlane.f32.xlu0 %v5700
        %v5702 = vpop.xlane.xlu0 %5701
        %v5703 = vsel %vm5372, %v5354, 0.0
        %5704 = vadd.xlane.f32.xlu0 %v5703
        %v5705 = vpop.xlane.xlu0 %5704
        %v5706 = vsel %vm5372, %v5355, 0.0
        %5707 = vadd.xlane.f32.xlu0 %v5706
        %v5708 = vpop.xlane.xlu0 %5707
        %v5709 = vsel %vm5372, %v5356, 0.0
        %5710 = vadd.xlane.f32.xlu0 %v5709
        %v5711 = vpop.xlane.xlu0 %5710
        %v5712 = vsel %vm5372, %v5357, 0.0
        %5713 = vadd.xlane.f32.xlu0 %v5712
        %v5714 = vpop.xlane.xlu0 %5713
        %v5715 = vsel %vm5372, %v5358, 0.0
        %5716 = vadd.xlane.f32.xlu0 %v5715
        %v5717 = vpop.xlane.xlu0 %5716
        %v5718 = vsel %vm5372, %v5359, 0.0
        %5719 = vadd.xlane.f32.xlu0 %v5718
        %v5720 = vpop.xlane.xlu0 %5719
        %v5721 = vsel %vm5372, %v5360, 0.0
        %5722 = vadd.xlane.f32.xlu0 %v5721
        %v5723 = vpop.xlane.xlu0 %5722
        %v5724 = vsel %vm5372, %v5361, 0.0
        %5725 = vadd.xlane.f32.xlu0 %v5724
        %v5726 = vpop.xlane.xlu0 %5725
        %v5727 = vsel %vm5372, %v5362, 0.0
        %5728 = vadd.xlane.f32.xlu0 %v5727
        %v5729 = vpop.xlane.xlu0 %5728
        %v5730 = vsel %vm5372, %v5363, 0.0
        %5731 = vadd.xlane.f32.xlu0 %v5730
        %v5732 = vpop.xlane.xlu0 %5731
        %v5733 = vsel %vm5372, %v5364, 0.0
        %5734 = vadd.xlane.f32.xlu0 %v5733
        %v5735 = vpop.xlane.xlu0 %5734
        %v5736 = vsel %vm5372, %v5365, 0.0
        %5737 = vadd.xlane.f32.xlu0 %v5736
        %v5738 = vpop.xlane.xlu0 %5737
        %v5739 = vsel %vm5372, %v5366, 0.0
        %5740 = vadd.xlane.f32.xlu0 %v5739
        %v5741 = vpop.xlane.xlu0 %5740
        %v5742 = vsel %vm5372, %v5367, 0.0
        %5743 = vadd.xlane.f32.xlu0 %v5742
        %v5744 = vpop.xlane.xlu0 %5743
        %v5745 = vsel %vm5372, %v5368, 0.0
        %5746 = vadd.xlane.f32.xlu0 %v5745
        %v5747 = vpop.xlane.xlu0 %5746
        %v5748 = vsel %vm5372, %v5369, 0.0
        %5749 = vadd.xlane.f32.xlu0 %v5748
        %v5750 = vpop.xlane.xlu0 %5749
        %v5751 = vsel %vm5372, %v5370, 0.0
        %5752 = vadd.xlane.f32.xlu0 %v5751
        %v5753 = vpop.xlane.xlu0 %5752
        %v5754 = vsel %vm5372, %v5371, 0.0
        %5755 = vadd.xlane.f32.xlu0 %v5754
        %v5756 = vpop.xlane.xlu0 %5755
        %v5885 = vrot.slane %v5378, 7
        %v5886 = vsel %vm2769, %v5885, %v5375
        %v5887 = vrot.slane %v5381, 6
        %v5888 = vsel %vm2771, %v5887, %v5886
        %v5889 = vrot.slane %v5384, 5
        %v5890 = vsel %vm2773, %v5889, %v5888
        %v5891 = vrot.slane %v5387, 4
        %v5892 = vsel %vm2775, %v5891, %v5890
        %v5893 = vrot.slane %v5390, 3
        %v5894 = vsel %vm2777, %v5893, %v5892
        %v5895 = vrot.slane %v5393, 2
        %v5896 = vsel %vm2779, %v5895, %v5894
        %v5897 = vrot.slane %v5396, 1
        %v5898 = vsel %vm2781, %v5897, %v5896
        %v5899 = vrot.slane %v5402, 7
        %v5900 = vsel %vm2769, %v5899, %v5399
        %v5901 = vrot.slane %v5405, 6
        %v5902 = vsel %vm2771, %v5901, %v5900
        %v5903 = vrot.slane %v5408, 5
        %v5904 = vsel %vm2773, %v5903, %v5902
        %v5905 = vrot.slane %v5411, 4
        %v5906 = vsel %vm2775, %v5905, %v5904
        %v5907 = vrot.slane %v5414, 3
        %v5908 = vsel %vm2777, %v5907, %v5906
        %v5909 = vrot.slane %v5417, 2
        %v5910 = vsel %vm2779, %v5909, %v5908
        %v5911 = vrot.slane %v5420, 1
        %v5912 = vsel %vm2781, %v5911, %v5910
        %v5913 = vrot.slane %v5426, 7
        %v5914 = vsel %vm2769, %v5913, %v5423
        %v5915 = vrot.slane %v5429, 6
        %v5916 = vsel %vm2771, %v5915, %v5914
        %v5917 = vrot.slane %v5432, 5
        %v5918 = vsel %vm2773, %v5917, %v5916
        %v5919 = vrot.slane %v5435, 4
        %v5920 = vsel %vm2775, %v5919, %v5918
        %v5921 = vrot.slane %v5438, 3
        %v5922 = vsel %vm2777, %v5921, %v5920
        %v5923 = vrot.slane %v5441, 2
        %v5924 = vsel %vm2779, %v5923, %v5922
        %v5925 = vrot.slane %v5444, 1
        %v5926 = vsel %vm2781, %v5925, %v5924
        %v5927 = vrot.slane %v5450, 7
        %v5928 = vsel %vm2769, %v5927, %v5447
        %v5929 = vrot.slane %v5453, 6
        %v5930 = vsel %vm2771, %v5929, %v5928
        %v5931 = vrot.slane %v5456, 5
        %v5932 = vsel %vm2773, %v5931, %v5930
        %v5933 = vrot.slane %v5459, 4
        %v5934 = vsel %vm2775, %v5933, %v5932
        %v5935 = vrot.slane %v5462, 3
        %v5936 = vsel %vm2777, %v5935, %v5934
        %v5937 = vrot.slane %v5465, 2
        %v5938 = vsel %vm2779, %v5937, %v5936
        %v5939 = vrot.slane %v5468, 1
        %v5940 = vsel %vm2781, %v5939, %v5938
        %v5941 = vrot.slane %v5474, 7
        %v5942 = vsel %vm2769, %v5941, %v5471
        %v5943 = vrot.slane %v5477, 6
        %v5944 = vsel %vm2771, %v5943, %v5942
        %v5945 = vrot.slane %v5480, 5
        %v5946 = vsel %vm2773, %v5945, %v5944
        %v5947 = vrot.slane %v5483, 4
        %v5948 = vsel %vm2775, %v5947, %v5946
        %v5949 = vrot.slane %v5486, 3
        %v5950 = vsel %vm2777, %v5949, %v5948
        %v5951 = vrot.slane %v5489, 2
        %v5952 = vsel %vm2779, %v5951, %v5950
        %v5953 = vrot.slane %v5492, 1
        %v5954 = vsel %vm2781, %v5953, %v5952
        %v5955 = vrot.slane %v5498, 7
        %v5956 = vsel %vm2769, %v5955, %v5495
        %v5957 = vrot.slane %v5501, 6
        %v5958 = vsel %vm2771, %v5957, %v5956
        %v5959 = vrot.slane %v5504, 5
        %v5960 = vsel %vm2773, %v5959, %v5958
        %v5961 = vrot.slane %v5507, 4
        %v5962 = vsel %vm2775, %v5961, %v5960
        %v5963 = vrot.slane %v5510, 3
        %v5964 = vsel %vm2777, %v5963, %v5962
        %v5965 = vrot.slane %v5513, 2
        %v5966 = vsel %vm2779, %v5965, %v5964
        %v5967 = vrot.slane %v5516, 1
        %v5968 = vsel %vm2781, %v5967, %v5966
        %v5969 = vrot.slane %v5522, 7
        %v5970 = vsel %vm2769, %v5969, %v5519
        %v5971 = vrot.slane %v5525, 6
        %v5972 = vsel %vm2771, %v5971, %v5970
        %v5973 = vrot.slane %v5528, 5
        %v5974 = vsel %vm2773, %v5973, %v5972
        %v5975 = vrot.slane %v5531, 4
        %v5976 = vsel %vm2775, %v5975, %v5974
        %v5977 = vrot.slane %v5534, 3
        %v5978 = vsel %vm2777, %v5977, %v5976
        %v5979 = vrot.slane %v5537, 2
        %v5980 = vsel %vm2779, %v5979, %v5978
        %v5981 = vrot.slane %v5540, 1
        %v5982 = vsel %vm2781, %v5981, %v5980
        %v5983 = vrot.slane %v5546, 7
        %v5984 = vsel %vm2769, %v5983, %v5543
        %v5985 = vrot.slane %v5549, 6
        %v5986 = vsel %vm2771, %v5985, %v5984
        %v5987 = vrot.slane %v5552, 5
        %v5988 = vsel %vm2773, %v5987, %v5986
        %v5989 = vrot.slane %v5555, 4
        %v5990 = vsel %vm2775, %v5989, %v5988
        %v5991 = vrot.slane %v5558, 3
        %v5992 = vsel %vm2777, %v5991, %v5990
        %v5993 = vrot.slane %v5561, 2
        %v5994 = vsel %vm2779, %v5993, %v5992
        %v5995 = vrot.slane %v5564, 1
        %v5996 = vsel %vm2781, %v5995, %v5994
        %v5997 = vrot.slane %v5570, 7
        %v5998 = vsel %vm2769, %v5997, %v5567
        %v5999 = vrot.slane %v5573, 6
        %v6000 = vsel %vm2771, %v5999, %v5998
        %v6001 = vrot.slane %v5576, 5
        %v6002 = vsel %vm2773, %v6001, %v6000
        %v6003 = vrot.slane %v5579, 4
        %v6004 = vsel %vm2775, %v6003, %v6002
        %v6005 = vrot.slane %v5582, 3
        %v6006 = vsel %vm2777, %v6005, %v6004
        %v6007 = vrot.slane %v5585, 2
        %v6008 = vsel %vm2779, %v6007, %v6006
        %v6009 = vrot.slane %v5588, 1
        %v6010 = vsel %vm2781, %v6009, %v6008
        %v6011 = vrot.slane %v5594, 7
        %v6012 = vsel %vm2769, %v6011, %v5591
        %v6013 = vrot.slane %v5597, 6
        %v6014 = vsel %vm2771, %v6013, %v6012
        %v6015 = vrot.slane %v5600, 5
        %v6016 = vsel %vm2773, %v6015, %v6014
        %v6017 = vrot.slane %v5603, 4
        %v6018 = vsel %vm2775, %v6017, %v6016
        %v6019 = vrot.slane %v5606, 3
        %v6020 = vsel %vm2777, %v6019, %v6018
        %v6021 = vrot.slane %v5609, 2
        %v6022 = vsel %vm2779, %v6021, %v6020
        %v6023 = vrot.slane %v5612, 1
        %v6024 = vsel %vm2781, %v6023, %v6022
        %v6025 = vrot.slane %v5618, 7
        %v6026 = vsel %vm2769, %v6025, %v5615
        %v6027 = vrot.slane %v5621, 6
        %v6028 = vsel %vm2771, %v6027, %v6026
        %v6029 = vrot.slane %v5624, 5
        %v6030 = vsel %vm2773, %v6029, %v6028
        %v6031 = vrot.slane %v5627, 4
        %v6032 = vsel %vm2775, %v6031, %v6030
        %v6033 = vrot.slane %v5630, 3
        %v6034 = vsel %vm2777, %v6033, %v6032
        %v6035 = vrot.slane %v5633, 2
        %v6036 = vsel %vm2779, %v6035, %v6034
        %v6037 = vrot.slane %v5636, 1
        %v6038 = vsel %vm2781, %v6037, %v6036
        %v6039 = vrot.slane %v5642, 7
        %v6040 = vsel %vm2769, %v6039, %v5639
        %v6041 = vrot.slane %v5645, 6
        %v6042 = vsel %vm2771, %v6041, %v6040
        %v6043 = vrot.slane %v5648, 5
        %v6044 = vsel %vm2773, %v6043, %v6042
        %v6045 = vrot.slane %v5651, 4
        %v6046 = vsel %vm2775, %v6045, %v6044
        %v6047 = vrot.slane %v5654, 3
        %v6048 = vsel %vm2777, %v6047, %v6046
        %v6049 = vrot.slane %v5657, 2
        %v6050 = vsel %vm2779, %v6049, %v6048
        %v6051 = vrot.slane %v5660, 1
        %v6052 = vsel %vm2781, %v6051, %v6050
        %v6053 = vrot.slane %v5666, 7
        %v6054 = vsel %vm2769, %v6053, %v5663
        %v6055 = vrot.slane %v5669, 6
        %v6056 = vsel %vm2771, %v6055, %v6054
        %v6057 = vrot.slane %v5672, 5
        %v6058 = vsel %vm2773, %v6057, %v6056
        %v6059 = vrot.slane %v5675, 4
        %v6060 = vsel %vm2775, %v6059, %v6058
        %v6061 = vrot.slane %v5678, 3
        %v6062 = vsel %vm2777, %v6061, %v6060
        %v6063 = vrot.slane %v5681, 2
        %v6064 = vsel %vm2779, %v6063, %v6062
        %v6065 = vrot.slane %v5684, 1
        %v6066 = vsel %vm2781, %v6065, %v6064
        %v6067 = vrot.slane %v5690, 7
        %v6068 = vsel %vm2769, %v6067, %v5687
        %v6069 = vrot.slane %v5693, 6
        %v6070 = vsel %vm2771, %v6069, %v6068
        %v6071 = vrot.slane %v5696, 5
        %v6072 = vsel %vm2773, %v6071, %v6070
        %v6073 = vrot.slane %v5699, 4
        %v6074 = vsel %vm2775, %v6073, %v6072
        %v6075 = vrot.slane %v5702, 3
        %v6076 = vsel %vm2777, %v6075, %v6074
        %v6077 = vrot.slane %v5705, 2
        %v6078 = vsel %vm2779, %v6077, %v6076
        %v6079 = vrot.slane %v5708, 1
        %v6080 = vsel %vm2781, %v6079, %v6078
        %v6081 = vrot.slane %v5714, 7
        %v6082 = vsel %vm2769, %v6081, %v5711
        %v6083 = vrot.slane %v5717, 6
        %v6084 = vsel %vm2771, %v6083, %v6082
        %v6085 = vrot.slane %v5720, 5
        %v6086 = vsel %vm2773, %v6085, %v6084
        %v6087 = vrot.slane %v5723, 4
        %v6088 = vsel %vm2775, %v6087, %v6086
        %v6089 = vrot.slane %v5726, 3
        %v6090 = vsel %vm2777, %v6089, %v6088
        %v6091 = vrot.slane %v5729, 2
        %v6092 = vsel %vm2779, %v6091, %v6090
        %v6093 = vrot.slane %v5732, 1
        %v6094 = vsel %vm2781, %v6093, %v6092
        %v6095 = vrot.slane %v5738, 7
        %v6096 = vsel %vm2769, %v6095, %v5735
        %v6097 = vrot.slane %v5741, 6
        %v6098 = vsel %vm2771, %v6097, %v6096
        %v6099 = vrot.slane %v5744, 5
        %v6100 = vsel %vm2773, %v6099, %v6098
        %v6101 = vrot.slane %v5747, 4
        %v6102 = vsel %vm2775, %v6101, %v6100
        %v6103 = vrot.slane %v5750, 3
        %v6104 = vsel %vm2777, %v6103, %v6102
        %v6105 = vrot.slane %v5753, 2
        %v6106 = vsel %vm2779, %v6105, %v6104
        %v6107 = vrot.slane %v5756, 1
        %v6108 = vsel %vm2781, %v6107, %v6106
        %vm6125 = vcmask 48168
        %6126 = vst.msk [vmem:[#allocation2] sm:$0xff] %vm6125, %v5898
        %6127 = vst.msk [vmem:[#allocation2 + $0x10] sm:$0xff] %vm6125, %v5912
        %6128 = vst.msk [vmem:[#allocation2 + $0x20] sm:$0xff] %vm6125, %v5926
        %6129 = vst.msk [vmem:[#allocation2 + $0x30] sm:$0xff] %vm6125, %v5940
        %6130 = vst.msk [vmem:[#allocation2 + $0x40] sm:$0xff] %vm6125, %v5954
        %6131 = vst.msk [vmem:[#allocation2 + $0x50] sm:$0xff] %vm6125, %v5968
        %6132 = vst.msk [vmem:[#allocation2 + $0x60] sm:$0xff] %vm6125, %v5982
        %6133 = vst.msk [vmem:[#allocation2 + $0x70] sm:$0xff] %vm6125, %v5996
        %6134 = vst.msk [vmem:[#allocation2 + $0x80] sm:$0xff] %vm6125, %v6010
        %6135 = vst.msk [vmem:[#allocation2 + $0x90] sm:$0xff] %vm6125, %v6024
        %6136 = vst.msk [vmem:[#allocation2 + $0xa0] sm:$0xff] %vm6125, %v6038
        %6137 = vst.msk [vmem:[#allocation2 + $0xb0] sm:$0xff] %vm6125, %v6052
        %6138 = vst.msk [vmem:[#allocation2 + $0xc0] sm:$0xff] %vm6125, %v6066
        %6139 = vst.msk [vmem:[#allocation2 + $0xd0] sm:$0xff] %vm6125, %v6080
        %6140 = vst.msk [vmem:[#allocation2 + $0xe0] sm:$0xff] %vm6125, %v6094
        %6141 = vst.msk [vmem:[#allocation2 + $0xf0] sm:$0xff] %vm6125, %v6108
        %v6158 = vcombine.high %v830, %v830
        %v6160 = vunpack.c.l.s4 1966171168
        %v6161 = vunpack.c.0.s8 %v6160
        %v6162 = vlaneseq
        %v6163 = vshrl.u32 %v6162, 7
        %v6164 = vsub.s32 %v6161, %v6163
        %v6165 = vrot.slane %v830, %v6164
        %v6167 = vunpack.c.l.s4 1966171168
        %v6168 = vunpack.c.0.s8 %v6167
        %v6169 = vlaneseq
        %v6170 = vshrl.u32 %v6169, 7
        %v6171 = vsub.s32 %v6168, %v6170
        %v6172 = vrot.slane %v6158, %v6171
        %v6173 = vcombine.high %v6165, %v6165
        %v6174 = vcombine.high %v6172, %v6172
        %v6176 = vunpack.c.l.s4 1966171168
        %v6177 = vunpack.c.0.s8 %v6176
        %v6178 = vlaneseq
        %v6179 = vshrl.u32 %v6178, 7
        %v6180 = vsub.s32 %v6177, %v6179
        %v6181 = vrot.slane %v6165, %v6180
        %v6183 = vunpack.c.l.s4 1966171168
        %v6184 = vunpack.c.0.s8 %v6183
        %v6185 = vlaneseq
        %v6186 = vshrl.u32 %v6185, 7
        %v6187 = vsub.s32 %v6184, %v6186
        %v6188 = vrot.slane %v6172, %v6187
        %v6190 = vunpack.c.l.s4 1966171168
        %v6191 = vunpack.c.0.s8 %v6190
        %v6192 = vlaneseq
        %v6193 = vshrl.u32 %v6192, 7
        %v6194 = vsub.s32 %v6191, %v6193
        %v6195 = vrot.slane %v6173, %v6194
        %v6197 = vunpack.c.l.s4 1966171168
        %v6198 = vunpack.c.0.s8 %v6197
        %v6199 = vlaneseq
        %v6200 = vshrl.u32 %v6199, 7
        %v6201 = vsub.s32 %v6198, %v6200
        %v6202 = vrot.slane %v6174, %v6201
        %v6203 = vcombine.high %v6181, %v6181
        %v6204 = vcombine.high %v6188, %v6188
        %v6205 = vcombine.high %v6195, %v6195
        %v6206 = vcombine.high %v6202, %v6202
        %v6207 = vcombine.high %v831, %v831
        %v6209 = vunpack.c.l.s4 1966171168
        %v6210 = vunpack.c.0.s8 %v6209
        %v6211 = vlaneseq
        %v6212 = vshrl.u32 %v6211, 7
        %v6213 = vsub.s32 %v6210, %v6212
        %v6214 = vrot.slane %v831, %v6213
        %v6216 = vunpack.c.l.s4 1966171168
        %v6217 = vunpack.c.0.s8 %v6216
        %v6218 = vlaneseq
        %v6219 = vshrl.u32 %v6218, 7
        %v6220 = vsub.s32 %v6217, %v6219
        %v6221 = vrot.slane %v6207, %v6220
        %v6222 = vcombine.high %v6214, %v6214
        %v6223 = vcombine.high %v6221, %v6221
        %v6225 = vunpack.c.l.s4 1966171168
        %v6226 = vunpack.c.0.s8 %v6225
        %v6227 = vlaneseq
        %v6228 = vshrl.u32 %v6227, 7
        %v6229 = vsub.s32 %v6226, %v6228
        %v6230 = vrot.slane %v6214, %v6229
        %v6232 = vunpack.c.l.s4 1966171168
        %v6233 = vunpack.c.0.s8 %v6232
        %v6234 = vlaneseq
        %v6235 = vshrl.u32 %v6234, 7
        %v6236 = vsub.s32 %v6233, %v6235
        %v6237 = vrot.slane %v6221, %v6236
        %v6239 = vunpack.c.l.s4 1966171168
        %v6240 = vunpack.c.0.s8 %v6239
        %v6241 = vlaneseq
        %v6242 = vshrl.u32 %v6241, 7
        %v6243 = vsub.s32 %v6240, %v6242
        %v6244 = vrot.slane %v6222, %v6243
        %v6246 = vunpack.c.l.s4 1966171168
        %v6247 = vunpack.c.0.s8 %v6246
        %v6248 = vlaneseq
        %v6249 = vshrl.u32 %v6248, 7
        %v6250 = vsub.s32 %v6247, %v6249
        %v6251 = vrot.slane %v6223, %v6250
        %v6252 = vcombine.high %v6230, %v6230
        %v6253 = vcombine.high %v6237, %v6237
        %v6254 = vcombine.high %v6244, %v6244
        %v6255 = vcombine.high %v6251, %v6251
        %v6256 = vcombine.high %v832, %v832
        %v6258 = vunpack.c.l.s4 1966171168
        %v6259 = vunpack.c.0.s8 %v6258
        %v6260 = vlaneseq
        %v6261 = vshrl.u32 %v6260, 7
        %v6262 = vsub.s32 %v6259, %v6261
        %v6263 = vrot.slane %v832, %v6262
        %v6265 = vunpack.c.l.s4 1966171168
        %v6266 = vunpack.c.0.s8 %v6265
        %v6267 = vlaneseq
        %v6268 = vshrl.u32 %v6267, 7
        %v6269 = vsub.s32 %v6266, %v6268
        %v6270 = vrot.slane %v6256, %v6269
        %v6271 = vcombine.high %v6263, %v6263
        %v6272 = vcombine.high %v6270, %v6270
        %v6274 = vunpack.c.l.s4 1966171168
        %v6275 = vunpack.c.0.s8 %v6274
        %v6276 = vlaneseq
        %v6277 = vshrl.u32 %v6276, 7
        %v6278 = vsub.s32 %v6275, %v6277
        %v6279 = vrot.slane %v6263, %v6278
        %v6281 = vunpack.c.l.s4 1966171168
        %v6282 = vunpack.c.0.s8 %v6281
        %v6283 = vlaneseq
        %v6284 = vshrl.u32 %v6283, 7
        %v6285 = vsub.s32 %v6282, %v6284
        %v6286 = vrot.slane %v6270, %v6285
        %v6288 = vunpack.c.l.s4 1966171168
        %v6289 = vunpack.c.0.s8 %v6288
        %v6290 = vlaneseq
        %v6291 = vshrl.u32 %v6290, 7
        %v6292 = vsub.s32 %v6289, %v6291
        %v6293 = vrot.slane %v6271, %v6292
        %v6295 = vunpack.c.l.s4 1966171168
        %v6296 = vunpack.c.0.s8 %v6295
        %v6297 = vlaneseq
        %v6298 = vshrl.u32 %v6297, 7
        %v6299 = vsub.s32 %v6296, %v6298
        %v6300 = vrot.slane %v6272, %v6299
        %v6301 = vcombine.high %v6279, %v6279
        %v6302 = vcombine.high %v6286, %v6286
        %v6303 = vcombine.high %v6293, %v6293
        %v6304 = vcombine.high %v6300, %v6300
        %v6305 = vcombine.high %v833, %v833
        %v6307 = vunpack.c.l.s4 1966171168
        %v6308 = vunpack.c.0.s8 %v6307
        %v6309 = vlaneseq
        %v6310 = vshrl.u32 %v6309, 7
        %v6311 = vsub.s32 %v6308, %v6310
        %v6312 = vrot.slane %v833, %v6311
        %v6314 = vunpack.c.l.s4 1966171168
        %v6315 = vunpack.c.0.s8 %v6314
        %v6316 = vlaneseq
        %v6317 = vshrl.u32 %v6316, 7
        %v6318 = vsub.s32 %v6315, %v6317
        %v6319 = vrot.slane %v6305, %v6318
        %v6320 = vcombine.high %v6312, %v6312
        %v6321 = vcombine.high %v6319, %v6319
        %v6323 = vunpack.c.l.s4 1966171168
        %v6324 = vunpack.c.0.s8 %v6323
        %v6325 = vlaneseq
        %v6326 = vshrl.u32 %v6325, 7
        %v6327 = vsub.s32 %v6324, %v6326
        %v6328 = vrot.slane %v6312, %v6327
        %v6330 = vunpack.c.l.s4 1966171168
        %v6331 = vunpack.c.0.s8 %v6330
        %v6332 = vlaneseq
        %v6333 = vshrl.u32 %v6332, 7
        %v6334 = vsub.s32 %v6331, %v6333
        %v6335 = vrot.slane %v6319, %v6334
        %v6337 = vunpack.c.l.s4 1966171168
        %v6338 = vunpack.c.0.s8 %v6337
        %v6339 = vlaneseq
        %v6340 = vshrl.u32 %v6339, 7
        %v6341 = vsub.s32 %v6338, %v6340
        %v6342 = vrot.slane %v6320, %v6341
        %v6344 = vunpack.c.l.s4 1966171168
        %v6345 = vunpack.c.0.s8 %v6344
        %v6346 = vlaneseq
        %v6347 = vshrl.u32 %v6346, 7
        %v6348 = vsub.s32 %v6345, %v6347
        %v6349 = vrot.slane %v6321, %v6348
        %v6350 = vcombine.high %v6328, %v6328
        %v6351 = vcombine.high %v6335, %v6335
        %v6352 = vcombine.high %v6342, %v6342
        %v6353 = vcombine.high %v6349, %v6349
        %v6354 = vcombine.high %v834, %v834
        %v6356 = vunpack.c.l.s4 1966171168
        %v6357 = vunpack.c.0.s8 %v6356
        %v6358 = vlaneseq
        %v6359 = vshrl.u32 %v6358, 7
        %v6360 = vsub.s32 %v6357, %v6359
        %v6361 = vrot.slane %v834, %v6360
        %v6363 = vunpack.c.l.s4 1966171168
        %v6364 = vunpack.c.0.s8 %v6363
        %v6365 = vlaneseq
        %v6366 = vshrl.u32 %v6365, 7
        %v6367 = vsub.s32 %v6364, %v6366
        %v6368 = vrot.slane %v6354, %v6367
        %v6369 = vcombine.high %v6361, %v6361
        %v6370 = vcombine.high %v6368, %v6368
        %v6372 = vunpack.c.l.s4 1966171168
        %v6373 = vunpack.c.0.s8 %v6372
        %v6374 = vlaneseq
        %v6375 = vshrl.u32 %v6374, 7
        %v6376 = vsub.s32 %v6373, %v6375
        %v6377 = vrot.slane %v6361, %v6376
        %v6379 = vunpack.c.l.s4 1966171168
        %v6380 = vunpack.c.0.s8 %v6379
        %v6381 = vlaneseq
        %v6382 = vshrl.u32 %v6381, 7
        %v6383 = vsub.s32 %v6380, %v6382
        %v6384 = vrot.slane %v6368, %v6383
        %v6386 = vunpack.c.l.s4 1966171168
        %v6387 = vunpack.c.0.s8 %v6386
        %v6388 = vlaneseq
        %v6389 = vshrl.u32 %v6388, 7
        %v6390 = vsub.s32 %v6387, %v6389
        %v6391 = vrot.slane %v6369, %v6390
        %v6393 = vunpack.c.l.s4 1966171168
        %v6394 = vunpack.c.0.s8 %v6393
        %v6395 = vlaneseq
        %v6396 = vshrl.u32 %v6395, 7
        %v6397 = vsub.s32 %v6394, %v6396
        %v6398 = vrot.slane %v6370, %v6397
        %v6399 = vcombine.high %v6377, %v6377
        %v6400 = vcombine.high %v6384, %v6384
        %v6401 = vcombine.high %v6391, %v6391
        %v6402 = vcombine.high %v6398, %v6398
        %v6403 = vcombine.high %v835, %v835
        %v6405 = vunpack.c.l.s4 1966171168
        %v6406 = vunpack.c.0.s8 %v6405
        %v6407 = vlaneseq
        %v6408 = vshrl.u32 %v6407, 7
        %v6409 = vsub.s32 %v6406, %v6408
        %v6410 = vrot.slane %v835, %v6409
        %v6412 = vunpack.c.l.s4 1966171168
        %v6413 = vunpack.c.0.s8 %v6412
        %v6414 = vlaneseq
        %v6415 = vshrl.u32 %v6414, 7
        %v6416 = vsub.s32 %v6413, %v6415
        %v6417 = vrot.slane %v6403, %v6416
        %v6418 = vcombine.high %v6410, %v6410
        %v6419 = vcombine.high %v6417, %v6417
        %v6421 = vunpack.c.l.s4 1966171168
        %v6422 = vunpack.c.0.s8 %v6421
        %v6423 = vlaneseq
        %v6424 = vshrl.u32 %v6423, 7
        %v6425 = vsub.s32 %v6422, %v6424
        %v6426 = vrot.slane %v6410, %v6425
        %v6428 = vunpack.c.l.s4 1966171168
        %v6429 = vunpack.c.0.s8 %v6428
        %v6430 = vlaneseq
        %v6431 = vshrl.u32 %v6430, 7
        %v6432 = vsub.s32 %v6429, %v6431
        %v6433 = vrot.slane %v6417, %v6432
        %v6435 = vunpack.c.l.s4 1966171168
        %v6436 = vunpack.c.0.s8 %v6435
        %v6437 = vlaneseq
        %v6438 = vshrl.u32 %v6437, 7
        %v6439 = vsub.s32 %v6436, %v6438
        %v6440 = vrot.slane %v6418, %v6439
        %v6442 = vunpack.c.l.s4 1966171168
        %v6443 = vunpack.c.0.s8 %v6442
        %v6444 = vlaneseq
        %v6445 = vshrl.u32 %v6444, 7
        %v6446 = vsub.s32 %v6443, %v6445
        %v6447 = vrot.slane %v6419, %v6446
        %v6448 = vcombine.high %v6426, %v6426
        %v6449 = vcombine.high %v6433, %v6433
        %v6450 = vcombine.high %v6440, %v6440
        %v6451 = vcombine.high %v6447, %v6447
        %v6452 = vcombine.high %v836, %v836
        %v6454 = vunpack.c.l.s4 1966171168
        %v6455 = vunpack.c.0.s8 %v6454
        %v6456 = vlaneseq
        %v6457 = vshrl.u32 %v6456, 7
        %v6458 = vsub.s32 %v6455, %v6457
        %v6459 = vrot.slane %v836, %v6458
        %v6461 = vunpack.c.l.s4 1966171168
        %v6462 = vunpack.c.0.s8 %v6461
        %v6463 = vlaneseq
        %v6464 = vshrl.u32 %v6463, 7
        %v6465 = vsub.s32 %v6462, %v6464
        %v6466 = vrot.slane %v6452, %v6465
        %v6467 = vcombine.high %v6459, %v6459
        %v6468 = vcombine.high %v6466, %v6466
        %v6470 = vunpack.c.l.s4 1966171168
        %v6471 = vunpack.c.0.s8 %v6470
        %v6472 = vlaneseq
        %v6473 = vshrl.u32 %v6472, 7
        %v6474 = vsub.s32 %v6471, %v6473
        %v6475 = vrot.slane %v6459, %v6474
        %v6477 = vunpack.c.l.s4 1966171168
        %v6478 = vunpack.c.0.s8 %v6477
        %v6479 = vlaneseq
        %v6480 = vshrl.u32 %v6479, 7
        %v6481 = vsub.s32 %v6478, %v6480
        %v6482 = vrot.slane %v6466, %v6481
        %v6484 = vunpack.c.l.s4 1966171168
        %v6485 = vunpack.c.0.s8 %v6484
        %v6486 = vlaneseq
        %v6487 = vshrl.u32 %v6486, 7
        %v6488 = vsub.s32 %v6485, %v6487
        %v6489 = vrot.slane %v6467, %v6488
        %v6491 = vunpack.c.l.s4 1966171168
        %v6492 = vunpack.c.0.s8 %v6491
        %v6493 = vlaneseq
        %v6494 = vshrl.u32 %v6493, 7
        %v6495 = vsub.s32 %v6492, %v6494
        %v6496 = vrot.slane %v6468, %v6495
        %v6497 = vcombine.high %v6475, %v6475
        %v6498 = vcombine.high %v6482, %v6482
        %v6499 = vcombine.high %v6489, %v6489
        %v6500 = vcombine.high %v6496, %v6496
        %v6501 = vcombine.high %v837, %v837
        %v6503 = vunpack.c.l.s4 1966171168
        %v6504 = vunpack.c.0.s8 %v6503
        %v6505 = vlaneseq
        %v6506 = vshrl.u32 %v6505, 7
        %v6507 = vsub.s32 %v6504, %v6506
        %v6508 = vrot.slane %v837, %v6507
        %v6510 = vunpack.c.l.s4 1966171168
        %v6511 = vunpack.c.0.s8 %v6510
        %v6512 = vlaneseq
        %v6513 = vshrl.u32 %v6512, 7
        %v6514 = vsub.s32 %v6511, %v6513
        %v6515 = vrot.slane %v6501, %v6514
        %v6516 = vcombine.high %v6508, %v6508
        %v6517 = vcombine.high %v6515, %v6515
        %v6519 = vunpack.c.l.s4 1966171168
        %v6520 = vunpack.c.0.s8 %v6519
        %v6521 = vlaneseq
        %v6522 = vshrl.u32 %v6521, 7
        %v6523 = vsub.s32 %v6520, %v6522
        %v6524 = vrot.slane %v6508, %v6523
        %v6526 = vunpack.c.l.s4 1966171168
        %v6527 = vunpack.c.0.s8 %v6526
        %v6528 = vlaneseq
        %v6529 = vshrl.u32 %v6528, 7
        %v6530 = vsub.s32 %v6527, %v6529
        %v6531 = vrot.slane %v6515, %v6530
        %v6533 = vunpack.c.l.s4 1966171168
        %v6534 = vunpack.c.0.s8 %v6533
        %v6535 = vlaneseq
        %v6536 = vshrl.u32 %v6535, 7
        %v6537 = vsub.s32 %v6534, %v6536
        %v6538 = vrot.slane %v6516, %v6537
        %v6540 = vunpack.c.l.s4 1966171168
        %v6541 = vunpack.c.0.s8 %v6540
        %v6542 = vlaneseq
        %v6543 = vshrl.u32 %v6542, 7
        %v6544 = vsub.s32 %v6541, %v6543
        %v6545 = vrot.slane %v6517, %v6544
        %v6546 = vcombine.high %v6524, %v6524
        %v6547 = vcombine.high %v6531, %v6531
        %v6548 = vcombine.high %v6538, %v6538
        %v6549 = vcombine.high %v6545, %v6545
        %v6550 = vcombine.high %v838, %v838
        %v6552 = vunpack.c.l.s4 1966171168
        %v6553 = vunpack.c.0.s8 %v6552
        %v6554 = vlaneseq
        %v6555 = vshrl.u32 %v6554, 7
        %v6556 = vsub.s32 %v6553, %v6555
        %v6557 = vrot.slane %v838, %v6556
        %v6559 = vunpack.c.l.s4 1966171168
        %v6560 = vunpack.c.0.s8 %v6559
        %v6561 = vlaneseq
        %v6562 = vshrl.u32 %v6561, 7
        %v6563 = vsub.s32 %v6560, %v6562
        %v6564 = vrot.slane %v6550, %v6563
        %v6565 = vcombine.high %v6557, %v6557
        %v6566 = vcombine.high %v6564, %v6564
        %v6568 = vunpack.c.l.s4 1966171168
        %v6569 = vunpack.c.0.s8 %v6568
        %v6570 = vlaneseq
        %v6571 = vshrl.u32 %v6570, 7
        %v6572 = vsub.s32 %v6569, %v6571
        %v6573 = vrot.slane %v6557, %v6572
        %v6575 = vunpack.c.l.s4 1966171168
        %v6576 = vunpack.c.0.s8 %v6575
        %v6577 = vlaneseq
        %v6578 = vshrl.u32 %v6577, 7
        %v6579 = vsub.s32 %v6576, %v6578
        %v6580 = vrot.slane %v6564, %v6579
        %v6582 = vunpack.c.l.s4 1966171168
        %v6583 = vunpack.c.0.s8 %v6582
        %v6584 = vlaneseq
        %v6585 = vshrl.u32 %v6584, 7
        %v6586 = vsub.s32 %v6583, %v6585
        %v6587 = vrot.slane %v6565, %v6586
        %v6589 = vunpack.c.l.s4 1966171168
        %v6590 = vunpack.c.0.s8 %v6589
        %v6591 = vlaneseq
        %v6592 = vshrl.u32 %v6591, 7
        %v6593 = vsub.s32 %v6590, %v6592
        %v6594 = vrot.slane %v6566, %v6593
        %v6595 = vcombine.high %v6573, %v6573
        %v6596 = vcombine.high %v6580, %v6580
        %v6597 = vcombine.high %v6587, %v6587
        %v6598 = vcombine.high %v6594, %v6594
        %v6599 = vcombine.high %v839, %v839
        %v6601 = vunpack.c.l.s4 1966171168
        %v6602 = vunpack.c.0.s8 %v6601
        %v6603 = vlaneseq
        %v6604 = vshrl.u32 %v6603, 7
        %v6605 = vsub.s32 %v6602, %v6604
        %v6606 = vrot.slane %v839, %v6605
        %v6608 = vunpack.c.l.s4 1966171168
        %v6609 = vunpack.c.0.s8 %v6608
        %v6610 = vlaneseq
        %v6611 = vshrl.u32 %v6610, 7
        %v6612 = vsub.s32 %v6609, %v6611
        %v6613 = vrot.slane %v6599, %v6612
        %v6614 = vcombine.high %v6606, %v6606
        %v6615 = vcombine.high %v6613, %v6613
        %v6617 = vunpack.c.l.s4 1966171168
        %v6618 = vunpack.c.0.s8 %v6617
        %v6619 = vlaneseq
        %v6620 = vshrl.u32 %v6619, 7
        %v6621 = vsub.s32 %v6618, %v6620
        %v6622 = vrot.slane %v6606, %v6621
        %v6624 = vunpack.c.l.s4 1966171168
        %v6625 = vunpack.c.0.s8 %v6624
        %v6626 = vlaneseq
        %v6627 = vshrl.u32 %v6626, 7
        %v6628 = vsub.s32 %v6625, %v6627
        %v6629 = vrot.slane %v6613, %v6628
        %v6631 = vunpack.c.l.s4 1966171168
        %v6632 = vunpack.c.0.s8 %v6631
        %v6633 = vlaneseq
        %v6634 = vshrl.u32 %v6633, 7
        %v6635 = vsub.s32 %v6632, %v6634
        %v6636 = vrot.slane %v6614, %v6635
        %v6638 = vunpack.c.l.s4 1966171168
        %v6639 = vunpack.c.0.s8 %v6638
        %v6640 = vlaneseq
        %v6641 = vshrl.u32 %v6640, 7
        %v6642 = vsub.s32 %v6639, %v6641
        %v6643 = vrot.slane %v6615, %v6642
        %v6644 = vcombine.high %v6622, %v6622
        %v6645 = vcombine.high %v6629, %v6629
        %v6646 = vcombine.high %v6636, %v6636
        %v6647 = vcombine.high %v6643, %v6643
        %v6648 = vcombine.high %v840, %v840
        %v6650 = vunpack.c.l.s4 1966171168
        %v6651 = vunpack.c.0.s8 %v6650
        %v6652 = vlaneseq
        %v6653 = vshrl.u32 %v6652, 7
        %v6654 = vsub.s32 %v6651, %v6653
        %v6655 = vrot.slane %v840, %v6654
        %v6657 = vunpack.c.l.s4 1966171168
        %v6658 = vunpack.c.0.s8 %v6657
        %v6659 = vlaneseq
        %v6660 = vshrl.u32 %v6659, 7
        %v6661 = vsub.s32 %v6658, %v6660
        %v6662 = vrot.slane %v6648, %v6661
        %v6663 = vcombine.high %v6655, %v6655
        %v6664 = vcombine.high %v6662, %v6662
        %v6666 = vunpack.c.l.s4 1966171168
        %v6667 = vunpack.c.0.s8 %v6666
        %v6668 = vlaneseq
        %v6669 = vshrl.u32 %v6668, 7
        %v6670 = vsub.s32 %v6667, %v6669
        %v6671 = vrot.slane %v6655, %v6670
        %v6673 = vunpack.c.l.s4 1966171168
        %v6674 = vunpack.c.0.s8 %v6673
        %v6675 = vlaneseq
        %v6676 = vshrl.u32 %v6675, 7
        %v6677 = vsub.s32 %v6674, %v6676
        %v6678 = vrot.slane %v6662, %v6677
        %v6680 = vunpack.c.l.s4 1966171168
        %v6681 = vunpack.c.0.s8 %v6680
        %v6682 = vlaneseq
        %v6683 = vshrl.u32 %v6682, 7
        %v6684 = vsub.s32 %v6681, %v6683
        %v6685 = vrot.slane %v6663, %v6684
        %v6687 = vunpack.c.l.s4 1966171168
        %v6688 = vunpack.c.0.s8 %v6687
        %v6689 = vlaneseq
        %v6690 = vshrl.u32 %v6689, 7
        %v6691 = vsub.s32 %v6688, %v6690
        %v6692 = vrot.slane %v6664, %v6691
        %v6693 = vcombine.high %v6671, %v6671
        %v6694 = vcombine.high %v6678, %v6678
        %v6695 = vcombine.high %v6685, %v6685
        %v6696 = vcombine.high %v6692, %v6692
        %v6697 = vcombine.high %v841, %v841
        %v6699 = vunpack.c.l.s4 1966171168
        %v6700 = vunpack.c.0.s8 %v6699
        %v6701 = vlaneseq
        %v6702 = vshrl.u32 %v6701, 7
        %v6703 = vsub.s32 %v6700, %v6702
        %v6704 = vrot.slane %v841, %v6703
        %v6706 = vunpack.c.l.s4 1966171168
        %v6707 = vunpack.c.0.s8 %v6706
        %v6708 = vlaneseq
        %v6709 = vshrl.u32 %v6708, 7
        %v6710 = vsub.s32 %v6707, %v6709
        %v6711 = vrot.slane %v6697, %v6710
        %v6712 = vcombine.high %v6704, %v6704
        %v6713 = vcombine.high %v6711, %v6711
        %v6715 = vunpack.c.l.s4 1966171168
        %v6716 = vunpack.c.0.s8 %v6715
        %v6717 = vlaneseq
        %v6718 = vshrl.u32 %v6717, 7
        %v6719 = vsub.s32 %v6716, %v6718
        %v6720 = vrot.slane %v6704, %v6719
        %v6722 = vunpack.c.l.s4 1966171168
        %v6723 = vunpack.c.0.s8 %v6722
        %v6724 = vlaneseq
        %v6725 = vshrl.u32 %v6724, 7
        %v6726 = vsub.s32 %v6723, %v6725
        %v6727 = vrot.slane %v6711, %v6726
        %v6729 = vunpack.c.l.s4 1966171168
        %v6730 = vunpack.c.0.s8 %v6729
        %v6731 = vlaneseq
        %v6732 = vshrl.u32 %v6731, 7
        %v6733 = vsub.s32 %v6730, %v6732
        %v6734 = vrot.slane %v6712, %v6733
        %v6736 = vunpack.c.l.s4 1966171168
        %v6737 = vunpack.c.0.s8 %v6736
        %v6738 = vlaneseq
        %v6739 = vshrl.u32 %v6738, 7
        %v6740 = vsub.s32 %v6737, %v6739
        %v6741 = vrot.slane %v6713, %v6740
        %v6742 = vcombine.high %v6720, %v6720
        %v6743 = vcombine.high %v6727, %v6727
        %v6744 = vcombine.high %v6734, %v6734
        %v6745 = vcombine.high %v6741, %v6741
        %v6746 = vcombine.high %v842, %v842
        %v6748 = vunpack.c.l.s4 1966171168
        %v6749 = vunpack.c.0.s8 %v6748
        %v6750 = vlaneseq
        %v6751 = vshrl.u32 %v6750, 7
        %v6752 = vsub.s32 %v6749, %v6751
        %v6753 = vrot.slane %v842, %v6752
        %v6755 = vunpack.c.l.s4 1966171168
        %v6756 = vunpack.c.0.s8 %v6755
        %v6757 = vlaneseq
        %v6758 = vshrl.u32 %v6757, 7
        %v6759 = vsub.s32 %v6756, %v6758
        %v6760 = vrot.slane %v6746, %v6759
        %v6761 = vcombine.high %v6753, %v6753
        %v6762 = vcombine.high %v6760, %v6760
        %v6764 = vunpack.c.l.s4 1966171168
        %v6765 = vunpack.c.0.s8 %v6764
        %v6766 = vlaneseq
        %v6767 = vshrl.u32 %v6766, 7
        %v6768 = vsub.s32 %v6765, %v6767
        %v6769 = vrot.slane %v6753, %v6768
        %v6771 = vunpack.c.l.s4 1966171168
        %v6772 = vunpack.c.0.s8 %v6771
        %v6773 = vlaneseq
        %v6774 = vshrl.u32 %v6773, 7
        %v6775 = vsub.s32 %v6772, %v6774
        %v6776 = vrot.slane %v6760, %v6775
        %v6778 = vunpack.c.l.s4 1966171168
        %v6779 = vunpack.c.0.s8 %v6778
        %v6780 = vlaneseq
        %v6781 = vshrl.u32 %v6780, 7
        %v6782 = vsub.s32 %v6779, %v6781
        %v6783 = vrot.slane %v6761, %v6782
        %v6785 = vunpack.c.l.s4 1966171168
        %v6786 = vunpack.c.0.s8 %v6785
        %v6787 = vlaneseq
        %v6788 = vshrl.u32 %v6787, 7
        %v6789 = vsub.s32 %v6786, %v6788
        %v6790 = vrot.slane %v6762, %v6789
        %v6791 = vcombine.high %v6769, %v6769
        %v6792 = vcombine.high %v6776, %v6776
        %v6793 = vcombine.high %v6783, %v6783
        %v6794 = vcombine.high %v6790, %v6790
        %v6795 = vcombine.high %v843, %v843
        %v6797 = vunpack.c.l.s4 1966171168
        %v6798 = vunpack.c.0.s8 %v6797
        %v6799 = vlaneseq
        %v6800 = vshrl.u32 %v6799, 7
        %v6801 = vsub.s32 %v6798, %v6800
        %v6802 = vrot.slane %v843, %v6801
        %v6804 = vunpack.c.l.s4 1966171168
        %v6805 = vunpack.c.0.s8 %v6804
        %v6806 = vlaneseq
        %v6807 = vshrl.u32 %v6806, 7
        %v6808 = vsub.s32 %v6805, %v6807
        %v6809 = vrot.slane %v6795, %v6808
        %v6810 = vcombine.high %v6802, %v6802
        %v6811 = vcombine.high %v6809, %v6809
        %v6813 = vunpack.c.l.s4 1966171168
        %v6814 = vunpack.c.0.s8 %v6813
        %v6815 = vlaneseq
        %v6816 = vshrl.u32 %v6815, 7
        %v6817 = vsub.s32 %v6814, %v6816
        %v6818 = vrot.slane %v6802, %v6817
        %v6820 = vunpack.c.l.s4 1966171168
        %v6821 = vunpack.c.0.s8 %v6820
        %v6822 = vlaneseq
        %v6823 = vshrl.u32 %v6822, 7
        %v6824 = vsub.s32 %v6821, %v6823
        %v6825 = vrot.slane %v6809, %v6824
        %v6827 = vunpack.c.l.s4 1966171168
        %v6828 = vunpack.c.0.s8 %v6827
        %v6829 = vlaneseq
        %v6830 = vshrl.u32 %v6829, 7
        %v6831 = vsub.s32 %v6828, %v6830
        %v6832 = vrot.slane %v6810, %v6831
        %v6834 = vunpack.c.l.s4 1966171168
        %v6835 = vunpack.c.0.s8 %v6834
        %v6836 = vlaneseq
        %v6837 = vshrl.u32 %v6836, 7
        %v6838 = vsub.s32 %v6835, %v6837
        %v6839 = vrot.slane %v6811, %v6838
        %v6840 = vcombine.high %v6818, %v6818
        %v6841 = vcombine.high %v6825, %v6825
        %v6842 = vcombine.high %v6832, %v6832
        %v6843 = vcombine.high %v6839, %v6839
        %v6844 = vcombine.high %v844, %v844
        %v6846 = vunpack.c.l.s4 1966171168
        %v6847 = vunpack.c.0.s8 %v6846
        %v6848 = vlaneseq
        %v6849 = vshrl.u32 %v6848, 7
        %v6850 = vsub.s32 %v6847, %v6849
        %v6851 = vrot.slane %v844, %v6850
        %v6853 = vunpack.c.l.s4 1966171168
        %v6854 = vunpack.c.0.s8 %v6853
        %v6855 = vlaneseq
        %v6856 = vshrl.u32 %v6855, 7
        %v6857 = vsub.s32 %v6854, %v6856
        %v6858 = vrot.slane %v6844, %v6857
        %v6859 = vcombine.high %v6851, %v6851
        %v6860 = vcombine.high %v6858, %v6858
        %v6862 = vunpack.c.l.s4 1966171168
        %v6863 = vunpack.c.0.s8 %v6862
        %v6864 = vlaneseq
        %v6865 = vshrl.u32 %v6864, 7
        %v6866 = vsub.s32 %v6863, %v6865
        %v6867 = vrot.slane %v6851, %v6866
        %v6869 = vunpack.c.l.s4 1966171168
        %v6870 = vunpack.c.0.s8 %v6869
        %v6871 = vlaneseq
        %v6872 = vshrl.u32 %v6871, 7
        %v6873 = vsub.s32 %v6870, %v6872
        %v6874 = vrot.slane %v6858, %v6873
        %v6876 = vunpack.c.l.s4 1966171168
        %v6877 = vunpack.c.0.s8 %v6876
        %v6878 = vlaneseq
        %v6879 = vshrl.u32 %v6878, 7
        %v6880 = vsub.s32 %v6877, %v6879
        %v6881 = vrot.slane %v6859, %v6880
        %v6883 = vunpack.c.l.s4 1966171168
        %v6884 = vunpack.c.0.s8 %v6883
        %v6885 = vlaneseq
        %v6886 = vshrl.u32 %v6885, 7
        %v6887 = vsub.s32 %v6884, %v6886
        %v6888 = vrot.slane %v6860, %v6887
        %v6889 = vcombine.high %v6867, %v6867
        %v6890 = vcombine.high %v6874, %v6874
        %v6891 = vcombine.high %v6881, %v6881
        %v6892 = vcombine.high %v6888, %v6888
        %v6893 = vcombine.high %v845, %v845
        %v6895 = vunpack.c.l.s4 1966171168
        %v6896 = vunpack.c.0.s8 %v6895
        %v6897 = vlaneseq
        %v6898 = vshrl.u32 %v6897, 7
        %v6899 = vsub.s32 %v6896, %v6898
        %v6900 = vrot.slane %v845, %v6899
        %v6902 = vunpack.c.l.s4 1966171168
        %v6903 = vunpack.c.0.s8 %v6902
        %v6904 = vlaneseq
        %v6905 = vshrl.u32 %v6904, 7
        %v6906 = vsub.s32 %v6903, %v6905
        %v6907 = vrot.slane %v6893, %v6906
        %v6908 = vcombine.high %v6900, %v6900
        %v6909 = vcombine.high %v6907, %v6907
        %v6911 = vunpack.c.l.s4 1966171168
        %v6912 = vunpack.c.0.s8 %v6911
        %v6913 = vlaneseq
        %v6914 = vshrl.u32 %v6913, 7
        %v6915 = vsub.s32 %v6912, %v6914
        %v6916 = vrot.slane %v6900, %v6915
        %v6918 = vunpack.c.l.s4 1966171168
        %v6919 = vunpack.c.0.s8 %v6918
        %v6920 = vlaneseq
        %v6921 = vshrl.u32 %v6920, 7
        %v6922 = vsub.s32 %v6919, %v6921
        %v6923 = vrot.slane %v6907, %v6922
        %v6925 = vunpack.c.l.s4 1966171168
        %v6926 = vunpack.c.0.s8 %v6925
        %v6927 = vlaneseq
        %v6928 = vshrl.u32 %v6927, 7
        %v6929 = vsub.s32 %v6926, %v6928
        %v6930 = vrot.slane %v6908, %v6929
        %v6932 = vunpack.c.l.s4 1966171168
        %v6933 = vunpack.c.0.s8 %v6932
        %v6934 = vlaneseq
        %v6935 = vshrl.u32 %v6934, 7
        %v6936 = vsub.s32 %v6933, %v6935
        %v6937 = vrot.slane %v6909, %v6936
        %v6938 = vcombine.high %v6916, %v6916
        %v6939 = vcombine.high %v6923, %v6923
        %v6940 = vcombine.high %v6930, %v6930
        %v6941 = vcombine.high %v6937, %v6937
        %v6942 = vld [vmem:[%s453] sm:$0xf]
        %v6943 = vld [vmem:[%s453 + $0x4] sm:$0xf]
        %v6944 = vld [vmem:[%s453 + $0x8] sm:$0xf]
        %v6945 = vld [vmem:[%s453 + $0xc] sm:$0xf]
        %v6946 = vld [vmem:[%s453 + $0x10] sm:$0xf]
        %v6947 = vld [vmem:[%s453 + $0x14] sm:$0xf]
        %v6948 = vld [vmem:[%s453 + $0x18] sm:$0xf]
        %v6949 = vld [vmem:[%s453 + $0x1c] sm:$0xf]
        %v6950 = vld [vmem:[%s453 + $0x20] sm:$0xf]
        %v6951 = vld [vmem:[%s453 + $0x24] sm:$0xf]
        %v6952 = vld [vmem:[%s453 + $0x28] sm:$0xf]
        %v6953 = vld [vmem:[%s453 + $0x2c] sm:$0xf]
        %v6954 = vld [vmem:[%s453 + $0x30] sm:$0xf]
        %v6955 = vld [vmem:[%s453 + $0x34] sm:$0xf]
        %v6956 = vld [vmem:[%s453 + $0x38] sm:$0xf]
        %v6957 = vld [vmem:[%s453 + $0x3c] sm:$0xf]
        %v6958 = vld [vmem:[%s453 + $0x40] sm:$0xf]
        %v6959 = vld [vmem:[%s453 + $0x44] sm:$0xf]
        %v6960 = vld [vmem:[%s453 + $0x48] sm:$0xf]
        %v6961 = vld [vmem:[%s453 + $0x4c] sm:$0xf]
        %v6962 = vld [vmem:[%s453 + $0x50] sm:$0xf]
        %v6963 = vld [vmem:[%s453 + $0x54] sm:$0xf]
        %v6964 = vld [vmem:[%s453 + $0x58] sm:$0xf]
        %v6965 = vld [vmem:[%s453 + $0x5c] sm:$0xf]
        %v6966 = vld [vmem:[%s453 + $0x60] sm:$0xf]
        %v6967 = vld [vmem:[%s453 + $0x64] sm:$0xf]
        %v6968 = vld [vmem:[%s453 + $0x68] sm:$0xf]
        %v6969 = vld [vmem:[%s453 + $0x6c] sm:$0xf]
        %v6970 = vld [vmem:[%s453 + $0x70] sm:$0xf]
        %v6971 = vld [vmem:[%s453 + $0x74] sm:$0xf]
        %v6972 = vld [vmem:[%s453 + $0x78] sm:$0xf]
        %v6973 = vld [vmem:[%s453 + $0x7c] sm:$0xf]
        %v6974 = vld [vmem:[%s453 + $0x80] sm:$0xf]
        %v6975 = vld [vmem:[%s453 + $0x84] sm:$0xf]
        %v6976 = vld [vmem:[%s453 + $0x88] sm:$0xf]
        %v6977 = vld [vmem:[%s453 + $0x8c] sm:$0xf]
        %v6978 = vld [vmem:[%s453 + $0x90] sm:$0xf]
        %v6979 = vld [vmem:[%s453 + $0x94] sm:$0xf]
        %v6980 = vld [vmem:[%s453 + $0x98] sm:$0xf]
        %v6981 = vld [vmem:[%s453 + $0x9c] sm:$0xf]
        %v6982 = vld [vmem:[%s453 + $0xa0] sm:$0xf]
        %v6983 = vld [vmem:[%s453 + $0xa4] sm:$0xf]
        %v6984 = vld [vmem:[%s453 + $0xa8] sm:$0xf]
        %v6985 = vld [vmem:[%s453 + $0xac] sm:$0xf]
        %v6986 = vld [vmem:[%s453 + $0xb0] sm:$0xf]
        %v6987 = vld [vmem:[%s453 + $0xb4] sm:$0xf]
        %v6988 = vld [vmem:[%s453 + $0xb8] sm:$0xf]
        %v6989 = vld [vmem:[%s453 + $0xbc] sm:$0xf]
        %v6990 = vld [vmem:[%s453 + $0xc0] sm:$0xf]
        %v6991 = vld [vmem:[%s453 + $0xc4] sm:$0xf]
        %v6992 = vld [vmem:[%s453 + $0xc8] sm:$0xf]
        %v6993 = vld [vmem:[%s453 + $0xcc] sm:$0xf]
        %v6994 = vld [vmem:[%s453 + $0xd0] sm:$0xf]
        %v6995 = vld [vmem:[%s453 + $0xd4] sm:$0xf]
        %v6996 = vld [vmem:[%s453 + $0xd8] sm:$0xf]
        %v6997 = vld [vmem:[%s453 + $0xdc] sm:$0xf]
        %v6998 = vld [vmem:[%s453 + $0xe0] sm:$0xf]
        %v6999 = vld [vmem:[%s453 + $0xe4] sm:$0xf]
        %v7000 = vld [vmem:[%s453 + $0xe8] sm:$0xf]
        %v7001 = vld [vmem:[%s453 + $0xec] sm:$0xf]
        %v7002 = vld [vmem:[%s453 + $0xf0] sm:$0xf]
        %v7003 = vld [vmem:[%s453 + $0xf4] sm:$0xf]
        %v7004 = vld [vmem:[%s453 + $0xf8] sm:$0xf]
        %v7005 = vld [vmem:[%s453 + $0xfc] sm:$0xf]
        %v7006 = vld [vmem:[%s453 + $0x100] sm:$0xf]
        %v7007 = vld [vmem:[%s453 + $0x104] sm:$0xf]
        %v7008 = vld [vmem:[%s453 + $0x108] sm:$0xf]
        %v7009 = vld [vmem:[%s453 + $0x10c] sm:$0xf]
        %v7010 = vld [vmem:[%s453 + $0x110] sm:$0xf]
        %v7011 = vld [vmem:[%s453 + $0x114] sm:$0xf]
        %v7012 = vld [vmem:[%s453 + $0x118] sm:$0xf]
        %v7013 = vld [vmem:[%s453 + $0x11c] sm:$0xf]
        %v7014 = vld [vmem:[%s453 + $0x120] sm:$0xf]
        %v7015 = vld [vmem:[%s453 + $0x124] sm:$0xf]
        %v7016 = vld [vmem:[%s453 + $0x128] sm:$0xf]
        %v7017 = vld [vmem:[%s453 + $0x12c] sm:$0xf]
        %v7018 = vld [vmem:[%s453 + $0x130] sm:$0xf]
        %v7019 = vld [vmem:[%s453 + $0x134] sm:$0xf]
        %v7020 = vld [vmem:[%s453 + $0x138] sm:$0xf]
        %v7021 = vld [vmem:[%s453 + $0x13c] sm:$0xf]
        %v7022 = vld [vmem:[%s453 + $0x140] sm:$0xf]
        %v7023 = vld [vmem:[%s453 + $0x144] sm:$0xf]
        %v7024 = vld [vmem:[%s453 + $0x148] sm:$0xf]
        %v7025 = vld [vmem:[%s453 + $0x14c] sm:$0xf]
        %v7026 = vld [vmem:[%s453 + $0x150] sm:$0xf]
        %v7027 = vld [vmem:[%s453 + $0x154] sm:$0xf]
        %v7028 = vld [vmem:[%s453 + $0x158] sm:$0xf]
        %v7029 = vld [vmem:[%s453 + $0x15c] sm:$0xf]
        %v7030 = vld [vmem:[%s453 + $0x160] sm:$0xf]
        %v7031 = vld [vmem:[%s453 + $0x164] sm:$0xf]
        %v7032 = vld [vmem:[%s453 + $0x168] sm:$0xf]
        %v7033 = vld [vmem:[%s453 + $0x16c] sm:$0xf]
        %v7034 = vld [vmem:[%s453 + $0x170] sm:$0xf]
        %v7035 = vld [vmem:[%s453 + $0x174] sm:$0xf]
        %v7036 = vld [vmem:[%s453 + $0x178] sm:$0xf]
        %v7037 = vld [vmem:[%s453 + $0x17c] sm:$0xf]
        %v7038 = vld [vmem:[%s453 + $0x180] sm:$0xf]
        %v7039 = vld [vmem:[%s453 + $0x184] sm:$0xf]
        %v7040 = vld [vmem:[%s453 + $0x188] sm:$0xf]
        %v7041 = vld [vmem:[%s453 + $0x18c] sm:$0xf]
        %v7042 = vld [vmem:[%s453 + $0x190] sm:$0xf]
        %v7043 = vld [vmem:[%s453 + $0x194] sm:$0xf]
        %v7044 = vld [vmem:[%s453 + $0x198] sm:$0xf]
        %v7045 = vld [vmem:[%s453 + $0x19c] sm:$0xf]
        %v7046 = vld [vmem:[%s453 + $0x1a0] sm:$0xf]
        %v7047 = vld [vmem:[%s453 + $0x1a4] sm:$0xf]
        %v7048 = vld [vmem:[%s453 + $0x1a8] sm:$0xf]
        %v7049 = vld [vmem:[%s453 + $0x1ac] sm:$0xf]
        %v7050 = vld [vmem:[%s453 + $0x1b0] sm:$0xf]
        %v7051 = vld [vmem:[%s453 + $0x1b4] sm:$0xf]
        %v7052 = vld [vmem:[%s453 + $0x1b8] sm:$0xf]
        %v7053 = vld [vmem:[%s453 + $0x1bc] sm:$0xf]
        %v7054 = vld [vmem:[%s453 + $0x1c0] sm:$0xf]
        %v7055 = vld [vmem:[%s453 + $0x1c4] sm:$0xf]
        %v7056 = vld [vmem:[%s453 + $0x1c8] sm:$0xf]
        %v7057 = vld [vmem:[%s453 + $0x1cc] sm:$0xf]
        %v7058 = vld [vmem:[%s453 + $0x1d0] sm:$0xf]
        %v7059 = vld [vmem:[%s453 + $0x1d4] sm:$0xf]
        %v7060 = vld [vmem:[%s453 + $0x1d8] sm:$0xf]
        %v7061 = vld [vmem:[%s453 + $0x1dc] sm:$0xf]
        %v7062 = vld [vmem:[%s453 + $0x1e0] sm:$0xf]
        %v7063 = vld [vmem:[%s453 + $0x1e4] sm:$0xf]
        %v7064 = vld [vmem:[%s453 + $0x1e8] sm:$0xf]
        %v7065 = vld [vmem:[%s453 + $0x1ec] sm:$0xf]
        %v7066 = vld [vmem:[%s453 + $0x1f0] sm:$0xf]
        %v7067 = vld [vmem:[%s453 + $0x1f4] sm:$0xf]
        %v7068 = vld [vmem:[%s453 + $0x1f8] sm:$0xf]
        %v7069 = vld [vmem:[%s453 + $0x1fc] sm:$0xf]
        %v7070 = vlaneseq
        %v7071 = vshrl.u32 %v7070, 7
        %v7072 = vsub.s32 0, %v7071
        %v7073 = vrot.slane %v6181, %v7072
        %v7074 = vlaneseq
        %v7075 = vshrl.u32 %v7074, 7
        %v7076 = vsub.s32 0, %v7075
        %v7077 = vrot.slane %v6195, %v7076
        %v7078 = vlaneseq
        %v7079 = vshrl.u32 %v7078, 7
        %v7080 = vsub.s32 0, %v7079
        %v7081 = vrot.slane %v6203, %v7080
        %v7082 = vlaneseq
        %v7083 = vshrl.u32 %v7082, 7
        %v7084 = vsub.s32 0, %v7083
        %v7085 = vrot.slane %v6205, %v7084
        %v7086 = vlaneseq
        %v7087 = vshrl.u32 %v7086, 7
        %v7088 = vsub.s32 0, %v7087
        %v7089 = vrot.slane %v6188, %v7088
        %v7090 = vlaneseq
        %v7091 = vshrl.u32 %v7090, 7
        %v7092 = vsub.s32 0, %v7091
        %v7093 = vrot.slane %v6202, %v7092
        %v7094 = vlaneseq
        %v7095 = vshrl.u32 %v7094, 7
        %v7096 = vsub.s32 0, %v7095
        %v7097 = vrot.slane %v6204, %v7096
        %v7098 = vlaneseq
        %v7099 = vshrl.u32 %v7098, 7
        %v7100 = vsub.s32 0, %v7099
        %v7101 = vrot.slane %v6206, %v7100
        %v7102 = vlaneseq
        %v7103 = vshrl.u32 %v7102, 7
        %v7104 = vsub.s32 0, %v7103
        %v7105 = vrot.slane %v6230, %v7104
        %v7106 = vlaneseq
        %v7107 = vshrl.u32 %v7106, 7
        %v7108 = vsub.s32 0, %v7107
        %v7109 = vrot.slane %v6244, %v7108
        %v7110 = vlaneseq
        %v7111 = vshrl.u32 %v7110, 7
        %v7112 = vsub.s32 0, %v7111
        %v7113 = vrot.slane %v6252, %v7112
        %v7114 = vlaneseq
        %v7115 = vshrl.u32 %v7114, 7
        %v7116 = vsub.s32 0, %v7115
        %v7117 = vrot.slane %v6254, %v7116
        %v7118 = vlaneseq
        %v7119 = vshrl.u32 %v7118, 7
        %v7120 = vsub.s32 0, %v7119
        %v7121 = vrot.slane %v6237, %v7120
        %v7122 = vlaneseq
        %v7123 = vshrl.u32 %v7122, 7
        %v7124 = vsub.s32 0, %v7123
        %v7125 = vrot.slane %v6251, %v7124
        %v7126 = vlaneseq
        %v7127 = vshrl.u32 %v7126, 7
        %v7128 = vsub.s32 0, %v7127
        %v7129 = vrot.slane %v6253, %v7128
        %v7130 = vlaneseq
        %v7131 = vshrl.u32 %v7130, 7
        %v7132 = vsub.s32 0, %v7131
        %v7133 = vrot.slane %v6255, %v7132
        %v7134 = vlaneseq
        %v7135 = vshrl.u32 %v7134, 7
        %v7136 = vsub.s32 0, %v7135
        %v7137 = vrot.slane %v6279, %v7136
        %v7138 = vlaneseq
        %v7139 = vshrl.u32 %v7138, 7
        %v7140 = vsub.s32 0, %v7139
        %v7141 = vrot.slane %v6293, %v7140
        %v7142 = vlaneseq
        %v7143 = vshrl.u32 %v7142, 7
        %v7144 = vsub.s32 0, %v7143
        %v7145 = vrot.slane %v6301, %v7144
        %v7146 = vlaneseq
        %v7147 = vshrl.u32 %v7146, 7
        %v7148 = vsub.s32 0, %v7147
        %v7149 = vrot.slane %v6303, %v7148
        %v7150 = vlaneseq
        %v7151 = vshrl.u32 %v7150, 7
        %v7152 = vsub.s32 0, %v7151
        %v7153 = vrot.slane %v6286, %v7152
        %v7154 = vlaneseq
        %v7155 = vshrl.u32 %v7154, 7
        %v7156 = vsub.s32 0, %v7155
        %v7157 = vrot.slane %v6300, %v7156
        %v7158 = vlaneseq
        %v7159 = vshrl.u32 %v7158, 7
        %v7160 = vsub.s32 0, %v7159
        %v7161 = vrot.slane %v6302, %v7160
        %v7162 = vlaneseq
        %v7163 = vshrl.u32 %v7162, 7
        %v7164 = vsub.s32 0, %v7163
        %v7165 = vrot.slane %v6304, %v7164
        %v7166 = vlaneseq
        %v7167 = vshrl.u32 %v7166, 7
        %v7168 = vsub.s32 0, %v7167
        %v7169 = vrot.slane %v6328, %v7168
        %v7170 = vlaneseq
        %v7171 = vshrl.u32 %v7170, 7
        %v7172 = vsub.s32 0, %v7171
        %v7173 = vrot.slane %v6342, %v7172
        %v7174 = vlaneseq
        %v7175 = vshrl.u32 %v7174, 7
        %v7176 = vsub.s32 0, %v7175
        %v7177 = vrot.slane %v6350, %v7176
        %v7178 = vlaneseq
        %v7179 = vshrl.u32 %v7178, 7
        %v7180 = vsub.s32 0, %v7179
        %v7181 = vrot.slane %v6352, %v7180
        %v7182 = vlaneseq
        %v7183 = vshrl.u32 %v7182, 7
        %v7184 = vsub.s32 0, %v7183
        %v7185 = vrot.slane %v6335, %v7184
        %v7186 = vlaneseq
        %v7187 = vshrl.u32 %v7186, 7
        %v7188 = vsub.s32 0, %v7187
        %v7189 = vrot.slane %v6349, %v7188
        %v7190 = vlaneseq
        %v7191 = vshrl.u32 %v7190, 7
        %v7192 = vsub.s32 0, %v7191
        %v7193 = vrot.slane %v6351, %v7192
        %v7194 = vlaneseq
        %v7195 = vshrl.u32 %v7194, 7
        %v7196 = vsub.s32 0, %v7195
        %v7197 = vrot.slane %v6353, %v7196
        %v7198 = vlaneseq
        %v7199 = vshrl.u32 %v7198, 7
        %v7200 = vsub.s32 0, %v7199
        %v7201 = vrot.slane %v6377, %v7200
        %v7202 = vlaneseq
        %v7203 = vshrl.u32 %v7202, 7
        %v7204 = vsub.s32 0, %v7203
        %v7205 = vrot.slane %v6391, %v7204
        %v7206 = vlaneseq
        %v7207 = vshrl.u32 %v7206, 7
        %v7208 = vsub.s32 0, %v7207
        %v7209 = vrot.slane %v6399, %v7208
        %v7210 = vlaneseq
        %v7211 = vshrl.u32 %v7210, 7
        %v7212 = vsub.s32 0, %v7211
        %v7213 = vrot.slane %v6401, %v7212
        %v7214 = vlaneseq
        %v7215 = vshrl.u32 %v7214, 7
        %v7216 = vsub.s32 0, %v7215
        %v7217 = vrot.slane %v6384, %v7216
        %v7218 = vlaneseq
        %v7219 = vshrl.u32 %v7218, 7
        %v7220 = vsub.s32 0, %v7219
        %v7221 = vrot.slane %v6398, %v7220
        %v7222 = vlaneseq
        %v7223 = vshrl.u32 %v7222, 7
        %v7224 = vsub.s32 0, %v7223
        %v7225 = vrot.slane %v6400, %v7224
        %v7226 = vlaneseq
        %v7227 = vshrl.u32 %v7226, 7
        %v7228 = vsub.s32 0, %v7227
        %v7229 = vrot.slane %v6402, %v7228
        %v7230 = vlaneseq
        %v7231 = vshrl.u32 %v7230, 7
        %v7232 = vsub.s32 0, %v7231
        %v7233 = vrot.slane %v6426, %v7232
        %v7234 = vlaneseq
        %v7235 = vshrl.u32 %v7234, 7
        %v7236 = vsub.s32 0, %v7235
        %v7237 = vrot.slane %v6440, %v7236
        %v7238 = vlaneseq
        %v7239 = vshrl.u32 %v7238, 7
        %v7240 = vsub.s32 0, %v7239
        %v7241 = vrot.slane %v6448, %v7240
        %v7242 = vlaneseq
        %v7243 = vshrl.u32 %v7242, 7
        %v7244 = vsub.s32 0, %v7243
        %v7245 = vrot.slane %v6450, %v7244
        %v7246 = vlaneseq
        %v7247 = vshrl.u32 %v7246, 7
        %v7248 = vsub.s32 0, %v7247
        %v7249 = vrot.slane %v6433, %v7248
        %v7250 = vlaneseq
        %v7251 = vshrl.u32 %v7250, 7
        %v7252 = vsub.s32 0, %v7251
        %v7253 = vrot.slane %v6447, %v7252
        %v7254 = vlaneseq
        %v7255 = vshrl.u32 %v7254, 7
        %v7256 = vsub.s32 0, %v7255
        %v7257 = vrot.slane %v6449, %v7256
        %v7258 = vlaneseq
        %v7259 = vshrl.u32 %v7258, 7
        %v7260 = vsub.s32 0, %v7259
        %v7261 = vrot.slane %v6451, %v7260
        %v7262 = vlaneseq
        %v7263 = vshrl.u32 %v7262, 7
        %v7264 = vsub.s32 0, %v7263
        %v7265 = vrot.slane %v6475, %v7264
        %v7266 = vlaneseq
        %v7267 = vshrl.u32 %v7266, 7
        %v7268 = vsub.s32 0, %v7267
        %v7269 = vrot.slane %v6489, %v7268
        %v7270 = vlaneseq
        %v7271 = vshrl.u32 %v7270, 7
        %v7272 = vsub.s32 0, %v7271
        %v7273 = vrot.slane %v6497, %v7272
        %v7274 = vlaneseq
        %v7275 = vshrl.u32 %v7274, 7
        %v7276 = vsub.s32 0, %v7275
        %v7277 = vrot.slane %v6499, %v7276
        %v7278 = vlaneseq
        %v7279 = vshrl.u32 %v7278, 7
        %v7280 = vsub.s32 0, %v7279
        %v7281 = vrot.slane %v6482, %v7280
        %v7282 = vlaneseq
        %v7283 = vshrl.u32 %v7282, 7
        %v7284 = vsub.s32 0, %v7283
        %v7285 = vrot.slane %v6496, %v7284
        %v7286 = vlaneseq
        %v7287 = vshrl.u32 %v7286, 7
        %v7288 = vsub.s32 0, %v7287
        %v7289 = vrot.slane %v6498, %v7288
        %v7290 = vlaneseq
        %v7291 = vshrl.u32 %v7290, 7
        %v7292 = vsub.s32 0, %v7291
        %v7293 = vrot.slane %v6500, %v7292
        %v7294 = vlaneseq
        %v7295 = vshrl.u32 %v7294, 7
        %v7296 = vsub.s32 0, %v7295
        %v7297 = vrot.slane %v6524, %v7296
        %v7298 = vlaneseq
        %v7299 = vshrl.u32 %v7298, 7
        %v7300 = vsub.s32 0, %v7299
        %v7301 = vrot.slane %v6538, %v7300
        %v7302 = vlaneseq
        %v7303 = vshrl.u32 %v7302, 7
        %v7304 = vsub.s32 0, %v7303
        %v7305 = vrot.slane %v6546, %v7304
        %v7306 = vlaneseq
        %v7307 = vshrl.u32 %v7306, 7
        %v7308 = vsub.s32 0, %v7307
        %v7309 = vrot.slane %v6548, %v7308
        %v7310 = vlaneseq
        %v7311 = vshrl.u32 %v7310, 7
        %v7312 = vsub.s32 0, %v7311
        %v7313 = vrot.slane %v6531, %v7312
        %v7314 = vlaneseq
        %v7315 = vshrl.u32 %v7314, 7
        %v7316 = vsub.s32 0, %v7315
        %v7317 = vrot.slane %v6545, %v7316
        %v7318 = vlaneseq
        %v7319 = vshrl.u32 %v7318, 7
        %v7320 = vsub.s32 0, %v7319
        %v7321 = vrot.slane %v6547, %v7320
        %v7322 = vlaneseq
        %v7323 = vshrl.u32 %v7322, 7
        %v7324 = vsub.s32 0, %v7323
        %v7325 = vrot.slane %v6549, %v7324
        %v7326 = vlaneseq
        %v7327 = vshrl.u32 %v7326, 7
        %v7328 = vsub.s32 0, %v7327
        %v7329 = vrot.slane %v6573, %v7328
        %v7330 = vlaneseq
        %v7331 = vshrl.u32 %v7330, 7
        %v7332 = vsub.s32 0, %v7331
        %v7333 = vrot.slane %v6587, %v7332
        %v7334 = vlaneseq
        %v7335 = vshrl.u32 %v7334, 7
        %v7336 = vsub.s32 0, %v7335
        %v7337 = vrot.slane %v6595, %v7336
        %v7338 = vlaneseq
        %v7339 = vshrl.u32 %v7338, 7
        %v7340 = vsub.s32 0, %v7339
        %v7341 = vrot.slane %v6597, %v7340
        %v7342 = vlaneseq
        %v7343 = vshrl.u32 %v7342, 7
        %v7344 = vsub.s32 0, %v7343
        %v7345 = vrot.slane %v6580, %v7344
        %v7346 = vlaneseq
        %v7347 = vshrl.u32 %v7346, 7
        %v7348 = vsub.s32 0, %v7347
        %v7349 = vrot.slane %v6594, %v7348
        %v7350 = vlaneseq
        %v7351 = vshrl.u32 %v7350, 7
        %v7352 = vsub.s32 0, %v7351
        %v7353 = vrot.slane %v6596, %v7352
        %v7354 = vlaneseq
        %v7355 = vshrl.u32 %v7354, 7
        %v7356 = vsub.s32 0, %v7355
        %v7357 = vrot.slane %v6598, %v7356
        %v7358 = vlaneseq
        %v7359 = vshrl.u32 %v7358, 7
        %v7360 = vsub.s32 0, %v7359
        %v7361 = vrot.slane %v6622, %v7360
        %v7362 = vlaneseq
        %v7363 = vshrl.u32 %v7362, 7
        %v7364 = vsub.s32 0, %v7363
        %v7365 = vrot.slane %v6636, %v7364
        %v7366 = vlaneseq
        %v7367 = vshrl.u32 %v7366, 7
        %v7368 = vsub.s32 0, %v7367
        %v7369 = vrot.slane %v6644, %v7368
        %v7370 = vlaneseq
        %v7371 = vshrl.u32 %v7370, 7
        %v7372 = vsub.s32 0, %v7371
        %v7373 = vrot.slane %v6646, %v7372
        %v7374 = vlaneseq
        %v7375 = vshrl.u32 %v7374, 7
        %v7376 = vsub.s32 0, %v7375
        %v7377 = vrot.slane %v6629, %v7376
        %v7378 = vlaneseq
        %v7379 = vshrl.u32 %v7378, 7
        %v7380 = vsub.s32 0, %v7379
        %v7381 = vrot.slane %v6643, %v7380
        %v7382 = vlaneseq
        %v7383 = vshrl.u32 %v7382, 7
        %v7384 = vsub.s32 0, %v7383
        %v7385 = vrot.slane %v6645, %v7384
        %v7386 = vlaneseq
        %v7387 = vshrl.u32 %v7386, 7
        %v7388 = vsub.s32 0, %v7387
        %v7389 = vrot.slane %v6647, %v7388
        %v7390 = vlaneseq
        %v7391 = vshrl.u32 %v7390, 7
        %v7392 = vsub.s32 0, %v7391
        %v7393 = vrot.slane %v6671, %v7392
        %v7394 = vlaneseq
        %v7395 = vshrl.u32 %v7394, 7
        %v7396 = vsub.s32 0, %v7395
        %v7397 = vrot.slane %v6685, %v7396
        %v7398 = vlaneseq
        %v7399 = vshrl.u32 %v7398, 7
        %v7400 = vsub.s32 0, %v7399
        %v7401 = vrot.slane %v6693, %v7400
        %v7402 = vlaneseq
        %v7403 = vshrl.u32 %v7402, 7
        %v7404 = vsub.s32 0, %v7403
        %v7405 = vrot.slane %v6695, %v7404
        %v7406 = vlaneseq
        %v7407 = vshrl.u32 %v7406, 7
        %v7408 = vsub.s32 0, %v7407
        %v7409 = vrot.slane %v6678, %v7408
        %v7410 = vlaneseq
        %v7411 = vshrl.u32 %v7410, 7
        %v7412 = vsub.s32 0, %v7411
        %v7413 = vrot.slane %v6692, %v7412
        %v7414 = vlaneseq
        %v7415 = vshrl.u32 %v7414, 7
        %v7416 = vsub.s32 0, %v7415
        %v7417 = vrot.slane %v6694, %v7416
        %v7418 = vlaneseq
        %v7419 = vshrl.u32 %v7418, 7
        %v7420 = vsub.s32 0, %v7419
        %v7421 = vrot.slane %v6696, %v7420
        %v7422 = vlaneseq
        %v7423 = vshrl.u32 %v7422, 7
        %v7424 = vsub.s32 0, %v7423
        %v7425 = vrot.slane %v6720, %v7424
        %v7426 = vlaneseq
        %v7427 = vshrl.u32 %v7426, 7
        %v7428 = vsub.s32 0, %v7427
        %v7429 = vrot.slane %v6734, %v7428
        %v7430 = vlaneseq
        %v7431 = vshrl.u32 %v7430, 7
        %v7432 = vsub.s32 0, %v7431
        %v7433 = vrot.slane %v6742, %v7432
        %v7434 = vlaneseq
        %v7435 = vshrl.u32 %v7434, 7
        %v7436 = vsub.s32 0, %v7435
        %v7437 = vrot.slane %v6744, %v7436
        %v7438 = vlaneseq
        %v7439 = vshrl.u32 %v7438, 7
        %v7440 = vsub.s32 0, %v7439
        %v7441 = vrot.slane %v6727, %v7440
        %v7442 = vlaneseq
        %v7443 = vshrl.u32 %v7442, 7
        %v7444 = vsub.s32 0, %v7443
        %v7445 = vrot.slane %v6741, %v7444
        %v7446 = vlaneseq
        %v7447 = vshrl.u32 %v7446, 7
        %v7448 = vsub.s32 0, %v7447
        %v7449 = vrot.slane %v6743, %v7448
        %v7450 = vlaneseq
        %v7451 = vshrl.u32 %v7450, 7
        %v7452 = vsub.s32 0, %v7451
        %v7453 = vrot.slane %v6745, %v7452
        %v7454 = vlaneseq
        %v7455 = vshrl.u32 %v7454, 7
        %v7456 = vsub.s32 0, %v7455
        %v7457 = vrot.slane %v6769, %v7456
        %v7458 = vlaneseq
        %v7459 = vshrl.u32 %v7458, 7
        %v7460 = vsub.s32 0, %v7459
        %v7461 = vrot.slane %v6783, %v7460
        %v7462 = vlaneseq
        %v7463 = vshrl.u32 %v7462, 7
        %v7464 = vsub.s32 0, %v7463
        %v7465 = vrot.slane %v6791, %v7464
        %v7466 = vlaneseq
        %v7467 = vshrl.u32 %v7466, 7
        %v7468 = vsub.s32 0, %v7467
        %v7469 = vrot.slane %v6793, %v7468
        %v7470 = vlaneseq
        %v7471 = vshrl.u32 %v7470, 7
        %v7472 = vsub.s32 0, %v7471
        %v7473 = vrot.slane %v6776, %v7472
        %v7474 = vlaneseq
        %v7475 = vshrl.u32 %v7474, 7
        %v7476 = vsub.s32 0, %v7475
        %v7477 = vrot.slane %v6790, %v7476
        %v7478 = vlaneseq
        %v7479 = vshrl.u32 %v7478, 7
        %v7480 = vsub.s32 0, %v7479
        %v7481 = vrot.slane %v6792, %v7480
        %v7482 = vlaneseq
        %v7483 = vshrl.u32 %v7482, 7
        %v7484 = vsub.s32 0, %v7483
        %v7485 = vrot.slane %v6794, %v7484
        %v7486 = vlaneseq
        %v7487 = vshrl.u32 %v7486, 7
        %v7488 = vsub.s32 0, %v7487
        %v7489 = vrot.slane %v6818, %v7488
        %v7490 = vlaneseq
        %v7491 = vshrl.u32 %v7490, 7
        %v7492 = vsub.s32 0, %v7491
        %v7493 = vrot.slane %v6832, %v7492
        %v7494 = vlaneseq
        %v7495 = vshrl.u32 %v7494, 7
        %v7496 = vsub.s32 0, %v7495
        %v7497 = vrot.slane %v6840, %v7496
        %v7498 = vlaneseq
        %v7499 = vshrl.u32 %v7498, 7
        %v7500 = vsub.s32 0, %v7499
        %v7501 = vrot.slane %v6842, %v7500
        %v7502 = vlaneseq
        %v7503 = vshrl.u32 %v7502, 7
        %v7504 = vsub.s32 0, %v7503
        %v7505 = vrot.slane %v6825, %v7504
        %v7506 = vlaneseq
        %v7507 = vshrl.u32 %v7506, 7
        %v7508 = vsub.s32 0, %v7507
        %v7509 = vrot.slane %v6839, %v7508
        %v7510 = vlaneseq
        %v7511 = vshrl.u32 %v7510, 7
        %v7512 = vsub.s32 0, %v7511
        %v7513 = vrot.slane %v6841, %v7512
        %v7514 = vlaneseq
        %v7515 = vshrl.u32 %v7514, 7
        %v7516 = vsub.s32 0, %v7515
        %v7517 = vrot.slane %v6843, %v7516
        %v7518 = vlaneseq
        %v7519 = vshrl.u32 %v7518, 7
        %v7520 = vsub.s32 0, %v7519
        %v7521 = vrot.slane %v6867, %v7520
        %v7522 = vlaneseq
        %v7523 = vshrl.u32 %v7522, 7
        %v7524 = vsub.s32 0, %v7523
        %v7525 = vrot.slane %v6881, %v7524
        %v7526 = vlaneseq
        %v7527 = vshrl.u32 %v7526, 7
        %v7528 = vsub.s32 0, %v7527
        %v7529 = vrot.slane %v6889, %v7528
        %v7530 = vlaneseq
        %v7531 = vshrl.u32 %v7530, 7
        %v7532 = vsub.s32 0, %v7531
        %v7533 = vrot.slane %v6891, %v7532
        %v7534 = vlaneseq
        %v7535 = vshrl.u32 %v7534, 7
        %v7536 = vsub.s32 0, %v7535
        %v7537 = vrot.slane %v6874, %v7536
        %v7538 = vlaneseq
        %v7539 = vshrl.u32 %v7538, 7
        %v7540 = vsub.s32 0, %v7539
        %v7541 = vrot.slane %v6888, %v7540
        %v7542 = vlaneseq
        %v7543 = vshrl.u32 %v7542, 7
        %v7544 = vsub.s32 0, %v7543
        %v7545 = vrot.slane %v6890, %v7544
        %v7546 = vlaneseq
        %v7547 = vshrl.u32 %v7546, 7
        %v7548 = vsub.s32 0, %v7547
        %v7549 = vrot.slane %v6892, %v7548
        %v7550 = vlaneseq
        %v7551 = vshrl.u32 %v7550, 7
        %v7552 = vsub.s32 0, %v7551
        %v7553 = vrot.slane %v6916, %v7552
        %v7554 = vlaneseq
        %v7555 = vshrl.u32 %v7554, 7
        %v7556 = vsub.s32 0, %v7555
        %v7557 = vrot.slane %v6930, %v7556
        %v7558 = vlaneseq
        %v7559 = vshrl.u32 %v7558, 7
        %v7560 = vsub.s32 0, %v7559
        %v7561 = vrot.slane %v6938, %v7560
        %v7562 = vlaneseq
        %v7563 = vshrl.u32 %v7562, 7
        %v7564 = vsub.s32 0, %v7563
        %v7565 = vrot.slane %v6940, %v7564
        %v7566 = vlaneseq
        %v7567 = vshrl.u32 %v7566, 7
        %v7568 = vsub.s32 0, %v7567
        %v7569 = vrot.slane %v6923, %v7568
        %v7570 = vlaneseq
        %v7571 = vshrl.u32 %v7570, 7
        %v7572 = vsub.s32 0, %v7571
        %v7573 = vrot.slane %v6937, %v7572
        %v7574 = vlaneseq
        %v7575 = vshrl.u32 %v7574, 7
        %v7576 = vsub.s32 0, %v7575
        %v7577 = vrot.slane %v6939, %v7576
        %v7578 = vlaneseq
        %v7579 = vshrl.u32 %v7578, 7
        %v7580 = vsub.s32 0, %v7579
        %v7581 = vrot.slane %v6941, %v7580
        %v7710 = vmul.f32 %v7073, %v6942
        %v7711 = vmul.f32 %v7077, %v6943
        %v7712 = vmul.f32 %v7081, %v6944
        %v7713 = vmul.f32 %v7085, %v6945
        %v7714 = vmul.f32 %v7089, %v6946
        %v7715 = vmul.f32 %v7093, %v6947
        %v7716 = vmul.f32 %v7097, %v6948
        %v7717 = vmul.f32 %v7101, %v6949
        %v7718 = vmul.f32 %v7105, %v6950
        %v7719 = vmul.f32 %v7109, %v6951
        %v7720 = vmul.f32 %v7113, %v6952
        %v7721 = vmul.f32 %v7117, %v6953
        %v7722 = vmul.f32 %v7121, %v6954
        %v7723 = vmul.f32 %v7125, %v6955
        %v7724 = vmul.f32 %v7129, %v6956
        %v7725 = vmul.f32 %v7133, %v6957
        %v7726 = vmul.f32 %v7137, %v6958
        %v7727 = vmul.f32 %v7141, %v6959
        %v7728 = vmul.f32 %v7145, %v6960
        %v7729 = vmul.f32 %v7149, %v6961
        %v7730 = vmul.f32 %v7153, %v6962
        %v7731 = vmul.f32 %v7157, %v6963
        %v7732 = vmul.f32 %v7161, %v6964
        %v7733 = vmul.f32 %v7165, %v6965
        %v7734 = vmul.f32 %v7169, %v6966
        %v7735 = vmul.f32 %v7173, %v6967
        %v7736 = vmul.f32 %v7177, %v6968
        %v7737 = vmul.f32 %v7181, %v6969
        %v7738 = vmul.f32 %v7185, %v6970
        %v7739 = vmul.f32 %v7189, %v6971
        %v7740 = vmul.f32 %v7193, %v6972
        %v7741 = vmul.f32 %v7197, %v6973
        %v7742 = vmul.f32 %v7201, %v6974
        %v7743 = vmul.f32 %v7205, %v6975
        %v7744 = vmul.f32 %v7209, %v6976
        %v7745 = vmul.f32 %v7213, %v6977
        %v7746 = vmul.f32 %v7217, %v6978
        %v7747 = vmul.f32 %v7221, %v6979
        %v7748 = vmul.f32 %v7225, %v6980
        %v7749 = vmul.f32 %v7229, %v6981
        %v7750 = vmul.f32 %v7233, %v6982
        %v7751 = vmul.f32 %v7237, %v6983
        %v7752 = vmul.f32 %v7241, %v6984
        %v7753 = vmul.f32 %v7245, %v6985
        %v7754 = vmul.f32 %v7249, %v6986
        %v7755 = vmul.f32 %v7253, %v6987
        %v7756 = vmul.f32 %v7257, %v6988
        %v7757 = vmul.f32 %v7261, %v6989
        %v7758 = vmul.f32 %v7265, %v6990
        %v7759 = vmul.f32 %v7269, %v6991
        %v7760 = vmul.f32 %v7273, %v6992
        %v7761 = vmul.f32 %v7277, %v6993
        %v7762 = vmul.f32 %v7281, %v6994
        %v7763 = vmul.f32 %v7285, %v6995
        %v7764 = vmul.f32 %v7289, %v6996
        %v7765 = vmul.f32 %v7293, %v6997
        %v7766 = vmul.f32 %v7297, %v6998
        %v7767 = vmul.f32 %v7301, %v6999
        %v7768 = vmul.f32 %v7305, %v7000
        %v7769 = vmul.f32 %v7309, %v7001
        %v7770 = vmul.f32 %v7313, %v7002
        %v7771 = vmul.f32 %v7317, %v7003
        %v7772 = vmul.f32 %v7321, %v7004
        %v7773 = vmul.f32 %v7325, %v7005
        %v7774 = vmul.f32 %v7329, %v7006
        %v7775 = vmul.f32 %v7333, %v7007
        %v7776 = vmul.f32 %v7337, %v7008
        %v7777 = vmul.f32 %v7341, %v7009
        %v7778 = vmul.f32 %v7345, %v7010
        %v7779 = vmul.f32 %v7349, %v7011
        %v7780 = vmul.f32 %v7353, %v7012
        %v7781 = vmul.f32 %v7357, %v7013
        %v7782 = vmul.f32 %v7361, %v7014
        %v7783 = vmul.f32 %v7365, %v7015
        %v7784 = vmul.f32 %v7369, %v7016
        %v7785 = vmul.f32 %v7373, %v7017
        %v7786 = vmul.f32 %v7377, %v7018
        %v7787 = vmul.f32 %v7381, %v7019
        %v7788 = vmul.f32 %v7385, %v7020
        %v7789 = vmul.f32 %v7389, %v7021
        %v7790 = vmul.f32 %v7393, %v7022
        %v7791 = vmul.f32 %v7397, %v7023
        %v7792 = vmul.f32 %v7401, %v7024
        %v7793 = vmul.f32 %v7405, %v7025
        %v7794 = vmul.f32 %v7409, %v7026
        %v7795 = vmul.f32 %v7413, %v7027
        %v7796 = vmul.f32 %v7417, %v7028
        %v7797 = vmul.f32 %v7421, %v7029
        %v7798 = vmul.f32 %v7425, %v7030
        %v7799 = vmul.f32 %v7429, %v7031
        %v7800 = vmul.f32 %v7433, %v7032
        %v7801 = vmul.f32 %v7437, %v7033
        %v7802 = vmul.f32 %v7441, %v7034
        %v7803 = vmul.f32 %v7445, %v7035
        %v7804 = vmul.f32 %v7449, %v7036
        %v7805 = vmul.f32 %v7453, %v7037
        %v7806 = vmul.f32 %v7457, %v7038
        %v7807 = vmul.f32 %v7461, %v7039
        %v7808 = vmul.f32 %v7465, %v7040
        %v7809 = vmul.f32 %v7469, %v7041
        %v7810 = vmul.f32 %v7473, %v7042
        %v7811 = vmul.f32 %v7477, %v7043
        %v7812 = vmul.f32 %v7481, %v7044
        %v7813 = vmul.f32 %v7485, %v7045
        %v7814 = vmul.f32 %v7489, %v7046
        %v7815 = vmul.f32 %v7493, %v7047
        %v7816 = vmul.f32 %v7497, %v7048
        %v7817 = vmul.f32 %v7501, %v7049
        %v7818 = vmul.f32 %v7505, %v7050
        %v7819 = vmul.f32 %v7509, %v7051
        %v7820 = vmul.f32 %v7513, %v7052
        %v7821 = vmul.f32 %v7517, %v7053
        %v7822 = vmul.f32 %v7521, %v7054
        %v7823 = vmul.f32 %v7525, %v7055
        %v7824 = vmul.f32 %v7529, %v7056
        %v7825 = vmul.f32 %v7533, %v7057
        %v7826 = vmul.f32 %v7537, %v7058
        %v7827 = vmul.f32 %v7541, %v7059
        %v7828 = vmul.f32 %v7545, %v7060
        %v7829 = vmul.f32 %v7549, %v7061
        %v7830 = vmul.f32 %v7553, %v7062
        %v7831 = vmul.f32 %v7557, %v7063
        %v7832 = vmul.f32 %v7561, %v7064
        %v7833 = vmul.f32 %v7565, %v7065
        %v7834 = vmul.f32 %v7569, %v7066
        %v7835 = vmul.f32 %v7573, %v7067
        %v7836 = vmul.f32 %v7577, %v7068
        %v7837 = vmul.f32 %v7581, %v7069
        %vm7838 = vcmask 1043456
        %v7839 = vsel %vm7838, %v7710, 0.0
        %7840 = vadd.xlane.f32.xlu0 %v7839
        %v7841 = vpop.xlane.xlu0 %7840
        %v7842 = vsel %vm7838, %v7711, 0.0
        %7843 = vadd.xlane.f32.xlu0 %v7842
        %v7844 = vpop.xlane.xlu0 %7843
        %v7845 = vsel %vm7838, %v7712, 0.0
        %7846 = vadd.xlane.f32.xlu0 %v7845
        %v7847 = vpop.xlane.xlu0 %7846
        %v7848 = vsel %vm7838, %v7713, 0.0
        %7849 = vadd.xlane.f32.xlu0 %v7848
        %v7850 = vpop.xlane.xlu0 %7849
        %v7851 = vsel %vm7838, %v7714, 0.0
        %7852 = vadd.xlane.f32.xlu0 %v7851
        %v7853 = vpop.xlane.xlu0 %7852
        %v7854 = vsel %vm7838, %v7715, 0.0
        %7855 = vadd.xlane.f32.xlu0 %v7854
        %v7856 = vpop.xlane.xlu0 %7855
        %v7857 = vsel %vm7838, %v7716, 0.0
        %7858 = vadd.xlane.f32.xlu0 %v7857
        %v7859 = vpop.xlane.xlu0 %7858
        %v7860 = vsel %vm7838, %v7717, 0.0
        %7861 = vadd.xlane.f32.xlu0 %v7860
        %v7862 = vpop.xlane.xlu0 %7861
        %v7863 = vsel %vm7838, %v7718, 0.0
        %7864 = vadd.xlane.f32.xlu0 %v7863
        %v7865 = vpop.xlane.xlu0 %7864
        %v7866 = vsel %vm7838, %v7719, 0.0
        %7867 = vadd.xlane.f32.xlu0 %v7866
        %v7868 = vpop.xlane.xlu0 %7867
        %v7869 = vsel %vm7838, %v7720, 0.0
        %7870 = vadd.xlane.f32.xlu0 %v7869
        %v7871 = vpop.xlane.xlu0 %7870
        %v7872 = vsel %vm7838, %v7721, 0.0
        %7873 = vadd.xlane.f32.xlu0 %v7872
        %v7874 = vpop.xlane.xlu0 %7873
        %v7875 = vsel %vm7838, %v7722, 0.0
        %7876 = vadd.xlane.f32.xlu0 %v7875
        %v7877 = vpop.xlane.xlu0 %7876
        %v7878 = vsel %vm7838, %v7723, 0.0
        %7879 = vadd.xlane.f32.xlu0 %v7878
        %v7880 = vpop.xlane.xlu0 %7879
        %v7881 = vsel %vm7838, %v7724, 0.0
        %7882 = vadd.xlane.f32.xlu0 %v7881
        %v7883 = vpop.xlane.xlu0 %7882
        %v7884 = vsel %vm7838, %v7725, 0.0
        %7885 = vadd.xlane.f32.xlu0 %v7884
        %v7886 = vpop.xlane.xlu0 %7885
        %v7887 = vsel %vm7838, %v7726, 0.0
        %7888 = vadd.xlane.f32.xlu0 %v7887
        %v7889 = vpop.xlane.xlu0 %7888
        %v7890 = vsel %vm7838, %v7727, 0.0
        %7891 = vadd.xlane.f32.xlu0 %v7890
        %v7892 = vpop.xlane.xlu0 %7891
        %v7893 = vsel %vm7838, %v7728, 0.0
        %7894 = vadd.xlane.f32.xlu0 %v7893
        %v7895 = vpop.xlane.xlu0 %7894
        %v7896 = vsel %vm7838, %v7729, 0.0
        %7897 = vadd.xlane.f32.xlu0 %v7896
        %v7898 = vpop.xlane.xlu0 %7897
        %v7899 = vsel %vm7838, %v7730, 0.0
        %7900 = vadd.xlane.f32.xlu0 %v7899
        %v7901 = vpop.xlane.xlu0 %7900
        %v7902 = vsel %vm7838, %v7731, 0.0
        %7903 = vadd.xlane.f32.xlu0 %v7902
        %v7904 = vpop.xlane.xlu0 %7903
        %v7905 = vsel %vm7838, %v7732, 0.0
        %7906 = vadd.xlane.f32.xlu0 %v7905
        %v7907 = vpop.xlane.xlu0 %7906
        %v7908 = vsel %vm7838, %v7733, 0.0
        %7909 = vadd.xlane.f32.xlu0 %v7908
        %v7910 = vpop.xlane.xlu0 %7909
        %v7911 = vsel %vm7838, %v7734, 0.0
        %7912 = vadd.xlane.f32.xlu0 %v7911
        %v7913 = vpop.xlane.xlu0 %7912
        %v7914 = vsel %vm7838, %v7735, 0.0
        %7915 = vadd.xlane.f32.xlu0 %v7914
        %v7916 = vpop.xlane.xlu0 %7915
        %v7917 = vsel %vm7838, %v7736, 0.0
        %7918 = vadd.xlane.f32.xlu0 %v7917
        %v7919 = vpop.xlane.xlu0 %7918
        %v7920 = vsel %vm7838, %v7737, 0.0
        %7921 = vadd.xlane.f32.xlu0 %v7920
        %v7922 = vpop.xlane.xlu0 %7921
        %v7923 = vsel %vm7838, %v7738, 0.0
        %7924 = vadd.xlane.f32.xlu0 %v7923
        %v7925 = vpop.xlane.xlu0 %7924
        %v7926 = vsel %vm7838, %v7739, 0.0
        %7927 = vadd.xlane.f32.xlu0 %v7926
        %v7928 = vpop.xlane.xlu0 %7927
        %v7929 = vsel %vm7838, %v7740, 0.0
        %7930 = vadd.xlane.f32.xlu0 %v7929
        %v7931 = vpop.xlane.xlu0 %7930
        %v7932 = vsel %vm7838, %v7741, 0.0
        %7933 = vadd.xlane.f32.xlu0 %v7932
        %v7934 = vpop.xlane.xlu0 %7933
        %v7935 = vsel %vm7838, %v7742, 0.0
        %7936 = vadd.xlane.f32.xlu0 %v7935
        %v7937 = vpop.xlane.xlu0 %7936
        %v7938 = vsel %vm7838, %v7743, 0.0
        %7939 = vadd.xlane.f32.xlu0 %v7938
        %v7940 = vpop.xlane.xlu0 %7939
        %v7941 = vsel %vm7838, %v7744, 0.0
        %7942 = vadd.xlane.f32.xlu0 %v7941
        %v7943 = vpop.xlane.xlu0 %7942
        %v7944 = vsel %vm7838, %v7745, 0.0
        %7945 = vadd.xlane.f32.xlu0 %v7944
        %v7946 = vpop.xlane.xlu0 %7945
        %v7947 = vsel %vm7838, %v7746, 0.0
        %7948 = vadd.xlane.f32.xlu0 %v7947
        %v7949 = vpop.xlane.xlu0 %7948
        %v7950 = vsel %vm7838, %v7747, 0.0
        %7951 = vadd.xlane.f32.xlu0 %v7950
        %v7952 = vpop.xlane.xlu0 %7951
        %v7953 = vsel %vm7838, %v7748, 0.0
        %7954 = vadd.xlane.f32.xlu0 %v7953
        %v7955 = vpop.xlane.xlu0 %7954
        %v7956 = vsel %vm7838, %v7749, 0.0
        %7957 = vadd.xlane.f32.xlu0 %v7956
        %v7958 = vpop.xlane.xlu0 %7957
        %v7959 = vsel %vm7838, %v7750, 0.0
        %7960 = vadd.xlane.f32.xlu0 %v7959
        %v7961 = vpop.xlane.xlu0 %7960
        %v7962 = vsel %vm7838, %v7751, 0.0
        %7963 = vadd.xlane.f32.xlu0 %v7962
        %v7964 = vpop.xlane.xlu0 %7963
        %v7965 = vsel %vm7838, %v7752, 0.0
        %7966 = vadd.xlane.f32.xlu0 %v7965
        %v7967 = vpop.xlane.xlu0 %7966
        %v7968 = vsel %vm7838, %v7753, 0.0
        %7969 = vadd.xlane.f32.xlu0 %v7968
        %v7970 = vpop.xlane.xlu0 %7969
        %v7971 = vsel %vm7838, %v7754, 0.0
        %7972 = vadd.xlane.f32.xlu0 %v7971
        %v7973 = vpop.xlane.xlu0 %7972
        %v7974 = vsel %vm7838, %v7755, 0.0
        %7975 = vadd.xlane.f32.xlu0 %v7974
        %v7976 = vpop.xlane.xlu0 %7975
        %v7977 = vsel %vm7838, %v7756, 0.0
        %7978 = vadd.xlane.f32.xlu0 %v7977
        %v7979 = vpop.xlane.xlu0 %7978
        %v7980 = vsel %vm7838, %v7757, 0.0
        %7981 = vadd.xlane.f32.xlu0 %v7980
        %v7982 = vpop.xlane.xlu0 %7981
        %v7983 = vsel %vm7838, %v7758, 0.0
        %7984 = vadd.xlane.f32.xlu0 %v7983
        %v7985 = vpop.xlane.xlu0 %7984
        %v7986 = vsel %vm7838, %v7759, 0.0
        %7987 = vadd.xlane.f32.xlu0 %v7986
        %v7988 = vpop.xlane.xlu0 %7987
        %v7989 = vsel %vm7838, %v7760, 0.0
        %7990 = vadd.xlane.f32.xlu0 %v7989
        %v7991 = vpop.xlane.xlu0 %7990
        %v7992 = vsel %vm7838, %v7761, 0.0
        %7993 = vadd.xlane.f32.xlu0 %v7992
        %v7994 = vpop.xlane.xlu0 %7993
        %v7995 = vsel %vm7838, %v7762, 0.0
        %7996 = vadd.xlane.f32.xlu0 %v7995
        %v7997 = vpop.xlane.xlu0 %7996
        %v7998 = vsel %vm7838, %v7763, 0.0
        %7999 = vadd.xlane.f32.xlu0 %v7998
        %v8000 = vpop.xlane.xlu0 %7999
        %v8001 = vsel %vm7838, %v7764, 0.0
        %8002 = vadd.xlane.f32.xlu0 %v8001
        %v8003 = vpop.xlane.xlu0 %8002
        %v8004 = vsel %vm7838, %v7765, 0.0
        %8005 = vadd.xlane.f32.xlu0 %v8004
        %v8006 = vpop.xlane.xlu0 %8005
        %v8007 = vsel %vm7838, %v7766, 0.0
        %8008 = vadd.xlane.f32.xlu0 %v8007
        %v8009 = vpop.xlane.xlu0 %8008
        %v8010 = vsel %vm7838, %v7767, 0.0
        %8011 = vadd.xlane.f32.xlu0 %v8010
        %v8012 = vpop.xlane.xlu0 %8011
        %v8013 = vsel %vm7838, %v7768, 0.0
        %8014 = vadd.xlane.f32.xlu0 %v8013
        %v8015 = vpop.xlane.xlu0 %8014
        %v8016 = vsel %vm7838, %v7769, 0.0
        %8017 = vadd.xlane.f32.xlu0 %v8016
        %v8018 = vpop.xlane.xlu0 %8017
        %v8019 = vsel %vm7838, %v7770, 0.0
        %8020 = vadd.xlane.f32.xlu0 %v8019
        %v8021 = vpop.xlane.xlu0 %8020
        %v8022 = vsel %vm7838, %v7771, 0.0
        %8023 = vadd.xlane.f32.xlu0 %v8022
        %v8024 = vpop.xlane.xlu0 %8023
        %v8025 = vsel %vm7838, %v7772, 0.0
        %8026 = vadd.xlane.f32.xlu0 %v8025
        %v8027 = vpop.xlane.xlu0 %8026
        %v8028 = vsel %vm7838, %v7773, 0.0
        %8029 = vadd.xlane.f32.xlu0 %v8028
        %v8030 = vpop.xlane.xlu0 %8029
        %v8031 = vsel %vm7838, %v7774, 0.0
        %8032 = vadd.xlane.f32.xlu0 %v8031
        %v8033 = vpop.xlane.xlu0 %8032
        %v8034 = vsel %vm7838, %v7775, 0.0
        %8035 = vadd.xlane.f32.xlu0 %v8034
        %v8036 = vpop.xlane.xlu0 %8035
        %v8037 = vsel %vm7838, %v7776, 0.0
        %8038 = vadd.xlane.f32.xlu0 %v8037
        %v8039 = vpop.xlane.xlu0 %8038
        %v8040 = vsel %vm7838, %v7777, 0.0
        %8041 = vadd.xlane.f32.xlu0 %v8040
        %v8042 = vpop.xlane.xlu0 %8041
        %v8043 = vsel %vm7838, %v7778, 0.0
        %8044 = vadd.xlane.f32.xlu0 %v8043
        %v8045 = vpop.xlane.xlu0 %8044
        %v8046 = vsel %vm7838, %v7779, 0.0
        %8047 = vadd.xlane.f32.xlu0 %v8046
        %v8048 = vpop.xlane.xlu0 %8047
        %v8049 = vsel %vm7838, %v7780, 0.0
        %8050 = vadd.xlane.f32.xlu0 %v8049
        %v8051 = vpop.xlane.xlu0 %8050
        %v8052 = vsel %vm7838, %v7781, 0.0
        %8053 = vadd.xlane.f32.xlu0 %v8052
        %v8054 = vpop.xlane.xlu0 %8053
        %v8055 = vsel %vm7838, %v7782, 0.0
        %8056 = vadd.xlane.f32.xlu0 %v8055
        %v8057 = vpop.xlane.xlu0 %8056
        %v8058 = vsel %vm7838, %v7783, 0.0
        %8059 = vadd.xlane.f32.xlu0 %v8058
        %v8060 = vpop.xlane.xlu0 %8059
        %v8061 = vsel %vm7838, %v7784, 0.0
        %8062 = vadd.xlane.f32.xlu0 %v8061
        %v8063 = vpop.xlane.xlu0 %8062
        %v8064 = vsel %vm7838, %v7785, 0.0
        %8065 = vadd.xlane.f32.xlu0 %v8064
        %v8066 = vpop.xlane.xlu0 %8065
        %v8067 = vsel %vm7838, %v7786, 0.0
        %8068 = vadd.xlane.f32.xlu0 %v8067
        %v8069 = vpop.xlane.xlu0 %8068
        %v8070 = vsel %vm7838, %v7787, 0.0
        %8071 = vadd.xlane.f32.xlu0 %v8070
        %v8072 = vpop.xlane.xlu0 %8071
        %v8073 = vsel %vm7838, %v7788, 0.0
        %8074 = vadd.xlane.f32.xlu0 %v8073
        %v8075 = vpop.xlane.xlu0 %8074
        %v8076 = vsel %vm7838, %v7789, 0.0
        %8077 = vadd.xlane.f32.xlu0 %v8076
        %v8078 = vpop.xlane.xlu0 %8077
        %v8079 = vsel %vm7838, %v7790, 0.0
        %8080 = vadd.xlane.f32.xlu0 %v8079
        %v8081 = vpop.xlane.xlu0 %8080
        %v8082 = vsel %vm7838, %v7791, 0.0
        %8083 = vadd.xlane.f32.xlu0 %v8082
        %v8084 = vpop.xlane.xlu0 %8083
        %v8085 = vsel %vm7838, %v7792, 0.0
        %8086 = vadd.xlane.f32.xlu0 %v8085
        %v8087 = vpop.xlane.xlu0 %8086
        %v8088 = vsel %vm7838, %v7793, 0.0
        %8089 = vadd.xlane.f32.xlu0 %v8088
        %v8090 = vpop.xlane.xlu0 %8089
        %v8091 = vsel %vm7838, %v7794, 0.0
        %8092 = vadd.xlane.f32.xlu0 %v8091
        %v8093 = vpop.xlane.xlu0 %8092
        %v8094 = vsel %vm7838, %v7795, 0.0
        %8095 = vadd.xlane.f32.xlu0 %v8094
        %v8096 = vpop.xlane.xlu0 %8095
        %v8097 = vsel %vm7838, %v7796, 0.0
        %8098 = vadd.xlane.f32.xlu0 %v8097
        %v8099 = vpop.xlane.xlu0 %8098
        %v8100 = vsel %vm7838, %v7797, 0.0
        %8101 = vadd.xlane.f32.xlu0 %v8100
        %v8102 = vpop.xlane.xlu0 %8101
        %v8103 = vsel %vm7838, %v7798, 0.0
        %8104 = vadd.xlane.f32.xlu0 %v8103
        %v8105 = vpop.xlane.xlu0 %8104
        %v8106 = vsel %vm7838, %v7799, 0.0
        %8107 = vadd.xlane.f32.xlu0 %v8106
        %v8108 = vpop.xlane.xlu0 %8107
        %v8109 = vsel %vm7838, %v7800, 0.0
        %8110 = vadd.xlane.f32.xlu0 %v8109
        %v8111 = vpop.xlane.xlu0 %8110
        %v8112 = vsel %vm7838, %v7801, 0.0
        %8113 = vadd.xlane.f32.xlu0 %v8112
        %v8114 = vpop.xlane.xlu0 %8113
        %v8115 = vsel %vm7838, %v7802, 0.0
        %8116 = vadd.xlane.f32.xlu0 %v8115
        %v8117 = vpop.xlane.xlu0 %8116
        %v8118 = vsel %vm7838, %v7803, 0.0
        %8119 = vadd.xlane.f32.xlu0 %v8118
        %v8120 = vpop.xlane.xlu0 %8119
        %v8121 = vsel %vm7838, %v7804, 0.0
        %8122 = vadd.xlane.f32.xlu0 %v8121
        %v8123 = vpop.xlane.xlu0 %8122
        %v8124 = vsel %vm7838, %v7805, 0.0
        %8125 = vadd.xlane.f32.xlu0 %v8124
        %v8126 = vpop.xlane.xlu0 %8125
        %v8127 = vsel %vm7838, %v7806, 0.0
        %8128 = vadd.xlane.f32.xlu0 %v8127
        %v8129 = vpop.xlane.xlu0 %8128
        %v8130 = vsel %vm7838, %v7807, 0.0
        %8131 = vadd.xlane.f32.xlu0 %v8130
        %v8132 = vpop.xlane.xlu0 %8131
        %v8133 = vsel %vm7838, %v7808, 0.0
        %8134 = vadd.xlane.f32.xlu0 %v8133
        %v8135 = vpop.xlane.xlu0 %8134
        %v8136 = vsel %vm7838, %v7809, 0.0
        %8137 = vadd.xlane.f32.xlu0 %v8136
        %v8138 = vpop.xlane.xlu0 %8137
        %v8139 = vsel %vm7838, %v7810, 0.0
        %8140 = vadd.xlane.f32.xlu0 %v8139
        %v8141 = vpop.xlane.xlu0 %8140
        %v8142 = vsel %vm7838, %v7811, 0.0
        %8143 = vadd.xlane.f32.xlu0 %v8142
        %v8144 = vpop.xlane.xlu0 %8143
        %v8145 = vsel %vm7838, %v7812, 0.0
        %8146 = vadd.xlane.f32.xlu0 %v8145
        %v8147 = vpop.xlane.xlu0 %8146
        %v8148 = vsel %vm7838, %v7813, 0.0
        %8149 = vadd.xlane.f32.xlu0 %v8148
        %v8150 = vpop.xlane.xlu0 %8149
        %v8151 = vsel %vm7838, %v7814, 0.0
        %8152 = vadd.xlane.f32.xlu0 %v8151
        %v8153 = vpop.xlane.xlu0 %8152
        %v8154 = vsel %vm7838, %v7815, 0.0
        %8155 = vadd.xlane.f32.xlu0 %v8154
        %v8156 = vpop.xlane.xlu0 %8155
        %v8157 = vsel %vm7838, %v7816, 0.0
        %8158 = vadd.xlane.f32.xlu0 %v8157
        %v8159 = vpop.xlane.xlu0 %8158
        %v8160 = vsel %vm7838, %v7817, 0.0
        %8161 = vadd.xlane.f32.xlu0 %v8160
        %v8162 = vpop.xlane.xlu0 %8161
        %v8163 = vsel %vm7838, %v7818, 0.0
        %8164 = vadd.xlane.f32.xlu0 %v8163
        %v8165 = vpop.xlane.xlu0 %8164
        %v8166 = vsel %vm7838, %v7819, 0.0
        %8167 = vadd.xlane.f32.xlu0 %v8166
        %v8168 = vpop.xlane.xlu0 %8167
        %v8169 = vsel %vm7838, %v7820, 0.0
        %8170 = vadd.xlane.f32.xlu0 %v8169
        %v8171 = vpop.xlane.xlu0 %8170
        %v8172 = vsel %vm7838, %v7821, 0.0
        %8173 = vadd.xlane.f32.xlu0 %v8172
        %v8174 = vpop.xlane.xlu0 %8173
        %v8175 = vsel %vm7838, %v7822, 0.0
        %8176 = vadd.xlane.f32.xlu0 %v8175
        %v8177 = vpop.xlane.xlu0 %8176
        %v8178 = vsel %vm7838, %v7823, 0.0
        %8179 = vadd.xlane.f32.xlu0 %v8178
        %v8180 = vpop.xlane.xlu0 %8179
        %v8181 = vsel %vm7838, %v7824, 0.0
        %8182 = vadd.xlane.f32.xlu0 %v8181
        %v8183 = vpop.xlane.xlu0 %8182
        %v8184 = vsel %vm7838, %v7825, 0.0
        %8185 = vadd.xlane.f32.xlu0 %v8184
        %v8186 = vpop.xlane.xlu0 %8185
        %v8187 = vsel %vm7838, %v7826, 0.0
        %8188 = vadd.xlane.f32.xlu0 %v8187
        %v8189 = vpop.xlane.xlu0 %8188
        %v8190 = vsel %vm7838, %v7827, 0.0
        %8191 = vadd.xlane.f32.xlu0 %v8190
        %v8192 = vpop.xlane.xlu0 %8191
        %v8193 = vsel %vm7838, %v7828, 0.0
        %8194 = vadd.xlane.f32.xlu0 %v8193
        %v8195 = vpop.xlane.xlu0 %8194
        %v8196 = vsel %vm7838, %v7829, 0.0
        %8197 = vadd.xlane.f32.xlu0 %v8196
        %v8198 = vpop.xlane.xlu0 %8197
        %v8199 = vsel %vm7838, %v7830, 0.0
        %8200 = vadd.xlane.f32.xlu0 %v8199
        %v8201 = vpop.xlane.xlu0 %8200
        %v8202 = vsel %vm7838, %v7831, 0.0
        %8203 = vadd.xlane.f32.xlu0 %v8202
        %v8204 = vpop.xlane.xlu0 %8203
        %v8205 = vsel %vm7838, %v7832, 0.0
        %8206 = vadd.xlane.f32.xlu0 %v8205
        %v8207 = vpop.xlane.xlu0 %8206
        %v8208 = vsel %vm7838, %v7833, 0.0
        %8209 = vadd.xlane.f32.xlu0 %v8208
        %v8210 = vpop.xlane.xlu0 %8209
        %v8211 = vsel %vm7838, %v7834, 0.0
        %8212 = vadd.xlane.f32.xlu0 %v8211
        %v8213 = vpop.xlane.xlu0 %8212
        %v8214 = vsel %vm7838, %v7835, 0.0
        %8215 = vadd.xlane.f32.xlu0 %v8214
        %v8216 = vpop.xlane.xlu0 %8215
        %v8217 = vsel %vm7838, %v7836, 0.0
        %8218 = vadd.xlane.f32.xlu0 %v8217
        %v8219 = vpop.xlane.xlu0 %8218
        %v8220 = vsel %vm7838, %v7837, 0.0
        %8221 = vadd.xlane.f32.xlu0 %v8220
        %v8222 = vpop.xlane.xlu0 %8221
        %v8351 = vadd.s32 %v2256, 4294967290
        %v8352 = vlaneseq
        %v8353 = vshrl.u32 %v8352, 7
        %v8354 = vsub.s32 %v8351, %v8353
        %v8355 = vrot.slane %v7841, %v8354
        %v8356 = vlaneseq
        %v8357 = vshrl.u32 %v8356, 7
        %v8358 = vsub.s32 %v8351, %v8357
        %v8359 = vrot.slane %v7844, %v8358
        %v8360 = vlaneseq
        %v8361 = vshrl.u32 %v8360, 7
        %v8362 = vsub.s32 %v8351, %v8361
        %v8363 = vrot.slane %v7847, %v8362
        %v8364 = vlaneseq
        %v8365 = vshrl.u32 %v8364, 7
        %v8366 = vsub.s32 %v8351, %v8365
        %v8367 = vrot.slane %v7850, %v8366
        %v8368 = vlaneseq
        %v8369 = vshrl.u32 %v8368, 7
        %v8370 = vsub.s32 %v8351, %v8369
        %v8371 = vrot.slane %v7853, %v8370
        %v8372 = vlaneseq
        %v8373 = vshrl.u32 %v8372, 7
        %v8374 = vsub.s32 %v8351, %v8373
        %v8375 = vrot.slane %v7856, %v8374
        %v8376 = vlaneseq
        %v8377 = vshrl.u32 %v8376, 7
        %v8378 = vsub.s32 %v8351, %v8377
        %v8379 = vrot.slane %v7859, %v8378
        %v8380 = vlaneseq
        %v8381 = vshrl.u32 %v8380, 7
        %v8382 = vsub.s32 %v8351, %v8381
        %v8383 = vrot.slane %v7862, %v8382
        %v8384 = vlaneseq
        %v8385 = vshrl.u32 %v8384, 7
        %v8386 = vsub.s32 %v8351, %v8385
        %v8387 = vrot.slane %v7865, %v8386
        %v8388 = vlaneseq
        %v8389 = vshrl.u32 %v8388, 7
        %v8390 = vsub.s32 %v8351, %v8389
        %v8391 = vrot.slane %v7868, %v8390
        %v8392 = vlaneseq
        %v8393 = vshrl.u32 %v8392, 7
        %v8394 = vsub.s32 %v8351, %v8393
        %v8395 = vrot.slane %v7871, %v8394
        %v8396 = vlaneseq
        %v8397 = vshrl.u32 %v8396, 7
        %v8398 = vsub.s32 %v8351, %v8397
        %v8399 = vrot.slane %v7874, %v8398
        %v8400 = vlaneseq
        %v8401 = vshrl.u32 %v8400, 7
        %v8402 = vsub.s32 %v8351, %v8401
        %v8403 = vrot.slane %v7877, %v8402
        %v8404 = vlaneseq
        %v8405 = vshrl.u32 %v8404, 7
        %v8406 = vsub.s32 %v8351, %v8405
        %v8407 = vrot.slane %v7880, %v8406
        %v8408 = vlaneseq
        %v8409 = vshrl.u32 %v8408, 7
        %v8410 = vsub.s32 %v8351, %v8409
        %v8411 = vrot.slane %v7883, %v8410
        %v8412 = vlaneseq
        %v8413 = vshrl.u32 %v8412, 7
        %v8414 = vsub.s32 %v8351, %v8413
        %v8415 = vrot.slane %v7886, %v8414
        %v8416 = vlaneseq
        %v8417 = vshrl.u32 %v8416, 7
        %v8418 = vsub.s32 %v8351, %v8417
        %v8419 = vrot.slane %v7889, %v8418
        %v8420 = vlaneseq
        %v8421 = vshrl.u32 %v8420, 7
        %v8422 = vsub.s32 %v8351, %v8421
        %v8423 = vrot.slane %v7892, %v8422
        %v8424 = vlaneseq
        %v8425 = vshrl.u32 %v8424, 7
        %v8426 = vsub.s32 %v8351, %v8425
        %v8427 = vrot.slane %v7895, %v8426
        %v8428 = vlaneseq
        %v8429 = vshrl.u32 %v8428, 7
        %v8430 = vsub.s32 %v8351, %v8429
        %v8431 = vrot.slane %v7898, %v8430
        %v8432 = vlaneseq
        %v8433 = vshrl.u32 %v8432, 7
        %v8434 = vsub.s32 %v8351, %v8433
        %v8435 = vrot.slane %v7901, %v8434
        %v8436 = vlaneseq
        %v8437 = vshrl.u32 %v8436, 7
        %v8438 = vsub.s32 %v8351, %v8437
        %v8439 = vrot.slane %v7904, %v8438
        %v8440 = vlaneseq
        %v8441 = vshrl.u32 %v8440, 7
        %v8442 = vsub.s32 %v8351, %v8441
        %v8443 = vrot.slane %v7907, %v8442
        %v8444 = vlaneseq
        %v8445 = vshrl.u32 %v8444, 7
        %v8446 = vsub.s32 %v8351, %v8445
        %v8447 = vrot.slane %v7910, %v8446
        %v8448 = vlaneseq
        %v8449 = vshrl.u32 %v8448, 7
        %v8450 = vsub.s32 %v8351, %v8449
        %v8451 = vrot.slane %v7913, %v8450
        %v8452 = vlaneseq
        %v8453 = vshrl.u32 %v8452, 7
        %v8454 = vsub.s32 %v8351, %v8453
        %v8455 = vrot.slane %v7916, %v8454
        %v8456 = vlaneseq
        %v8457 = vshrl.u32 %v8456, 7
        %v8458 = vsub.s32 %v8351, %v8457
        %v8459 = vrot.slane %v7919, %v8458
        %v8460 = vlaneseq
        %v8461 = vshrl.u32 %v8460, 7
        %v8462 = vsub.s32 %v8351, %v8461
        %v8463 = vrot.slane %v7922, %v8462
        %v8464 = vlaneseq
        %v8465 = vshrl.u32 %v8464, 7
        %v8466 = vsub.s32 %v8351, %v8465
        %v8467 = vrot.slane %v7925, %v8466
        %v8468 = vlaneseq
        %v8469 = vshrl.u32 %v8468, 7
        %v8470 = vsub.s32 %v8351, %v8469
        %v8471 = vrot.slane %v7928, %v8470
        %v8472 = vlaneseq
        %v8473 = vshrl.u32 %v8472, 7
        %v8474 = vsub.s32 %v8351, %v8473
        %v8475 = vrot.slane %v7931, %v8474
        %v8476 = vlaneseq
        %v8477 = vshrl.u32 %v8476, 7
        %v8478 = vsub.s32 %v8351, %v8477
        %v8479 = vrot.slane %v7934, %v8478
        %v8480 = vlaneseq
        %v8481 = vshrl.u32 %v8480, 7
        %v8482 = vsub.s32 %v8351, %v8481
        %v8483 = vrot.slane %v7937, %v8482
        %v8484 = vlaneseq
        %v8485 = vshrl.u32 %v8484, 7
        %v8486 = vsub.s32 %v8351, %v8485
        %v8487 = vrot.slane %v7940, %v8486
        %v8488 = vlaneseq
        %v8489 = vshrl.u32 %v8488, 7
        %v8490 = vsub.s32 %v8351, %v8489
        %v8491 = vrot.slane %v7943, %v8490
        %v8492 = vlaneseq
        %v8493 = vshrl.u32 %v8492, 7
        %v8494 = vsub.s32 %v8351, %v8493
        %v8495 = vrot.slane %v7946, %v8494
        %v8496 = vlaneseq
        %v8497 = vshrl.u32 %v8496, 7
        %v8498 = vsub.s32 %v8351, %v8497
        %v8499 = vrot.slane %v7949, %v8498
        %v8500 = vlaneseq
        %v8501 = vshrl.u32 %v8500, 7
        %v8502 = vsub.s32 %v8351, %v8501
        %v8503 = vrot.slane %v7952, %v8502
        %v8504 = vlaneseq
        %v8505 = vshrl.u32 %v8504, 7
        %v8506 = vsub.s32 %v8351, %v8505
        %v8507 = vrot.slane %v7955, %v8506
        %v8508 = vlaneseq
        %v8509 = vshrl.u32 %v8508, 7
        %v8510 = vsub.s32 %v8351, %v8509
        %v8511 = vrot.slane %v7958, %v8510
        %v8512 = vlaneseq
        %v8513 = vshrl.u32 %v8512, 7
        %v8514 = vsub.s32 %v8351, %v8513
        %v8515 = vrot.slane %v7961, %v8514
        %v8516 = vlaneseq
        %v8517 = vshrl.u32 %v8516, 7
        %v8518 = vsub.s32 %v8351, %v8517
        %v8519 = vrot.slane %v7964, %v8518
        %v8520 = vlaneseq
        %v8521 = vshrl.u32 %v8520, 7
        %v8522 = vsub.s32 %v8351, %v8521
        %v8523 = vrot.slane %v7967, %v8522
        %v8524 = vlaneseq
        %v8525 = vshrl.u32 %v8524, 7
        %v8526 = vsub.s32 %v8351, %v8525
        %v8527 = vrot.slane %v7970, %v8526
        %v8528 = vlaneseq
        %v8529 = vshrl.u32 %v8528, 7
        %v8530 = vsub.s32 %v8351, %v8529
        %v8531 = vrot.slane %v7973, %v8530
        %v8532 = vlaneseq
        %v8533 = vshrl.u32 %v8532, 7
        %v8534 = vsub.s32 %v8351, %v8533
        %v8535 = vrot.slane %v7976, %v8534
        %v8536 = vlaneseq
        %v8537 = vshrl.u32 %v8536, 7
        %v8538 = vsub.s32 %v8351, %v8537
        %v8539 = vrot.slane %v7979, %v8538
        %v8540 = vlaneseq
        %v8541 = vshrl.u32 %v8540, 7
        %v8542 = vsub.s32 %v8351, %v8541
        %v8543 = vrot.slane %v7982, %v8542
        %v8544 = vlaneseq
        %v8545 = vshrl.u32 %v8544, 7
        %v8546 = vsub.s32 %v8351, %v8545
        %v8547 = vrot.slane %v7985, %v8546
        %v8548 = vlaneseq
        %v8549 = vshrl.u32 %v8548, 7
        %v8550 = vsub.s32 %v8351, %v8549
        %v8551 = vrot.slane %v7988, %v8550
        %v8552 = vlaneseq
        %v8553 = vshrl.u32 %v8552, 7
        %v8554 = vsub.s32 %v8351, %v8553
        %v8555 = vrot.slane %v7991, %v8554
        %v8556 = vlaneseq
        %v8557 = vshrl.u32 %v8556, 7
        %v8558 = vsub.s32 %v8351, %v8557
        %v8559 = vrot.slane %v7994, %v8558
        %v8560 = vlaneseq
        %v8561 = vshrl.u32 %v8560, 7
        %v8562 = vsub.s32 %v8351, %v8561
        %v8563 = vrot.slane %v7997, %v8562
        %v8564 = vlaneseq
        %v8565 = vshrl.u32 %v8564, 7
        %v8566 = vsub.s32 %v8351, %v8565
        %v8567 = vrot.slane %v8000, %v8566
        %v8568 = vlaneseq
        %v8569 = vshrl.u32 %v8568, 7
        %v8570 = vsub.s32 %v8351, %v8569
        %v8571 = vrot.slane %v8003, %v8570
        %v8572 = vlaneseq
        %v8573 = vshrl.u32 %v8572, 7
        %v8574 = vsub.s32 %v8351, %v8573
        %v8575 = vrot.slane %v8006, %v8574
        %v8576 = vlaneseq
        %v8577 = vshrl.u32 %v8576, 7
        %v8578 = vsub.s32 %v8351, %v8577
        %v8579 = vrot.slane %v8009, %v8578
        %v8580 = vlaneseq
        %v8581 = vshrl.u32 %v8580, 7
        %v8582 = vsub.s32 %v8351, %v8581
        %v8583 = vrot.slane %v8012, %v8582
        %v8584 = vlaneseq
        %v8585 = vshrl.u32 %v8584, 7
        %v8586 = vsub.s32 %v8351, %v8585
        %v8587 = vrot.slane %v8015, %v8586
        %v8588 = vlaneseq
        %v8589 = vshrl.u32 %v8588, 7
        %v8590 = vsub.s32 %v8351, %v8589
        %v8591 = vrot.slane %v8018, %v8590
        %v8592 = vlaneseq
        %v8593 = vshrl.u32 %v8592, 7
        %v8594 = vsub.s32 %v8351, %v8593
        %v8595 = vrot.slane %v8021, %v8594
        %v8596 = vlaneseq
        %v8597 = vshrl.u32 %v8596, 7
        %v8598 = vsub.s32 %v8351, %v8597
        %v8599 = vrot.slane %v8024, %v8598
        %v8600 = vlaneseq
        %v8601 = vshrl.u32 %v8600, 7
        %v8602 = vsub.s32 %v8351, %v8601
        %v8603 = vrot.slane %v8027, %v8602
        %v8604 = vlaneseq
        %v8605 = vshrl.u32 %v8604, 7
        %v8606 = vsub.s32 %v8351, %v8605
        %v8607 = vrot.slane %v8030, %v8606
        %v8608 = vlaneseq
        %v8609 = vshrl.u32 %v8608, 7
        %v8610 = vsub.s32 %v8351, %v8609
        %v8611 = vrot.slane %v8033, %v8610
        %v8612 = vlaneseq
        %v8613 = vshrl.u32 %v8612, 7
        %v8614 = vsub.s32 %v8351, %v8613
        %v8615 = vrot.slane %v8036, %v8614
        %v8616 = vlaneseq
        %v8617 = vshrl.u32 %v8616, 7
        %v8618 = vsub.s32 %v8351, %v8617
        %v8619 = vrot.slane %v8039, %v8618
        %v8620 = vlaneseq
        %v8621 = vshrl.u32 %v8620, 7
        %v8622 = vsub.s32 %v8351, %v8621
        %v8623 = vrot.slane %v8042, %v8622
        %v8624 = vlaneseq
        %v8625 = vshrl.u32 %v8624, 7
        %v8626 = vsub.s32 %v8351, %v8625
        %v8627 = vrot.slane %v8045, %v8626
        %v8628 = vlaneseq
        %v8629 = vshrl.u32 %v8628, 7
        %v8630 = vsub.s32 %v8351, %v8629
        %v8631 = vrot.slane %v8048, %v8630
        %v8632 = vlaneseq
        %v8633 = vshrl.u32 %v8632, 7
        %v8634 = vsub.s32 %v8351, %v8633
        %v8635 = vrot.slane %v8051, %v8634
        %v8636 = vlaneseq
        %v8637 = vshrl.u32 %v8636, 7
        %v8638 = vsub.s32 %v8351, %v8637
        %v8639 = vrot.slane %v8054, %v8638
        %v8640 = vlaneseq
        %v8641 = vshrl.u32 %v8640, 7
        %v8642 = vsub.s32 %v8351, %v8641
        %v8643 = vrot.slane %v8057, %v8642
        %v8644 = vlaneseq
        %v8645 = vshrl.u32 %v8644, 7
        %v8646 = vsub.s32 %v8351, %v8645
        %v8647 = vrot.slane %v8060, %v8646
        %v8648 = vlaneseq
        %v8649 = vshrl.u32 %v8648, 7
        %v8650 = vsub.s32 %v8351, %v8649
        %v8651 = vrot.slane %v8063, %v8650
        %v8652 = vlaneseq
        %v8653 = vshrl.u32 %v8652, 7
        %v8654 = vsub.s32 %v8351, %v8653
        %v8655 = vrot.slane %v8066, %v8654
        %v8656 = vlaneseq
        %v8657 = vshrl.u32 %v8656, 7
        %v8658 = vsub.s32 %v8351, %v8657
        %v8659 = vrot.slane %v8069, %v8658
        %v8660 = vlaneseq
        %v8661 = vshrl.u32 %v8660, 7
        %v8662 = vsub.s32 %v8351, %v8661
        %v8663 = vrot.slane %v8072, %v8662
        %v8664 = vlaneseq
        %v8665 = vshrl.u32 %v8664, 7
        %v8666 = vsub.s32 %v8351, %v8665
        %v8667 = vrot.slane %v8075, %v8666
        %v8668 = vlaneseq
        %v8669 = vshrl.u32 %v8668, 7
        %v8670 = vsub.s32 %v8351, %v8669
        %v8671 = vrot.slane %v8078, %v8670
        %v8672 = vlaneseq
        %v8673 = vshrl.u32 %v8672, 7
        %v8674 = vsub.s32 %v8351, %v8673
        %v8675 = vrot.slane %v8081, %v8674
        %v8676 = vlaneseq
        %v8677 = vshrl.u32 %v8676, 7
        %v8678 = vsub.s32 %v8351, %v8677
        %v8679 = vrot.slane %v8084, %v8678
        %v8680 = vlaneseq
        %v8681 = vshrl.u32 %v8680, 7
        %v8682 = vsub.s32 %v8351, %v8681
        %v8683 = vrot.slane %v8087, %v8682
        %v8684 = vlaneseq
        %v8685 = vshrl.u32 %v8684, 7
        %v8686 = vsub.s32 %v8351, %v8685
        %v8687 = vrot.slane %v8090, %v8686
        %v8688 = vlaneseq
        %v8689 = vshrl.u32 %v8688, 7
        %v8690 = vsub.s32 %v8351, %v8689
        %v8691 = vrot.slane %v8093, %v8690
        %v8692 = vlaneseq
        %v8693 = vshrl.u32 %v8692, 7
        %v8694 = vsub.s32 %v8351, %v8693
        %v8695 = vrot.slane %v8096, %v8694
        %v8696 = vlaneseq
        %v8697 = vshrl.u32 %v8696, 7
        %v8698 = vsub.s32 %v8351, %v8697
        %v8699 = vrot.slane %v8099, %v8698
        %v8700 = vlaneseq
        %v8701 = vshrl.u32 %v8700, 7
        %v8702 = vsub.s32 %v8351, %v8701
        %v8703 = vrot.slane %v8102, %v8702
        %v8704 = vlaneseq
        %v8705 = vshrl.u32 %v8704, 7
        %v8706 = vsub.s32 %v8351, %v8705
        %v8707 = vrot.slane %v8105, %v8706
        %v8708 = vlaneseq
        %v8709 = vshrl.u32 %v8708, 7
        %v8710 = vsub.s32 %v8351, %v8709
        %v8711 = vrot.slane %v8108, %v8710
        %v8712 = vlaneseq
        %v8713 = vshrl.u32 %v8712, 7
        %v8714 = vsub.s32 %v8351, %v8713
        %v8715 = vrot.slane %v8111, %v8714
        %v8716 = vlaneseq
        %v8717 = vshrl.u32 %v8716, 7
        %v8718 = vsub.s32 %v8351, %v8717
        %v8719 = vrot.slane %v8114, %v8718
        %v8720 = vlaneseq
        %v8721 = vshrl.u32 %v8720, 7
        %v8722 = vsub.s32 %v8351, %v8721
        %v8723 = vrot.slane %v8117, %v8722
        %v8724 = vlaneseq
        %v8725 = vshrl.u32 %v8724, 7
        %v8726 = vsub.s32 %v8351, %v8725
        %v8727 = vrot.slane %v8120, %v8726
        %v8728 = vlaneseq
        %v8729 = vshrl.u32 %v8728, 7
        %v8730 = vsub.s32 %v8351, %v8729
        %v8731 = vrot.slane %v8123, %v8730
        %v8732 = vlaneseq
        %v8733 = vshrl.u32 %v8732, 7
        %v8734 = vsub.s32 %v8351, %v8733
        %v8735 = vrot.slane %v8126, %v8734
        %v8736 = vlaneseq
        %v8737 = vshrl.u32 %v8736, 7
        %v8738 = vsub.s32 %v8351, %v8737
        %v8739 = vrot.slane %v8129, %v8738
        %v8740 = vlaneseq
        %v8741 = vshrl.u32 %v8740, 7
        %v8742 = vsub.s32 %v8351, %v8741
        %v8743 = vrot.slane %v8132, %v8742
        %v8744 = vlaneseq
        %v8745 = vshrl.u32 %v8744, 7
        %v8746 = vsub.s32 %v8351, %v8745
        %v8747 = vrot.slane %v8135, %v8746
        %v8748 = vlaneseq
        %v8749 = vshrl.u32 %v8748, 7
        %v8750 = vsub.s32 %v8351, %v8749
        %v8751 = vrot.slane %v8138, %v8750
        %v8752 = vlaneseq
        %v8753 = vshrl.u32 %v8752, 7
        %v8754 = vsub.s32 %v8351, %v8753
        %v8755 = vrot.slane %v8141, %v8754
        %v8756 = vlaneseq
        %v8757 = vshrl.u32 %v8756, 7
        %v8758 = vsub.s32 %v8351, %v8757
        %v8759 = vrot.slane %v8144, %v8758
        %v8760 = vlaneseq
        %v8761 = vshrl.u32 %v8760, 7
        %v8762 = vsub.s32 %v8351, %v8761
        %v8763 = vrot.slane %v8147, %v8762
        %v8764 = vlaneseq
        %v8765 = vshrl.u32 %v8764, 7
        %v8766 = vsub.s32 %v8351, %v8765
        %v8767 = vrot.slane %v8150, %v8766
        %v8768 = vlaneseq
        %v8769 = vshrl.u32 %v8768, 7
        %v8770 = vsub.s32 %v8351, %v8769
        %v8771 = vrot.slane %v8153, %v8770
        %v8772 = vlaneseq
        %v8773 = vshrl.u32 %v8772, 7
        %v8774 = vsub.s32 %v8351, %v8773
        %v8775 = vrot.slane %v8156, %v8774
        %v8776 = vlaneseq
        %v8777 = vshrl.u32 %v8776, 7
        %v8778 = vsub.s32 %v8351, %v8777
        %v8779 = vrot.slane %v8159, %v8778
        %v8780 = vlaneseq
        %v8781 = vshrl.u32 %v8780, 7
        %v8782 = vsub.s32 %v8351, %v8781
        %v8783 = vrot.slane %v8162, %v8782
        %v8784 = vlaneseq
        %v8785 = vshrl.u32 %v8784, 7
        %v8786 = vsub.s32 %v8351, %v8785
        %v8787 = vrot.slane %v8165, %v8786
        %v8788 = vlaneseq
        %v8789 = vshrl.u32 %v8788, 7
        %v8790 = vsub.s32 %v8351, %v8789
        %v8791 = vrot.slane %v8168, %v8790
        %v8792 = vlaneseq
        %v8793 = vshrl.u32 %v8792, 7
        %v8794 = vsub.s32 %v8351, %v8793
        %v8795 = vrot.slane %v8171, %v8794
        %v8796 = vlaneseq
        %v8797 = vshrl.u32 %v8796, 7
        %v8798 = vsub.s32 %v8351, %v8797
        %v8799 = vrot.slane %v8174, %v8798
        %v8800 = vlaneseq
        %v8801 = vshrl.u32 %v8800, 7
        %v8802 = vsub.s32 %v8351, %v8801
        %v8803 = vrot.slane %v8177, %v8802
        %v8804 = vlaneseq
        %v8805 = vshrl.u32 %v8804, 7
        %v8806 = vsub.s32 %v8351, %v8805
        %v8807 = vrot.slane %v8180, %v8806
        %v8808 = vlaneseq
        %v8809 = vshrl.u32 %v8808, 7
        %v8810 = vsub.s32 %v8351, %v8809
        %v8811 = vrot.slane %v8183, %v8810
        %v8812 = vlaneseq
        %v8813 = vshrl.u32 %v8812, 7
        %v8814 = vsub.s32 %v8351, %v8813
        %v8815 = vrot.slane %v8186, %v8814
        %v8816 = vlaneseq
        %v8817 = vshrl.u32 %v8816, 7
        %v8818 = vsub.s32 %v8351, %v8817
        %v8819 = vrot.slane %v8189, %v8818
        %v8820 = vlaneseq
        %v8821 = vshrl.u32 %v8820, 7
        %v8822 = vsub.s32 %v8351, %v8821
        %v8823 = vrot.slane %v8192, %v8822
        %v8824 = vlaneseq
        %v8825 = vshrl.u32 %v8824, 7
        %v8826 = vsub.s32 %v8351, %v8825
        %v8827 = vrot.slane %v8195, %v8826
        %v8828 = vlaneseq
        %v8829 = vshrl.u32 %v8828, 7
        %v8830 = vsub.s32 %v8351, %v8829
        %v8831 = vrot.slane %v8198, %v8830
        %v8832 = vlaneseq
        %v8833 = vshrl.u32 %v8832, 7
        %v8834 = vsub.s32 %v8351, %v8833
        %v8835 = vrot.slane %v8201, %v8834
        %v8836 = vlaneseq
        %v8837 = vshrl.u32 %v8836, 7
        %v8838 = vsub.s32 %v8351, %v8837
        %v8839 = vrot.slane %v8204, %v8838
        %v8840 = vlaneseq
        %v8841 = vshrl.u32 %v8840, 7
        %v8842 = vsub.s32 %v8351, %v8841
        %v8843 = vrot.slane %v8207, %v8842
        %v8844 = vlaneseq
        %v8845 = vshrl.u32 %v8844, 7
        %v8846 = vsub.s32 %v8351, %v8845
        %v8847 = vrot.slane %v8210, %v8846
        %v8848 = vlaneseq
        %v8849 = vshrl.u32 %v8848, 7
        %v8850 = vsub.s32 %v8351, %v8849
        %v8851 = vrot.slane %v8213, %v8850
        %v8852 = vlaneseq
        %v8853 = vshrl.u32 %v8852, 7
        %v8854 = vsub.s32 %v8351, %v8853
        %v8855 = vrot.slane %v8216, %v8854
        %v8856 = vlaneseq
        %v8857 = vshrl.u32 %v8856, 7
        %v8858 = vsub.s32 %v8351, %v8857
        %v8859 = vrot.slane %v8219, %v8858
        %v8860 = vlaneseq
        %v8861 = vshrl.u32 %v8860, 7
        %v8862 = vsub.s32 %v8351, %v8861
        %v8863 = vrot.slane %v8222, %v8862
        %v8864 = vsel %vm2769, %v8359, %v8355
        %v8865 = vsel %vm2771, %v8363, %v8864
        %v8866 = vsel %vm2773, %v8367, %v8865
        %v8867 = vsel %vm2775, %v8371, %v8866
        %v8868 = vsel %vm2777, %v8375, %v8867
        %v8869 = vsel %vm2779, %v8379, %v8868
        %v8870 = vsel %vm2781, %v8383, %v8869
        %v8871 = vsel %vm2769, %v8391, %v8387
        %v8872 = vsel %vm2771, %v8395, %v8871
        %v8873 = vsel %vm2773, %v8399, %v8872
        %v8874 = vsel %vm2775, %v8403, %v8873
        %v8875 = vsel %vm2777, %v8407, %v8874
        %v8876 = vsel %vm2779, %v8411, %v8875
        %v8877 = vsel %vm2781, %v8415, %v8876
        %v8878 = vsel %vm2769, %v8423, %v8419
        %v8879 = vsel %vm2771, %v8427, %v8878
        %v8880 = vsel %vm2773, %v8431, %v8879
        %v8881 = vsel %vm2775, %v8435, %v8880
        %v8882 = vsel %vm2777, %v8439, %v8881
        %v8883 = vsel %vm2779, %v8443, %v8882
        %v8884 = vsel %vm2781, %v8447, %v8883
        %v8885 = vsel %vm2769, %v8455, %v8451
        %v8886 = vsel %vm2771, %v8459, %v8885
        %v8887 = vsel %vm2773, %v8463, %v8886
        %v8888 = vsel %vm2775, %v8467, %v8887
        %v8889 = vsel %vm2777, %v8471, %v8888
        %v8890 = vsel %vm2779, %v8475, %v8889
        %v8891 = vsel %vm2781, %v8479, %v8890
        %v8892 = vsel %vm2769, %v8487, %v8483
        %v8893 = vsel %vm2771, %v8491, %v8892
        %v8894 = vsel %vm2773, %v8495, %v8893
        %v8895 = vsel %vm2775, %v8499, %v8894
        %v8896 = vsel %vm2777, %v8503, %v8895
        %v8897 = vsel %vm2779, %v8507, %v8896
        %v8898 = vsel %vm2781, %v8511, %v8897
        %v8899 = vsel %vm2769, %v8519, %v8515
        %v8900 = vsel %vm2771, %v8523, %v8899
        %v8901 = vsel %vm2773, %v8527, %v8900
        %v8902 = vsel %vm2775, %v8531, %v8901
        %v8903 = vsel %vm2777, %v8535, %v8902
        %v8904 = vsel %vm2779, %v8539, %v8903
        %v8905 = vsel %vm2781, %v8543, %v8904
        %v8906 = vsel %vm2769, %v8551, %v8547
        %v8907 = vsel %vm2771, %v8555, %v8906
        %v8908 = vsel %vm2773, %v8559, %v8907
        %v8909 = vsel %vm2775, %v8563, %v8908
        %v8910 = vsel %vm2777, %v8567, %v8909
        %v8911 = vsel %vm2779, %v8571, %v8910
        %v8912 = vsel %vm2781, %v8575, %v8911
        %v8913 = vsel %vm2769, %v8583, %v8579
        %v8914 = vsel %vm2771, %v8587, %v8913
        %v8915 = vsel %vm2773, %v8591, %v8914
        %v8916 = vsel %vm2775, %v8595, %v8915
        %v8917 = vsel %vm2777, %v8599, %v8916
        %v8918 = vsel %vm2779, %v8603, %v8917
        %v8919 = vsel %vm2781, %v8607, %v8918
        %v8920 = vsel %vm2769, %v8615, %v8611
        %v8921 = vsel %vm2771, %v8619, %v8920
        %v8922 = vsel %vm2773, %v8623, %v8921
        %v8923 = vsel %vm2775, %v8627, %v8922
        %v8924 = vsel %vm2777, %v8631, %v8923
        %v8925 = vsel %vm2779, %v8635, %v8924
        %v8926 = vsel %vm2781, %v8639, %v8925
        %v8927 = vsel %vm2769, %v8647, %v8643
        %v8928 = vsel %vm2771, %v8651, %v8927
        %v8929 = vsel %vm2773, %v8655, %v8928
        %v8930 = vsel %vm2775, %v8659, %v8929
        %v8931 = vsel %vm2777, %v8663, %v8930
        %v8932 = vsel %vm2779, %v8667, %v8931
        %v8933 = vsel %vm2781, %v8671, %v8932
        %v8934 = vsel %vm2769, %v8679, %v8675
        %v8935 = vsel %vm2771, %v8683, %v8934
        %v8936 = vsel %vm2773, %v8687, %v8935
        %v8937 = vsel %vm2775, %v8691, %v8936
        %v8938 = vsel %vm2777, %v8695, %v8937
        %v8939 = vsel %vm2779, %v8699, %v8938
        %v8940 = vsel %vm2781, %v8703, %v8939
        %v8941 = vsel %vm2769, %v8711, %v8707
        %v8942 = vsel %vm2771, %v8715, %v8941
        %v8943 = vsel %vm2773, %v8719, %v8942
        %v8944 = vsel %vm2775, %v8723, %v8943
        %v8945 = vsel %vm2777, %v8727, %v8944
        %v8946 = vsel %vm2779, %v8731, %v8945
        %v8947 = vsel %vm2781, %v8735, %v8946
        %v8948 = vsel %vm2769, %v8743, %v8739
        %v8949 = vsel %vm2771, %v8747, %v8948
        %v8950 = vsel %vm2773, %v8751, %v8949
        %v8951 = vsel %vm2775, %v8755, %v8950
        %v8952 = vsel %vm2777, %v8759, %v8951
        %v8953 = vsel %vm2779, %v8763, %v8952
        %v8954 = vsel %vm2781, %v8767, %v8953
        %v8955 = vsel %vm2769, %v8775, %v8771
        %v8956 = vsel %vm2771, %v8779, %v8955
        %v8957 = vsel %vm2773, %v8783, %v8956
        %v8958 = vsel %vm2775, %v8787, %v8957
        %v8959 = vsel %vm2777, %v8791, %v8958
        %v8960 = vsel %vm2779, %v8795, %v8959
        %v8961 = vsel %vm2781, %v8799, %v8960
        %v8962 = vsel %vm2769, %v8807, %v8803
        %v8963 = vsel %vm2771, %v8811, %v8962
        %v8964 = vsel %vm2773, %v8815, %v8963
        %v8965 = vsel %vm2775, %v8819, %v8964
        %v8966 = vsel %vm2777, %v8823, %v8965
        %v8967 = vsel %vm2779, %v8827, %v8966
        %v8968 = vsel %vm2781, %v8831, %v8967
        %v8969 = vsel %vm2769, %v8839, %v8835
        %v8970 = vsel %vm2771, %v8843, %v8969
        %v8971 = vsel %vm2773, %v8847, %v8970
        %v8972 = vsel %vm2775, %v8851, %v8971
        %v8973 = vsel %vm2777, %v8855, %v8972
        %v8974 = vsel %vm2779, %v8859, %v8973
        %v8975 = vsel %vm2781, %v8863, %v8974
        %vm8992 = vcmask 80944
        %8993 = vst.msk [vmem:[#allocation2] sm:$0xff] %vm8992, %v8870
        %8994 = vst.msk [vmem:[#allocation2 + $0x10] sm:$0xff] %vm8992, %v8877
        %8995 = vst.msk [vmem:[#allocation2 + $0x20] sm:$0xff] %vm8992, %v8884
        %8996 = vst.msk [vmem:[#allocation2 + $0x30] sm:$0xff] %vm8992, %v8891
        %8997 = vst.msk [vmem:[#allocation2 + $0x40] sm:$0xff] %vm8992, %v8898
        %8998 = vst.msk [vmem:[#allocation2 + $0x50] sm:$0xff] %vm8992, %v8905
        %8999 = vst.msk [vmem:[#allocation2 + $0x60] sm:$0xff] %vm8992, %v8912
        %9000 = vst.msk [vmem:[#allocation2 + $0x70] sm:$0xff] %vm8992, %v8919
        %9001 = vst.msk [vmem:[#allocation2 + $0x80] sm:$0xff] %vm8992, %v8926
        %9002 = vst.msk [vmem:[#allocation2 + $0x90] sm:$0xff] %vm8992, %v8933
        %9003 = vst.msk [vmem:[#allocation2 + $0xa0] sm:$0xff] %vm8992, %v8940
        %9004 = vst.msk [vmem:[#allocation2 + $0xb0] sm:$0xff] %vm8992, %v8947
        %9005 = vst.msk [vmem:[#allocation2 + $0xc0] sm:$0xff] %vm8992, %v8954
        %9006 = vst.msk [vmem:[#allocation2 + $0xd0] sm:$0xff] %vm8992, %v8961
        %9007 = vst.msk [vmem:[#allocation2 + $0xe0] sm:$0xff] %vm8992, %v8968
        %9008 = vst.msk [vmem:[#allocation2 + $0xf0] sm:$0xff] %vm8992, %v8975
        %vm9009 = vcmask 1047632
        %9010 = vst.msk [vmem:[#allocation2] sm:$0xff] %vm9009, 0.0
        %9011 = vst.msk [vmem:[#allocation2 + $0x10] sm:$0xff] %vm9009, 0.0
        %9012 = vst.msk [vmem:[#allocation2 + $0x20] sm:$0xff] %vm9009, 0.0
        %9013 = vst.msk [vmem:[#allocation2 + $0x30] sm:$0xff] %vm9009, 0.0
        %9014 = vst.msk [vmem:[#allocation2 + $0x40] sm:$0xff] %vm9009, 0.0
        %9015 = vst.msk [vmem:[#allocation2 + $0x50] sm:$0xff] %vm9009, 0.0
        %9016 = vst.msk [vmem:[#allocation2 + $0x60] sm:$0xff] %vm9009, 0.0
        %9017 = vst.msk [vmem:[#allocation2 + $0x70] sm:$0xff] %vm9009, 0.0
        %9018 = vst.msk [vmem:[#allocation2 + $0x80] sm:$0xff] %vm9009, 0.0
        %9019 = vst.msk [vmem:[#allocation2 + $0x90] sm:$0xff] %vm9009, 0.0
        %9020 = vst.msk [vmem:[#allocation2 + $0xa0] sm:$0xff] %vm9009, 0.0
        %9021 = vst.msk [vmem:[#allocation2 + $0xb0] sm:$0xff] %vm9009, 0.0
        %9022 = vst.msk [vmem:[#allocation2 + $0xc0] sm:$0xff] %vm9009, 0.0
        %9023 = vst.msk [vmem:[#allocation2 + $0xd0] sm:$0xff] %vm9009, 0.0
        %9024 = vst.msk [vmem:[#allocation2 + $0xe0] sm:$0xff] %vm9009, 0.0
        %9025 = vst.msk [vmem:[#allocation2 + $0xf0] sm:$0xff] %vm9009, 0.0
        %9026 = vst [vmem:[#allocation2 + $0x8] sm:$0xff] %v830
        %9027 = vst [vmem:[#allocation2 + $0x18] sm:$0xff] %v831
        %9028 = vst [vmem:[#allocation2 + $0x28] sm:$0xff] %v832
        %9029 = vst [vmem:[#allocation2 + $0x38] sm:$0xff] %v833
        %9030 = vst [vmem:[#allocation2 + $0x48] sm:$0xff] %v834
        %9031 = vst [vmem:[#allocation2 + $0x58] sm:$0xff] %v835
        %9032 = vst [vmem:[#allocation2 + $0x68] sm:$0xff] %v836
        %9033 = vst [vmem:[#allocation2 + $0x78] sm:$0xff] %v837
        %9034 = vst [vmem:[#allocation2 + $0x88] sm:$0xff] %v838
        %9035 = vst [vmem:[#allocation2 + $0x98] sm:$0xff] %v839
        %9036 = vst [vmem:[#allocation2 + $0xa8] sm:$0xff] %v840
        %9037 = vst [vmem:[#allocation2 + $0xb8] sm:$0xff] %v841
        %9038 = vst [vmem:[#allocation2 + $0xc8] sm:$0xff] %v842
        %9039 = vst [vmem:[#allocation2 + $0xd8] sm:$0xff] %v843
        %9040 = vst [vmem:[#allocation2 + $0xe8] sm:$0xff] %v844
        %9041 = vst [vmem:[#allocation2 + $0xf8] sm:$0xff] %v845
        %v9042 = vld [vmem:[#allocation2] sm:$0xff]
        %v9043 = vld [vmem:[#allocation2 + $0x8] sm:$0xff]
        %v9044 = vld [vmem:[#allocation2 + $0x10] sm:$0xff]
        %v9045 = vld [vmem:[#allocation2 + $0x18] sm:$0xff]
        %v9046 = vld [vmem:[#allocation2 + $0x20] sm:$0xff]
        %v9047 = vld [vmem:[#allocation2 + $0x28] sm:$0xff]
        %v9048 = vld [vmem:[#allocation2 + $0x30] sm:$0xff]
        %v9049 = vld [vmem:[#allocation2 + $0x38] sm:$0xff]
        %v9050 = vld [vmem:[#allocation2 + $0x40] sm:$0xff]
        %v9051 = vld [vmem:[#allocation2 + $0x48] sm:$0xff]
        %v9052 = vld [vmem:[#allocation2 + $0x50] sm:$0xff]
        %v9053 = vld [vmem:[#allocation2 + $0x58] sm:$0xff]
        %v9054 = vld [vmem:[#allocation2 + $0x60] sm:$0xff]
        %v9055 = vld [vmem:[#allocation2 + $0x68] sm:$0xff]
        %v9056 = vld [vmem:[#allocation2 + $0x70] sm:$0xff]
        %v9057 = vld [vmem:[#allocation2 + $0x78] sm:$0xff]
        %v9058 = vld [vmem:[#allocation2 + $0x80] sm:$0xff]
        %v9059 = vld [vmem:[#allocation2 + $0x88] sm:$0xff]
        %v9060 = vld [vmem:[#allocation2 + $0x90] sm:$0xff]
        %v9061 = vld [vmem:[#allocation2 + $0x98] sm:$0xff]
        %v9062 = vld [vmem:[#allocation2 + $0xa0] sm:$0xff]
        %v9063 = vld [vmem:[#allocation2 + $0xa8] sm:$0xff]
        %v9064 = vld [vmem:[#allocation2 + $0xb0] sm:$0xff]
        %v9065 = vld [vmem:[#allocation2 + $0xb8] sm:$0xff]
        %v9066 = vld [vmem:[#allocation2 + $0xc0] sm:$0xff]
        %v9067 = vld [vmem:[#allocation2 + $0xc8] sm:$0xff]
        %v9068 = vld [vmem:[#allocation2 + $0xd0] sm:$0xff]
        %v9069 = vld [vmem:[#allocation2 + $0xd8] sm:$0xff]
        %v9070 = vld [vmem:[#allocation2 + $0xe0] sm:$0xff]
        %v9071 = vld [vmem:[#allocation2 + $0xe8] sm:$0xff]
        %v9072 = vld [vmem:[#allocation2 + $0xf0] sm:$0xff]
        %v9073 = vld [vmem:[#allocation2 + $0xf8] sm:$0xff]
        %v9074 = vld [vmem:[%s7] sm:$0xff]
        %v9075 = vld [vmem:[%s7 + $0x8] sm:$0xff]
        %v9076 = vld [vmem:[%s7 + $0x10] sm:$0xff]
        %v9077 = vld [vmem:[%s7 + $0x18] sm:$0xff]
        %v9078 = vld [vmem:[%s7 + $0x20] sm:$0xff]
        %v9079 = vld [vmem:[%s7 + $0x28] sm:$0xff]
        %v9080 = vld [vmem:[%s7 + $0x30] sm:$0xff]
        %v9081 = vld [vmem:[%s7 + $0x38] sm:$0xff]
        %v9082 = vld [vmem:[%s7 + $0x40] sm:$0xff]
        %v9083 = vld [vmem:[%s7 + $0x48] sm:$0xff]
        %v9084 = vld [vmem:[%s7 + $0x50] sm:$0xff]
        %v9085 = vld [vmem:[%s7 + $0x58] sm:$0xff]
        %v9086 = vld [vmem:[%s7 + $0x60] sm:$0xff]
        %v9087 = vld [vmem:[%s7 + $0x68] sm:$0xff]
        %v9088 = vld [vmem:[%s7 + $0x70] sm:$0xff]
        %v9089 = vld [vmem:[%s7 + $0x78] sm:$0xff]
        %v9090 = vld [vmem:[%s7 + $0x80] sm:$0xff]
        %v9091 = vld [vmem:[%s7 + $0x88] sm:$0xff]
        %v9092 = vld [vmem:[%s7 + $0x90] sm:$0xff]
        %v9093 = vld [vmem:[%s7 + $0x98] sm:$0xff]
        %v9094 = vld [vmem:[%s7 + $0xa0] sm:$0xff]
        %v9095 = vld [vmem:[%s7 + $0xa8] sm:$0xff]
        %v9096 = vld [vmem:[%s7 + $0xb0] sm:$0xff]
        %v9097 = vld [vmem:[%s7 + $0xb8] sm:$0xff]
        %v9098 = vld [vmem:[%s7 + $0xc0] sm:$0xff]
        %v9099 = vld [vmem:[%s7 + $0xc8] sm:$0xff]
        %v9100 = vld [vmem:[%s7 + $0xd0] sm:$0xff]
        %v9101 = vld [vmem:[%s7 + $0xd8] sm:$0xff]
        %v9102 = vld [vmem:[%s7 + $0xe0] sm:$0xff]
        %v9103 = vld [vmem:[%s7 + $0xe8] sm:$0xff]
        %v9104 = vld [vmem:[%s7 + $0xf0] sm:$0xff]
        %v9105 = vld [vmem:[%s7 + $0xf8] sm:$0xff]
        %v9106 = vld [vmem:[%s8] sm:$0x1]
        %v9108 = vlaneseq
        %v9109 = vshrl.u32 %v9108, 7
        %v9110 = vsub.s32 0, %v9109
        %v9111 = vrot.slane %v9106, %v9110
        %9113 = vmatprep.subr.mxu0 0.0
        %9114 = vmatpush1.msra.mxu0 %v9089
        %9115 = vmatprep.subr.mxu0 0.0
        %9116 = vmatpush1.msra.mxu0 %v9088
        %9117 = vmatprep.subr.mxu0 0.0
        %9118 = vmatpush1.msra.mxu0 %v9087
        %9119 = vmatprep.subr.mxu0 0.0
        %9120 = vmatpush1.msra.mxu0 %v9086
        %9121 = vmatprep.subr.mxu0 0.0
        %9122 = vmatpush1.msra.mxu0 %v9085
        %9123 = vmatprep.subr.mxu0 0.0
        %9124 = vmatpush1.msra.mxu0 %v9084
        %9125 = vmatprep.subr.mxu0 0.0
        %9126 = vmatpush1.msra.mxu0 %v9083
        %9127 = vmatprep.subr.mxu0 0.0
        %9128 = vmatpush1.msra.mxu0 %v9082
        %9129 = vmatprep.subr.mxu0 0.0
        %9130 = vmatpush1.msra.mxu0 %v9081
        %9131 = vmatprep.subr.mxu0 0.0
        %9132 = vmatpush1.msra.mxu0 %v9080
        %9133 = vmatprep.subr.mxu0 0.0
        %9134 = vmatpush1.msra.mxu0 %v9079
        %9135 = vmatprep.subr.mxu0 0.0
        %9136 = vmatpush1.msra.mxu0 %v9078
        %9137 = vmatprep.subr.mxu0 0.0
        %9138 = vmatpush1.msra.mxu0 %v9077
        %9139 = vmatprep.subr.mxu0 0.0
        %9140 = vmatpush1.msra.mxu0 %v9076
        %9141 = vmatprep.subr.mxu0 0.0
        %9142 = vmatpush1.msra.mxu0 %v9075
        %9143 = vmatprep.subr.mxu0 0.0
        %9144 = vmatpush1.msra.mxu0 %v9074
        %9145 = vmatprep.subr.mxu0 0.0
        %9146 = vmatpush2.msra.mxu0 %v9105
        %9147 = vmatprep.subr.mxu0 0.0
        %9148 = vmatpush2.msra.mxu0 %v9104
        %9149 = vmatprep.subr.mxu0 0.0
        %9150 = vmatpush2.msra.mxu0 %v9103
        %9151 = vmatprep.subr.mxu0 0.0
        %9152 = vmatpush2.msra.mxu0 %v9102
        %9153 = vmatprep.subr.mxu0 0.0
        %9154 = vmatpush2.msra.mxu0 %v9101
        %9155 = vmatprep.subr.mxu0 0.0
        %9156 = vmatpush2.msra.mxu0 %v9100
        %9157 = vmatprep.subr.mxu0 0.0
        %9158 = vmatpush2.msra.mxu0 %v9099
        %9159 = vmatprep.subr.mxu0 0.0
        %9160 = vmatpush2.msra.mxu0 %v9098
        %9161 = vmatprep.subr.mxu0 0.0
        %9162 = vmatpush2.msra.mxu0 %v9097
        %9163 = vmatprep.subr.mxu0 0.0
        %9164 = vmatpush2.msra.mxu0 %v9096
        %9165 = vmatprep.subr.mxu0 0.0
        %9166 = vmatpush2.msra.mxu0 %v9095
        %9167 = vmatprep.subr.mxu0 0.0
        %9168 = vmatpush2.msra.mxu0 %v9094
        %9169 = vmatprep.subr.mxu0 0.0
        %9170 = vmatpush2.msra.mxu0 %v9093
        %9171 = vmatprep.subr.mxu0 0.0
        %9172 = vmatpush2.msra.mxu0 %v9092
        %9173 = vmatprep.subr.mxu0 0.0
        %9174 = vmatpush2.msra.mxu0 %v9091
        %9175 = vmatprep.subr.mxu0 0.0
        %9176 = vmatpush2.msra.mxu0 %v9090
        %9177 = vmatprep.mubr.f32.mxu0 %v9043
        %9178 = vmatmul.mubr.f32.gmra.mxu0 %v9042
        %v9179 = vpop.f32.mrf.mxu0
        %v9180 = vadd.f32 %v9111, %v9179
        %v9181 = vpop.f32.mrf.mxu0
        %9182 = vmatprep.mubr.f32.mxu0 %v9045
        %9183 = vmatmul.mubr.f32.gmra.mxu0 %v9044
        %v9184 = vpop.f32.mrf.mxu0
        %v9185 = vadd.f32 %v9111, %v9184
        %v9186 = vpop.f32.mrf.mxu0
        %9187 = vmatprep.mubr.f32.mxu0 %v9047
        %9188 = vmatmul.mubr.f32.gmra.mxu0 %v9046
        %v9189 = vpop.f32.mrf.mxu0
        %v9190 = vadd.f32 %v9111, %v9189
        %v9191 = vpop.f32.mrf.mxu0
        %9192 = vmatprep.mubr.f32.mxu0 %v9049
        %9193 = vmatmul.mubr.f32.gmra.mxu0 %v9048
        %v9194 = vpop.f32.mrf.mxu0
        %v9195 = vadd.f32 %v9111, %v9194
        %v9196 = vpop.f32.mrf.mxu0
        %9197 = vmatprep.mubr.f32.mxu0 %v9051
        %9198 = vmatmul.mubr.f32.gmra.mxu0 %v9050
        %v9199 = vpop.f32.mrf.mxu0
        %v9200 = vadd.f32 %v9111, %v9199
        %v9201 = vpop.f32.mrf.mxu0
        %9202 = vmatprep.mubr.f32.mxu0 %v9053
        %9203 = vmatmul.mubr.f32.gmra.mxu0 %v9052
        %v9204 = vpop.f32.mrf.mxu0
        %v9205 = vadd.f32 %v9111, %v9204
        %v9206 = vpop.f32.mrf.mxu0
        %9207 = vmatprep.mubr.f32.mxu0 %v9055
        %9208 = vmatmul.mubr.f32.gmra.mxu0 %v9054
        %v9209 = vpop.f32.mrf.mxu0
        %v9210 = vadd.f32 %v9111, %v9209
        %v9211 = vpop.f32.mrf.mxu0
        %9212 = vmatprep.mubr.f32.mxu0 %v9057
        %9213 = vmatmul.mubr.f32.gmra.mxu0 %v9056
        %v9214 = vpop.f32.mrf.mxu0
        %v9215 = vadd.f32 %v9111, %v9214
        %v9216 = vpop.f32.mrf.mxu0
        %9217 = vmatprep.mubr.f32.mxu0 %v9059
        %9218 = vmatmul.mubr.f32.gmra.mxu0 %v9058
        %v9219 = vpop.f32.mrf.mxu0
        %v9220 = vadd.f32 %v9111, %v9219
        %v9221 = vpop.f32.mrf.mxu0
        %9222 = vmatprep.mubr.f32.mxu0 %v9061
        %9223 = vmatmul.mubr.f32.gmra.mxu0 %v9060
        %v9224 = vpop.f32.mrf.mxu0
        %v9225 = vadd.f32 %v9111, %v9224
        %v9226 = vpop.f32.mrf.mxu0
        %9227 = vmatprep.mubr.f32.mxu0 %v9063
        %9228 = vmatmul.mubr.f32.gmra.mxu0 %v9062
        %v9229 = vpop.f32.mrf.mxu0
        %v9230 = vadd.f32 %v9111, %v9229
        %v9231 = vpop.f32.mrf.mxu0
        %9232 = vmatprep.mubr.f32.mxu0 %v9065
        %9233 = vmatmul.mubr.f32.gmra.mxu0 %v9064
        %v9234 = vpop.f32.mrf.mxu0
        %v9235 = vadd.f32 %v9111, %v9234
        %v9236 = vpop.f32.mrf.mxu0
        %9237 = vmatprep.mubr.f32.mxu0 %v9067
        %9238 = vmatmul.mubr.f32.gmra.mxu0 %v9066
        %v9239 = vpop.f32.mrf.mxu0
        %v9240 = vadd.f32 %v9111, %v9239
        %v9241 = vpop.f32.mrf.mxu0
        %9242 = vmatprep.mubr.f32.mxu0 %v9069
        %9243 = vmatmul.mubr.f32.gmra.mxu0 %v9068
        %v9244 = vpop.f32.mrf.mxu0
        %v9245 = vadd.f32 %v9111, %v9244
        %v9246 = vpop.f32.mrf.mxu0
        %9247 = vmatprep.mubr.f32.mxu0 %v9071
        %9248 = vmatmul.mubr.f32.gmra.mxu0 %v9070
        %v9249 = vpop.f32.mrf.mxu0
        %v9250 = vadd.f32 %v9111, %v9249
        %v9251 = vpop.f32.mrf.mxu0
        %9252 = vmatprep.mubr.f32.mxu0 %v9073
        %9253 = vmatmul.mubr.f32.gmra.mxu0 %v9072
        %v9254 = vpop.f32.mrf.mxu0
        %v9255 = vadd.f32 %v9111, %v9254
        %v9256 = vpop.f32.mrf.mxu0
        %9257 = vdwg.mxu0
        %v9258 = vmax.f32 %v9180, 0.0
        %v9259 = vmax.f32 %v9185, 0.0
        %v9260 = vmax.f32 %v9190, 0.0
        %v9261 = vmax.f32 %v9195, 0.0
        %v9262 = vmax.f32 %v9200, 0.0
        %v9263 = vmax.f32 %v9205, 0.0
        %v9264 = vmax.f32 %v9210, 0.0
        %v9265 = vmax.f32 %v9215, 0.0
        %v9266 = vmax.f32 %v9220, 0.0
        %v9267 = vmax.f32 %v9225, 0.0
        %v9268 = vmax.f32 %v9230, 0.0
        %v9269 = vmax.f32 %v9235, 0.0
        %v9270 = vmax.f32 %v9240, 0.0
        %v9271 = vmax.f32 %v9245, 0.0
        %v9272 = vmax.f32 %v9250, 0.0
        %v9273 = vmax.f32 %v9255, 0.0
        %v9274 = vld [vmem:[%s9] sm:$0x1]
        %v9275 = vld [vmem:[#allocation3] sm:$0x1]
        %9277 = vset.pattern.permute.xlu0 0
        %9278 = vperm.xlu0 %9277, %v9275
        %v9279 = vpop.permute.xlu0 %9278
        %v9281 = vlaneseq
        %v9282 = vshrl.u32 %v9281, 7
        %v9283 = vsub.s32 0, %v9282
        %v9284 = vrot.slane %v9279, %v9283
        %9285 = vmatprep.subr.mxu0 0.0
        %9286 = vmatpush1.xpose.msra.mxu0 %v9273
        %9287 = vmatprep.subr.mxu0 0.0
        %9288 = vmatpush1.xpose.msra.mxu0 %v9272
        %9289 = vmatprep.subr.mxu0 0.0
        %9290 = vmatpush1.xpose.msra.mxu0 %v9271
        %9291 = vmatprep.subr.mxu0 0.0
        %9292 = vmatpush1.xpose.msra.mxu0 %v9270
        %9293 = vmatprep.subr.mxu0 0.0
        %9294 = vmatpush1.xpose.msra.mxu0 %v9269
        %9295 = vmatprep.subr.mxu0 0.0
        %9296 = vmatpush1.xpose.msra.mxu0 %v9268
        %9297 = vmatprep.subr.mxu0 0.0
        %9298 = vmatpush1.xpose.msra.mxu0 %v9267
        %9299 = vmatprep.subr.mxu0 0.0
        %9300 = vmatpush1.xpose.msra.mxu0 %v9266
        %9301 = vmatprep.subr.mxu0 0.0
        %9302 = vmatpush1.xpose.msra.mxu0 %v9265
        %9303 = vmatprep.subr.mxu0 0.0
        %9304 = vmatpush1.xpose.msra.mxu0 %v9264
        %9305 = vmatprep.subr.mxu0 0.0
        %9306 = vmatpush1.xpose.msra.mxu0 %v9263
        %9307 = vmatprep.subr.mxu0 0.0
        %9308 = vmatpush1.xpose.msra.mxu0 %v9262
        %9309 = vmatprep.subr.mxu0 0.0
        %9310 = vmatpush1.xpose.msra.mxu0 %v9261
        %9311 = vmatprep.subr.mxu0 0.0
        %9312 = vmatpush1.xpose.msra.mxu0 %v9260
        %9313 = vmatprep.subr.mxu0 0.0
        %9314 = vmatpush1.xpose.msra.mxu0 %v9259
        %9315 = vmatprep.subr.mxu0 0.0
        %9316 = vmatpush1.xpose.msra.mxu0 %v9258
        %9317 = vmatprep.subr.mxu0 0.0
        %9318 = vmatpush2.xpose.msra.mxu0 0.0
        %9319 = vmatprep.subr.mxu0 0.0
        %9320 = vmatpush2.xpose.msra.mxu0 0.0
        %9321 = vmatprep.subr.mxu0 0.0
        %9322 = vmatpush2.xpose.msra.mxu0 0.0
        %9323 = vmatprep.subr.mxu0 0.0
        %9324 = vmatpush2.xpose.msra.mxu0 0.0
        %9325 = vmatprep.subr.mxu0 0.0
        %9326 = vmatpush2.xpose.msra.mxu0 0.0
        %9327 = vmatprep.subr.mxu0 0.0
        %9328 = vmatpush2.xpose.msra.mxu0 0.0
        %9329 = vmatprep.subr.mxu0 0.0
        %9330 = vmatpush2.xpose.msra.mxu0 0.0
        %9331 = vmatprep.subr.mxu0 0.0
        %9332 = vmatpush2.xpose.msra.mxu0 0.0
        %9333 = vmatprep.subr.mxu0 0.0
        %9334 = vmatpush2.xpose.msra.mxu0 0.0
        %9335 = vmatprep.subr.mxu0 0.0
        %9336 = vmatpush2.xpose.msra.mxu0 0.0
        %9337 = vmatprep.subr.mxu0 0.0
        %9338 = vmatpush2.xpose.msra.mxu0 0.0
        %9339 = vmatprep.subr.mxu0 0.0
        %9340 = vmatpush2.xpose.msra.mxu0 0.0
        %9341 = vmatprep.subr.mxu0 0.0
        %9342 = vmatpush2.xpose.msra.mxu0 0.0
        %9343 = vmatprep.subr.mxu0 0.0
        %9344 = vmatpush2.xpose.msra.mxu0 0.0
        %9345 = vmatprep.subr.mxu0 0.0
        %9346 = vmatpush2.xpose.msra.mxu0 0.0
        %9347 = vmatprep.subr.mxu0 0.0
        %9348 = vmatpush2.xpose.msra.mxu0 0.0
        %9349 = vmatprep.mubr.f32.mxu0 0.0
        %9350 = vmatmul.mubr.f32.gmra.mxu0 %v9274
        %v9351 = vpop.f32.mrf.mxu0
        %v9352 = vadd.f32 %v9284, %v9351
        %v9353 = vpop.f32.mrf.mxu0
        %9354 = vdwg.mxu0
        %9355 = vst [vmem:[%s436] sm:$0x1] %v9352
        %v9356 = vld [vmem:[%s457] sm:$0x1]
        %s9357 = smul.u32 %s29, 128
        %v9358 = vstv %s9357
        %v9359 = vadd.s32 %v9358, %v2256
        %vm9360 = vcmp.lt.s32.totalorder %v9359, 200
        %v9361 = vsel %vm9360, 1, 0
        %v9362 = vcvt.s32.f32 %v9361
        %v9363 = vmax.f32 %v9352, 0.0
        %v9364 = vmul.f32 %v9352, %v9356
        %v9365 = vsub.f32 %v9363, %v9364
        %v9366 = vand.u32 2147483647, %v9352
        %v9367 = vsub.f32 0.0, %v9366
        %v9368 = vmul.f32 %v9367, 1.442695
        %v9369 = vpow.pop %v9368
        %v9370 = vadd.f32 %v9369, 1.0
        %v9371 = vlog2.pop %v9370
        %v9372 = vmul.f32 %v9371, 0.6931472
        %v9373 = vadd.f32 %v9365, %v9372
        %v9374 = vmul.f32 %v9373, %v9362
        %v9375 = vsel %vm5372, %v9374, 0.0
        %9376 = vadd.xlane.f32.xlu0 %v9375
        %v9377 = vpop.xlane.xlu0 %9376
        %v9378 = vlaneseq
        %v9379 = vshrl.u32 %v9378, 7
        %v9380 = vsub.s32 0, %v9379
        %v9381 = vrot.slane %v9377, %v9380
        %9382 = vst [vmem:[%s461] sm:$0xff] %v9381
        %s9383 = sand.u32 %s283, 1
        %s9384 = scalar_lea.sflag [#allocation5], %s9383
        %s9385 = sand.u32 %s283, 1
        %s9386 = scalar_lea.vmem [#allocation4], %s9385
        %p9387 = scmp.lt.s32.totalorder %s29, 1
        %s9388 = scalar_select %p9387, %s29, 1
        %s9389 = smul.addr %s9388, 8
        %s9390 = scalar_lea.vmem %s12, %s9389
        // Predicated region
        $region65: #{dlrm_train_forward.1} parent=63 // pred_check
          %p9391 = pneg %p293
        $region66: #{dlrm_train_forward.1} parent=63 // pred_check_branch
          %9393 = sbr.rel (%p9391) target = $region68
        $region67: #{dlrm_train_forward.1} parent=63 // pred_region
          %s9395 = ssub.s32 16, 16
          %9396 = vsyncadd %s9384, %s9395
          %s9397 = smul.addr %s29, 16
          %s9398 = scalar_lea.hbm %s11, %s9397
          %s9400 = sshll.u32 %s9386, 4
          %s9401 = int_to_ptr.vmem [resolvable:$true] %s9400
          %9403 = dma.vmem_to_hbm [thread:$0]  %s9401, 16, %s9398, %s9384
        $region68: #{dlrm_train_forward.1} parent=63 // pred_fallthru
          _
        // Predicated region
        $region69: #{dlrm_train_forward.1} parent=63 // pred_check
          %p9404 = pneg %p319
        $region70: #{dlrm_train_forward.1} parent=63 // pred_check_branch
          %9406 = sbr.rel (%p9404) target = $region72
        $region71: #{dlrm_train_forward.1} parent=63 // pred_region
          _
        $region72: #{dlrm_train_forward.1} parent=63 // pred_fallthru
          _
      $region64: #{dlrm_train_forward.1} parent=5 // pred_fallthru
        _
      %p9407 = scmp.le.s32.totalorder 2, %s24
      // Predicated region
      $region73: #{dlrm_train_forward.1} parent=5 // pred_check
        %p9408 = pneg %p9407
      $region74: #{dlrm_train_forward.1} parent=5 // pred_check_branch
        %9410 = sbr.rel (%p9408) target = $region76
      $region75: #{dlrm_train_forward.1} parent=5 // pred_region
        %s9411 = ssub.s32 %s24, 2
        // Predicated region
        $region77: #{dlrm_train_forward.1} parent=75 // pred_check
          %p9412 = pneg %p299
        $region78: #{dlrm_train_forward.1} parent=75 // pred_check_branch
          %9414 = sbr.rel (%p9412) target = $region80
        $region79: #{dlrm_train_forward.1} parent=75 // pred_region
          %s9415 = sand.u32 %s284, 1
          %s9416 = scalar_lea.sflag [#allocation5], %s9415
          %s9417 = sand.u32 %s284, 1
          %s9418 = scalar_lea.vmem [#allocation4], %s9417
          %9419 = dma.done %s9416, 16
        $region80: #{dlrm_train_forward.1} parent=75 // pred_fallthru
          _
        // Predicated region
        $region81: #{dlrm_train_forward.1} parent=75 // pred_check
          %p9420 = pneg %p325
        $region82: #{dlrm_train_forward.1} parent=75 // pred_check_branch
          %9422 = sbr.rel (%p9420) target = $region84
        $region83: #{dlrm_train_forward.1} parent=75 // pred_region
          %p9423 = scmp.lt.s32.totalorder %s30, 1
          %s9424 = scalar_select %p9423, %s30, 1
          %s9425 = smul.addr %s9424, 8
          %s9426 = scalar_lea.vmem %s12, %s9425
        $region84: #{dlrm_train_forward.1} parent=75 // pred_fallthru
          _
      $region76: #{dlrm_train_forward.1} parent=5 // pred_fallthru
        _
    $region6: #{dlrm_train_forward.1} parent=1 // loop_footer
      %s28 = sadd.s32 1, %s24
    $region7: #{dlrm_train_forward.1} parent=1 // loop_footer_branch
      %23 = sbr.rel target = $region3
    $region8: #{dlrm_train_forward.1} parent=1 // loop_exit
      _
    %9427 = vsyncpa [#allocation5], 1
    %s9428 = scalar_lea.sflag [#allocation5], 1
    %9429 = vsyncpa %s9428, 1

</llo_original>
